<compile_context>
chip_gen: v7x
topology: tpu7x:2x2x1
jax: 0.10.0
libtpu: 0.0.40
codegen_flags: <defaults>
</compile_context>

<pallas_src>
import functools

import jax
import jax.numpy as jnp
from jax.experimental import pallas as pl
from jax.experimental.pallas import tpu as pltpu


# ----------------------------------------------------------------------------
# Fused kernel: 2-layer post-norm TransformerEncoder + fc head, eval mode
# (dropout = identity).  Processes both live slots (pos/neg item columns) in
# one invocation; x stays in VMEM/vregs across layers.
# ----------------------------------------------------------------------------
def fused_encoder_fc_kernel(x_ref,                    # (R, D) f32, R = 2*seq
                            in_w_ref, in_b_ref,       # (L,D,3D) bf16, (L,1,3D) f32
                            out_w_ref, out_b_ref,     # (L,D,D)  bf16, (L,1,D)  f32
                            ln1_w_ref, ln1_b_ref,     # (L,1,D) f32
                            lin1_w_ref, lin1_b_ref,   # (L,D,FF) bf16, (L,1,FF) f32
                            lin2_w_ref, lin2_b_ref,   # (L,FF,D) bf16, (L,1,D) f32
                            ln2_w_ref, ln2_b_ref,     # (L,1,D) f32
                            fc_w_ref, fc_b_ref,       # (D,1) f32, (1,1) f32
                            o_ref,                    # (R, 1) f32
                            *, nhead, num_layers, seq, eps=1e-5):
    x = x_ref[...].astype(jnp.float32)                # (R, D)
    R, D = x.shape
    hd = D // nhead
    n_slots = R // seq

    for l in range(num_layers):                       # static unroll over layers
        # ---- QKV projection: both slots batched (R rows in one MXU feed) ----
        qkv = jnp.dot(x.astype(jnp.bfloat16), in_w_ref[l],
                      preferred_element_type=jnp.float32) + in_b_ref[l]
        q, k, v = qkv[:, :D], qkv[:, D:2 * D], qkv[:, 2 * D:]
        # NOTE: 1/sqrt(hd) is pre-folded into the Q columns of in_w / in_b.

        # ---- multi-head self-attention: slots batched via dot_general batch
        # dims.  Heads stay a short static loop (hd-wide lane slices); fully
        # batching heads would need a lane->sublane transpose that costs more
        # than it saves at this size (attention is <5% of the FLOPs).
        heads = []
        for h in range(nhead):
            qh = q[:, h * hd:(h + 1) * hd].reshape(n_slots, seq, hd)
            kh = k[:, h * hd:(h + 1) * hd].reshape(n_slots, seq, hd)
            vh = v[:, h * hd:(h + 1) * hd].reshape(n_slots, seq, hd)
            s = jax.lax.dot_general(qh, kh, (((2,), (2,)), ((0,), (0,))),
                                    preferred_element_type=jnp.float32)
            s = s - jnp.max(s, axis=-1, keepdims=True)
            p = jnp.exp(s)
            p = p * pl.reciprocal(jnp.sum(p, axis=-1, keepdims=True), approx=True)
            oh = jax.lax.dot_general(p, vh, (((2,), (1,)), ((0,), (0,))),
                                     preferred_element_type=jnp.float32)
            heads.append(oh.reshape(R, hd))
        attn = jnp.concatenate(heads, axis=-1)                            # (R, D)
        attn = jnp.dot(attn.astype(jnp.bfloat16), out_w_ref[l],
                       preferred_element_type=jnp.float32) + out_b_ref[l]
        # dropout = identity (eval mode)

        # ---- residual + LayerNorm 1 (post-norm) ----
        y = x + attn
        mu = jnp.mean(y, axis=-1, keepdims=True)
        var = jnp.mean((y - mu) ** 2, axis=-1, keepdims=True)
        y = (y - mu) * jax.lax.rsqrt(var + eps) * ln1_w_ref[l] + ln1_b_ref[l]

        # ---- feed-forward (Linear -> ReLU -> Linear), both slots batched ----
        h1 = jnp.dot(y.astype(jnp.bfloat16), lin1_w_ref[l],
                     preferred_element_type=jnp.float32) + lin1_b_ref[l]
        h1 = jnp.maximum(h1, 0.0)
        h2 = jnp.dot(h1.astype(jnp.bfloat16), lin2_w_ref[l],
                     preferred_element_type=jnp.float32) + lin2_b_ref[l]

        # ---- residual + LayerNorm 2 ----
        z = y + h2
        mu2 = jnp.mean(z, axis=-1, keepdims=True)
        var2 = jnp.mean((z - mu2) ** 2, axis=-1, keepdims=True)
        x = (z - mu2) * jax.lax.rsqrt(var2 + eps) * ln2_w_ref[l] + ln2_b_ref[l]

    # ---- fused fc head: only the (R, 1) scores ever leave VMEM ----
    o_ref[...] = (jnp.dot(x, fc_w_ref[...], preferred_element_type=jnp.float32)
                  + fc_b_ref[...]).astype(o_ref.dtype)


# ----------------------------------------------------------------------------
# One-time parameter packing: transpose to (in, out), fold 1/sqrt(hd) into Q,
# stack layers along a leading L axis, cast matmul weights to bf16.
# ----------------------------------------------------------------------------
def prepare_params(params, nhead):
    D = params["user_emb"].shape[1]
    hd = D // nhead
    scale = 1.0 / (hd ** 0.5)

    def stack(fn):
        return jnp.stack([fn(lp) for lp in params["layers"]], axis=0)

    in_w = stack(lambda lp: lp["in_w"].T)                    # (L, D, 3D)
    in_b = stack(lambda lp: lp["in_b"].reshape(1, -1))       # (L, 1, 3D)
    in_w = in_w.at[:, :, :D].multiply(scale)                 # fold softmax scale into Q
    in_b = in_b.at[:, :, :D].multiply(scale)

    return dict(
        in_w=in_w.astype(jnp.bfloat16),
        in_b=in_b,
        out_w=stack(lambda lp: lp["out_w"].T).astype(jnp.bfloat16),
        out_b=stack(lambda lp: lp["out_b"].reshape(1, -1)),
        ln1_w=stack(lambda lp: lp["ln1_w"].reshape(1, -1)),
        ln1_b=stack(lambda lp: lp["ln1_b"].reshape(1, -1)),
        lin1_w=stack(lambda lp: lp["lin1_w"].T).astype(jnp.bfloat16),
        lin1_b=stack(lambda lp: lp["lin1_b"].reshape(1, -1)),
        lin2_w=stack(lambda lp: lp["lin2_w"].T).astype(jnp.bfloat16),
        lin2_b=stack(lambda lp: lp["lin2_b"].reshape(1, -1)),
        ln2_w=stack(lambda lp: lp["ln2_w"].reshape(1, -1)),
        ln2_b=stack(lambda lp: lp["ln2_b"].reshape(1, -1)),
        fc_w=params["fc_w"].T,                               # (D, 1)
        fc_b=params["fc_b"].reshape(1, 1),
    )


# ----------------------------------------------------------------------------
# Parameter init (deterministic, synthetic — shapes mirror the PyTorch module)
# ----------------------------------------------------------------------------
def init_params(key, num_users, num_items, D, num_layers, FF):
    ks = jax.random.split(key, 4 + num_layers)
    params = {
        "user_emb": 0.02 * jax.random.normal(ks[0], (num_users, D), jnp.float32),
        "item_emb": 0.02 * jax.random.normal(ks[1], (num_items, D), jnp.float32),
        "fc_w": 0.02 * jax.random.normal(ks[2], (1, D), jnp.float32),
        "fc_b": jnp.zeros((1,), jnp.float32),
        "layers": [],
    }
    for l in range(num_layers):
        lk = jax.random.split(ks[4 + l], 4)
        params["layers"].append({
            "in_w": 0.02 * jax.random.normal(lk[0], (3 * D, D), jnp.float32),
            "in_b": jnp.zeros((3 * D,), jnp.float32),
            "out_w": 0.02 * jax.random.normal(lk[1], (D, D), jnp.float32),
            "out_b": jnp.zeros((D,), jnp.float32),
            "ln1_w": jnp.ones((D,), jnp.float32),
            "ln1_b": jnp.zeros((D,), jnp.float32),
            "lin1_w": 0.02 * jax.random.normal(lk[2], (FF, D), jnp.float32),
            "lin1_b": jnp.zeros((FF,), jnp.float32),
            "lin2_w": 0.02 * jax.random.normal(lk[3], (D, FF), jnp.float32),
            "lin2_b": jnp.zeros((D,), jnp.float32),
            "ln2_w": jnp.ones((D,), jnp.float32),
            "ln2_b": jnp.zeros((D,), jnp.float32),
        })
    return params


# ----------------------------------------------------------------------------
# Full forward (mirrors Transformer_self.forward, eval mode)
# ----------------------------------------------------------------------------
@functools.partial(jax.jit, static_argnames=("nhead", "num_layers"))
def transformer_self_forward(packed, item_emb, pos_item, neg_item, *,
                             nhead, num_layers):
    # Embedding gather is JAX glue.  The user column is dead (never read and
    # never influences the item column), so it is not computed at all.
    i = item_emb[pos_item]                       # (B, D) pos item column
    j = item_emb[neg_item]                       # (B, D) neg item column
    B, _ = i.shape
    x2d = jnp.concatenate([i, j], axis=0)        # (2B, D): rows [0,B) pos, [B,2B) neg

    scores = pl.pallas_call(
        functools.partial(fused_encoder_fc_kernel, nhead=nhead,
                          num_layers=num_layers, seq=B),
        out_shape=jax.ShapeDtypeStruct((2 * B, 1), jnp.float32),
        compiler_params=pltpu.CompilerParams(vmem_limit_bytes=32 * 1024 * 1024),
    )(x2d,
      packed["in_w"], packed["in_b"],
      packed["out_w"], packed["out_b"],
      packed["ln1_w"], packed["ln1_b"],
      packed["lin1_w"], packed["lin1_b"],
      packed["lin2_w"], packed["lin2_b"],
      packed["ln2_w"], packed["ln2_b"],
      packed["fc_w"], packed["fc_b"])

    # pos_output[:, -1, :] -> rows [0, B);  neg_output[:, -1, :] -> rows [B, 2B)
    return scores[:B], scores[B:]


if __name__ == "__main__":
    num_users, num_items = 10, 20
    embedding_dim, nhead, num_layers = 32, 4, 2
    dim_feedforward = 2048          # PyTorch TransformerEncoderLayer default
    B = 8                           # mini-batch size (= attention sequence length)

    key = jax.random.PRNGKey(0)
    pkey, dkey = jax.random.split(key)
    params = init_params(pkey, num_users, num_items, embedding_dim, num_layers,
                         dim_feedforward)
    packed = prepare_params(params, nhead)

    k1, k2, k3 = jax.random.split(dkey, 3)
    user = jax.random.randint(k1, (B,), 0, num_users)       # kept for interface parity;
    pos_item = jax.random.randint(k2, (B,), 0, num_items)   # user column is dead compute.
    neg_item = jax.random.randint(k3, (B,), 0, num_items)

    pos_score, neg_score = transformer_self_forward(
        packed, params["item_emb"], pos_item, neg_item,
        nhead=nhead, num_layers=num_layers)
    jax.block_until_ready((pos_score, neg_score))

    assert pos_score.shape == (B, 1) and neg_score.shape == (B, 1)
    assert bool(jnp.all(jnp.isfinite(pos_score))) and bool(jnp.all(jnp.isfinite(neg_score)))
    print("KERNEL_OK")
</pallas_src>

<mosaic_0001>
module attributes {stable_mosaic.version = 11 : i64} {
  func.func @fused_encoder_fc_kernel(%arg0: memref<16x32xf32, #tpu.memory_space<vmem>>, %arg1: memref<2x32x96xbf16, #tpu.memory_space<vmem>>, %arg2: memref<2x1x96xf32, #tpu.memory_space<vmem>>, %arg3: memref<2x32x32xbf16, #tpu.memory_space<vmem>>, %arg4: memref<2x1x32xf32, #tpu.memory_space<vmem>>, %arg5: memref<2x1x32xf32, #tpu.memory_space<vmem>>, %arg6: memref<2x1x32xf32, #tpu.memory_space<vmem>>, %arg7: memref<2x32x2048xbf16, #tpu.memory_space<vmem>>, %arg8: memref<2x1x2048xf32, #tpu.memory_space<vmem>>, %arg9: memref<2x2048x32xbf16, #tpu.memory_space<vmem>>, %arg10: memref<2x1x32xf32, #tpu.memory_space<vmem>>, %arg11: memref<2x1x32xf32, #tpu.memory_space<vmem>>, %arg12: memref<2x1x32xf32, #tpu.memory_space<vmem>>, %arg13: memref<32x1xf32, #tpu.memory_space<vmem>>, %arg14: memref<1x1xf32, #tpu.memory_space<vmem>>, %arg15: memref<16x1xf32, #tpu.memory_space<vmem>>) attributes {dimension_semantics = [], scalar_prefetch = 0 : i64, scratch_operands = 0 : i64, tpu.core_type = #tpu.core_type<tc>} {
    %c0 = arith.constant 0 : index
    %c0_0 = arith.constant 0 : index
    %0 = vector.load %arg0[%c0, %c0_0] : memref<16x32xf32, #tpu.memory_space<vmem>>, vector<16x32xf32>
    %1 = arith.truncf %0 : vector<16x32xf32> to vector<16x32xbf16>
    %c0_1 = arith.constant 0 : index
    %c0_2 = arith.constant 0 : index
    %c0_3 = arith.constant 0 : index
    %2 = vector.load %arg1[%c0_1, %c0_2, %c0_3] : memref<2x32x96xbf16, #tpu.memory_space<vmem>>, vector<1x32x96xbf16>
    %3 = vector.shape_cast %2 : vector<1x32x96xbf16> to vector<32x96xbf16>
    %cst = arith.constant dense<0.000000e+00> : vector<16x96xf32>
    %4 = tpu.matmul %1, %3, %cst {dimension_numbers = #tpu.dot_dimension_numbers<[1], [0], [0], [1], [0, 0, 1, 1], [], []>} : vector<16x32xbf16>, vector<32x96xbf16>, vector<16x96xf32> -> vector<16x96xf32>
    %c0_4 = arith.constant 0 : index
    %c0_5 = arith.constant 0 : index
    %c0_6 = arith.constant 0 : index
    %5 = vector.load %arg2[%c0_4, %c0_5, %c0_6] : memref<2x1x96xf32, #tpu.memory_space<vmem>>, vector<1x1x96xf32>
    %6 = vector.shape_cast %5 : vector<1x1x96xf32> to vector<1x96xf32>
    %7 = vector.broadcast %6 : vector<1x96xf32> to vector<16x96xf32>
    %8 = arith.addf %4, %7 : vector<16x96xf32>
    %9 = vector.extract_strided_slice %8 {offsets = [0, 0], sizes = [16, 32], strides = [1, 1]} : vector<16x96xf32> to vector<16x32xf32>
    %10 = vector.extract_strided_slice %8 {offsets = [0, 32], sizes = [16, 32], strides = [1, 1]} : vector<16x96xf32> to vector<16x32xf32>
    %11 = vector.extract_strided_slice %8 {offsets = [0, 64], sizes = [16, 32], strides = [1, 1]} : vector<16x96xf32> to vector<16x32xf32>
    %12 = vector.extract_strided_slice %9 {offsets = [0, 0], sizes = [16, 8], strides = [1, 1]} : vector<16x32xf32> to vector<16x8xf32>
    %13 = vector.shape_cast %12 : vector<16x8xf32> to vector<2x8x8xf32>
    %14 = vector.extract_strided_slice %10 {offsets = [0, 0], sizes = [16, 8], strides = [1, 1]} : vector<16x32xf32> to vector<16x8xf32>
    %15 = vector.shape_cast %14 : vector<16x8xf32> to vector<2x8x8xf32>
    %16 = vector.extract_strided_slice %11 {offsets = [0, 0], sizes = [16, 8], strides = [1, 1]} : vector<16x32xf32> to vector<16x8xf32>
    %17 = vector.shape_cast %16 : vector<16x8xf32> to vector<2x8x8xf32>
    %cst_7 = arith.constant dense<0.000000e+00> : vector<2x8x8xf32>
    %18 = tpu.matmul %13, %15, %cst_7 {dimension_numbers = #tpu.dot_dimension_numbers<[2], [2], [1], [1], [0, 0, 0, 1, 1, 1], [0], [0]>} : vector<2x8x8xf32>, vector<2x8x8xf32>, vector<2x8x8xf32> -> vector<2x8x8xf32>
    %cst_8 = arith.constant dense<0xFF800000> : vector<2x8xf32>
    %19 = vector.multi_reduction <maximumf>, %18, %cst_8 [2] : vector<2x8x8xf32> to vector<2x8xf32>
    %20 = vector.shape_cast %19 : vector<2x8xf32> to vector<2x8x1xf32>
    %21 = vector.broadcast %20 : vector<2x8x1xf32> to vector<2x8x8xf32>
    %22 = arith.subf %18, %21 : vector<2x8x8xf32>
    %23 = math.exp %22 : vector<2x8x8xf32>
    %cst_9 = arith.constant dense<0.000000e+00> : vector<2x8xf32>
    %24 = vector.multi_reduction <add>, %23, %cst_9 [2] : vector<2x8x8xf32> to vector<2x8xf32>
    %25 = vector.shape_cast %24 : vector<2x8xf32> to vector<2x8x1xf32>
    %26 = tpu.reciprocal %25 {approx = true} : vector<2x8x1xf32> -> vector<2x8x1xf32>
    %27 = vector.broadcast %26 : vector<2x8x1xf32> to vector<2x8x8xf32>
    %28 = arith.mulf %23, %27 : vector<2x8x8xf32>
    %cst_10 = arith.constant dense<0.000000e+00> : vector<2x8x8xf32>
    %29 = tpu.matmul %28, %17, %cst_10 {dimension_numbers = #tpu.dot_dimension_numbers<[2], [1], [1], [2], [0, 0, 0, 1, 1, 2], [0], [0]>} : vector<2x8x8xf32>, vector<2x8x8xf32>, vector<2x8x8xf32> -> vector<2x8x8xf32>
    %30 = vector.shape_cast %29 : vector<2x8x8xf32> to vector<16x8xf32>
    %31 = vector.extract_strided_slice %9 {offsets = [0, 8], sizes = [16, 8], strides = [1, 1]} : vector<16x32xf32> to vector<16x8xf32>
    %32 = vector.shape_cast %31 : vector<16x8xf32> to vector<2x8x8xf32>
    %33 = vector.extract_strided_slice %10 {offsets = [0, 8], sizes = [16, 8], strides = [1, 1]} : vector<16x32xf32> to vector<16x8xf32>
    %34 = vector.shape_cast %33 : vector<16x8xf32> to vector<2x8x8xf32>
    %35 = vector.extract_strided_slice %11 {offsets = [0, 8], sizes = [16, 8], strides = [1, 1]} : vector<16x32xf32> to vector<16x8xf32>
    %36 = vector.shape_cast %35 : vector<16x8xf32> to vector<2x8x8xf32>
    %cst_11 = arith.constant dense<0.000000e+00> : vector<2x8x8xf32>
    %37 = tpu.matmul %32, %34, %cst_11 {dimension_numbers = #tpu.dot_dimension_numbers<[2], [2], [1], [1], [0, 0, 0, 1, 1, 1], [0], [0]>} : vector<2x8x8xf32>, vector<2x8x8xf32>, vector<2x8x8xf32> -> vector<2x8x8xf32>
    %cst_12 = arith.constant dense<0xFF800000> : vector<2x8xf32>
    %38 = vector.multi_reduction <maximumf>, %37, %cst_12 [2] : vector<2x8x8xf32> to vector<2x8xf32>
    %39 = vector.shape_cast %38 : vector<2x8xf32> to vector<2x8x1xf32>
    %40 = vector.broadcast %39 : vector<2x8x1xf32> to vector<2x8x8xf32>
    %41 = arith.subf %37, %40 : vector<2x8x8xf32>
    %42 = math.exp %41 : vector<2x8x8xf32>
    %cst_13 = arith.constant dense<0.000000e+00> : vector<2x8xf32>
    %43 = vector.multi_reduction <add>, %42, %cst_13 [2] : vector<2x8x8xf32> to vector<2x8xf32>
    %44 = vector.shape_cast %43 : vector<2x8xf32> to vector<2x8x1xf32>
    %45 = tpu.reciprocal %44 {approx = true} : vector<2x8x1xf32> -> vector<2x8x1xf32>
    %46 = vector.broadcast %45 : vector<2x8x1xf32> to vector<2x8x8xf32>
    %47 = arith.mulf %42, %46 : vector<2x8x8xf32>
    %cst_14 = arith.constant dense<0.000000e+00> : vector<2x8x8xf32>
    %48 = tpu.matmul %47, %36, %cst_14 {dimension_numbers = #tpu.dot_dimension_numbers<[2], [1], [1], [2], [0, 0, 0, 1, 1, 2], [0], [0]>} : vector<2x8x8xf32>, vector<2x8x8xf32>, vector<2x8x8xf32> -> vector<2x8x8xf32>
    %49 = vector.shape_cast %48 : vector<2x8x8xf32> to vector<16x8xf32>
    %50 = vector.extract_strided_slice %9 {offsets = [0, 16], sizes = [16, 8], strides = [1, 1]} : vector<16x32xf32> to vector<16x8xf32>
    %51 = vector.shape_cast %50 : vector<16x8xf32> to vector<2x8x8xf32>
    %52 = vector.extract_strided_slice %10 {offsets = [0, 16], sizes = [16, 8], strides = [1, 1]} : vector<16x32xf32> to vector<16x8xf32>
    %53 = vector.shape_cast %52 : vector<16x8xf32> to vector<2x8x8xf32>
    %54 = vector.extract_strided_slice %11 {offsets = [0, 16], sizes = [16, 8], strides = [1, 1]} : vector<16x32xf32> to vector<16x8xf32>
    %55 = vector.shape_cast %54 : vector<16x8xf32> to vector<2x8x8xf32>
    %cst_15 = arith.constant dense<0.000000e+00> : vector<2x8x8xf32>
    %56 = tpu.matmul %51, %53, %cst_15 {dimension_numbers = #tpu.dot_dimension_numbers<[2], [2], [1], [1], [0, 0, 0, 1, 1, 1], [0], [0]>} : vector<2x8x8xf32>, vector<2x8x8xf32>, vector<2x8x8xf32> -> vector<2x8x8xf32>
    %cst_16 = arith.constant dense<0xFF800000> : vector<2x8xf32>
    %57 = vector.multi_reduction <maximumf>, %56, %cst_16 [2] : vector<2x8x8xf32> to vector<2x8xf32>
    %58 = vector.shape_cast %57 : vector<2x8xf32> to vector<2x8x1xf32>
    %59 = vector.broadcast %58 : vector<2x8x1xf32> to vector<2x8x8xf32>
    %60 = arith.subf %56, %59 : vector<2x8x8xf32>
    %61 = math.exp %60 : vector<2x8x8xf32>
    %cst_17 = arith.constant dense<0.000000e+00> : vector<2x8xf32>
    %62 = vector.multi_reduction <add>, %61, %cst_17 [2] : vector<2x8x8xf32> to vector<2x8xf32>
    %63 = vector.shape_cast %62 : vector<2x8xf32> to vector<2x8x1xf32>
    %64 = tpu.reciprocal %63 {approx = true} : vector<2x8x1xf32> -> vector<2x8x1xf32>
    %65 = vector.broadcast %64 : vector<2x8x1xf32> to vector<2x8x8xf32>
    %66 = arith.mulf %61, %65 : vector<2x8x8xf32>
    %cst_18 = arith.constant dense<0.000000e+00> : vector<2x8x8xf32>
    %67 = tpu.matmul %66, %55, %cst_18 {dimension_numbers = #tpu.dot_dimension_numbers<[2], [1], [1], [2], [0, 0, 0, 1, 1, 2], [0], [0]>} : vector<2x8x8xf32>, vector<2x8x8xf32>, vector<2x8x8xf32> -> vector<2x8x8xf32>
    %68 = vector.shape_cast %67 : vector<2x8x8xf32> to vector<16x8xf32>
    %69 = vector.extract_strided_slice %9 {offsets = [0, 24], sizes = [16, 8], strides = [1, 1]} : vector<16x32xf32> to vector<16x8xf32>
    %70 = vector.shape_cast %69 : vector<16x8xf32> to vector<2x8x8xf32>
    %71 = vector.extract_strided_slice %10 {offsets = [0, 24], sizes = [16, 8], strides = [1, 1]} : vector<16x32xf32> to vector<16x8xf32>
    %72 = vector.shape_cast %71 : vector<16x8xf32> to vector<2x8x8xf32>
    %73 = vector.extract_strided_slice %11 {offsets = [0, 24], sizes = [16, 8], strides = [1, 1]} : vector<16x32xf32> to vector<16x8xf32>
    %74 = vector.shape_cast %73 : vector<16x8xf32> to vector<2x8x8xf32>
    %cst_19 = arith.constant dense<0.000000e+00> : vector<2x8x8xf32>
    %75 = tpu.matmul %70, %72, %cst_19 {dimension_numbers = #tpu.dot_dimension_numbers<[2], [2], [1], [1], [0, 0, 0, 1, 1, 1], [0], [0]>} : vector<2x8x8xf32>, vector<2x8x8xf32>, vector<2x8x8xf32> -> vector<2x8x8xf32>
    %cst_20 = arith.constant dense<0xFF800000> : vector<2x8xf32>
    %76 = vector.multi_reduction <maximumf>, %75, %cst_20 [2] : vector<2x8x8xf32> to vector<2x8xf32>
    %77 = vector.shape_cast %76 : vector<2x8xf32> to vector<2x8x1xf32>
    %78 = vector.broadcast %77 : vector<2x8x1xf32> to vector<2x8x8xf32>
    %79 = arith.subf %75, %78 : vector<2x8x8xf32>
    %80 = math.exp %79 : vector<2x8x8xf32>
    %cst_21 = arith.constant dense<0.000000e+00> : vector<2x8xf32>
    %81 = vector.multi_reduction <add>, %80, %cst_21 [2] : vector<2x8x8xf32> to vector<2x8xf32>
    %82 = vector.shape_cast %81 : vector<2x8xf32> to vector<2x8x1xf32>
    %83 = tpu.reciprocal %82 {approx = true} : vector<2x8x1xf32> -> vector<2x8x1xf32>
    %84 = vector.broadcast %83 : vector<2x8x1xf32> to vector<2x8x8xf32>
    %85 = arith.mulf %80, %84 : vector<2x8x8xf32>
    %cst_22 = arith.constant dense<0.000000e+00> : vector<2x8x8xf32>
    %86 = tpu.matmul %85, %74, %cst_22 {dimension_numbers = #tpu.dot_dimension_numbers<[2], [1], [1], [2], [0, 0, 0, 1, 1, 2], [0], [0]>} : vector<2x8x8xf32>, vector<2x8x8xf32>, vector<2x8x8xf32> -> vector<2x8x8xf32>
    %87 = vector.shape_cast %86 : vector<2x8x8xf32> to vector<16x8xf32>
    %88 = tpu.concatenate %30, %49, %68, %87 in 1 : vector<16x8xf32>, vector<16x8xf32>, vector<16x8xf32>, vector<16x8xf32> -> vector<16x32xf32>
    %89 = arith.truncf %88 : vector<16x32xf32> to vector<16x32xbf16>
    %c0_23 = arith.constant 0 : index
    %c0_24 = arith.constant 0 : index
    %c0_25 = arith.constant 0 : index
    %90 = vector.load %arg3[%c0_23, %c0_24, %c0_25] : memref<2x32x32xbf16, #tpu.memory_space<vmem>>, vector<1x32x32xbf16>
    %91 = vector.shape_cast %90 : vector<1x32x32xbf16> to vector<32x32xbf16>
    %cst_26 = arith.constant dense<0.000000e+00> : vector<16x32xf32>
    %92 = tpu.matmul %89, %91, %cst_26 {dimension_numbers = #tpu.dot_dimension_numbers<[1], [0], [0], [1], [0, 0, 1, 1], [], []>} : vector<16x32xbf16>, vector<32x32xbf16>, vector<16x32xf32> -> vector<16x32xf32>
    %c0_27 = arith.constant 0 : index
    %c0_28 = arith.constant 0 : index
    %c0_29 = arith.constant 0 : index
    %93 = vector.load %arg4[%c0_27, %c0_28, %c0_29] : memref<2x1x32xf32, #tpu.memory_space<vmem>>, vector<1x1x32xf32>
    %94 = vector.shape_cast %93 : vector<1x1x32xf32> to vector<1x32xf32>
    %95 = vector.broadcast %94 : vector<1x32xf32> to vector<16x32xf32>
    %96 = arith.addf %92, %95 : vector<16x32xf32>
    %97 = arith.addf %0, %96 : vector<16x32xf32>
    %cst_30 = arith.constant dense<0.000000e+00> : vector<16xf32>
    %98 = vector.multi_reduction <add>, %97, %cst_30 [1] : vector<16x32xf32> to vector<16xf32>
    %99 = vector.shape_cast %98 : vector<16xf32> to vector<16x1xf32>
    %cst_31 = arith.constant 3.200000e+01 : f32
    %100 = vector.broadcast %cst_31 : f32 to vector<16x1xf32>
    %101 = arith.divf %99, %100 : vector<16x1xf32>
    %102 = vector.broadcast %101 : vector<16x1xf32> to vector<16x32xf32>
    %103 = arith.subf %97, %102 : vector<16x32xf32>
    %104 = arith.mulf %103, %103 : vector<16x32xf32>
    %cst_32 = arith.constant dense<0.000000e+00> : vector<16xf32>
    %105 = vector.multi_reduction <add>, %104, %cst_32 [1] : vector<16x32xf32> to vector<16xf32>
    %106 = vector.shape_cast %105 : vector<16xf32> to vector<16x1xf32>
    %cst_33 = arith.constant 3.200000e+01 : f32
    %107 = vector.broadcast %cst_33 : f32 to vector<16x1xf32>
    %108 = arith.divf %106, %107 : vector<16x1xf32>
    %109 = vector.broadcast %101 : vector<16x1xf32> to vector<16x32xf32>
    %110 = arith.subf %97, %109 : vector<16x32xf32>
    %cst_34 = arith.constant 9.99999974E-6 : f32
    %111 = vector.broadcast %cst_34 : f32 to vector<16x1xf32>
    %112 = arith.addf %108, %111 : vector<16x1xf32>
    %113 = math.rsqrt %112 : vector<16x1xf32>
    %114 = vector.broadcast %113 : vector<16x1xf32> to vector<16x32xf32>
    %115 = arith.mulf %110, %114 : vector<16x32xf32>
    %c0_35 = arith.constant 0 : index
    %c0_36 = arith.constant 0 : index
    %c0_37 = arith.constant 0 : index
    %116 = vector.load %arg5[%c0_35, %c0_36, %c0_37] : memref<2x1x32xf32, #tpu.memory_space<vmem>>, vector<1x1x32xf32>
    %117 = vector.shape_cast %116 : vector<1x1x32xf32> to vector<1x32xf32>
    %118 = vector.broadcast %117 : vector<1x32xf32> to vector<16x32xf32>
    %119 = arith.mulf %115, %118 : vector<16x32xf32>
    %c0_38 = arith.constant 0 : index
    %c0_39 = arith.constant 0 : index
    %c0_40 = arith.constant 0 : index
    %120 = vector.load %arg6[%c0_38, %c0_39, %c0_40] : memref<2x1x32xf32, #tpu.memory_space<vmem>>, vector<1x1x32xf32>
    %121 = vector.shape_cast %120 : vector<1x1x32xf32> to vector<1x32xf32>
    %122 = vector.broadcast %121 : vector<1x32xf32> to vector<16x32xf32>
    %123 = arith.addf %119, %122 : vector<16x32xf32>
    %124 = arith.truncf %123 : vector<16x32xf32> to vector<16x32xbf16>
    %c0_41 = arith.constant 0 : index
    %c0_42 = arith.constant 0 : index
    %c0_43 = arith.constant 0 : index
    %125 = vector.load %arg7[%c0_41, %c0_42, %c0_43] : memref<2x32x2048xbf16, #tpu.memory_space<vmem>>, vector<1x32x2048xbf16>
    %126 = vector.shape_cast %125 : vector<1x32x2048xbf16> to vector<32x2048xbf16>
    %cst_44 = arith.constant dense<0.000000e+00> : vector<16x2048xf32>
    %127 = tpu.matmul %124, %126, %cst_44 {dimension_numbers = #tpu.dot_dimension_numbers<[1], [0], [0], [1], [0, 0, 1, 1], [], []>} : vector<16x32xbf16>, vector<32x2048xbf16>, vector<16x2048xf32> -> vector<16x2048xf32>
    %c0_45 = arith.constant 0 : index
    %c0_46 = arith.constant 0 : index
    %c0_47 = arith.constant 0 : index
    %128 = vector.load %arg8[%c0_45, %c0_46, %c0_47] : memref<2x1x2048xf32, #tpu.memory_space<vmem>>, vector<1x1x2048xf32>
    %129 = vector.shape_cast %128 : vector<1x1x2048xf32> to vector<1x2048xf32>
    %130 = vector.broadcast %129 : vector<1x2048xf32> to vector<16x2048xf32>
    %131 = arith.addf %127, %130 : vector<16x2048xf32>
    %cst_48 = arith.constant 0.000000e+00 : f32
    %132 = vector.broadcast %cst_48 : f32 to vector<16x2048xf32>
    %133 = arith.maximumf %131, %132 : vector<16x2048xf32>
    %134 = arith.truncf %133 : vector<16x2048xf32> to vector<16x2048xbf16>
    %c0_49 = arith.constant 0 : index
    %c0_50 = arith.constant 0 : index
    %c0_51 = arith.constant 0 : index
    %135 = vector.load %arg9[%c0_49, %c0_50, %c0_51] : memref<2x2048x32xbf16, #tpu.memory_space<vmem>>, vector<1x2048x32xbf16>
    %136 = vector.shape_cast %135 : vector<1x2048x32xbf16> to vector<2048x32xbf16>
    %cst_52 = arith.constant dense<0.000000e+00> : vector<16x32xf32>
    %137 = tpu.matmul %134, %136, %cst_52 {dimension_numbers = #tpu.dot_dimension_numbers<[1], [0], [0], [1], [0, 0, 1, 1], [], []>} : vector<16x2048xbf16>, vector<2048x32xbf16>, vector<16x32xf32> -> vector<16x32xf32>
    %c0_53 = arith.constant 0 : index
    %c0_54 = arith.constant 0 : index
    %c0_55 = arith.constant 0 : index
    %138 = vector.load %arg10[%c0_53, %c0_54, %c0_55] : memref<2x1x32xf32, #tpu.memory_space<vmem>>, vector<1x1x32xf32>
    %139 = vector.shape_cast %138 : vector<1x1x32xf32> to vector<1x32xf32>
    %140 = vector.broadcast %139 : vector<1x32xf32> to vector<16x32xf32>
    %141 = arith.addf %137, %140 : vector<16x32xf32>
    %142 = arith.addf %123, %141 : vector<16x32xf32>
    %cst_56 = arith.constant dense<0.000000e+00> : vector<16xf32>
    %143 = vector.multi_reduction <add>, %142, %cst_56 [1] : vector<16x32xf32> to vector<16xf32>
    %144 = vector.shape_cast %143 : vector<16xf32> to vector<16x1xf32>
    %cst_57 = arith.constant 3.200000e+01 : f32
    %145 = vector.broadcast %cst_57 : f32 to vector<16x1xf32>
    %146 = arith.divf %144, %145 : vector<16x1xf32>
    %147 = vector.broadcast %146 : vector<16x1xf32> to vector<16x32xf32>
    %148 = arith.subf %142, %147 : vector<16x32xf32>
    %149 = arith.mulf %148, %148 : vector<16x32xf32>
    %cst_58 = arith.constant dense<0.000000e+00> : vector<16xf32>
    %150 = vector.multi_reduction <add>, %149, %cst_58 [1] : vector<16x32xf32> to vector<16xf32>
    %151 = vector.shape_cast %150 : vector<16xf32> to vector<16x1xf32>
    %cst_59 = arith.constant 3.200000e+01 : f32
    %152 = vector.broadcast %cst_59 : f32 to vector<16x1xf32>
    %153 = arith.divf %151, %152 : vector<16x1xf32>
    %154 = vector.broadcast %146 : vector<16x1xf32> to vector<16x32xf32>
    %155 = arith.subf %142, %154 : vector<16x32xf32>
    %cst_60 = arith.constant 9.99999974E-6 : f32
    %156 = vector.broadcast %cst_60 : f32 to vector<16x1xf32>
    %157 = arith.addf %153, %156 : vector<16x1xf32>
    %158 = math.rsqrt %157 : vector<16x1xf32>
    %159 = vector.broadcast %158 : vector<16x1xf32> to vector<16x32xf32>
    %160 = arith.mulf %155, %159 : vector<16x32xf32>
    %c0_61 = arith.constant 0 : index
    %c0_62 = arith.constant 0 : index
    %c0_63 = arith.constant 0 : index
    %161 = vector.load %arg11[%c0_61, %c0_62, %c0_63] : memref<2x1x32xf32, #tpu.memory_space<vmem>>, vector<1x1x32xf32>
    %162 = vector.shape_cast %161 : vector<1x1x32xf32> to vector<1x32xf32>
    %163 = vector.broadcast %162 : vector<1x32xf32> to vector<16x32xf32>
    %164 = arith.mulf %160, %163 : vector<16x32xf32>
    %c0_64 = arith.constant 0 : index
    %c0_65 = arith.constant 0 : index
    %c0_66 = arith.constant 0 : index
    %165 = vector.load %arg12[%c0_64, %c0_65, %c0_66] : memref<2x1x32xf32, #tpu.memory_space<vmem>>, vector<1x1x32xf32>
    %166 = vector.shape_cast %165 : vector<1x1x32xf32> to vector<1x32xf32>
    %167 = vector.broadcast %166 : vector<1x32xf32> to vector<16x32xf32>
    %168 = arith.addf %164, %167 : vector<16x32xf32>
    %169 = arith.truncf %168 : vector<16x32xf32> to vector<16x32xbf16>
    %c1 = arith.constant 1 : index
    %c0_67 = arith.constant 0 : index
    %c0_68 = arith.constant 0 : index
    %170 = vector.load %arg1[%c1, %c0_67, %c0_68] : memref<2x32x96xbf16, #tpu.memory_space<vmem>>, vector<1x32x96xbf16>
    %171 = vector.shape_cast %170 : vector<1x32x96xbf16> to vector<32x96xbf16>
    %cst_69 = arith.constant dense<0.000000e+00> : vector<16x96xf32>
    %172 = tpu.matmul %169, %171, %cst_69 {dimension_numbers = #tpu.dot_dimension_numbers<[1], [0], [0], [1], [0, 0, 1, 1], [], []>} : vector<16x32xbf16>, vector<32x96xbf16>, vector<16x96xf32> -> vector<16x96xf32>
    %c1_70 = arith.constant 1 : index
    %c0_71 = arith.constant 0 : index
    %c0_72 = arith.constant 0 : index
    %173 = vector.load %arg2[%c1_70, %c0_71, %c0_72] : memref<2x1x96xf32, #tpu.memory_space<vmem>>, vector<1x1x96xf32>
    %174 = vector.shape_cast %173 : vector<1x1x96xf32> to vector<1x96xf32>
    %175 = vector.broadcast %174 : vector<1x96xf32> to vector<16x96xf32>
    %176 = arith.addf %172, %175 : vector<16x96xf32>
    %177 = vector.extract_strided_slice %176 {offsets = [0, 0], sizes = [16, 32], strides = [1, 1]} : vector<16x96xf32> to vector<16x32xf32>
    %178 = vector.extract_strided_slice %176 {offsets = [0, 32], sizes = [16, 32], strides = [1, 1]} : vector<16x96xf32> to vector<16x32xf32>
    %179 = vector.extract_strided_slice %176 {offsets = [0, 64], sizes = [16, 32], strides = [1, 1]} : vector<16x96xf32> to vector<16x32xf32>
    %180 = vector.extract_strided_slice %177 {offsets = [0, 0], sizes = [16, 8], strides = [1, 1]} : vector<16x32xf32> to vector<16x8xf32>
    %181 = vector.shape_cast %180 : vector<16x8xf32> to vector<2x8x8xf32>
    %182 = vector.extract_strided_slice %178 {offsets = [0, 0], sizes = [16, 8], strides = [1, 1]} : vector<16x32xf32> to vector<16x8xf32>
    %183 = vector.shape_cast %182 : vector<16x8xf32> to vector<2x8x8xf32>
    %184 = vector.extract_strided_slice %179 {offsets = [0, 0], sizes = [16, 8], strides = [1, 1]} : vector<16x32xf32> to vector<16x8xf32>
    %185 = vector.shape_cast %184 : vector<16x8xf32> to vector<2x8x8xf32>
    %cst_73 = arith.constant dense<0.000000e+00> : vector<2x8x8xf32>
    %186 = tpu.matmul %181, %183, %cst_73 {dimension_numbers = #tpu.dot_dimension_numbers<[2], [2], [1], [1], [0, 0, 0, 1, 1, 1], [0], [0]>} : vector<2x8x8xf32>, vector<2x8x8xf32>, vector<2x8x8xf32> -> vector<2x8x8xf32>
    %cst_74 = arith.constant dense<0xFF800000> : vector<2x8xf32>
    %187 = vector.multi_reduction <maximumf>, %186, %cst_74 [2] : vector<2x8x8xf32> to vector<2x8xf32>
    %188 = vector.shape_cast %187 : vector<2x8xf32> to vector<2x8x1xf32>
    %189 = vector.broadcast %188 : vector<2x8x1xf32> to vector<2x8x8xf32>
    %190 = arith.subf %186, %189 : vector<2x8x8xf32>
    %191 = math.exp %190 : vector<2x8x8xf32>
    %cst_75 = arith.constant dense<0.000000e+00> : vector<2x8xf32>
    %192 = vector.multi_reduction <add>, %191, %cst_75 [2] : vector<2x8x8xf32> to vector<2x8xf32>
    %193 = vector.shape_cast %192 : vector<2x8xf32> to vector<2x8x1xf32>
    %194 = tpu.reciprocal %193 {approx = true} : vector<2x8x1xf32> -> vector<2x8x1xf32>
    %195 = vector.broadcast %194 : vector<2x8x1xf32> to vector<2x8x8xf32>
    %196 = arith.mulf %191, %195 : vector<2x8x8xf32>
    %cst_76 = arith.constant dense<0.000000e+00> : vector<2x8x8xf32>
    %197 = tpu.matmul %196, %185, %cst_76 {dimension_numbers = #tpu.dot_dimension_numbers<[2], [1], [1], [2], [0, 0, 0, 1, 1, 2], [0], [0]>} : vector<2x8x8xf32>, vector<2x8x8xf32>, vector<2x8x8xf32> -> vector<2x8x8xf32>
    %198 = vector.shape_cast %197 : vector<2x8x8xf32> to vector<16x8xf32>
    %199 = vector.extract_strided_slice %177 {offsets = [0, 8], sizes = [16, 8], strides = [1, 1]} : vector<16x32xf32> to vector<16x8xf32>
    %200 = vector.shape_cast %199 : vector<16x8xf32> to vector<2x8x8xf32>
    %201 = vector.extract_strided_slice %178 {offsets = [0, 8], sizes = [16, 8], strides = [1, 1]} : vector<16x32xf32> to vector<16x8xf32>
    %202 = vector.shape_cast %201 : vector<16x8xf32> to vector<2x8x8xf32>
    %203 = vector.extract_strided_slice %179 {offsets = [0, 8], sizes = [16, 8], strides = [1, 1]} : vector<16x32xf32> to vector<16x8xf32>
    %204 = vector.shape_cast %203 : vector<16x8xf32> to vector<2x8x8xf32>
    %cst_77 = arith.constant dense<0.000000e+00> : vector<2x8x8xf32>
    %205 = tpu.matmul %200, %202, %cst_77 {dimension_numbers = #tpu.dot_dimension_numbers<[2], [2], [1], [1], [0, 0, 0, 1, 1, 1], [0], [0]>} : vector<2x8x8xf32>, vector<2x8x8xf32>, vector<2x8x8xf32> -> vector<2x8x8xf32>
    %cst_78 = arith.constant dense<0xFF800000> : vector<2x8xf32>
    %206 = vector.multi_reduction <maximumf>, %205, %cst_78 [2] : vector<2x8x8xf32> to vector<2x8xf32>
    %207 = vector.shape_cast %206 : vector<2x8xf32> to vector<2x8x1xf32>
    %208 = vector.broadcast %207 : vector<2x8x1xf32> to vector<2x8x8xf32>
    %209 = arith.subf %205, %208 : vector<2x8x8xf32>
    %210 = math.exp %209 : vector<2x8x8xf32>
    %cst_79 = arith.constant dense<0.000000e+00> : vector<2x8xf32>
    %211 = vector.multi_reduction <add>, %210, %cst_79 [2] : vector<2x8x8xf32> to vector<2x8xf32>
    %212 = vector.shape_cast %211 : vector<2x8xf32> to vector<2x8x1xf32>
    %213 = tpu.reciprocal %212 {approx = true} : vector<2x8x1xf32> -> vector<2x8x1xf32>
    %214 = vector.broadcast %213 : vector<2x8x1xf32> to vector<2x8x8xf32>
    %215 = arith.mulf %210, %214 : vector<2x8x8xf32>
    %cst_80 = arith.constant dense<0.000000e+00> : vector<2x8x8xf32>
    %216 = tpu.matmul %215, %204, %cst_80 {dimension_numbers = #tpu.dot_dimension_numbers<[2], [1], [1], [2], [0, 0, 0, 1, 1, 2], [0], [0]>} : vector<2x8x8xf32>, vector<2x8x8xf32>, vector<2x8x8xf32> -> vector<2x8x8xf32>
    %217 = vector.shape_cast %216 : vector<2x8x8xf32> to vector<16x8xf32>
    %218 = vector.extract_strided_slice %177 {offsets = [0, 16], sizes = [16, 8], strides = [1, 1]} : vector<16x32xf32> to vector<16x8xf32>
    %219 = vector.shape_cast %218 : vector<16x8xf32> to vector<2x8x8xf32>
    %220 = vector.extract_strided_slice %178 {offsets = [0, 16], sizes = [16, 8], strides = [1, 1]} : vector<16x32xf32> to vector<16x8xf32>
    %221 = vector.shape_cast %220 : vector<16x8xf32> to vector<2x8x8xf32>
    %222 = vector.extract_strided_slice %179 {offsets = [0, 16], sizes = [16, 8], strides = [1, 1]} : vector<16x32xf32> to vector<16x8xf32>
    %223 = vector.shape_cast %222 : vector<16x8xf32> to vector<2x8x8xf32>
    %cst_81 = arith.constant dense<0.000000e+00> : vector<2x8x8xf32>
    %224 = tpu.matmul %219, %221, %cst_81 {dimension_numbers = #tpu.dot_dimension_numbers<[2], [2], [1], [1], [0, 0, 0, 1, 1, 1], [0], [0]>} : vector<2x8x8xf32>, vector<2x8x8xf32>, vector<2x8x8xf32> -> vector<2x8x8xf32>
    %cst_82 = arith.constant dense<0xFF800000> : vector<2x8xf32>
    %225 = vector.multi_reduction <maximumf>, %224, %cst_82 [2] : vector<2x8x8xf32> to vector<2x8xf32>
    %226 = vector.shape_cast %225 : vector<2x8xf32> to vector<2x8x1xf32>
    %227 = vector.broadcast %226 : vector<2x8x1xf32> to vector<2x8x8xf32>
    %228 = arith.subf %224, %227 : vector<2x8x8xf32>
    %229 = math.exp %228 : vector<2x8x8xf32>
    %cst_83 = arith.constant dense<0.000000e+00> : vector<2x8xf32>
    %230 = vector.multi_reduction <add>, %229, %cst_83 [2] : vector<2x8x8xf32> to vector<2x8xf32>
    %231 = vector.shape_cast %230 : vector<2x8xf32> to vector<2x8x1xf32>
    %232 = tpu.reciprocal %231 {approx = true} : vector<2x8x1xf32> -> vector<2x8x1xf32>
    %233 = vector.broadcast %232 : vector<2x8x1xf32> to vector<2x8x8xf32>
    %234 = arith.mulf %229, %233 : vector<2x8x8xf32>
    %cst_84 = arith.constant dense<0.000000e+00> : vector<2x8x8xf32>
    %235 = tpu.matmul %234, %223, %cst_84 {dimension_numbers = #tpu.dot_dimension_numbers<[2], [1], [1], [2], [0, 0, 0, 1, 1, 2], [0], [0]>} : vector<2x8x8xf32>, vector<2x8x8xf32>, vector<2x8x8xf32> -> vector<2x8x8xf32>
    %236 = vector.shape_cast %235 : vector<2x8x8xf32> to vector<16x8xf32>
    %237 = vector.extract_strided_slice %177 {offsets = [0, 24], sizes = [16, 8], strides = [1, 1]} : vector<16x32xf32> to vector<16x8xf32>
    %238 = vector.shape_cast %237 : vector<16x8xf32> to vector<2x8x8xf32>
    %239 = vector.extract_strided_slice %178 {offsets = [0, 24], sizes = [16, 8], strides = [1, 1]} : vector<16x32xf32> to vector<16x8xf32>
    %240 = vector.shape_cast %239 : vector<16x8xf32> to vector<2x8x8xf32>
    %241 = vector.extract_strided_slice %179 {offsets = [0, 24], sizes = [16, 8], strides = [1, 1]} : vector<16x32xf32> to vector<16x8xf32>
    %242 = vector.shape_cast %241 : vector<16x8xf32> to vector<2x8x8xf32>
    %cst_85 = arith.constant dense<0.000000e+00> : vector<2x8x8xf32>
    %243 = tpu.matmul %238, %240, %cst_85 {dimension_numbers = #tpu.dot_dimension_numbers<[2], [2], [1], [1], [0, 0, 0, 1, 1, 1], [0], [0]>} : vector<2x8x8xf32>, vector<2x8x8xf32>, vector<2x8x8xf32> -> vector<2x8x8xf32>
    %cst_86 = arith.constant dense<0xFF800000> : vector<2x8xf32>
    %244 = vector.multi_reduction <maximumf>, %243, %cst_86 [2] : vector<2x8x8xf32> to vector<2x8xf32>
    %245 = vector.shape_cast %244 : vector<2x8xf32> to vector<2x8x1xf32>
    %246 = vector.broadcast %245 : vector<2x8x1xf32> to vector<2x8x8xf32>
    %247 = arith.subf %243, %246 : vector<2x8x8xf32>
    %248 = math.exp %247 : vector<2x8x8xf32>
    %cst_87 = arith.constant dense<0.000000e+00> : vector<2x8xf32>
    %249 = vector.multi_reduction <add>, %248, %cst_87 [2] : vector<2x8x8xf32> to vector<2x8xf32>
    %250 = vector.shape_cast %249 : vector<2x8xf32> to vector<2x8x1xf32>
    %251 = tpu.reciprocal %250 {approx = true} : vector<2x8x1xf32> -> vector<2x8x1xf32>
    %252 = vector.broadcast %251 : vector<2x8x1xf32> to vector<2x8x8xf32>
    %253 = arith.mulf %248, %252 : vector<2x8x8xf32>
    %cst_88 = arith.constant dense<0.000000e+00> : vector<2x8x8xf32>
    %254 = tpu.matmul %253, %242, %cst_88 {dimension_numbers = #tpu.dot_dimension_numbers<[2], [1], [1], [2], [0, 0, 0, 1, 1, 2], [0], [0]>} : vector<2x8x8xf32>, vector<2x8x8xf32>, vector<2x8x8xf32> -> vector<2x8x8xf32>
    %255 = vector.shape_cast %254 : vector<2x8x8xf32> to vector<16x8xf32>
    %256 = tpu.concatenate %198, %217, %236, %255 in 1 : vector<16x8xf32>, vector<16x8xf32>, vector<16x8xf32>, vector<16x8xf32> -> vector<16x32xf32>
    %257 = arith.truncf %256 : vector<16x32xf32> to vector<16x32xbf16>
    %c1_89 = arith.constant 1 : index
    %c0_90 = arith.constant 0 : index
    %c0_91 = arith.constant 0 : index
    %258 = vector.load %arg3[%c1_89, %c0_90, %c0_91] : memref<2x32x32xbf16, #tpu.memory_space<vmem>>, vector<1x32x32xbf16>
    %259 = vector.shape_cast %258 : vector<1x32x32xbf16> to vector<32x32xbf16>
    %cst_92 = arith.constant dense<0.000000e+00> : vector<16x32xf32>
    %260 = tpu.matmul %257, %259, %cst_92 {dimension_numbers = #tpu.dot_dimension_numbers<[1], [0], [0], [1], [0, 0, 1, 1], [], []>} : vector<16x32xbf16>, vector<32x32xbf16>, vector<16x32xf32> -> vector<16x32xf32>
    %c1_93 = arith.constant 1 : index
    %c0_94 = arith.constant 0 : index
    %c0_95 = arith.constant 0 : index
    %261 = vector.load %arg4[%c1_93, %c0_94, %c0_95] : memref<2x1x32xf32, #tpu.memory_space<vmem>>, vector<1x1x32xf32>
    %262 = vector.shape_cast %261 : vector<1x1x32xf32> to vector<1x32xf32>
    %263 = vector.broadcast %262 : vector<1x32xf32> to vector<16x32xf32>
    %264 = arith.addf %260, %263 : vector<16x32xf32>
    %265 = arith.addf %168, %264 : vector<16x32xf32>
    %cst_96 = arith.constant dense<0.000000e+00> : vector<16xf32>
    %266 = vector.multi_reduction <add>, %265, %cst_96 [1] : vector<16x32xf32> to vector<16xf32>
    %267 = vector.shape_cast %266 : vector<16xf32> to vector<16x1xf32>
    %cst_97 = arith.constant 3.200000e+01 : f32
    %268 = vector.broadcast %cst_97 : f32 to vector<16x1xf32>
    %269 = arith.divf %267, %268 : vector<16x1xf32>
    %270 = vector.broadcast %269 : vector<16x1xf32> to vector<16x32xf32>
    %271 = arith.subf %265, %270 : vector<16x32xf32>
    %272 = arith.mulf %271, %271 : vector<16x32xf32>
    %cst_98 = arith.constant dense<0.000000e+00> : vector<16xf32>
    %273 = vector.multi_reduction <add>, %272, %cst_98 [1] : vector<16x32xf32> to vector<16xf32>
    %274 = vector.shape_cast %273 : vector<16xf32> to vector<16x1xf32>
    %cst_99 = arith.constant 3.200000e+01 : f32
    %275 = vector.broadcast %cst_99 : f32 to vector<16x1xf32>
    %276 = arith.divf %274, %275 : vector<16x1xf32>
    %277 = vector.broadcast %269 : vector<16x1xf32> to vector<16x32xf32>
    %278 = arith.subf %265, %277 : vector<16x32xf32>
    %cst_100 = arith.constant 9.99999974E-6 : f32
    %279 = vector.broadcast %cst_100 : f32 to vector<16x1xf32>
    %280 = arith.addf %276, %279 : vector<16x1xf32>
    %281 = math.rsqrt %280 : vector<16x1xf32>
    %282 = vector.broadcast %281 : vector<16x1xf32> to vector<16x32xf32>
    %283 = arith.mulf %278, %282 : vector<16x32xf32>
    %c1_101 = arith.constant 1 : index
    %c0_102 = arith.constant 0 : index
    %c0_103 = arith.constant 0 : index
    %284 = vector.load %arg5[%c1_101, %c0_102, %c0_103] : memref<2x1x32xf32, #tpu.memory_space<vmem>>, vector<1x1x32xf32>
    %285 = vector.shape_cast %284 : vector<1x1x32xf32> to vector<1x32xf32>
    %286 = vector.broadcast %285 : vector<1x32xf32> to vector<16x32xf32>
    %287 = arith.mulf %283, %286 : vector<16x32xf32>
    %c1_104 = arith.constant 1 : index
    %c0_105 = arith.constant 0 : index
    %c0_106 = arith.constant 0 : index
    %288 = vector.load %arg6[%c1_104, %c0_105, %c0_106] : memref<2x1x32xf32, #tpu.memory_space<vmem>>, vector<1x1x32xf32>
    %289 = vector.shape_cast %288 : vector<1x1x32xf32> to vector<1x32xf32>
    %290 = vector.broadcast %289 : vector<1x32xf32> to vector<16x32xf32>
    %291 = arith.addf %287, %290 : vector<16x32xf32>
    %292 = arith.truncf %291 : vector<16x32xf32> to vector<16x32xbf16>
    %c1_107 = arith.constant 1 : index
    %c0_108 = arith.constant 0 : index
    %c0_109 = arith.constant 0 : index
    %293 = vector.load %arg7[%c1_107, %c0_108, %c0_109] : memref<2x32x2048xbf16, #tpu.memory_space<vmem>>, vector<1x32x2048xbf16>
    %294 = vector.shape_cast %293 : vector<1x32x2048xbf16> to vector<32x2048xbf16>
    %cst_110 = arith.constant dense<0.000000e+00> : vector<16x2048xf32>
    %295 = tpu.matmul %292, %294, %cst_110 {dimension_numbers = #tpu.dot_dimension_numbers<[1], [0], [0], [1], [0, 0, 1, 1], [], []>} : vector<16x32xbf16>, vector<32x2048xbf16>, vector<16x2048xf32> -> vector<16x2048xf32>
    %c1_111 = arith.constant 1 : index
    %c0_112 = arith.constant 0 : index
    %c0_113 = arith.constant 0 : index
    %296 = vector.load %arg8[%c1_111, %c0_112, %c0_113] : memref<2x1x2048xf32, #tpu.memory_space<vmem>>, vector<1x1x2048xf32>
    %297 = vector.shape_cast %296 : vector<1x1x2048xf32> to vector<1x2048xf32>
    %298 = vector.broadcast %297 : vector<1x2048xf32> to vector<16x2048xf32>
    %299 = arith.addf %295, %298 : vector<16x2048xf32>
    %cst_114 = arith.constant 0.000000e+00 : f32
    %300 = vector.broadcast %cst_114 : f32 to vector<16x2048xf32>
    %301 = arith.maximumf %299, %300 : vector<16x2048xf32>
    %302 = arith.truncf %301 : vector<16x2048xf32> to vector<16x2048xbf16>
    %c1_115 = arith.constant 1 : index
    %c0_116 = arith.constant 0 : index
    %c0_117 = arith.constant 0 : index
    %303 = vector.load %arg9[%c1_115, %c0_116, %c0_117] : memref<2x2048x32xbf16, #tpu.memory_space<vmem>>, vector<1x2048x32xbf16>
    %304 = vector.shape_cast %303 : vector<1x2048x32xbf16> to vector<2048x32xbf16>
    %cst_118 = arith.constant dense<0.000000e+00> : vector<16x32xf32>
    %305 = tpu.matmul %302, %304, %cst_118 {dimension_numbers = #tpu.dot_dimension_numbers<[1], [0], [0], [1], [0, 0, 1, 1], [], []>} : vector<16x2048xbf16>, vector<2048x32xbf16>, vector<16x32xf32> -> vector<16x32xf32>
    %c1_119 = arith.constant 1 : index
    %c0_120 = arith.constant 0 : index
    %c0_121 = arith.constant 0 : index
    %306 = vector.load %arg10[%c1_119, %c0_120, %c0_121] : memref<2x1x32xf32, #tpu.memory_space<vmem>>, vector<1x1x32xf32>
    %307 = vector.shape_cast %306 : vector<1x1x32xf32> to vector<1x32xf32>
    %308 = vector.broadcast %307 : vector<1x32xf32> to vector<16x32xf32>
    %309 = arith.addf %305, %308 : vector<16x32xf32>
    %310 = arith.addf %291, %309 : vector<16x32xf32>
    %cst_122 = arith.constant dense<0.000000e+00> : vector<16xf32>
    %311 = vector.multi_reduction <add>, %310, %cst_122 [1] : vector<16x32xf32> to vector<16xf32>
    %312 = vector.shape_cast %311 : vector<16xf32> to vector<16x1xf32>
    %cst_123 = arith.constant 3.200000e+01 : f32
    %313 = vector.broadcast %cst_123 : f32 to vector<16x1xf32>
    %314 = arith.divf %312, %313 : vector<16x1xf32>
    %315 = vector.broadcast %314 : vector<16x1xf32> to vector<16x32xf32>
    %316 = arith.subf %310, %315 : vector<16x32xf32>
    %317 = arith.mulf %316, %316 : vector<16x32xf32>
    %cst_124 = arith.constant dense<0.000000e+00> : vector<16xf32>
    %318 = vector.multi_reduction <add>, %317, %cst_124 [1] : vector<16x32xf32> to vector<16xf32>
    %319 = vector.shape_cast %318 : vector<16xf32> to vector<16x1xf32>
    %cst_125 = arith.constant 3.200000e+01 : f32
    %320 = vector.broadcast %cst_125 : f32 to vector<16x1xf32>
    %321 = arith.divf %319, %320 : vector<16x1xf32>
    %322 = vector.broadcast %314 : vector<16x1xf32> to vector<16x32xf32>
    %323 = arith.subf %310, %322 : vector<16x32xf32>
    %cst_126 = arith.constant 9.99999974E-6 : f32
    %324 = vector.broadcast %cst_126 : f32 to vector<16x1xf32>
    %325 = arith.addf %321, %324 : vector<16x1xf32>
    %326 = math.rsqrt %325 : vector<16x1xf32>
    %327 = vector.broadcast %326 : vector<16x1xf32> to vector<16x32xf32>
    %328 = arith.mulf %323, %327 : vector<16x32xf32>
    %c1_127 = arith.constant 1 : index
    %c0_128 = arith.constant 0 : index
    %c0_129 = arith.constant 0 : index
    %329 = vector.load %arg11[%c1_127, %c0_128, %c0_129] : memref<2x1x32xf32, #tpu.memory_space<vmem>>, vector<1x1x32xf32>
    %330 = vector.shape_cast %329 : vector<1x1x32xf32> to vector<1x32xf32>
    %331 = vector.broadcast %330 : vector<1x32xf32> to vector<16x32xf32>
    %332 = arith.mulf %328, %331 : vector<16x32xf32>
    %c1_130 = arith.constant 1 : index
    %c0_131 = arith.constant 0 : index
    %c0_132 = arith.constant 0 : index
    %333 = vector.load %arg12[%c1_130, %c0_131, %c0_132] : memref<2x1x32xf32, #tpu.memory_space<vmem>>, vector<1x1x32xf32>
    %334 = vector.shape_cast %333 : vector<1x1x32xf32> to vector<1x32xf32>
    %335 = vector.broadcast %334 : vector<1x32xf32> to vector<16x32xf32>
    %336 = arith.addf %332, %335 : vector<16x32xf32>
    %c0_133 = arith.constant 0 : index
    %c0_134 = arith.constant 0 : index
    %337 = vector.load %arg13[%c0_133, %c0_134] : memref<32x1xf32, #tpu.memory_space<vmem>>, vector<32x1xf32>
    %cst_135 = arith.constant dense<0.000000e+00> : vector<16x1xf32>
    %338 = tpu.matmul %336, %337, %cst_135 {dimension_numbers = #tpu.dot_dimension_numbers<[1], [0], [0], [1], [0, 0, 1, 1], [], []>} : vector<16x32xf32>, vector<32x1xf32>, vector<16x1xf32> -> vector<16x1xf32>
    %c0_136 = arith.constant 0 : index
    %c0_137 = arith.constant 0 : index
    %339 = vector.load %arg14[%c0_136, %c0_137] : memref<1x1xf32, #tpu.memory_space<vmem>>, vector<1x1xf32>
    %340 = vector.broadcast %339 : vector<1x1xf32> to vector<16x1xf32>
    %341 = arith.addf %338, %340 : vector<16x1xf32>
    %c0_138 = arith.constant 0 : index
    %c0_139 = arith.constant 0 : index
    %342 = vector.load %arg15[%c0_138, %c0_139] : memref<16x1xf32, #tpu.memory_space<vmem>>, vector<16x1xf32>
    tpu.vector_store %arg15[%c0_138, %c0_139], %341 {strides = array<i32>} : memref<16x1xf32, #tpu.memory_space<vmem>>, vector<16x1xf32>,
    return
  }
}

</mosaic_0001>

<llo_original>
// kernel: transformer_self_forward.1
$region0: #{transformer_self_forward.1}
  #allocation0 [shape = 'u32[]', space=smem, size = 0x4, offset = 0x4, fixed_abs, tag = 'smem constant byte address 0x4 - core index']
  #allocation1 [shape = 'u32[144,128]{1,0:T(1,128)}', space=vmem, size = 0x12000, scoped, tag = 'internal scratch']
  #allocation2 [shape = 'f32[1,1]{1,0:T(1,128)S(1)}', space=vmem, size = 0x200, scoped, tag = 'scoped memory for transformer_self_forward.1']
  %s0 = inlined_call_operand.vmem [shape: f32[16,32], index: 0, kind: input, shape index: {}]
  %s1 = inlined_call_operand.vmem [shape: bf16[2,32,96], index: 1, kind: input, shape index: {}]
  %s2 = inlined_call_operand.vmem [shape: f32[2,1,96], index: 2, kind: input, shape index: {}]
  %s3 = inlined_call_operand.vmem [shape: bf16[2,32,32], index: 3, kind: input, shape index: {}]
  %s4 = inlined_call_operand.vmem [shape: f32[2,1,32], index: 4, kind: input, shape index: {}]
  %s5 = inlined_call_operand.vmem [shape: f32[2,1,32], index: 5, kind: input, shape index: {}]
  %s6 = inlined_call_operand.vmem [shape: f32[2,1,32], index: 6, kind: input, shape index: {}]
  %s7 = inlined_call_operand.vmem [shape: bf16[2,32,2048], index: 7, kind: input, shape index: {}]
  %s8 = inlined_call_operand.vmem [shape: f32[2,1,2048], index: 8, kind: input, shape index: {}]
  %s9 = inlined_call_operand.vmem [shape: bf16[2,2048,32], index: 9, kind: input, shape index: {}]
  %s10 = inlined_call_operand.vmem [shape: f32[2,1,32], index: 10, kind: input, shape index: {}]
  %s11 = inlined_call_operand.vmem [shape: f32[2,1,32], index: 11, kind: input, shape index: {}]
  %s12 = inlined_call_operand.vmem [shape: f32[2,1,32], index: 12, kind: input, shape index: {}]
  %s13 = inlined_call_operand.vmem [shape: f32[32,1], index: 13, kind: input, shape index: {}]
  %s14 = inlined_call_operand.<no memory space> [shape: f32[1,1], index: 14, kind: input, shape index: {}]
  %s15 = inlined_call_operand.vmem [shape: f32[16,1], index: 15, kind: output, shape index: {}]
  %s16 = sld [smem:[#allocation0]]
  $region70: #{transformer_self_forward.1} parent=0
    _
  %s18 = ssub.s32 1, %s16
  %s19 = scalar_select 0, %s18, %s16
  %v20 = vstv %s14
  %21 = vst [vmem:[#allocation2] sm:$0x1] %v20
  // Predicated region
  $region2: #{transformer_self_forward.1} parent=0 // pred_check
    _
  $region3: #{transformer_self_forward.1} parent=0 // pred_check_branch
    %23 = sbr.rel (0) target = $region5
  $region4: #{transformer_self_forward.1} parent=0 // pred_region
    _
  $region5: #{transformer_self_forward.1} parent=0 // pred_fallthru
    _
  // Predicated region
  $region6: #{transformer_self_forward.1} parent=0 // pred_check
    _
  $region7: #{transformer_self_forward.1} parent=0 // pred_check_branch
    %25 = sbr.rel (0) target = $region9
  $region8: #{transformer_self_forward.1} parent=0 // pred_region
    _
  $region9: #{transformer_self_forward.1} parent=0 // pred_fallthru
    _
  // Predicated region
  $region10: #{transformer_self_forward.1} parent=0 // pred_check
    _
  $region11: #{transformer_self_forward.1} parent=0 // pred_check_branch
    %27 = sbr.rel (0) target = $region13
  $region12: #{transformer_self_forward.1} parent=0 // pred_region
    _
  $region13: #{transformer_self_forward.1} parent=0 // pred_fallthru
    _
  // Predicated region
  $region14: #{transformer_self_forward.1} parent=0 // pred_check
    _
  $region15: #{transformer_self_forward.1} parent=0 // pred_check_branch
    %29 = sbr.rel (0) target = $region17
  $region16: #{transformer_self_forward.1} parent=0 // pred_region
    _
  $region17: #{transformer_self_forward.1} parent=0 // pred_fallthru
    _
  // Predicated region
  $region18: #{transformer_self_forward.1} parent=0 // pred_check
    _
  $region19: #{transformer_self_forward.1} parent=0 // pred_check_branch
    %31 = sbr.rel (0) target = $region21
  $region20: #{transformer_self_forward.1} parent=0 // pred_region
    _
  $region21: #{transformer_self_forward.1} parent=0 // pred_fallthru
    _
  // Predicated region
  $region22: #{transformer_self_forward.1} parent=0 // pred_check
    _
  $region23: #{transformer_self_forward.1} parent=0 // pred_check_branch
    %33 = sbr.rel (0) target = $region25
  $region24: #{transformer_self_forward.1} parent=0 // pred_region
    _
  $region25: #{transformer_self_forward.1} parent=0 // pred_fallthru
    _
  // Predicated region
  $region26: #{transformer_self_forward.1} parent=0 // pred_check
    _
  $region27: #{transformer_self_forward.1} parent=0 // pred_check_branch
    %35 = sbr.rel (0) target = $region29
  $region28: #{transformer_self_forward.1} parent=0 // pred_region
    _
  $region29: #{transformer_self_forward.1} parent=0 // pred_fallthru
    _
  // Predicated region
  $region30: #{transformer_self_forward.1} parent=0 // pred_check
    _
  $region31: #{transformer_self_forward.1} parent=0 // pred_check_branch
    %37 = sbr.rel (0) target = $region33
  $region32: #{transformer_self_forward.1} parent=0 // pred_region
    _
  $region33: #{transformer_self_forward.1} parent=0 // pred_fallthru
    _
  // Predicated region
  $region34: #{transformer_self_forward.1} parent=0 // pred_check
    _
  $region35: #{transformer_self_forward.1} parent=0 // pred_check_branch
    %39 = sbr.rel (0) target = $region37
  $region36: #{transformer_self_forward.1} parent=0 // pred_region
    _
  $region37: #{transformer_self_forward.1} parent=0 // pred_fallthru
    _
  // Predicated region
  $region38: #{transformer_self_forward.1} parent=0 // pred_check
    _
  $region39: #{transformer_self_forward.1} parent=0 // pred_check_branch
    %41 = sbr.rel (0) target = $region41
  $region40: #{transformer_self_forward.1} parent=0 // pred_region
    _
  $region41: #{transformer_self_forward.1} parent=0 // pred_fallthru
    _
  // Predicated region
  $region42: #{transformer_self_forward.1} parent=0 // pred_check
    _
  $region43: #{transformer_self_forward.1} parent=0 // pred_check_branch
    %43 = sbr.rel (0) target = $region45
  $region44: #{transformer_self_forward.1} parent=0 // pred_region
    _
  $region45: #{transformer_self_forward.1} parent=0 // pred_fallthru
    _
  // Predicated region
  $region46: #{transformer_self_forward.1} parent=0 // pred_check
    _
  $region47: #{transformer_self_forward.1} parent=0 // pred_check_branch
    %45 = sbr.rel (0) target = $region49
  $region48: #{transformer_self_forward.1} parent=0 // pred_region
    _
  $region49: #{transformer_self_forward.1} parent=0 // pred_fallthru
    _
  // Predicated region
  $region50: #{transformer_self_forward.1} parent=0 // pred_check
    _
  $region51: #{transformer_self_forward.1} parent=0 // pred_check_branch
    %47 = sbr.rel (0) target = $region53
  $region52: #{transformer_self_forward.1} parent=0 // pred_region
    _
  $region53: #{transformer_self_forward.1} parent=0 // pred_fallthru
    _
  // Predicated region
  $region54: #{transformer_self_forward.1} parent=0 // pred_check
    _
  $region55: #{transformer_self_forward.1} parent=0 // pred_check_branch
    %49 = sbr.rel (0) target = $region57
  $region56: #{transformer_self_forward.1} parent=0 // pred_region
    _
  $region57: #{transformer_self_forward.1} parent=0 // pred_fallthru
    _
  // Predicated region
  $region58: #{transformer_self_forward.1} parent=0 // pred_check
    _
  $region59: #{transformer_self_forward.1} parent=0 // pred_check_branch
    %51 = sbr.rel (0) target = $region61
  $region60: #{transformer_self_forward.1} parent=0 // pred_region
    _
  $region61: #{transformer_self_forward.1} parent=0 // pred_fallthru
    _
  %v53 = vld [vmem:[%s0] sm:$0xff]
  %v54 = vld [vmem:[%s0 + $0x8] sm:$0xff]
  %v55 = vpack.c.bf16 %v54, %v53
  %v56 = vld [vmem:[%s1] sm:$0xf]
  %v57 = vld [vmem:[%s1 + $0x4] sm:$0xf]
  %v58 = vld [vmem:[%s1 + $0x8] sm:$0xf]
  %v59 = vld [vmem:[%s1 + $0xc] sm:$0xf]
  %v60 = vld [vmem:[%s2] sm:$0x1]
  %v62 = vlaneseq
  %v63 = vshrl.u32 %v62, 7
  %v64 = vsub.s32 0, %v63
  %v65 = vrot.slane %v60, %v64
  %v71 = vunpack.c.l.b16 %v56
  %v72 = vunpack.c.l.b16 %v57
  %v73 = vunpack.c.l.b16 %v58
  %v74 = vunpack.c.l.b16 %v59
  %v75 = vpack.c.b16 %v72, %v71
  %v76 = vpack.c.b16 %v74, %v73
  %vm79 = vcmask 261120
  %v81 = vsel %vm79, %v55, 0
  %83 = vmatprep.subr.bf16.mxu0 0
  %84 = vmatpush1.bf16.msra.mxu0 %v75
  %85 = vmatprep.subr.bf16.mxu0 0
  %86 = vmatpush1.bf16.msra.mxu0 %v76
  %87 = vmatprep.subr.bf16.mxu0 0
  %88 = vmatpush1.bf16.msra.mxu0 0
  %89 = vmatprep.subr.bf16.mxu0 0
  %90 = vmatpush1.bf16.msra.mxu0 0
  %91 = vmatprep.subr.bf16.mxu0 0
  %92 = vmatpush1.bf16.msra.mxu0 0
  %93 = vmatprep.subr.bf16.mxu0 0
  %94 = vmatpush1.bf16.msra.mxu0 0
  %95 = vmatprep.subr.bf16.mxu0 0
  %96 = vmatpush1.bf16.msra.mxu0 0
  %97 = vmatprep.subr.bf16.mxu0 0
  %98 = vmatpush1.bf16.msra.mxu0 0
  %99 = vmatprep.subr.bf16.mxu0 0
  %100 = vmatpush1.bf16.msra.mxu0 0
  %101 = vmatprep.subr.bf16.mxu0 0
  %102 = vmatpush1.bf16.msra.mxu0 0
  %103 = vmatprep.subr.bf16.mxu0 0
  %104 = vmatpush1.bf16.msra.mxu0 0
  %105 = vmatprep.subr.bf16.mxu0 0
  %106 = vmatpush1.bf16.msra.mxu0 0
  %107 = vmatprep.subr.bf16.mxu0 0
  %108 = vmatpush1.bf16.msra.mxu0 0
  %109 = vmatprep.subr.bf16.mxu0 0
  %110 = vmatpush1.bf16.msra.mxu0 0
  %111 = vmatprep.subr.bf16.mxu0 0
  %112 = vmatpush1.bf16.msra.mxu0 0
  %113 = vmatprep.subr.bf16.mxu0 0
  %114 = vmatpush1.bf16.msra.mxu0 0
  %115 = vmatprep.mubr.bf16.mxu0 0
  %116 = vmatmul.mubr.bf16.gmra.mrb[0].mxu0 %v81
  %v117 = vpop.f32.mrb[0].mxu0
  %v118 = vadd.f32 %v65, %v117
  %v119 = vpop.f32.mrb[0].mxu0
  %v120 = vpop.f32.mrb[0].mxu0
  %v121 = vadd.f32 %v65, %v120
  %v122 = vpop.f32.mrb[0].mxu0
  %123 = vdwg.mxu0
  %125 = vrot.lane.b32.xlu0 %v118, 96
  %v126 = vpop.permute.xlu0 %125
  %vm127 = vcmask 64512
  %v128 = vsel %vm127, %v118, 0
  %v130 = vsel %vm127, %v126, 0
  %132 = vmatprep.subr.mxu0 0.0
  %133 = vmatpush1.xpose.msra.mxu0 %v130
  %134 = vmatprep.subr.mxu0 0.0
  %135 = vmatpush1.xpose.msra.mxu0 0.0
  %136 = vmatprep.subr.mxu0 0.0
  %137 = vmatpush1.xpose.msra.mxu0 0.0
  %138 = vmatprep.subr.mxu0 0.0
  %139 = vmatpush1.xpose.msra.mxu0 0.0
  %140 = vmatprep.subr.mxu0 0.0
  %141 = vmatpush1.xpose.msra.mxu0 0.0
  %142 = vmatprep.subr.mxu0 0.0
  %143 = vmatpush1.xpose.msra.mxu0 0.0
  %144 = vmatprep.subr.mxu0 0.0
  %145 = vmatpush1.xpose.msra.mxu0 0.0
  %146 = vmatprep.subr.mxu0 0.0
  %147 = vmatpush1.xpose.msra.mxu0 0.0
  %148 = vmatprep.subr.mxu0 0.0
  %149 = vmatpush1.xpose.msra.mxu0 0.0
  %150 = vmatprep.subr.mxu0 0.0
  %151 = vmatpush1.xpose.msra.mxu0 0.0
  %152 = vmatprep.subr.mxu0 0.0
  %153 = vmatpush1.xpose.msra.mxu0 0.0
  %154 = vmatprep.subr.mxu0 0.0
  %155 = vmatpush1.xpose.msra.mxu0 0.0
  %156 = vmatprep.subr.mxu0 0.0
  %157 = vmatpush1.xpose.msra.mxu0 0.0
  %158 = vmatprep.subr.mxu0 0.0
  %159 = vmatpush1.xpose.msra.mxu0 0.0
  %160 = vmatprep.subr.mxu0 0.0
  %161 = vmatpush1.xpose.msra.mxu0 0.0
  %162 = vmatprep.subr.mxu0 0.0
  %163 = vmatpush1.xpose.msra.mxu0 0.0
  %164 = vmatprep.subr.mxu0 0.0
  %165 = vmatpush1.xpose.msra.mxu0 0.0
  %166 = vmatprep.subr.mxu0 0.0
  %167 = vmatpush1.xpose.msra.mxu0 0.0
  %168 = vmatprep.subr.mxu0 0.0
  %169 = vmatpush1.xpose.msra.mxu0 0.0
  %170 = vmatprep.subr.mxu0 0.0
  %171 = vmatpush1.xpose.msra.mxu0 0.0
  %172 = vmatprep.subr.mxu0 0.0
  %173 = vmatpush1.xpose.msra.mxu0 0.0
  %174 = vmatprep.subr.mxu0 0.0
  %175 = vmatpush1.xpose.msra.mxu0 0.0
  %176 = vmatprep.subr.mxu0 0.0
  %177 = vmatpush1.xpose.msra.mxu0 0.0
  %178 = vmatprep.subr.mxu0 0.0
  %179 = vmatpush1.xpose.msra.mxu0 0.0
  %180 = vmatprep.subr.mxu0 0.0
  %181 = vmatpush1.xpose.msra.mxu0 0.0
  %182 = vmatprep.subr.mxu0 0.0
  %183 = vmatpush1.xpose.msra.mxu0 0.0
  %184 = vmatprep.subr.mxu0 0.0
  %185 = vmatpush1.xpose.msra.mxu0 0.0
  %186 = vmatprep.subr.mxu0 0.0
  %187 = vmatpush1.xpose.msra.mxu0 0.0
  %188 = vmatprep.subr.mxu0 0.0
  %189 = vmatpush1.xpose.msra.mxu0 0.0
  %190 = vmatprep.subr.mxu0 0.0
  %191 = vmatpush1.xpose.msra.mxu0 0.0
  %192 = vmatprep.subr.mxu0 0.0
  %193 = vmatpush1.xpose.msra.mxu0 0.0
  %194 = vmatprep.subr.mxu0 0.0
  %195 = vmatpush1.xpose.msra.mxu0 0.0
  %196 = vmatprep.mubr.f32.mxu0 0.0
  %197 = vmatmul.mubr.f32.gmra.mrb[0].mxu0 %v128
  %v198 = vpop.f32.mrb[0].mxu0
  %v199 = vadd.f32 0.0, %v198
  %v200 = vpop.f32.mrb[0].mxu0
  %201 = vdwg.mxu0
  %203 = vrot.lane.b32.xlu0 %v121, 96
  %v204 = vpop.permute.xlu0 %203
  %v205 = vsel %vm127, %v121, 0
  %v207 = vsel %vm127, %v204, 0
  %209 = vmatprep.subr.mxu0 0.0
  %210 = vmatpush1.xpose.msra.mxu0 %v207
  %211 = vmatprep.subr.mxu0 0.0
  %212 = vmatpush1.xpose.msra.mxu0 0.0
  %213 = vmatprep.subr.mxu0 0.0
  %214 = vmatpush1.xpose.msra.mxu0 0.0
  %215 = vmatprep.subr.mxu0 0.0
  %216 = vmatpush1.xpose.msra.mxu0 0.0
  %217 = vmatprep.subr.mxu0 0.0
  %218 = vmatpush1.xpose.msra.mxu0 0.0
  %219 = vmatprep.subr.mxu0 0.0
  %220 = vmatpush1.xpose.msra.mxu0 0.0
  %221 = vmatprep.subr.mxu0 0.0
  %222 = vmatpush1.xpose.msra.mxu0 0.0
  %223 = vmatprep.subr.mxu0 0.0
  %224 = vmatpush1.xpose.msra.mxu0 0.0
  %225 = vmatprep.subr.mxu0 0.0
  %226 = vmatpush1.xpose.msra.mxu0 0.0
  %227 = vmatprep.subr.mxu0 0.0
  %228 = vmatpush1.xpose.msra.mxu0 0.0
  %229 = vmatprep.subr.mxu0 0.0
  %230 = vmatpush1.xpose.msra.mxu0 0.0
  %231 = vmatprep.subr.mxu0 0.0
  %232 = vmatpush1.xpose.msra.mxu0 0.0
  %233 = vmatprep.subr.mxu0 0.0
  %234 = vmatpush1.xpose.msra.mxu0 0.0
  %235 = vmatprep.subr.mxu0 0.0
  %236 = vmatpush1.xpose.msra.mxu0 0.0
  %237 = vmatprep.subr.mxu0 0.0
  %238 = vmatpush1.xpose.msra.mxu0 0.0
  %239 = vmatprep.subr.mxu0 0.0
  %240 = vmatpush1.xpose.msra.mxu0 0.0
  %241 = vmatprep.subr.mxu0 0.0
  %242 = vmatpush1.xpose.msra.mxu0 0.0
  %243 = vmatprep.subr.mxu0 0.0
  %244 = vmatpush1.xpose.msra.mxu0 0.0
  %245 = vmatprep.subr.mxu0 0.0
  %246 = vmatpush1.xpose.msra.mxu0 0.0
  %247 = vmatprep.subr.mxu0 0.0
  %248 = vmatpush1.xpose.msra.mxu0 0.0
  %249 = vmatprep.subr.mxu0 0.0
  %250 = vmatpush1.xpose.msra.mxu0 0.0
  %251 = vmatprep.subr.mxu0 0.0
  %252 = vmatpush1.xpose.msra.mxu0 0.0
  %253 = vmatprep.subr.mxu0 0.0
  %254 = vmatpush1.xpose.msra.mxu0 0.0
  %255 = vmatprep.subr.mxu0 0.0
  %256 = vmatpush1.xpose.msra.mxu0 0.0
  %257 = vmatprep.subr.mxu0 0.0
  %258 = vmatpush1.xpose.msra.mxu0 0.0
  %259 = vmatprep.subr.mxu0 0.0
  %260 = vmatpush1.xpose.msra.mxu0 0.0
  %261 = vmatprep.subr.mxu0 0.0
  %262 = vmatpush1.xpose.msra.mxu0 0.0
  %263 = vmatprep.subr.mxu0 0.0
  %264 = vmatpush1.xpose.msra.mxu0 0.0
  %265 = vmatprep.subr.mxu0 0.0
  %266 = vmatpush1.xpose.msra.mxu0 0.0
  %267 = vmatprep.subr.mxu0 0.0
  %268 = vmatpush1.xpose.msra.mxu0 0.0
  %269 = vmatprep.subr.mxu0 0.0
  %270 = vmatpush1.xpose.msra.mxu0 0.0
  %271 = vmatprep.subr.mxu0 0.0
  %272 = vmatpush1.xpose.msra.mxu0 0.0
  %273 = vmatprep.mubr.f32.mxu0 0.0
  %274 = vmatmul.mubr.f32.gmra.mrb[0].mxu0 %v205
  %v275 = vpop.f32.mrb[0].mxu0
  %v276 = vadd.f32 0.0, %v275
  %v277 = vpop.f32.mrb[0].mxu0
  %278 = vdwg.mxu0
  %v279 = vsel %vm127, %v199, -inf
  %280 = vmax.xlane.f32.xlu0 %v279
  %v281 = vpop.xlane.xlu0 %280
  %v282 = vsel %vm127, %v276, -inf
  %283 = vmax.xlane.f32.xlu0 %v282
  %v284 = vpop.xlane.xlu0 %283
  %v285 = vsub.f32 %v199, %v281
  %v286 = vsub.f32 %v276, %v284
  %v287 = vmul.f32 %v285, 1.442695
  %v288 = vpow.pop %v287
  %v289 = vmul.f32 %v286, 1.442695
  %v290 = vpow.pop %v289
  %v291 = vsel %vm127, %v288, 0.0
  %292 = vadd.xlane.f32.xlu0 %v291
  %v293 = vpop.xlane.xlu0 %292
  %v294 = vsel %vm127, %v290, 0.0
  %295 = vadd.xlane.f32.xlu0 %v294
  %v296 = vpop.xlane.xlu0 %295
  %v297 = vrcp.pop %v293
  %v298 = vrcp.pop %v296
  %v299 = vmul.f32 %v288, %v297
  %v300 = vmul.f32 %v290, %v298
  %301 = vrot.lane.b32.xlu0 %v118, 64
  %v302 = vpop.permute.xlu0 %301
  %v305 = vsel %vm127, %v299, 0
  %307 = vmatprep.subr.mxu0 0.0
  %308 = vmatpush1.msra.mxu0 %v302
  %309 = vmatprep.subr.mxu0 0.0
  %310 = vmatpush1.msra.mxu0 0.0
  %311 = vmatprep.subr.mxu0 0.0
  %312 = vmatpush1.msra.mxu0 0.0
  %313 = vmatprep.subr.mxu0 0.0
  %314 = vmatpush1.msra.mxu0 0.0
  %315 = vmatprep.subr.mxu0 0.0
  %316 = vmatpush1.msra.mxu0 0.0
  %317 = vmatprep.subr.mxu0 0.0
  %318 = vmatpush1.msra.mxu0 0.0
  %319 = vmatprep.subr.mxu0 0.0
  %320 = vmatpush1.msra.mxu0 0.0
  %321 = vmatprep.subr.mxu0 0.0
  %322 = vmatpush1.msra.mxu0 0.0
  %323 = vmatprep.subr.mxu0 0.0
  %324 = vmatpush1.msra.mxu0 0.0
  %325 = vmatprep.subr.mxu0 0.0
  %326 = vmatpush1.msra.mxu0 0.0
  %327 = vmatprep.subr.mxu0 0.0
  %328 = vmatpush1.msra.mxu0 0.0
  %329 = vmatprep.subr.mxu0 0.0
  %330 = vmatpush1.msra.mxu0 0.0
  %331 = vmatprep.subr.mxu0 0.0
  %332 = vmatpush1.msra.mxu0 0.0
  %333 = vmatprep.subr.mxu0 0.0
  %334 = vmatpush1.msra.mxu0 0.0
  %335 = vmatprep.subr.mxu0 0.0
  %336 = vmatpush1.msra.mxu0 0.0
  %337 = vmatprep.subr.mxu0 0.0
  %338 = vmatpush1.msra.mxu0 0.0
  %339 = vmatprep.subr.mxu0 0.0
  %340 = vmatpush1.msra.mxu0 0.0
  %341 = vmatprep.subr.mxu0 0.0
  %342 = vmatpush1.msra.mxu0 0.0
  %343 = vmatprep.subr.mxu0 0.0
  %344 = vmatpush1.msra.mxu0 0.0
  %345 = vmatprep.subr.mxu0 0.0
  %346 = vmatpush1.msra.mxu0 0.0
  %347 = vmatprep.subr.mxu0 0.0
  %348 = vmatpush1.msra.mxu0 0.0
  %349 = vmatprep.subr.mxu0 0.0
  %350 = vmatpush1.msra.mxu0 0.0
  %351 = vmatprep.subr.mxu0 0.0
  %352 = vmatpush1.msra.mxu0 0.0
  %353 = vmatprep.subr.mxu0 0.0
  %354 = vmatpush1.msra.mxu0 0.0
  %355 = vmatprep.subr.mxu0 0.0
  %356 = vmatpush1.msra.mxu0 0.0
  %357 = vmatprep.subr.mxu0 0.0
  %358 = vmatpush1.msra.mxu0 0.0
  %359 = vmatprep.subr.mxu0 0.0
  %360 = vmatpush1.msra.mxu0 0.0
  %361 = vmatprep.subr.mxu0 0.0
  %362 = vmatpush1.msra.mxu0 0.0
  %363 = vmatprep.subr.mxu0 0.0
  %364 = vmatpush1.msra.mxu0 0.0
  %365 = vmatprep.subr.mxu0 0.0
  %366 = vmatpush1.msra.mxu0 0.0
  %367 = vmatprep.subr.mxu0 0.0
  %368 = vmatpush1.msra.mxu0 0.0
  %369 = vmatprep.subr.mxu0 0.0
  %370 = vmatpush1.msra.mxu0 0.0
  %371 = vmatprep.mubr.f32.mxu0 0.0
  %372 = vmatmul.mubr.f32.gmra.mrb[0].mxu0 %v305
  %v373 = vpop.f32.mrb[0].mxu0
  %v374 = vadd.f32 0.0, %v373
  %v375 = vpop.f32.mrb[0].mxu0
  %376 = vdwg.mxu0
  %377 = vrot.lane.b32.xlu0 %v121, 64
  %v378 = vpop.permute.xlu0 %377
  %v381 = vsel %vm127, %v300, 0
  %383 = vmatprep.subr.mxu0 0.0
  %384 = vmatpush1.msra.mxu0 %v378
  %385 = vmatprep.subr.mxu0 0.0
  %386 = vmatpush1.msra.mxu0 0.0
  %387 = vmatprep.subr.mxu0 0.0
  %388 = vmatpush1.msra.mxu0 0.0
  %389 = vmatprep.subr.mxu0 0.0
  %390 = vmatpush1.msra.mxu0 0.0
  %391 = vmatprep.subr.mxu0 0.0
  %392 = vmatpush1.msra.mxu0 0.0
  %393 = vmatprep.subr.mxu0 0.0
  %394 = vmatpush1.msra.mxu0 0.0
  %395 = vmatprep.subr.mxu0 0.0
  %396 = vmatpush1.msra.mxu0 0.0
  %397 = vmatprep.subr.mxu0 0.0
  %398 = vmatpush1.msra.mxu0 0.0
  %399 = vmatprep.subr.mxu0 0.0
  %400 = vmatpush1.msra.mxu0 0.0
  %401 = vmatprep.subr.mxu0 0.0
  %402 = vmatpush1.msra.mxu0 0.0
  %403 = vmatprep.subr.mxu0 0.0
  %404 = vmatpush1.msra.mxu0 0.0
  %405 = vmatprep.subr.mxu0 0.0
  %406 = vmatpush1.msra.mxu0 0.0
  %407 = vmatprep.subr.mxu0 0.0
  %408 = vmatpush1.msra.mxu0 0.0
  %409 = vmatprep.subr.mxu0 0.0
  %410 = vmatpush1.msra.mxu0 0.0
  %411 = vmatprep.subr.mxu0 0.0
  %412 = vmatpush1.msra.mxu0 0.0
  %413 = vmatprep.subr.mxu0 0.0
  %414 = vmatpush1.msra.mxu0 0.0
  %415 = vmatprep.subr.mxu0 0.0
  %416 = vmatpush1.msra.mxu0 0.0
  %417 = vmatprep.subr.mxu0 0.0
  %418 = vmatpush1.msra.mxu0 0.0
  %419 = vmatprep.subr.mxu0 0.0
  %420 = vmatpush1.msra.mxu0 0.0
  %421 = vmatprep.subr.mxu0 0.0
  %422 = vmatpush1.msra.mxu0 0.0
  %423 = vmatprep.subr.mxu0 0.0
  %424 = vmatpush1.msra.mxu0 0.0
  %425 = vmatprep.subr.mxu0 0.0
  %426 = vmatpush1.msra.mxu0 0.0
  %427 = vmatprep.subr.mxu0 0.0
  %428 = vmatpush1.msra.mxu0 0.0
  %429 = vmatprep.subr.mxu0 0.0
  %430 = vmatpush1.msra.mxu0 0.0
  %431 = vmatprep.subr.mxu0 0.0
  %432 = vmatpush1.msra.mxu0 0.0
  %433 = vmatprep.subr.mxu0 0.0
  %434 = vmatpush1.msra.mxu0 0.0
  %435 = vmatprep.subr.mxu0 0.0
  %436 = vmatpush1.msra.mxu0 0.0
  %437 = vmatprep.subr.mxu0 0.0
  %438 = vmatpush1.msra.mxu0 0.0
  %439 = vmatprep.subr.mxu0 0.0
  %440 = vmatpush1.msra.mxu0 0.0
  %441 = vmatprep.subr.mxu0 0.0
  %442 = vmatpush1.msra.mxu0 0.0
  %443 = vmatprep.subr.mxu0 0.0
  %444 = vmatpush1.msra.mxu0 0.0
  %445 = vmatprep.subr.mxu0 0.0
  %446 = vmatpush1.msra.mxu0 0.0
  %447 = vmatprep.mubr.f32.mxu0 0.0
  %448 = vmatmul.mubr.f32.gmra.mrb[0].mxu0 %v381
  %v449 = vpop.f32.mrb[0].mxu0
  %v450 = vadd.f32 0.0, %v449
  %v451 = vpop.f32.mrb[0].mxu0
  %452 = vdwg.mxu0
  %453 = vrot.lane.b32.xlu0 %v118, 120
  %v454 = vpop.permute.xlu0 %453
  %455 = vrot.lane.b32.xlu0 %v118, 88
  %v456 = vpop.permute.xlu0 %455
  %v457 = vsel %vm127, %v454, 0
  %v459 = vsel %vm127, %v456, 0
  %461 = vmatprep.subr.mxu0 0.0
  %462 = vmatpush1.xpose.msra.mxu0 %v459
  %463 = vmatprep.subr.mxu0 0.0
  %464 = vmatpush1.xpose.msra.mxu0 0.0
  %465 = vmatprep.subr.mxu0 0.0
  %466 = vmatpush1.xpose.msra.mxu0 0.0
  %467 = vmatprep.subr.mxu0 0.0
  %468 = vmatpush1.xpose.msra.mxu0 0.0
  %469 = vmatprep.subr.mxu0 0.0
  %470 = vmatpush1.xpose.msra.mxu0 0.0
  %471 = vmatprep.subr.mxu0 0.0
  %472 = vmatpush1.xpose.msra.mxu0 0.0
  %473 = vmatprep.subr.mxu0 0.0
  %474 = vmatpush1.xpose.msra.mxu0 0.0
  %475 = vmatprep.subr.mxu0 0.0
  %476 = vmatpush1.xpose.msra.mxu0 0.0
  %477 = vmatprep.subr.mxu0 0.0
  %478 = vmatpush1.xpose.msra.mxu0 0.0
  %479 = vmatprep.subr.mxu0 0.0
  %480 = vmatpush1.xpose.msra.mxu0 0.0
  %481 = vmatprep.subr.mxu0 0.0
  %482 = vmatpush1.xpose.msra.mxu0 0.0
  %483 = vmatprep.subr.mxu0 0.0
  %484 = vmatpush1.xpose.msra.mxu0 0.0
  %485 = vmatprep.subr.mxu0 0.0
  %486 = vmatpush1.xpose.msra.mxu0 0.0
  %487 = vmatprep.subr.mxu0 0.0
  %488 = vmatpush1.xpose.msra.mxu0 0.0
  %489 = vmatprep.subr.mxu0 0.0
  %490 = vmatpush1.xpose.msra.mxu0 0.0
  %491 = vmatprep.subr.mxu0 0.0
  %492 = vmatpush1.xpose.msra.mxu0 0.0
  %493 = vmatprep.subr.mxu0 0.0
  %494 = vmatpush1.xpose.msra.mxu0 0.0
  %495 = vmatprep.subr.mxu0 0.0
  %496 = vmatpush1.xpose.msra.mxu0 0.0
  %497 = vmatprep.subr.mxu0 0.0
  %498 = vmatpush1.xpose.msra.mxu0 0.0
  %499 = vmatprep.subr.mxu0 0.0
  %500 = vmatpush1.xpose.msra.mxu0 0.0
  %501 = vmatprep.subr.mxu0 0.0
  %502 = vmatpush1.xpose.msra.mxu0 0.0
  %503 = vmatprep.subr.mxu0 0.0
  %504 = vmatpush1.xpose.msra.mxu0 0.0
  %505 = vmatprep.subr.mxu0 0.0
  %506 = vmatpush1.xpose.msra.mxu0 0.0
  %507 = vmatprep.subr.mxu0 0.0
  %508 = vmatpush1.xpose.msra.mxu0 0.0
  %509 = vmatprep.subr.mxu0 0.0
  %510 = vmatpush1.xpose.msra.mxu0 0.0
  %511 = vmatprep.subr.mxu0 0.0
  %512 = vmatpush1.xpose.msra.mxu0 0.0
  %513 = vmatprep.subr.mxu0 0.0
  %514 = vmatpush1.xpose.msra.mxu0 0.0
  %515 = vmatprep.subr.mxu0 0.0
  %516 = vmatpush1.xpose.msra.mxu0 0.0
  %517 = vmatprep.subr.mxu0 0.0
  %518 = vmatpush1.xpose.msra.mxu0 0.0
  %519 = vmatprep.subr.mxu0 0.0
  %520 = vmatpush1.xpose.msra.mxu0 0.0
  %521 = vmatprep.subr.mxu0 0.0
  %522 = vmatpush1.xpose.msra.mxu0 0.0
  %523 = vmatprep.subr.mxu0 0.0
  %524 = vmatpush1.xpose.msra.mxu0 0.0
  %525 = vmatprep.mubr.f32.mxu0 0.0
  %526 = vmatmul.mubr.f32.gmra.mrb[0].mxu0 %v457
  %v527 = vpop.f32.mrb[0].mxu0
  %v528 = vadd.f32 0.0, %v527
  %v529 = vpop.f32.mrb[0].mxu0
  %530 = vdwg.mxu0
  %531 = vrot.lane.b32.xlu0 %v121, 120
  %v532 = vpop.permute.xlu0 %531
  %533 = vrot.lane.b32.xlu0 %v121, 88
  %v534 = vpop.permute.xlu0 %533
  %v535 = vsel %vm127, %v532, 0
  %v537 = vsel %vm127, %v534, 0
  %539 = vmatprep.subr.mxu0 0.0
  %540 = vmatpush1.xpose.msra.mxu0 %v537
  %541 = vmatprep.subr.mxu0 0.0
  %542 = vmatpush1.xpose.msra.mxu0 0.0
  %543 = vmatprep.subr.mxu0 0.0
  %544 = vmatpush1.xpose.msra.mxu0 0.0
  %545 = vmatprep.subr.mxu0 0.0
  %546 = vmatpush1.xpose.msra.mxu0 0.0
  %547 = vmatprep.subr.mxu0 0.0
  %548 = vmatpush1.xpose.msra.mxu0 0.0
  %549 = vmatprep.subr.mxu0 0.0
  %550 = vmatpush1.xpose.msra.mxu0 0.0
  %551 = vmatprep.subr.mxu0 0.0
  %552 = vmatpush1.xpose.msra.mxu0 0.0
  %553 = vmatprep.subr.mxu0 0.0
  %554 = vmatpush1.xpose.msra.mxu0 0.0
  %555 = vmatprep.subr.mxu0 0.0
  %556 = vmatpush1.xpose.msra.mxu0 0.0
  %557 = vmatprep.subr.mxu0 0.0
  %558 = vmatpush1.xpose.msra.mxu0 0.0
  %559 = vmatprep.subr.mxu0 0.0
  %560 = vmatpush1.xpose.msra.mxu0 0.0
  %561 = vmatprep.subr.mxu0 0.0
  %562 = vmatpush1.xpose.msra.mxu0 0.0
  %563 = vmatprep.subr.mxu0 0.0
  %564 = vmatpush1.xpose.msra.mxu0 0.0
  %565 = vmatprep.subr.mxu0 0.0
  %566 = vmatpush1.xpose.msra.mxu0 0.0
  %567 = vmatprep.subr.mxu0 0.0
  %568 = vmatpush1.xpose.msra.mxu0 0.0
  %569 = vmatprep.subr.mxu0 0.0
  %570 = vmatpush1.xpose.msra.mxu0 0.0
  %571 = vmatprep.subr.mxu0 0.0
  %572 = vmatpush1.xpose.msra.mxu0 0.0
  %573 = vmatprep.subr.mxu0 0.0
  %574 = vmatpush1.xpose.msra.mxu0 0.0
  %575 = vmatprep.subr.mxu0 0.0
  %576 = vmatpush1.xpose.msra.mxu0 0.0
  %577 = vmatprep.subr.mxu0 0.0
  %578 = vmatpush1.xpose.msra.mxu0 0.0
  %579 = vmatprep.subr.mxu0 0.0
  %580 = vmatpush1.xpose.msra.mxu0 0.0
  %581 = vmatprep.subr.mxu0 0.0
  %582 = vmatpush1.xpose.msra.mxu0 0.0
  %583 = vmatprep.subr.mxu0 0.0
  %584 = vmatpush1.xpose.msra.mxu0 0.0
  %585 = vmatprep.subr.mxu0 0.0
  %586 = vmatpush1.xpose.msra.mxu0 0.0
  %587 = vmatprep.subr.mxu0 0.0
  %588 = vmatpush1.xpose.msra.mxu0 0.0
  %589 = vmatprep.subr.mxu0 0.0
  %590 = vmatpush1.xpose.msra.mxu0 0.0
  %591 = vmatprep.subr.mxu0 0.0
  %592 = vmatpush1.xpose.msra.mxu0 0.0
  %593 = vmatprep.subr.mxu0 0.0
  %594 = vmatpush1.xpose.msra.mxu0 0.0
  %595 = vmatprep.subr.mxu0 0.0
  %596 = vmatpush1.xpose.msra.mxu0 0.0
  %597 = vmatprep.subr.mxu0 0.0
  %598 = vmatpush1.xpose.msra.mxu0 0.0
  %599 = vmatprep.subr.mxu0 0.0
  %600 = vmatpush1.xpose.msra.mxu0 0.0
  %601 = vmatprep.subr.mxu0 0.0
  %602 = vmatpush1.xpose.msra.mxu0 0.0
  %603 = vmatprep.mubr.f32.mxu0 0.0
  %604 = vmatmul.mubr.f32.gmra.mrb[0].mxu0 %v535
  %v605 = vpop.f32.mrb[0].mxu0
  %v606 = vadd.f32 0.0, %v605
  %v607 = vpop.f32.mrb[0].mxu0
  %608 = vdwg.mxu0
  %v609 = vsel %vm127, %v528, -inf
  %610 = vmax.xlane.f32.xlu0 %v609
  %v611 = vpop.xlane.xlu0 %610
  %v612 = vsel %vm127, %v606, -inf
  %613 = vmax.xlane.f32.xlu0 %v612
  %v614 = vpop.xlane.xlu0 %613
  %v615 = vsub.f32 %v528, %v611
  %v616 = vsub.f32 %v606, %v614
  %v617 = vmul.f32 %v615, 1.442695
  %v618 = vpow.pop %v617
  %v619 = vmul.f32 %v616, 1.442695
  %v620 = vpow.pop %v619
  %v621 = vsel %vm127, %v618, 0.0
  %622 = vadd.xlane.f32.xlu0 %v621
  %v623 = vpop.xlane.xlu0 %622
  %v624 = vsel %vm127, %v620, 0.0
  %625 = vadd.xlane.f32.xlu0 %v624
  %v626 = vpop.xlane.xlu0 %625
  %v627 = vrcp.pop %v623
  %v628 = vrcp.pop %v626
  %v629 = vmul.f32 %v618, %v627
  %v630 = vmul.f32 %v620, %v628
  %631 = vrot.lane.b32.xlu0 %v118, 56
  %v632 = vpop.permute.xlu0 %631
  %v635 = vsel %vm127, %v629, 0
  %637 = vmatprep.subr.mxu0 0.0
  %638 = vmatpush1.msra.mxu0 %v632
  %639 = vmatprep.subr.mxu0 0.0
  %640 = vmatpush1.msra.mxu0 0.0
  %641 = vmatprep.subr.mxu0 0.0
  %642 = vmatpush1.msra.mxu0 0.0
  %643 = vmatprep.subr.mxu0 0.0
  %644 = vmatpush1.msra.mxu0 0.0
  %645 = vmatprep.subr.mxu0 0.0
  %646 = vmatpush1.msra.mxu0 0.0
  %647 = vmatprep.subr.mxu0 0.0
  %648 = vmatpush1.msra.mxu0 0.0
  %649 = vmatprep.subr.mxu0 0.0
  %650 = vmatpush1.msra.mxu0 0.0
  %651 = vmatprep.subr.mxu0 0.0
  %652 = vmatpush1.msra.mxu0 0.0
  %653 = vmatprep.subr.mxu0 0.0
  %654 = vmatpush1.msra.mxu0 0.0
  %655 = vmatprep.subr.mxu0 0.0
  %656 = vmatpush1.msra.mxu0 0.0
  %657 = vmatprep.subr.mxu0 0.0
  %658 = vmatpush1.msra.mxu0 0.0
  %659 = vmatprep.subr.mxu0 0.0
  %660 = vmatpush1.msra.mxu0 0.0
  %661 = vmatprep.subr.mxu0 0.0
  %662 = vmatpush1.msra.mxu0 0.0
  %663 = vmatprep.subr.mxu0 0.0
  %664 = vmatpush1.msra.mxu0 0.0
  %665 = vmatprep.subr.mxu0 0.0
  %666 = vmatpush1.msra.mxu0 0.0
  %667 = vmatprep.subr.mxu0 0.0
  %668 = vmatpush1.msra.mxu0 0.0
  %669 = vmatprep.subr.mxu0 0.0
  %670 = vmatpush1.msra.mxu0 0.0
  %671 = vmatprep.subr.mxu0 0.0
  %672 = vmatpush1.msra.mxu0 0.0
  %673 = vmatprep.subr.mxu0 0.0
  %674 = vmatpush1.msra.mxu0 0.0
  %675 = vmatprep.subr.mxu0 0.0
  %676 = vmatpush1.msra.mxu0 0.0
  %677 = vmatprep.subr.mxu0 0.0
  %678 = vmatpush1.msra.mxu0 0.0
  %679 = vmatprep.subr.mxu0 0.0
  %680 = vmatpush1.msra.mxu0 0.0
  %681 = vmatprep.subr.mxu0 0.0
  %682 = vmatpush1.msra.mxu0 0.0
  %683 = vmatprep.subr.mxu0 0.0
  %684 = vmatpush1.msra.mxu0 0.0
  %685 = vmatprep.subr.mxu0 0.0
  %686 = vmatpush1.msra.mxu0 0.0
  %687 = vmatprep.subr.mxu0 0.0
  %688 = vmatpush1.msra.mxu0 0.0
  %689 = vmatprep.subr.mxu0 0.0
  %690 = vmatpush1.msra.mxu0 0.0
  %691 = vmatprep.subr.mxu0 0.0
  %692 = vmatpush1.msra.mxu0 0.0
  %693 = vmatprep.subr.mxu0 0.0
  %694 = vmatpush1.msra.mxu0 0.0
  %695 = vmatprep.subr.mxu0 0.0
  %696 = vmatpush1.msra.mxu0 0.0
  %697 = vmatprep.subr.mxu0 0.0
  %698 = vmatpush1.msra.mxu0 0.0
  %699 = vmatprep.subr.mxu0 0.0
  %700 = vmatpush1.msra.mxu0 0.0
  %701 = vmatprep.mubr.f32.mxu0 0.0
  %702 = vmatmul.mubr.f32.gmra.mrb[0].mxu0 %v635
  %v703 = vpop.f32.mrb[0].mxu0
  %v704 = vadd.f32 0.0, %v703
  %v705 = vpop.f32.mrb[0].mxu0
  %706 = vdwg.mxu0
  %707 = vrot.lane.b32.xlu0 %v121, 56
  %v708 = vpop.permute.xlu0 %707
  %v711 = vsel %vm127, %v630, 0
  %713 = vmatprep.subr.mxu0 0.0
  %714 = vmatpush1.msra.mxu0 %v708
  %715 = vmatprep.subr.mxu0 0.0
  %716 = vmatpush1.msra.mxu0 0.0
  %717 = vmatprep.subr.mxu0 0.0
  %718 = vmatpush1.msra.mxu0 0.0
  %719 = vmatprep.subr.mxu0 0.0
  %720 = vmatpush1.msra.mxu0 0.0
  %721 = vmatprep.subr.mxu0 0.0
  %722 = vmatpush1.msra.mxu0 0.0
  %723 = vmatprep.subr.mxu0 0.0
  %724 = vmatpush1.msra.mxu0 0.0
  %725 = vmatprep.subr.mxu0 0.0
  %726 = vmatpush1.msra.mxu0 0.0
  %727 = vmatprep.subr.mxu0 0.0
  %728 = vmatpush1.msra.mxu0 0.0
  %729 = vmatprep.subr.mxu0 0.0
  %730 = vmatpush1.msra.mxu0 0.0
  %731 = vmatprep.subr.mxu0 0.0
  %732 = vmatpush1.msra.mxu0 0.0
  %733 = vmatprep.subr.mxu0 0.0
  %734 = vmatpush1.msra.mxu0 0.0
  %735 = vmatprep.subr.mxu0 0.0
  %736 = vmatpush1.msra.mxu0 0.0
  %737 = vmatprep.subr.mxu0 0.0
  %738 = vmatpush1.msra.mxu0 0.0
  %739 = vmatprep.subr.mxu0 0.0
  %740 = vmatpush1.msra.mxu0 0.0
  %741 = vmatprep.subr.mxu0 0.0
  %742 = vmatpush1.msra.mxu0 0.0
  %743 = vmatprep.subr.mxu0 0.0
  %744 = vmatpush1.msra.mxu0 0.0
  %745 = vmatprep.subr.mxu0 0.0
  %746 = vmatpush1.msra.mxu0 0.0
  %747 = vmatprep.subr.mxu0 0.0
  %748 = vmatpush1.msra.mxu0 0.0
  %749 = vmatprep.subr.mxu0 0.0
  %750 = vmatpush1.msra.mxu0 0.0
  %751 = vmatprep.subr.mxu0 0.0
  %752 = vmatpush1.msra.mxu0 0.0
  %753 = vmatprep.subr.mxu0 0.0
  %754 = vmatpush1.msra.mxu0 0.0
  %755 = vmatprep.subr.mxu0 0.0
  %756 = vmatpush1.msra.mxu0 0.0
  %757 = vmatprep.subr.mxu0 0.0
  %758 = vmatpush1.msra.mxu0 0.0
  %759 = vmatprep.subr.mxu0 0.0
  %760 = vmatpush1.msra.mxu0 0.0
  %761 = vmatprep.subr.mxu0 0.0
  %762 = vmatpush1.msra.mxu0 0.0
  %763 = vmatprep.subr.mxu0 0.0
  %764 = vmatpush1.msra.mxu0 0.0
  %765 = vmatprep.subr.mxu0 0.0
  %766 = vmatpush1.msra.mxu0 0.0
  %767 = vmatprep.subr.mxu0 0.0
  %768 = vmatpush1.msra.mxu0 0.0
  %769 = vmatprep.subr.mxu0 0.0
  %770 = vmatpush1.msra.mxu0 0.0
  %771 = vmatprep.subr.mxu0 0.0
  %772 = vmatpush1.msra.mxu0 0.0
  %773 = vmatprep.subr.mxu0 0.0
  %774 = vmatpush1.msra.mxu0 0.0
  %775 = vmatprep.subr.mxu0 0.0
  %776 = vmatpush1.msra.mxu0 0.0
  %777 = vmatprep.mubr.f32.mxu0 0.0
  %778 = vmatmul.mubr.f32.gmra.mrb[0].mxu0 %v711
  %v779 = vpop.f32.mrb[0].mxu0
  %v780 = vadd.f32 0.0, %v779
  %v781 = vpop.f32.mrb[0].mxu0
  %782 = vdwg.mxu0
  %783 = vrot.lane.b32.xlu0 %v118, 112
  %v784 = vpop.permute.xlu0 %783
  %785 = vrot.lane.b32.xlu0 %v118, 80
  %v786 = vpop.permute.xlu0 %785
  %v787 = vsel %vm127, %v784, 0
  %v789 = vsel %vm127, %v786, 0
  %791 = vmatprep.subr.mxu0 0.0
  %792 = vmatpush1.xpose.msra.mxu0 %v789
  %793 = vmatprep.subr.mxu0 0.0
  %794 = vmatpush1.xpose.msra.mxu0 0.0
  %795 = vmatprep.subr.mxu0 0.0
  %796 = vmatpush1.xpose.msra.mxu0 0.0
  %797 = vmatprep.subr.mxu0 0.0
  %798 = vmatpush1.xpose.msra.mxu0 0.0
  %799 = vmatprep.subr.mxu0 0.0
  %800 = vmatpush1.xpose.msra.mxu0 0.0
  %801 = vmatprep.subr.mxu0 0.0
  %802 = vmatpush1.xpose.msra.mxu0 0.0
  %803 = vmatprep.subr.mxu0 0.0
  %804 = vmatpush1.xpose.msra.mxu0 0.0
  %805 = vmatprep.subr.mxu0 0.0
  %806 = vmatpush1.xpose.msra.mxu0 0.0
  %807 = vmatprep.subr.mxu0 0.0
  %808 = vmatpush1.xpose.msra.mxu0 0.0
  %809 = vmatprep.subr.mxu0 0.0
  %810 = vmatpush1.xpose.msra.mxu0 0.0
  %811 = vmatprep.subr.mxu0 0.0
  %812 = vmatpush1.xpose.msra.mxu0 0.0
  %813 = vmatprep.subr.mxu0 0.0
  %814 = vmatpush1.xpose.msra.mxu0 0.0
  %815 = vmatprep.subr.mxu0 0.0
  %816 = vmatpush1.xpose.msra.mxu0 0.0
  %817 = vmatprep.subr.mxu0 0.0
  %818 = vmatpush1.xpose.msra.mxu0 0.0
  %819 = vmatprep.subr.mxu0 0.0
  %820 = vmatpush1.xpose.msra.mxu0 0.0
  %821 = vmatprep.subr.mxu0 0.0
  %822 = vmatpush1.xpose.msra.mxu0 0.0
  %823 = vmatprep.subr.mxu0 0.0
  %824 = vmatpush1.xpose.msra.mxu0 0.0
  %825 = vmatprep.subr.mxu0 0.0
  %826 = vmatpush1.xpose.msra.mxu0 0.0
  %827 = vmatprep.subr.mxu0 0.0
  %828 = vmatpush1.xpose.msra.mxu0 0.0
  %829 = vmatprep.subr.mxu0 0.0
  %830 = vmatpush1.xpose.msra.mxu0 0.0
  %831 = vmatprep.subr.mxu0 0.0
  %832 = vmatpush1.xpose.msra.mxu0 0.0
  %833 = vmatprep.subr.mxu0 0.0
  %834 = vmatpush1.xpose.msra.mxu0 0.0
  %835 = vmatprep.subr.mxu0 0.0
  %836 = vmatpush1.xpose.msra.mxu0 0.0
  %837 = vmatprep.subr.mxu0 0.0
  %838 = vmatpush1.xpose.msra.mxu0 0.0
  %839 = vmatprep.subr.mxu0 0.0
  %840 = vmatpush1.xpose.msra.mxu0 0.0
  %841 = vmatprep.subr.mxu0 0.0
  %842 = vmatpush1.xpose.msra.mxu0 0.0
  %843 = vmatprep.subr.mxu0 0.0
  %844 = vmatpush1.xpose.msra.mxu0 0.0
  %845 = vmatprep.subr.mxu0 0.0
  %846 = vmatpush1.xpose.msra.mxu0 0.0
  %847 = vmatprep.subr.mxu0 0.0
  %848 = vmatpush1.xpose.msra.mxu0 0.0
  %849 = vmatprep.subr.mxu0 0.0
  %850 = vmatpush1.xpose.msra.mxu0 0.0
  %851 = vmatprep.subr.mxu0 0.0
  %852 = vmatpush1.xpose.msra.mxu0 0.0
  %853 = vmatprep.subr.mxu0 0.0
  %854 = vmatpush1.xpose.msra.mxu0 0.0
  %855 = vmatprep.mubr.f32.mxu0 0.0
  %856 = vmatmul.mubr.f32.gmra.mrb[0].mxu0 %v787
  %v857 = vpop.f32.mrb[0].mxu0
  %v858 = vadd.f32 0.0, %v857
  %v859 = vpop.f32.mrb[0].mxu0
  %860 = vdwg.mxu0
  %861 = vrot.lane.b32.xlu0 %v121, 112
  %v862 = vpop.permute.xlu0 %861
  %863 = vrot.lane.b32.xlu0 %v121, 80
  %v864 = vpop.permute.xlu0 %863
  %v865 = vsel %vm127, %v862, 0
  %v867 = vsel %vm127, %v864, 0
  %869 = vmatprep.subr.mxu0 0.0
  %870 = vmatpush1.xpose.msra.mxu0 %v867
  %871 = vmatprep.subr.mxu0 0.0
  %872 = vmatpush1.xpose.msra.mxu0 0.0
  %873 = vmatprep.subr.mxu0 0.0
  %874 = vmatpush1.xpose.msra.mxu0 0.0
  %875 = vmatprep.subr.mxu0 0.0
  %876 = vmatpush1.xpose.msra.mxu0 0.0
  %877 = vmatprep.subr.mxu0 0.0
  %878 = vmatpush1.xpose.msra.mxu0 0.0
  %879 = vmatprep.subr.mxu0 0.0
  %880 = vmatpush1.xpose.msra.mxu0 0.0
  %881 = vmatprep.subr.mxu0 0.0
  %882 = vmatpush1.xpose.msra.mxu0 0.0
  %883 = vmatprep.subr.mxu0 0.0
  %884 = vmatpush1.xpose.msra.mxu0 0.0
  %885 = vmatprep.subr.mxu0 0.0
  %886 = vmatpush1.xpose.msra.mxu0 0.0
  %887 = vmatprep.subr.mxu0 0.0
  %888 = vmatpush1.xpose.msra.mxu0 0.0
  %889 = vmatprep.subr.mxu0 0.0
  %890 = vmatpush1.xpose.msra.mxu0 0.0
  %891 = vmatprep.subr.mxu0 0.0
  %892 = vmatpush1.xpose.msra.mxu0 0.0
  %893 = vmatprep.subr.mxu0 0.0
  %894 = vmatpush1.xpose.msra.mxu0 0.0
  %895 = vmatprep.subr.mxu0 0.0
  %896 = vmatpush1.xpose.msra.mxu0 0.0
  %897 = vmatprep.subr.mxu0 0.0
  %898 = vmatpush1.xpose.msra.mxu0 0.0
  %899 = vmatprep.subr.mxu0 0.0
  %900 = vmatpush1.xpose.msra.mxu0 0.0
  %901 = vmatprep.subr.mxu0 0.0
  %902 = vmatpush1.xpose.msra.mxu0 0.0
  %903 = vmatprep.subr.mxu0 0.0
  %904 = vmatpush1.xpose.msra.mxu0 0.0
  %905 = vmatprep.subr.mxu0 0.0
  %906 = vmatpush1.xpose.msra.mxu0 0.0
  %907 = vmatprep.subr.mxu0 0.0
  %908 = vmatpush1.xpose.msra.mxu0 0.0
  %909 = vmatprep.subr.mxu0 0.0
  %910 = vmatpush1.xpose.msra.mxu0 0.0
  %911 = vmatprep.subr.mxu0 0.0
  %912 = vmatpush1.xpose.msra.mxu0 0.0
  %913 = vmatprep.subr.mxu0 0.0
  %914 = vmatpush1.xpose.msra.mxu0 0.0
  %915 = vmatprep.subr.mxu0 0.0
  %916 = vmatpush1.xpose.msra.mxu0 0.0
  %917 = vmatprep.subr.mxu0 0.0
  %918 = vmatpush1.xpose.msra.mxu0 0.0
  %919 = vmatprep.subr.mxu0 0.0
  %920 = vmatpush1.xpose.msra.mxu0 0.0
  %921 = vmatprep.subr.mxu0 0.0
  %922 = vmatpush1.xpose.msra.mxu0 0.0
  %923 = vmatprep.subr.mxu0 0.0
  %924 = vmatpush1.xpose.msra.mxu0 0.0
  %925 = vmatprep.subr.mxu0 0.0
  %926 = vmatpush1.xpose.msra.mxu0 0.0
  %927 = vmatprep.subr.mxu0 0.0
  %928 = vmatpush1.xpose.msra.mxu0 0.0
  %929 = vmatprep.subr.mxu0 0.0
  %930 = vmatpush1.xpose.msra.mxu0 0.0
  %931 = vmatprep.subr.mxu0 0.0
  %932 = vmatpush1.xpose.msra.mxu0 0.0
  %933 = vmatprep.mubr.f32.mxu0 0.0
  %934 = vmatmul.mubr.f32.gmra.mrb[0].mxu0 %v865
  %v935 = vpop.f32.mrb[0].mxu0
  %v936 = vadd.f32 0.0, %v935
  %v937 = vpop.f32.mrb[0].mxu0
  %938 = vdwg.mxu0
  %v939 = vsel %vm127, %v858, -inf
  %940 = vmax.xlane.f32.xlu0 %v939
  %v941 = vpop.xlane.xlu0 %940
  %v942 = vsel %vm127, %v936, -inf
  %943 = vmax.xlane.f32.xlu0 %v942
  %v944 = vpop.xlane.xlu0 %943
  %v945 = vsub.f32 %v858, %v941
  %v946 = vsub.f32 %v936, %v944
  %v947 = vmul.f32 %v945, 1.442695
  %v948 = vpow.pop %v947
  %v949 = vmul.f32 %v946, 1.442695
  %v950 = vpow.pop %v949
  %v951 = vsel %vm127, %v948, 0.0
  %952 = vadd.xlane.f32.xlu0 %v951
  %v953 = vpop.xlane.xlu0 %952
  %v954 = vsel %vm127, %v950, 0.0
  %955 = vadd.xlane.f32.xlu0 %v954
  %v956 = vpop.xlane.xlu0 %955
  %v957 = vrcp.pop %v953
  %v958 = vrcp.pop %v956
  %v959 = vmul.f32 %v948, %v957
  %v960 = vmul.f32 %v950, %v958
  %961 = vrot.lane.b32.xlu0 %v118, 48
  %v962 = vpop.permute.xlu0 %961
  %v965 = vsel %vm127, %v959, 0
  %967 = vmatprep.subr.mxu0 0.0
  %968 = vmatpush1.msra.mxu0 %v962
  %969 = vmatprep.subr.mxu0 0.0
  %970 = vmatpush1.msra.mxu0 0.0
  %971 = vmatprep.subr.mxu0 0.0
  %972 = vmatpush1.msra.mxu0 0.0
  %973 = vmatprep.subr.mxu0 0.0
  %974 = vmatpush1.msra.mxu0 0.0
  %975 = vmatprep.subr.mxu0 0.0
  %976 = vmatpush1.msra.mxu0 0.0
  %977 = vmatprep.subr.mxu0 0.0
  %978 = vmatpush1.msra.mxu0 0.0
  %979 = vmatprep.subr.mxu0 0.0
  %980 = vmatpush1.msra.mxu0 0.0
  %981 = vmatprep.subr.mxu0 0.0
  %982 = vmatpush1.msra.mxu0 0.0
  %983 = vmatprep.subr.mxu0 0.0
  %984 = vmatpush1.msra.mxu0 0.0
  %985 = vmatprep.subr.mxu0 0.0
  %986 = vmatpush1.msra.mxu0 0.0
  %987 = vmatprep.subr.mxu0 0.0
  %988 = vmatpush1.msra.mxu0 0.0
  %989 = vmatprep.subr.mxu0 0.0
  %990 = vmatpush1.msra.mxu0 0.0
  %991 = vmatprep.subr.mxu0 0.0
  %992 = vmatpush1.msra.mxu0 0.0
  %993 = vmatprep.subr.mxu0 0.0
  %994 = vmatpush1.msra.mxu0 0.0
  %995 = vmatprep.subr.mxu0 0.0
  %996 = vmatpush1.msra.mxu0 0.0
  %997 = vmatprep.subr.mxu0 0.0
  %998 = vmatpush1.msra.mxu0 0.0
  %999 = vmatprep.subr.mxu0 0.0
  %1000 = vmatpush1.msra.mxu0 0.0
  %1001 = vmatprep.subr.mxu0 0.0
  %1002 = vmatpush1.msra.mxu0 0.0
  %1003 = vmatprep.subr.mxu0 0.0
  %1004 = vmatpush1.msra.mxu0 0.0
  %1005 = vmatprep.subr.mxu0 0.0
  %1006 = vmatpush1.msra.mxu0 0.0
  %1007 = vmatprep.subr.mxu0 0.0
  %1008 = vmatpush1.msra.mxu0 0.0
  %1009 = vmatprep.subr.mxu0 0.0
  %1010 = vmatpush1.msra.mxu0 0.0
  %1011 = vmatprep.subr.mxu0 0.0
  %1012 = vmatpush1.msra.mxu0 0.0
  %1013 = vmatprep.subr.mxu0 0.0
  %1014 = vmatpush1.msra.mxu0 0.0
  %1015 = vmatprep.subr.mxu0 0.0
  %1016 = vmatpush1.msra.mxu0 0.0
  %1017 = vmatprep.subr.mxu0 0.0
  %1018 = vmatpush1.msra.mxu0 0.0
  %1019 = vmatprep.subr.mxu0 0.0
  %1020 = vmatpush1.msra.mxu0 0.0
  %1021 = vmatprep.subr.mxu0 0.0
  %1022 = vmatpush1.msra.mxu0 0.0
  %1023 = vmatprep.subr.mxu0 0.0
  %1024 = vmatpush1.msra.mxu0 0.0
  %1025 = vmatprep.subr.mxu0 0.0
  %1026 = vmatpush1.msra.mxu0 0.0
  %1027 = vmatprep.subr.mxu0 0.0
  %1028 = vmatpush1.msra.mxu0 0.0
  %1029 = vmatprep.subr.mxu0 0.0
  %1030 = vmatpush1.msra.mxu0 0.0
  %1031 = vmatprep.mubr.f32.mxu0 0.0
  %1032 = vmatmul.mubr.f32.gmra.mrb[0].mxu0 %v965
  %v1033 = vpop.f32.mrb[0].mxu0
  %v1034 = vadd.f32 0.0, %v1033
  %v1035 = vpop.f32.mrb[0].mxu0
  %1036 = vdwg.mxu0
  %1037 = vrot.lane.b32.xlu0 %v121, 48
  %v1038 = vpop.permute.xlu0 %1037
  %v1041 = vsel %vm127, %v960, 0
  %1043 = vmatprep.subr.mxu0 0.0
  %1044 = vmatpush1.msra.mxu0 %v1038
  %1045 = vmatprep.subr.mxu0 0.0
  %1046 = vmatpush1.msra.mxu0 0.0
  %1047 = vmatprep.subr.mxu0 0.0
  %1048 = vmatpush1.msra.mxu0 0.0
  %1049 = vmatprep.subr.mxu0 0.0
  %1050 = vmatpush1.msra.mxu0 0.0
  %1051 = vmatprep.subr.mxu0 0.0
  %1052 = vmatpush1.msra.mxu0 0.0
  %1053 = vmatprep.subr.mxu0 0.0
  %1054 = vmatpush1.msra.mxu0 0.0
  %1055 = vmatprep.subr.mxu0 0.0
  %1056 = vmatpush1.msra.mxu0 0.0
  %1057 = vmatprep.subr.mxu0 0.0
  %1058 = vmatpush1.msra.mxu0 0.0
  %1059 = vmatprep.subr.mxu0 0.0
  %1060 = vmatpush1.msra.mxu0 0.0
  %1061 = vmatprep.subr.mxu0 0.0
  %1062 = vmatpush1.msra.mxu0 0.0
  %1063 = vmatprep.subr.mxu0 0.0
  %1064 = vmatpush1.msra.mxu0 0.0
  %1065 = vmatprep.subr.mxu0 0.0
  %1066 = vmatpush1.msra.mxu0 0.0
  %1067 = vmatprep.subr.mxu0 0.0
  %1068 = vmatpush1.msra.mxu0 0.0
  %1069 = vmatprep.subr.mxu0 0.0
  %1070 = vmatpush1.msra.mxu0 0.0
  %1071 = vmatprep.subr.mxu0 0.0
  %1072 = vmatpush1.msra.mxu0 0.0
  %1073 = vmatprep.subr.mxu0 0.0
  %1074 = vmatpush1.msra.mxu0 0.0
  %1075 = vmatprep.subr.mxu0 0.0
  %1076 = vmatpush1.msra.mxu0 0.0
  %1077 = vmatprep.subr.mxu0 0.0
  %1078 = vmatpush1.msra.mxu0 0.0
  %1079 = vmatprep.subr.mxu0 0.0
  %1080 = vmatpush1.msra.mxu0 0.0
  %1081 = vmatprep.subr.mxu0 0.0
  %1082 = vmatpush1.msra.mxu0 0.0
  %1083 = vmatprep.subr.mxu0 0.0
  %1084 = vmatpush1.msra.mxu0 0.0
  %1085 = vmatprep.subr.mxu0 0.0
  %1086 = vmatpush1.msra.mxu0 0.0
  %1087 = vmatprep.subr.mxu0 0.0
  %1088 = vmatpush1.msra.mxu0 0.0
  %1089 = vmatprep.subr.mxu0 0.0
  %1090 = vmatpush1.msra.mxu0 0.0
  %1091 = vmatprep.subr.mxu0 0.0
  %1092 = vmatpush1.msra.mxu0 0.0
  %1093 = vmatprep.subr.mxu0 0.0
  %1094 = vmatpush1.msra.mxu0 0.0
  %1095 = vmatprep.subr.mxu0 0.0
  %1096 = vmatpush1.msra.mxu0 0.0
  %1097 = vmatprep.subr.mxu0 0.0
  %1098 = vmatpush1.msra.mxu0 0.0
  %1099 = vmatprep.subr.mxu0 0.0
  %1100 = vmatpush1.msra.mxu0 0.0
  %1101 = vmatprep.subr.mxu0 0.0
  %1102 = vmatpush1.msra.mxu0 0.0
  %1103 = vmatprep.subr.mxu0 0.0
  %1104 = vmatpush1.msra.mxu0 0.0
  %1105 = vmatprep.subr.mxu0 0.0
  %1106 = vmatpush1.msra.mxu0 0.0
  %1107 = vmatprep.mubr.f32.mxu0 0.0
  %1108 = vmatmul.mubr.f32.gmra.mrb[0].mxu0 %v1041
  %v1109 = vpop.f32.mrb[0].mxu0
  %v1110 = vadd.f32 0.0, %v1109
  %v1111 = vpop.f32.mrb[0].mxu0
  %1112 = vdwg.mxu0
  %1113 = vrot.lane.b32.xlu0 %v118, 104
  %v1114 = vpop.permute.xlu0 %1113
  %1115 = vrot.lane.b32.xlu0 %v118, 72
  %v1116 = vpop.permute.xlu0 %1115
  %v1117 = vsel %vm127, %v1114, 0
  %v1119 = vsel %vm127, %v1116, 0
  %1121 = vmatprep.subr.mxu0 0.0
  %1122 = vmatpush1.xpose.msra.mxu0 %v1119
  %1123 = vmatprep.subr.mxu0 0.0
  %1124 = vmatpush1.xpose.msra.mxu0 0.0
  %1125 = vmatprep.subr.mxu0 0.0
  %1126 = vmatpush1.xpose.msra.mxu0 0.0
  %1127 = vmatprep.subr.mxu0 0.0
  %1128 = vmatpush1.xpose.msra.mxu0 0.0
  %1129 = vmatprep.subr.mxu0 0.0
  %1130 = vmatpush1.xpose.msra.mxu0 0.0
  %1131 = vmatprep.subr.mxu0 0.0
  %1132 = vmatpush1.xpose.msra.mxu0 0.0
  %1133 = vmatprep.subr.mxu0 0.0
  %1134 = vmatpush1.xpose.msra.mxu0 0.0
  %1135 = vmatprep.subr.mxu0 0.0
  %1136 = vmatpush1.xpose.msra.mxu0 0.0
  %1137 = vmatprep.subr.mxu0 0.0
  %1138 = vmatpush1.xpose.msra.mxu0 0.0
  %1139 = vmatprep.subr.mxu0 0.0
  %1140 = vmatpush1.xpose.msra.mxu0 0.0
  %1141 = vmatprep.subr.mxu0 0.0
  %1142 = vmatpush1.xpose.msra.mxu0 0.0
  %1143 = vmatprep.subr.mxu0 0.0
  %1144 = vmatpush1.xpose.msra.mxu0 0.0
  %1145 = vmatprep.subr.mxu0 0.0
  %1146 = vmatpush1.xpose.msra.mxu0 0.0
  %1147 = vmatprep.subr.mxu0 0.0
  %1148 = vmatpush1.xpose.msra.mxu0 0.0
  %1149 = vmatprep.subr.mxu0 0.0
  %1150 = vmatpush1.xpose.msra.mxu0 0.0
  %1151 = vmatprep.subr.mxu0 0.0
  %1152 = vmatpush1.xpose.msra.mxu0 0.0
  %1153 = vmatprep.subr.mxu0 0.0
  %1154 = vmatpush1.xpose.msra.mxu0 0.0
  %1155 = vmatprep.subr.mxu0 0.0
  %1156 = vmatpush1.xpose.msra.mxu0 0.0
  %1157 = vmatprep.subr.mxu0 0.0
  %1158 = vmatpush1.xpose.msra.mxu0 0.0
  %1159 = vmatprep.subr.mxu0 0.0
  %1160 = vmatpush1.xpose.msra.mxu0 0.0
  %1161 = vmatprep.subr.mxu0 0.0
  %1162 = vmatpush1.xpose.msra.mxu0 0.0
  %1163 = vmatprep.subr.mxu0 0.0
  %1164 = vmatpush1.xpose.msra.mxu0 0.0
  %1165 = vmatprep.subr.mxu0 0.0
  %1166 = vmatpush1.xpose.msra.mxu0 0.0
  %1167 = vmatprep.subr.mxu0 0.0
  %1168 = vmatpush1.xpose.msra.mxu0 0.0
  %1169 = vmatprep.subr.mxu0 0.0
  %1170 = vmatpush1.xpose.msra.mxu0 0.0
  %1171 = vmatprep.subr.mxu0 0.0
  %1172 = vmatpush1.xpose.msra.mxu0 0.0
  %1173 = vmatprep.subr.mxu0 0.0
  %1174 = vmatpush1.xpose.msra.mxu0 0.0
  %1175 = vmatprep.subr.mxu0 0.0
  %1176 = vmatpush1.xpose.msra.mxu0 0.0
  %1177 = vmatprep.subr.mxu0 0.0
  %1178 = vmatpush1.xpose.msra.mxu0 0.0
  %1179 = vmatprep.subr.mxu0 0.0
  %1180 = vmatpush1.xpose.msra.mxu0 0.0
  %1181 = vmatprep.subr.mxu0 0.0
  %1182 = vmatpush1.xpose.msra.mxu0 0.0
  %1183 = vmatprep.subr.mxu0 0.0
  %1184 = vmatpush1.xpose.msra.mxu0 0.0
  %1185 = vmatprep.mubr.f32.mxu0 0.0
  %1186 = vmatmul.mubr.f32.gmra.mrb[0].mxu0 %v1117
  %v1187 = vpop.f32.mrb[0].mxu0
  %v1188 = vadd.f32 0.0, %v1187
  %v1189 = vpop.f32.mrb[0].mxu0
  %1190 = vdwg.mxu0
  %1191 = vrot.lane.b32.xlu0 %v121, 104
  %v1192 = vpop.permute.xlu0 %1191
  %1193 = vrot.lane.b32.xlu0 %v121, 72
  %v1194 = vpop.permute.xlu0 %1193
  %v1195 = vsel %vm127, %v1192, 0
  %v1197 = vsel %vm127, %v1194, 0
  %1199 = vmatprep.subr.mxu0 0.0
  %1200 = vmatpush1.xpose.msra.mxu0 %v1197
  %1201 = vmatprep.subr.mxu0 0.0
  %1202 = vmatpush1.xpose.msra.mxu0 0.0
  %1203 = vmatprep.subr.mxu0 0.0
  %1204 = vmatpush1.xpose.msra.mxu0 0.0
  %1205 = vmatprep.subr.mxu0 0.0
  %1206 = vmatpush1.xpose.msra.mxu0 0.0
  %1207 = vmatprep.subr.mxu0 0.0
  %1208 = vmatpush1.xpose.msra.mxu0 0.0
  %1209 = vmatprep.subr.mxu0 0.0
  %1210 = vmatpush1.xpose.msra.mxu0 0.0
  %1211 = vmatprep.subr.mxu0 0.0
  %1212 = vmatpush1.xpose.msra.mxu0 0.0
  %1213 = vmatprep.subr.mxu0 0.0
  %1214 = vmatpush1.xpose.msra.mxu0 0.0
  %1215 = vmatprep.subr.mxu0 0.0
  %1216 = vmatpush1.xpose.msra.mxu0 0.0
  %1217 = vmatprep.subr.mxu0 0.0
  %1218 = vmatpush1.xpose.msra.mxu0 0.0
  %1219 = vmatprep.subr.mxu0 0.0
  %1220 = vmatpush1.xpose.msra.mxu0 0.0
  %1221 = vmatprep.subr.mxu0 0.0
  %1222 = vmatpush1.xpose.msra.mxu0 0.0
  %1223 = vmatprep.subr.mxu0 0.0
  %1224 = vmatpush1.xpose.msra.mxu0 0.0
  %1225 = vmatprep.subr.mxu0 0.0
  %1226 = vmatpush1.xpose.msra.mxu0 0.0
  %1227 = vmatprep.subr.mxu0 0.0
  %1228 = vmatpush1.xpose.msra.mxu0 0.0
  %1229 = vmatprep.subr.mxu0 0.0
  %1230 = vmatpush1.xpose.msra.mxu0 0.0
  %1231 = vmatprep.subr.mxu0 0.0
  %1232 = vmatpush1.xpose.msra.mxu0 0.0
  %1233 = vmatprep.subr.mxu0 0.0
  %1234 = vmatpush1.xpose.msra.mxu0 0.0
  %1235 = vmatprep.subr.mxu0 0.0
  %1236 = vmatpush1.xpose.msra.mxu0 0.0
  %1237 = vmatprep.subr.mxu0 0.0
  %1238 = vmatpush1.xpose.msra.mxu0 0.0
  %1239 = vmatprep.subr.mxu0 0.0
  %1240 = vmatpush1.xpose.msra.mxu0 0.0
  %1241 = vmatprep.subr.mxu0 0.0
  %1242 = vmatpush1.xpose.msra.mxu0 0.0
  %1243 = vmatprep.subr.mxu0 0.0
  %1244 = vmatpush1.xpose.msra.mxu0 0.0
  %1245 = vmatprep.subr.mxu0 0.0
  %1246 = vmatpush1.xpose.msra.mxu0 0.0
  %1247 = vmatprep.subr.mxu0 0.0
  %1248 = vmatpush1.xpose.msra.mxu0 0.0
  %1249 = vmatprep.subr.mxu0 0.0
  %1250 = vmatpush1.xpose.msra.mxu0 0.0
  %1251 = vmatprep.subr.mxu0 0.0
  %1252 = vmatpush1.xpose.msra.mxu0 0.0
  %1253 = vmatprep.subr.mxu0 0.0
  %1254 = vmatpush1.xpose.msra.mxu0 0.0
  %1255 = vmatprep.subr.mxu0 0.0
  %1256 = vmatpush1.xpose.msra.mxu0 0.0
  %1257 = vmatprep.subr.mxu0 0.0
  %1258 = vmatpush1.xpose.msra.mxu0 0.0
  %1259 = vmatprep.subr.mxu0 0.0
  %1260 = vmatpush1.xpose.msra.mxu0 0.0
  %1261 = vmatprep.subr.mxu0 0.0
  %1262 = vmatpush1.xpose.msra.mxu0 0.0
  %1263 = vmatprep.mubr.f32.mxu0 0.0
  %1264 = vmatmul.mubr.f32.gmra.mrb[0].mxu0 %v1195
  %v1265 = vpop.f32.mrb[0].mxu0
  %v1266 = vadd.f32 0.0, %v1265
  %v1267 = vpop.f32.mrb[0].mxu0
  %1268 = vdwg.mxu0
  %v1269 = vsel %vm127, %v1188, -inf
  %1270 = vmax.xlane.f32.xlu0 %v1269
  %v1271 = vpop.xlane.xlu0 %1270
  %v1272 = vsel %vm127, %v1266, -inf
  %1273 = vmax.xlane.f32.xlu0 %v1272
  %v1274 = vpop.xlane.xlu0 %1273
  %v1275 = vsub.f32 %v1188, %v1271
  %v1276 = vsub.f32 %v1266, %v1274
  %v1277 = vmul.f32 %v1275, 1.442695
  %v1278 = vpow.pop %v1277
  %v1279 = vmul.f32 %v1276, 1.442695
  %v1280 = vpow.pop %v1279
  %v1281 = vsel %vm127, %v1278, 0.0
  %1282 = vadd.xlane.f32.xlu0 %v1281
  %v1283 = vpop.xlane.xlu0 %1282
  %v1284 = vsel %vm127, %v1280, 0.0
  %1285 = vadd.xlane.f32.xlu0 %v1284
  %v1286 = vpop.xlane.xlu0 %1285
  %v1287 = vrcp.pop %v1283
  %v1288 = vrcp.pop %v1286
  %v1289 = vmul.f32 %v1278, %v1287
  %v1290 = vmul.f32 %v1280, %v1288
  %1291 = vrot.lane.b32.xlu0 %v118, 40
  %v1292 = vpop.permute.xlu0 %1291
  %v1295 = vsel %vm127, %v1289, 0
  %1297 = vmatprep.subr.mxu0 0.0
  %1298 = vmatpush1.msra.mxu0 %v1292
  %1299 = vmatprep.subr.mxu0 0.0
  %1300 = vmatpush1.msra.mxu0 0.0
  %1301 = vmatprep.subr.mxu0 0.0
  %1302 = vmatpush1.msra.mxu0 0.0
  %1303 = vmatprep.subr.mxu0 0.0
  %1304 = vmatpush1.msra.mxu0 0.0
  %1305 = vmatprep.subr.mxu0 0.0
  %1306 = vmatpush1.msra.mxu0 0.0
  %1307 = vmatprep.subr.mxu0 0.0
  %1308 = vmatpush1.msra.mxu0 0.0
  %1309 = vmatprep.subr.mxu0 0.0
  %1310 = vmatpush1.msra.mxu0 0.0
  %1311 = vmatprep.subr.mxu0 0.0
  %1312 = vmatpush1.msra.mxu0 0.0
  %1313 = vmatprep.subr.mxu0 0.0
  %1314 = vmatpush1.msra.mxu0 0.0
  %1315 = vmatprep.subr.mxu0 0.0
  %1316 = vmatpush1.msra.mxu0 0.0
  %1317 = vmatprep.subr.mxu0 0.0
  %1318 = vmatpush1.msra.mxu0 0.0
  %1319 = vmatprep.subr.mxu0 0.0
  %1320 = vmatpush1.msra.mxu0 0.0
  %1321 = vmatprep.subr.mxu0 0.0
  %1322 = vmatpush1.msra.mxu0 0.0
  %1323 = vmatprep.subr.mxu0 0.0
  %1324 = vmatpush1.msra.mxu0 0.0
  %1325 = vmatprep.subr.mxu0 0.0
  %1326 = vmatpush1.msra.mxu0 0.0
  %1327 = vmatprep.subr.mxu0 0.0
  %1328 = vmatpush1.msra.mxu0 0.0
  %1329 = vmatprep.subr.mxu0 0.0
  %1330 = vmatpush1.msra.mxu0 0.0
  %1331 = vmatprep.subr.mxu0 0.0
  %1332 = vmatpush1.msra.mxu0 0.0
  %1333 = vmatprep.subr.mxu0 0.0
  %1334 = vmatpush1.msra.mxu0 0.0
  %1335 = vmatprep.subr.mxu0 0.0
  %1336 = vmatpush1.msra.mxu0 0.0
  %1337 = vmatprep.subr.mxu0 0.0
  %1338 = vmatpush1.msra.mxu0 0.0
  %1339 = vmatprep.subr.mxu0 0.0
  %1340 = vmatpush1.msra.mxu0 0.0
  %1341 = vmatprep.subr.mxu0 0.0
  %1342 = vmatpush1.msra.mxu0 0.0
  %1343 = vmatprep.subr.mxu0 0.0
  %1344 = vmatpush1.msra.mxu0 0.0
  %1345 = vmatprep.subr.mxu0 0.0
  %1346 = vmatpush1.msra.mxu0 0.0
  %1347 = vmatprep.subr.mxu0 0.0
  %1348 = vmatpush1.msra.mxu0 0.0
  %1349 = vmatprep.subr.mxu0 0.0
  %1350 = vmatpush1.msra.mxu0 0.0
  %1351 = vmatprep.subr.mxu0 0.0
  %1352 = vmatpush1.msra.mxu0 0.0
  %1353 = vmatprep.subr.mxu0 0.0
  %1354 = vmatpush1.msra.mxu0 0.0
  %1355 = vmatprep.subr.mxu0 0.0
  %1356 = vmatpush1.msra.mxu0 0.0
  %1357 = vmatprep.subr.mxu0 0.0
  %1358 = vmatpush1.msra.mxu0 0.0
  %1359 = vmatprep.subr.mxu0 0.0
  %1360 = vmatpush1.msra.mxu0 0.0
  %1361 = vmatprep.mubr.f32.mxu0 0.0
  %1362 = vmatmul.mubr.f32.gmra.mrb[0].mxu0 %v1295
  %v1363 = vpop.f32.mrb[0].mxu0
  %v1364 = vadd.f32 0.0, %v1363
  %v1365 = vpop.f32.mrb[0].mxu0
  %1366 = vdwg.mxu0
  %1367 = vrot.lane.b32.xlu0 %v121, 40
  %v1368 = vpop.permute.xlu0 %1367
  %v1371 = vsel %vm127, %v1290, 0
  %1373 = vmatprep.subr.mxu0 0.0
  %1374 = vmatpush1.msra.mxu0 %v1368
  %1375 = vmatprep.subr.mxu0 0.0
  %1376 = vmatpush1.msra.mxu0 0.0
  %1377 = vmatprep.subr.mxu0 0.0
  %1378 = vmatpush1.msra.mxu0 0.0
  %1379 = vmatprep.subr.mxu0 0.0
  %1380 = vmatpush1.msra.mxu0 0.0
  %1381 = vmatprep.subr.mxu0 0.0
  %1382 = vmatpush1.msra.mxu0 0.0
  %1383 = vmatprep.subr.mxu0 0.0
  %1384 = vmatpush1.msra.mxu0 0.0
  %1385 = vmatprep.subr.mxu0 0.0
  %1386 = vmatpush1.msra.mxu0 0.0
  %1387 = vmatprep.subr.mxu0 0.0
  %1388 = vmatpush1.msra.mxu0 0.0
  %1389 = vmatprep.subr.mxu0 0.0
  %1390 = vmatpush1.msra.mxu0 0.0
  %1391 = vmatprep.subr.mxu0 0.0
  %1392 = vmatpush1.msra.mxu0 0.0
  %1393 = vmatprep.subr.mxu0 0.0
  %1394 = vmatpush1.msra.mxu0 0.0
  %1395 = vmatprep.subr.mxu0 0.0
  %1396 = vmatpush1.msra.mxu0 0.0
  %1397 = vmatprep.subr.mxu0 0.0
  %1398 = vmatpush1.msra.mxu0 0.0
  %1399 = vmatprep.subr.mxu0 0.0
  %1400 = vmatpush1.msra.mxu0 0.0
  %1401 = vmatprep.subr.mxu0 0.0
  %1402 = vmatpush1.msra.mxu0 0.0
  %1403 = vmatprep.subr.mxu0 0.0
  %1404 = vmatpush1.msra.mxu0 0.0
  %1405 = vmatprep.subr.mxu0 0.0
  %1406 = vmatpush1.msra.mxu0 0.0
  %1407 = vmatprep.subr.mxu0 0.0
  %1408 = vmatpush1.msra.mxu0 0.0
  %1409 = vmatprep.subr.mxu0 0.0
  %1410 = vmatpush1.msra.mxu0 0.0
  %1411 = vmatprep.subr.mxu0 0.0
  %1412 = vmatpush1.msra.mxu0 0.0
  %1413 = vmatprep.subr.mxu0 0.0
  %1414 = vmatpush1.msra.mxu0 0.0
  %1415 = vmatprep.subr.mxu0 0.0
  %1416 = vmatpush1.msra.mxu0 0.0
  %1417 = vmatprep.subr.mxu0 0.0
  %1418 = vmatpush1.msra.mxu0 0.0
  %1419 = vmatprep.subr.mxu0 0.0
  %1420 = vmatpush1.msra.mxu0 0.0
  %1421 = vmatprep.subr.mxu0 0.0
  %1422 = vmatpush1.msra.mxu0 0.0
  %1423 = vmatprep.subr.mxu0 0.0
  %1424 = vmatpush1.msra.mxu0 0.0
  %1425 = vmatprep.subr.mxu0 0.0
  %1426 = vmatpush1.msra.mxu0 0.0
  %1427 = vmatprep.subr.mxu0 0.0
  %1428 = vmatpush1.msra.mxu0 0.0
  %1429 = vmatprep.subr.mxu0 0.0
  %1430 = vmatpush1.msra.mxu0 0.0
  %1431 = vmatprep.subr.mxu0 0.0
  %1432 = vmatpush1.msra.mxu0 0.0
  %1433 = vmatprep.subr.mxu0 0.0
  %1434 = vmatpush1.msra.mxu0 0.0
  %1435 = vmatprep.subr.mxu0 0.0
  %1436 = vmatpush1.msra.mxu0 0.0
  %1437 = vmatprep.mubr.f32.mxu0 0.0
  %1438 = vmatmul.mubr.f32.gmra.mrb[0].mxu0 %v1371
  %v1439 = vpop.f32.mrb[0].mxu0
  %v1440 = vadd.f32 0.0, %v1439
  %v1441 = vpop.f32.mrb[0].mxu0
  %1442 = vdwg.mxu0
  %1445 = vrot.lane.b32.xlu0 %v704, 8
  %v1446 = vpop.permute.xlu0 %1445
  %1447 = vrot.lane.b32.xlu0 %v780, 8
  %v1448 = vpop.permute.xlu0 %1447
  %1453 = vrot.lane.b32.xlu0 %v1034, 16
  %v1454 = vpop.permute.xlu0 %1453
  %1455 = vrot.lane.b32.xlu0 %v1110, 16
  %v1456 = vpop.permute.xlu0 %1455
  %1461 = vrot.lane.b32.xlu0 %v1364, 24
  %v1462 = vpop.permute.xlu0 %1461
  %1463 = vrot.lane.b32.xlu0 %v1440, 24
  %v1464 = vpop.permute.xlu0 %1463
  %v1467 = vsel %vm127, %v374, %v1446
  %v1468 = vsel %vm127, %v450, %v1448
  %vm1469 = vcmask 130048
  %v1470 = vsel %vm1469, %v1467, %v1454
  %v1471 = vsel %vm1469, %v1468, %v1456
  %vm1472 = vcmask 195584
  %v1473 = vsel %vm1472, %v1470, %v1462
  %v1474 = vsel %vm1472, %v1471, %v1464
  %v1475 = vpack.c.bf16 %v1474, %v1473
  %v1476 = vld [vmem:[%s3] sm:$0xf]
  %v1477 = vld [vmem:[%s3 + $0x4] sm:$0xf]
  %v1478 = vld [vmem:[%s3 + $0x8] sm:$0xf]
  %v1479 = vld [vmem:[%s3 + $0xc] sm:$0xf]
  %v1480 = vld [vmem:[%s4] sm:$0x1]
  %v1482 = vlaneseq
  %v1483 = vshrl.u32 %v1482, 7
  %v1484 = vsub.s32 0, %v1483
  %v1485 = vrot.slane %v1480, %v1484
  %v1491 = vunpack.c.l.b16 %v1476
  %v1492 = vunpack.c.l.b16 %v1477
  %v1493 = vunpack.c.l.b16 %v1478
  %v1494 = vunpack.c.l.b16 %v1479
  %v1495 = vpack.c.b16 %v1492, %v1491
  %v1496 = vpack.c.b16 %v1494, %v1493
  %v1500 = vsel %vm79, %v1475, 0
  %1502 = vmatprep.subr.bf16.mxu0 0
  %1503 = vmatpush1.bf16.msra.mxu0 %v1495
  %1504 = vmatprep.subr.bf16.mxu0 0
  %1505 = vmatpush1.bf16.msra.mxu0 %v1496
  %1506 = vmatprep.subr.bf16.mxu0 0
  %1507 = vmatpush1.bf16.msra.mxu0 0
  %1508 = vmatprep.subr.bf16.mxu0 0
  %1509 = vmatpush1.bf16.msra.mxu0 0
  %1510 = vmatprep.subr.bf16.mxu0 0
  %1511 = vmatpush1.bf16.msra.mxu0 0
  %1512 = vmatprep.subr.bf16.mxu0 0
  %1513 = vmatpush1.bf16.msra.mxu0 0
  %1514 = vmatprep.subr.bf16.mxu0 0
  %1515 = vmatpush1.bf16.msra.mxu0 0
  %1516 = vmatprep.subr.bf16.mxu0 0
  %1517 = vmatpush1.bf16.msra.mxu0 0
  %1518 = vmatprep.subr.bf16.mxu0 0
  %1519 = vmatpush1.bf16.msra.mxu0 0
  %1520 = vmatprep.subr.bf16.mxu0 0
  %1521 = vmatpush1.bf16.msra.mxu0 0
  %1522 = vmatprep.subr.bf16.mxu0 0
  %1523 = vmatpush1.bf16.msra.mxu0 0
  %1524 = vmatprep.subr.bf16.mxu0 0
  %1525 = vmatpush1.bf16.msra.mxu0 0
  %1526 = vmatprep.subr.bf16.mxu0 0
  %1527 = vmatpush1.bf16.msra.mxu0 0
  %1528 = vmatprep.subr.bf16.mxu0 0
  %1529 = vmatpush1.bf16.msra.mxu0 0
  %1530 = vmatprep.subr.bf16.mxu0 0
  %1531 = vmatpush1.bf16.msra.mxu0 0
  %1532 = vmatprep.subr.bf16.mxu0 0
  %1533 = vmatpush1.bf16.msra.mxu0 0
  %1534 = vmatprep.mubr.bf16.mxu0 0
  %1535 = vmatmul.mubr.bf16.gmra.mrb[0].mxu0 %v1500
  %v1536 = vpop.f32.mrb[0].mxu0
  %v1537 = vadd.f32 %v1485, %v1536
  %v1538 = vpop.f32.mrb[0].mxu0
  %v1539 = vpop.f32.mrb[0].mxu0
  %v1540 = vadd.f32 %v1485, %v1539
  %v1541 = vpop.f32.mrb[0].mxu0
  %1542 = vdwg.mxu0
  %v1543 = vadd.f32 %v53, %v1537
  %v1544 = vadd.f32 %v54, %v1540
  %v1545 = vsel %vm79, %v1543, 0.0
  %1546 = vadd.xlane.f32.xlu0 %v1545
  %v1547 = vpop.xlane.xlu0 %1546
  %v1548 = vsel %vm79, %v1544, 0.0
  %1549 = vadd.xlane.f32.xlu0 %v1548
  %v1550 = vpop.xlane.xlu0 %1549
  %v1551 = vrcp.pop 32.0
  %v1552 = vmul.f32 %v1547, %v1551
  %v1553 = vmul.f32 %v1550, %v1551
  %v1554 = vsub.f32 %v1543, %v1552
  %v1555 = vsub.f32 %v1544, %v1553
  %v1556 = vmul.f32 %v1554, %v1554
  %v1557 = vmul.f32 %v1555, %v1555
  %v1558 = vsel %vm79, %v1556, 0.0
  %1559 = vadd.xlane.f32.xlu0 %v1558
  %v1560 = vpop.xlane.xlu0 %1559
  %v1561 = vsel %vm79, %v1557, 0.0
  %1562 = vadd.xlane.f32.xlu0 %v1561
  %v1563 = vpop.xlane.xlu0 %1562
  %v1564 = vmul.f32 %v1560, %v1551
  %v1565 = vmul.f32 %v1563, %v1551
  %v1566 = vadd.f32 %v1564, 1e-05
  %v1567 = vadd.f32 %v1565, 1e-05
  %v1568 = vrsqrt.pop %v1566
  %v1569 = vrsqrt.pop %v1567
  %v1570 = vmul.f32 %v1554, %v1568
  %v1571 = vmul.f32 %v1555, %v1569
  %v1572 = vld [vmem:[%s5] sm:$0x1]
  %v1574 = vlaneseq
  %v1575 = vshrl.u32 %v1574, 7
  %v1576 = vsub.s32 0, %v1575
  %v1577 = vrot.slane %v1572, %v1576
  %v1579 = vmul.f32 %v1570, %v1577
  %v1580 = vmul.f32 %v1571, %v1577
  %v1581 = vld [vmem:[%s6] sm:$0x1]
  %v1583 = vlaneseq
  %v1584 = vshrl.u32 %v1583, 7
  %v1585 = vsub.s32 0, %v1584
  %v1586 = vrot.slane %v1581, %v1585
  %v1588 = vadd.f32 %v1579, %v1586
  %v1589 = vadd.f32 %v1580, %v1586
  %v1590 = vpack.c.bf16 %v1589, %v1588
  %v1591 = vld [vmem:[%s7] sm:$0xff]
  %v1592 = vld [vmem:[%s7 + $0x8] sm:$0xff]
  %v1593 = vld [vmem:[%s7 + $0x10] sm:$0xff]
  %v1594 = vld [vmem:[%s7 + $0x18] sm:$0xff]
  %v1595 = vld [vmem:[%s7 + $0x20] sm:$0xff]
  %v1596 = vld [vmem:[%s7 + $0x28] sm:$0xff]
  %v1597 = vld [vmem:[%s7 + $0x30] sm:$0xff]
  %v1598 = vld [vmem:[%s7 + $0x38] sm:$0xff]
  %v1599 = vld [vmem:[%s7 + $0x40] sm:$0xff]
  %v1600 = vld [vmem:[%s7 + $0x48] sm:$0xff]
  %v1601 = vld [vmem:[%s7 + $0x50] sm:$0xff]
  %v1602 = vld [vmem:[%s7 + $0x58] sm:$0xff]
  %v1603 = vld [vmem:[%s7 + $0x60] sm:$0xff]
  %v1604 = vld [vmem:[%s7 + $0x68] sm:$0xff]
  %v1605 = vld [vmem:[%s7 + $0x70] sm:$0xff]
  %v1606 = vld [vmem:[%s7 + $0x78] sm:$0xff]
  %v1607 = vld [vmem:[%s7 + $0x80] sm:$0xff]
  %v1608 = vld [vmem:[%s7 + $0x88] sm:$0xff]
  %v1609 = vld [vmem:[%s7 + $0x90] sm:$0xff]
  %v1610 = vld [vmem:[%s7 + $0x98] sm:$0xff]
  %v1611 = vld [vmem:[%s7 + $0xa0] sm:$0xff]
  %v1612 = vld [vmem:[%s7 + $0xa8] sm:$0xff]
  %v1613 = vld [vmem:[%s7 + $0xb0] sm:$0xff]
  %v1614 = vld [vmem:[%s7 + $0xb8] sm:$0xff]
  %v1615 = vld [vmem:[%s7 + $0xc0] sm:$0xff]
  %v1616 = vld [vmem:[%s7 + $0xc8] sm:$0xff]
  %v1617 = vld [vmem:[%s7 + $0xd0] sm:$0xff]
  %v1618 = vld [vmem:[%s7 + $0xd8] sm:$0xff]
  %v1619 = vld [vmem:[%s7 + $0xe0] sm:$0xff]
  %v1620 = vld [vmem:[%s7 + $0xe8] sm:$0xff]
  %v1621 = vld [vmem:[%s7 + $0xf0] sm:$0xff]
  %v1622 = vld [vmem:[%s7 + $0xf8] sm:$0xff]
  %v1623 = vld [vmem:[%s8] sm:$0xff]
  %v1624 = vld [vmem:[%s8 + $0x8] sm:$0xff]
  %v1627 = vlaneseq
  %v1628 = vshrl.u32 %v1627, 7
  %v1629 = vsub.s32 0, %v1628
  %v1630 = vrot.slane %v1623, %v1629
  %v1631 = vlaneseq
  %v1632 = vshrl.u32 %v1631, 7
  %v1633 = vsub.s32 1, %v1632
  %v1634 = vrot.slane %v1623, %v1633
  %v1635 = vlaneseq
  %v1636 = vshrl.u32 %v1635, 7
  %v1637 = vsub.s32 2, %v1636
  %v1638 = vrot.slane %v1623, %v1637
  %v1639 = vlaneseq
  %v1640 = vshrl.u32 %v1639, 7
  %v1641 = vsub.s32 3, %v1640
  %v1642 = vrot.slane %v1623, %v1641
  %v1643 = vlaneseq
  %v1644 = vshrl.u32 %v1643, 7
  %v1645 = vsub.s32 4, %v1644
  %v1646 = vrot.slane %v1623, %v1645
  %v1647 = vlaneseq
  %v1648 = vshrl.u32 %v1647, 7
  %v1649 = vsub.s32 5, %v1648
  %v1650 = vrot.slane %v1623, %v1649
  %v1651 = vlaneseq
  %v1652 = vshrl.u32 %v1651, 7
  %v1653 = vsub.s32 6, %v1652
  %v1654 = vrot.slane %v1623, %v1653
  %v1655 = vlaneseq
  %v1656 = vshrl.u32 %v1655, 7
  %v1657 = vsub.s32 7, %v1656
  %v1658 = vrot.slane %v1623, %v1657
  %v1659 = vlaneseq
  %v1660 = vshrl.u32 %v1659, 7
  %v1661 = vsub.s32 0, %v1660
  %v1662 = vrot.slane %v1624, %v1661
  %v1663 = vlaneseq
  %v1664 = vshrl.u32 %v1663, 7
  %v1665 = vsub.s32 1, %v1664
  %v1666 = vrot.slane %v1624, %v1665
  %v1667 = vlaneseq
  %v1668 = vshrl.u32 %v1667, 7
  %v1669 = vsub.s32 2, %v1668
  %v1670 = vrot.slane %v1624, %v1669
  %v1671 = vlaneseq
  %v1672 = vshrl.u32 %v1671, 7
  %v1673 = vsub.s32 3, %v1672
  %v1674 = vrot.slane %v1624, %v1673
  %v1675 = vlaneseq
  %v1676 = vshrl.u32 %v1675, 7
  %v1677 = vsub.s32 4, %v1676
  %v1678 = vrot.slane %v1624, %v1677
  %v1679 = vlaneseq
  %v1680 = vshrl.u32 %v1679, 7
  %v1681 = vsub.s32 5, %v1680
  %v1682 = vrot.slane %v1624, %v1681
  %v1683 = vlaneseq
  %v1684 = vshrl.u32 %v1683, 7
  %v1685 = vsub.s32 6, %v1684
  %v1686 = vrot.slane %v1624, %v1685
  %v1687 = vlaneseq
  %v1688 = vshrl.u32 %v1687, 7
  %v1689 = vsub.s32 7, %v1688
  %v1690 = vrot.slane %v1624, %v1689
  %v1739 = vunpack.c.l.b16 %v1591
  %v1740 = vunpack.c.h.b16 %v1591
  %v1741 = vunpack.c.l.b16 %v1592
  %v1742 = vunpack.c.h.b16 %v1592
  %v1743 = vunpack.c.l.b16 %v1593
  %v1744 = vunpack.c.h.b16 %v1593
  %v1745 = vunpack.c.l.b16 %v1594
  %v1746 = vunpack.c.h.b16 %v1594
  %v1747 = vunpack.c.l.b16 %v1595
  %v1748 = vunpack.c.h.b16 %v1595
  %v1749 = vunpack.c.l.b16 %v1596
  %v1750 = vunpack.c.h.b16 %v1596
  %v1751 = vunpack.c.l.b16 %v1597
  %v1752 = vunpack.c.h.b16 %v1597
  %v1753 = vunpack.c.l.b16 %v1598
  %v1754 = vunpack.c.h.b16 %v1598
  %v1755 = vunpack.c.l.b16 %v1599
  %v1756 = vunpack.c.h.b16 %v1599
  %v1757 = vunpack.c.l.b16 %v1600
  %v1758 = vunpack.c.h.b16 %v1600
  %v1759 = vunpack.c.l.b16 %v1601
  %v1760 = vunpack.c.h.b16 %v1601
  %v1761 = vunpack.c.l.b16 %v1602
  %v1762 = vunpack.c.h.b16 %v1602
  %v1763 = vunpack.c.l.b16 %v1603
  %v1764 = vunpack.c.h.b16 %v1603
  %v1765 = vunpack.c.l.b16 %v1604
  %v1766 = vunpack.c.h.b16 %v1604
  %v1767 = vunpack.c.l.b16 %v1605
  %v1768 = vunpack.c.h.b16 %v1605
  %v1769 = vunpack.c.l.b16 %v1606
  %v1770 = vunpack.c.h.b16 %v1606
  %v1771 = vunpack.c.l.b16 %v1607
  %v1772 = vunpack.c.h.b16 %v1607
  %v1773 = vunpack.c.l.b16 %v1608
  %v1774 = vunpack.c.h.b16 %v1608
  %v1775 = vunpack.c.l.b16 %v1609
  %v1776 = vunpack.c.h.b16 %v1609
  %v1777 = vunpack.c.l.b16 %v1610
  %v1778 = vunpack.c.h.b16 %v1610
  %v1779 = vunpack.c.l.b16 %v1611
  %v1780 = vunpack.c.h.b16 %v1611
  %v1781 = vunpack.c.l.b16 %v1612
  %v1782 = vunpack.c.h.b16 %v1612
  %v1783 = vunpack.c.l.b16 %v1613
  %v1784 = vunpack.c.h.b16 %v1613
  %v1785 = vunpack.c.l.b16 %v1614
  %v1786 = vunpack.c.h.b16 %v1614
  %v1787 = vunpack.c.l.b16 %v1615
  %v1788 = vunpack.c.h.b16 %v1615
  %v1789 = vunpack.c.l.b16 %v1616
  %v1790 = vunpack.c.h.b16 %v1616
  %v1791 = vunpack.c.l.b16 %v1617
  %v1792 = vunpack.c.h.b16 %v1617
  %v1793 = vunpack.c.l.b16 %v1618
  %v1794 = vunpack.c.h.b16 %v1618
  %v1795 = vunpack.c.l.b16 %v1619
  %v1796 = vunpack.c.h.b16 %v1619
  %v1797 = vunpack.c.l.b16 %v1620
  %v1798 = vunpack.c.h.b16 %v1620
  %v1799 = vunpack.c.l.b16 %v1621
  %v1800 = vunpack.c.h.b16 %v1621
  %v1801 = vunpack.c.l.b16 %v1622
  %v1802 = vunpack.c.h.b16 %v1622
  %v1803 = vpack.c.b16 %v1755, %v1739
  %v1804 = vpack.c.b16 %v1756, %v1740
  %v1805 = vpack.c.b16 %v1757, %v1741
  %v1806 = vpack.c.b16 %v1758, %v1742
  %v1807 = vpack.c.b16 %v1759, %v1743
  %v1808 = vpack.c.b16 %v1760, %v1744
  %v1809 = vpack.c.b16 %v1761, %v1745
  %v1810 = vpack.c.b16 %v1762, %v1746
  %v1811 = vpack.c.b16 %v1763, %v1747
  %v1812 = vpack.c.b16 %v1764, %v1748
  %v1813 = vpack.c.b16 %v1765, %v1749
  %v1814 = vpack.c.b16 %v1766, %v1750
  %v1815 = vpack.c.b16 %v1767, %v1751
  %v1816 = vpack.c.b16 %v1768, %v1752
  %v1817 = vpack.c.b16 %v1769, %v1753
  %v1818 = vpack.c.b16 %v1770, %v1754
  %v1819 = vpack.c.b16 %v1787, %v1771
  %v1820 = vpack.c.b16 %v1788, %v1772
  %v1821 = vpack.c.b16 %v1789, %v1773
  %v1822 = vpack.c.b16 %v1790, %v1774
  %v1823 = vpack.c.b16 %v1791, %v1775
  %v1824 = vpack.c.b16 %v1792, %v1776
  %v1825 = vpack.c.b16 %v1793, %v1777
  %v1826 = vpack.c.b16 %v1794, %v1778
  %v1827 = vpack.c.b16 %v1795, %v1779
  %v1828 = vpack.c.b16 %v1796, %v1780
  %v1829 = vpack.c.b16 %v1797, %v1781
  %v1830 = vpack.c.b16 %v1798, %v1782
  %v1831 = vpack.c.b16 %v1799, %v1783
  %v1832 = vpack.c.b16 %v1800, %v1784
  %v1833 = vpack.c.b16 %v1801, %v1785
  %v1834 = vpack.c.b16 %v1802, %v1786
  %v1868 = vsel %vm79, %v1590, 0
  %1870 = vmatprep.subr.bf16.mxu0 %v1804
  %1871 = vmatpush1.bf16.msra.mxu0 %v1803
  %1872 = vmatprep.subr.bf16.mxu0 %v1820
  %1873 = vmatpush1.bf16.msra.mxu0 %v1819
  %1874 = vmatprep.subr.bf16.mxu0 0
  %1875 = vmatpush1.bf16.msra.mxu0 0
  %1876 = vmatprep.subr.bf16.mxu0 0
  %1877 = vmatpush1.bf16.msra.mxu0 0
  %1878 = vmatprep.subr.bf16.mxu0 0
  %1879 = vmatpush1.bf16.msra.mxu0 0
  %1880 = vmatprep.subr.bf16.mxu0 0
  %1881 = vmatpush1.bf16.msra.mxu0 0
  %1882 = vmatprep.subr.bf16.mxu0 0
  %1883 = vmatpush1.bf16.msra.mxu0 0
  %1884 = vmatprep.subr.bf16.mxu0 0
  %1885 = vmatpush1.bf16.msra.mxu0 0
  %1886 = vmatprep.subr.bf16.mxu0 0
  %1887 = vmatpush1.bf16.msra.mxu0 0
  %1888 = vmatprep.subr.bf16.mxu0 0
  %1889 = vmatpush1.bf16.msra.mxu0 0
  %1890 = vmatprep.subr.bf16.mxu0 0
  %1891 = vmatpush1.bf16.msra.mxu0 0
  %1892 = vmatprep.subr.bf16.mxu0 0
  %1893 = vmatpush1.bf16.msra.mxu0 0
  %1894 = vmatprep.subr.bf16.mxu0 0
  %1895 = vmatpush1.bf16.msra.mxu0 0
  %1896 = vmatprep.subr.bf16.mxu0 0
  %1897 = vmatpush1.bf16.msra.mxu0 0
  %1898 = vmatprep.subr.bf16.mxu0 0
  %1899 = vmatpush1.bf16.msra.mxu0 0
  %1900 = vmatprep.subr.bf16.mxu0 0
  %1901 = vmatpush1.bf16.msra.mxu0 0
  %1902 = vmatprep.mubr.bf16.mxu0 0
  %1903 = vmatmul.mubr.bf16.gmra.mrb[0].mxu0 %v1868
  %v1904 = vpop.f32.mrb[0].mxu0
  %v1905 = vadd.f32 %v1630, %v1904
  %v1906 = vpop.f32.mrb[0].mxu0
  %v1907 = vadd.f32 %v1634, %v1906
  %v1908 = vpop.f32.mrb[0].mxu0
  %v1909 = vadd.f32 %v1630, %v1908
  %v1910 = vpop.f32.mrb[0].mxu0
  %v1911 = vadd.f32 %v1634, %v1910
  %1912 = vdwg.mxu0
  %1913 = vmatprep.subr.bf16.mxu0 %v1806
  %1914 = vmatpush1.bf16.msra.mxu0 %v1805
  %1915 = vmatprep.subr.bf16.mxu0 %v1822
  %1916 = vmatpush1.bf16.msra.mxu0 %v1821
  %1917 = vmatprep.subr.bf16.mxu0 0
  %1918 = vmatpush1.bf16.msra.mxu0 0
  %1919 = vmatprep.subr.bf16.mxu0 0
  %1920 = vmatpush1.bf16.msra.mxu0 0
  %1921 = vmatprep.subr.bf16.mxu0 0
  %1922 = vmatpush1.bf16.msra.mxu0 0
  %1923 = vmatprep.subr.bf16.mxu0 0
  %1924 = vmatpush1.bf16.msra.mxu0 0
  %1925 = vmatprep.subr.bf16.mxu0 0
  %1926 = vmatpush1.bf16.msra.mxu0 0
  %1927 = vmatprep.subr.bf16.mxu0 0
  %1928 = vmatpush1.bf16.msra.mxu0 0
  %1929 = vmatprep.subr.bf16.mxu0 0
  %1930 = vmatpush1.bf16.msra.mxu0 0
  %1931 = vmatprep.subr.bf16.mxu0 0
  %1932 = vmatpush1.bf16.msra.mxu0 0
  %1933 = vmatprep.subr.bf16.mxu0 0
  %1934 = vmatpush1.bf16.msra.mxu0 0
  %1935 = vmatprep.subr.bf16.mxu0 0
  %1936 = vmatpush1.bf16.msra.mxu0 0
  %1937 = vmatprep.subr.bf16.mxu0 0
  %1938 = vmatpush1.bf16.msra.mxu0 0
  %1939 = vmatprep.subr.bf16.mxu0 0
  %1940 = vmatpush1.bf16.msra.mxu0 0
  %1941 = vmatprep.subr.bf16.mxu0 0
  %1942 = vmatpush1.bf16.msra.mxu0 0
  %1943 = vmatprep.subr.bf16.mxu0 0
  %1944 = vmatpush1.bf16.msra.mxu0 0
  %1945 = vmatprep.mubr.bf16.mxu0 0
  %1946 = vmatmul.mubr.bf16.gmra.mrb[0].mxu0 %v1868
  %v1947 = vpop.f32.mrb[0].mxu0
  %v1948 = vadd.f32 %v1638, %v1947
  %v1949 = vpop.f32.mrb[0].mxu0
  %v1950 = vadd.f32 %v1642, %v1949
  %v1951 = vpop.f32.mrb[0].mxu0
  %v1952 = vadd.f32 %v1638, %v1951
  %v1953 = vpop.f32.mrb[0].mxu0
  %v1954 = vadd.f32 %v1642, %v1953
  %1955 = vdwg.mxu0
  %1956 = vmatprep.subr.bf16.mxu0 %v1808
  %1957 = vmatpush1.bf16.msra.mxu0 %v1807
  %1958 = vmatprep.subr.bf16.mxu0 %v1824
  %1959 = vmatpush1.bf16.msra.mxu0 %v1823
  %1960 = vmatprep.subr.bf16.mxu0 0
  %1961 = vmatpush1.bf16.msra.mxu0 0
  %1962 = vmatprep.subr.bf16.mxu0 0
  %1963 = vmatpush1.bf16.msra.mxu0 0
  %1964 = vmatprep.subr.bf16.mxu0 0
  %1965 = vmatpush1.bf16.msra.mxu0 0
  %1966 = vmatprep.subr.bf16.mxu0 0
  %1967 = vmatpush1.bf16.msra.mxu0 0
  %1968 = vmatprep.subr.bf16.mxu0 0
  %1969 = vmatpush1.bf16.msra.mxu0 0
  %1970 = vmatprep.subr.bf16.mxu0 0
  %1971 = vmatpush1.bf16.msra.mxu0 0
  %1972 = vmatprep.subr.bf16.mxu0 0
  %1973 = vmatpush1.bf16.msra.mxu0 0
  %1974 = vmatprep.subr.bf16.mxu0 0
  %1975 = vmatpush1.bf16.msra.mxu0 0
  %1976 = vmatprep.subr.bf16.mxu0 0
  %1977 = vmatpush1.bf16.msra.mxu0 0
  %1978 = vmatprep.subr.bf16.mxu0 0
  %1979 = vmatpush1.bf16.msra.mxu0 0
  %1980 = vmatprep.subr.bf16.mxu0 0
  %1981 = vmatpush1.bf16.msra.mxu0 0
  %1982 = vmatprep.subr.bf16.mxu0 0
  %1983 = vmatpush1.bf16.msra.mxu0 0
  %1984 = vmatprep.subr.bf16.mxu0 0
  %1985 = vmatpush1.bf16.msra.mxu0 0
  %1986 = vmatprep.subr.bf16.mxu0 0
  %1987 = vmatpush1.bf16.msra.mxu0 0
  %1988 = vmatprep.mubr.bf16.mxu0 0
  %1989 = vmatmul.mubr.bf16.gmra.mrb[0].mxu0 %v1868
  %v1990 = vpop.f32.mrb[0].mxu0
  %v1991 = vadd.f32 %v1646, %v1990
  %v1992 = vpop.f32.mrb[0].mxu0
  %v1993 = vadd.f32 %v1650, %v1992
  %v1994 = vpop.f32.mrb[0].mxu0
  %v1995 = vadd.f32 %v1646, %v1994
  %v1996 = vpop.f32.mrb[0].mxu0
  %v1997 = vadd.f32 %v1650, %v1996
  %1998 = vdwg.mxu0
  %1999 = vmatprep.subr.bf16.mxu0 %v1810
  %2000 = vmatpush1.bf16.msra.mxu0 %v1809
  %2001 = vmatprep.subr.bf16.mxu0 %v1826
  %2002 = vmatpush1.bf16.msra.mxu0 %v1825
  %2003 = vmatprep.subr.bf16.mxu0 0
  %2004 = vmatpush1.bf16.msra.mxu0 0
  %2005 = vmatprep.subr.bf16.mxu0 0
  %2006 = vmatpush1.bf16.msra.mxu0 0
  %2007 = vmatprep.subr.bf16.mxu0 0
  %2008 = vmatpush1.bf16.msra.mxu0 0
  %2009 = vmatprep.subr.bf16.mxu0 0
  %2010 = vmatpush1.bf16.msra.mxu0 0
  %2011 = vmatprep.subr.bf16.mxu0 0
  %2012 = vmatpush1.bf16.msra.mxu0 0
  %2013 = vmatprep.subr.bf16.mxu0 0
  %2014 = vmatpush1.bf16.msra.mxu0 0
  %2015 = vmatprep.subr.bf16.mxu0 0
  %2016 = vmatpush1.bf16.msra.mxu0 0
  %2017 = vmatprep.subr.bf16.mxu0 0
  %2018 = vmatpush1.bf16.msra.mxu0 0
  %2019 = vmatprep.subr.bf16.mxu0 0
  %2020 = vmatpush1.bf16.msra.mxu0 0
  %2021 = vmatprep.subr.bf16.mxu0 0
  %2022 = vmatpush1.bf16.msra.mxu0 0
  %2023 = vmatprep.subr.bf16.mxu0 0
  %2024 = vmatpush1.bf16.msra.mxu0 0
  %2025 = vmatprep.subr.bf16.mxu0 0
  %2026 = vmatpush1.bf16.msra.mxu0 0
  %2027 = vmatprep.subr.bf16.mxu0 0
  %2028 = vmatpush1.bf16.msra.mxu0 0
  %2029 = vmatprep.subr.bf16.mxu0 0
  %2030 = vmatpush1.bf16.msra.mxu0 0
  %2031 = vmatprep.mubr.bf16.mxu0 0
  %2032 = vmatmul.mubr.bf16.gmra.mrb[0].mxu0 %v1868
  %v2033 = vpop.f32.mrb[0].mxu0
  %v2034 = vadd.f32 %v1654, %v2033
  %v2035 = vpop.f32.mrb[0].mxu0
  %v2036 = vadd.f32 %v1658, %v2035
  %v2037 = vpop.f32.mrb[0].mxu0
  %v2038 = vadd.f32 %v1654, %v2037
  %v2039 = vpop.f32.mrb[0].mxu0
  %v2040 = vadd.f32 %v1658, %v2039
  %2041 = vdwg.mxu0
  %2042 = vmatprep.subr.bf16.mxu0 %v1812
  %2043 = vmatpush1.bf16.msra.mxu0 %v1811
  %2044 = vmatprep.subr.bf16.mxu0 %v1828
  %2045 = vmatpush1.bf16.msra.mxu0 %v1827
  %2046 = vmatprep.subr.bf16.mxu0 0
  %2047 = vmatpush1.bf16.msra.mxu0 0
  %2048 = vmatprep.subr.bf16.mxu0 0
  %2049 = vmatpush1.bf16.msra.mxu0 0
  %2050 = vmatprep.subr.bf16.mxu0 0
  %2051 = vmatpush1.bf16.msra.mxu0 0
  %2052 = vmatprep.subr.bf16.mxu0 0
  %2053 = vmatpush1.bf16.msra.mxu0 0
  %2054 = vmatprep.subr.bf16.mxu0 0
  %2055 = vmatpush1.bf16.msra.mxu0 0
  %2056 = vmatprep.subr.bf16.mxu0 0
  %2057 = vmatpush1.bf16.msra.mxu0 0
  %2058 = vmatprep.subr.bf16.mxu0 0
  %2059 = vmatpush1.bf16.msra.mxu0 0
  %2060 = vmatprep.subr.bf16.mxu0 0
  %2061 = vmatpush1.bf16.msra.mxu0 0
  %2062 = vmatprep.subr.bf16.mxu0 0
  %2063 = vmatpush1.bf16.msra.mxu0 0
  %2064 = vmatprep.subr.bf16.mxu0 0
  %2065 = vmatpush1.bf16.msra.mxu0 0
  %2066 = vmatprep.subr.bf16.mxu0 0
  %2067 = vmatpush1.bf16.msra.mxu0 0
  %2068 = vmatprep.subr.bf16.mxu0 0
  %2069 = vmatpush1.bf16.msra.mxu0 0
  %2070 = vmatprep.subr.bf16.mxu0 0
  %2071 = vmatpush1.bf16.msra.mxu0 0
  %2072 = vmatprep.subr.bf16.mxu0 0
  %2073 = vmatpush1.bf16.msra.mxu0 0
  %2074 = vmatprep.mubr.bf16.mxu0 0
  %2075 = vmatmul.mubr.bf16.gmra.mrb[0].mxu0 %v1868
  %v2076 = vpop.f32.mrb[0].mxu0
  %v2077 = vadd.f32 %v1662, %v2076
  %v2078 = vpop.f32.mrb[0].mxu0
  %v2079 = vadd.f32 %v1666, %v2078
  %v2080 = vpop.f32.mrb[0].mxu0
  %v2081 = vadd.f32 %v1662, %v2080
  %v2082 = vpop.f32.mrb[0].mxu0
  %v2083 = vadd.f32 %v1666, %v2082
  %2084 = vdwg.mxu0
  %2085 = vmatprep.subr.bf16.mxu0 %v1814
  %2086 = vmatpush1.bf16.msra.mxu0 %v1813
  %2087 = vmatprep.subr.bf16.mxu0 %v1830
  %2088 = vmatpush1.bf16.msra.mxu0 %v1829
  %2089 = vmatprep.subr.bf16.mxu0 0
  %2090 = vmatpush1.bf16.msra.mxu0 0
  %2091 = vmatprep.subr.bf16.mxu0 0
  %2092 = vmatpush1.bf16.msra.mxu0 0
  %2093 = vmatprep.subr.bf16.mxu0 0
  %2094 = vmatpush1.bf16.msra.mxu0 0
  %2095 = vmatprep.subr.bf16.mxu0 0
  %2096 = vmatpush1.bf16.msra.mxu0 0
  %2097 = vmatprep.subr.bf16.mxu0 0
  %2098 = vmatpush1.bf16.msra.mxu0 0
  %2099 = vmatprep.subr.bf16.mxu0 0
  %2100 = vmatpush1.bf16.msra.mxu0 0
  %2101 = vmatprep.subr.bf16.mxu0 0
  %2102 = vmatpush1.bf16.msra.mxu0 0
  %2103 = vmatprep.subr.bf16.mxu0 0
  %2104 = vmatpush1.bf16.msra.mxu0 0
  %2105 = vmatprep.subr.bf16.mxu0 0
  %2106 = vmatpush1.bf16.msra.mxu0 0
  %2107 = vmatprep.subr.bf16.mxu0 0
  %2108 = vmatpush1.bf16.msra.mxu0 0
  %2109 = vmatprep.subr.bf16.mxu0 0
  %2110 = vmatpush1.bf16.msra.mxu0 0
  %2111 = vmatprep.subr.bf16.mxu0 0
  %2112 = vmatpush1.bf16.msra.mxu0 0
  %2113 = vmatprep.subr.bf16.mxu0 0
  %2114 = vmatpush1.bf16.msra.mxu0 0
  %2115 = vmatprep.subr.bf16.mxu0 0
  %2116 = vmatpush1.bf16.msra.mxu0 0
  %2117 = vmatprep.mubr.bf16.mxu0 0
  %2118 = vmatmul.mubr.bf16.gmra.mrb[0].mxu0 %v1868
  %v2119 = vpop.f32.mrb[0].mxu0
  %v2120 = vadd.f32 %v1670, %v2119
  %v2121 = vpop.f32.mrb[0].mxu0
  %v2122 = vadd.f32 %v1674, %v2121
  %v2123 = vpop.f32.mrb[0].mxu0
  %v2124 = vadd.f32 %v1670, %v2123
  %v2125 = vpop.f32.mrb[0].mxu0
  %v2126 = vadd.f32 %v1674, %v2125
  %2127 = vdwg.mxu0
  %2128 = vmatprep.subr.bf16.mxu0 %v1816
  %2129 = vmatpush1.bf16.msra.mxu0 %v1815
  %2130 = vmatprep.subr.bf16.mxu0 %v1832
  %2131 = vmatpush1.bf16.msra.mxu0 %v1831
  %2132 = vmatprep.subr.bf16.mxu0 0
  %2133 = vmatpush1.bf16.msra.mxu0 0
  %2134 = vmatprep.subr.bf16.mxu0 0
  %2135 = vmatpush1.bf16.msra.mxu0 0
  %2136 = vmatprep.subr.bf16.mxu0 0
  %2137 = vmatpush1.bf16.msra.mxu0 0
  %2138 = vmatprep.subr.bf16.mxu0 0
  %2139 = vmatpush1.bf16.msra.mxu0 0
  %2140 = vmatprep.subr.bf16.mxu0 0
  %2141 = vmatpush1.bf16.msra.mxu0 0
  %2142 = vmatprep.subr.bf16.mxu0 0
  %2143 = vmatpush1.bf16.msra.mxu0 0
  %2144 = vmatprep.subr.bf16.mxu0 0
  %2145 = vmatpush1.bf16.msra.mxu0 0
  %2146 = vmatprep.subr.bf16.mxu0 0
  %2147 = vmatpush1.bf16.msra.mxu0 0
  %2148 = vmatprep.subr.bf16.mxu0 0
  %2149 = vmatpush1.bf16.msra.mxu0 0
  %2150 = vmatprep.subr.bf16.mxu0 0
  %2151 = vmatpush1.bf16.msra.mxu0 0
  %2152 = vmatprep.subr.bf16.mxu0 0
  %2153 = vmatpush1.bf16.msra.mxu0 0
  %2154 = vmatprep.subr.bf16.mxu0 0
  %2155 = vmatpush1.bf16.msra.mxu0 0
  %2156 = vmatprep.subr.bf16.mxu0 0
  %2157 = vmatpush1.bf16.msra.mxu0 0
  %2158 = vmatprep.subr.bf16.mxu0 0
  %2159 = vmatpush1.bf16.msra.mxu0 0
  %2160 = vmatprep.mubr.bf16.mxu0 0
  %2161 = vmatmul.mubr.bf16.gmra.mrb[0].mxu0 %v1868
  %v2162 = vpop.f32.mrb[0].mxu0
  %v2163 = vadd.f32 %v1678, %v2162
  %v2164 = vpop.f32.mrb[0].mxu0
  %v2165 = vadd.f32 %v1682, %v2164
  %v2166 = vpop.f32.mrb[0].mxu0
  %v2167 = vadd.f32 %v1678, %v2166
  %v2168 = vpop.f32.mrb[0].mxu0
  %v2169 = vadd.f32 %v1682, %v2168
  %2170 = vdwg.mxu0
  %2171 = vmatprep.subr.bf16.mxu0 %v1818
  %2172 = vmatpush1.bf16.msra.mxu0 %v1817
  %2173 = vmatprep.subr.bf16.mxu0 %v1834
  %2174 = vmatpush1.bf16.msra.mxu0 %v1833
  %2175 = vmatprep.subr.bf16.mxu0 0
  %2176 = vmatpush1.bf16.msra.mxu0 0
  %2177 = vmatprep.subr.bf16.mxu0 0
  %2178 = vmatpush1.bf16.msra.mxu0 0
  %2179 = vmatprep.subr.bf16.mxu0 0
  %2180 = vmatpush1.bf16.msra.mxu0 0
  %2181 = vmatprep.subr.bf16.mxu0 0
  %2182 = vmatpush1.bf16.msra.mxu0 0
  %2183 = vmatprep.subr.bf16.mxu0 0
  %2184 = vmatpush1.bf16.msra.mxu0 0
  %2185 = vmatprep.subr.bf16.mxu0 0
  %2186 = vmatpush1.bf16.msra.mxu0 0
  %2187 = vmatprep.subr.bf16.mxu0 0
  %2188 = vmatpush1.bf16.msra.mxu0 0
  %2189 = vmatprep.subr.bf16.mxu0 0
  %2190 = vmatpush1.bf16.msra.mxu0 0
  %2191 = vmatprep.subr.bf16.mxu0 0
  %2192 = vmatpush1.bf16.msra.mxu0 0
  %2193 = vmatprep.subr.bf16.mxu0 0
  %2194 = vmatpush1.bf16.msra.mxu0 0
  %2195 = vmatprep.subr.bf16.mxu0 0
  %2196 = vmatpush1.bf16.msra.mxu0 0
  %2197 = vmatprep.subr.bf16.mxu0 0
  %2198 = vmatpush1.bf16.msra.mxu0 0
  %2199 = vmatprep.subr.bf16.mxu0 0
  %2200 = vmatpush1.bf16.msra.mxu0 0
  %2201 = vmatprep.subr.bf16.mxu0 0
  %2202 = vmatpush1.bf16.msra.mxu0 0
  %2203 = vmatprep.mubr.bf16.mxu0 0
  %2204 = vmatmul.mubr.bf16.gmra.mrb[0].mxu0 %v1868
  %v2205 = vpop.f32.mrb[0].mxu0
  %v2206 = vadd.f32 %v1686, %v2205
  %v2207 = vpop.f32.mrb[0].mxu0
  %v2208 = vadd.f32 %v1690, %v2207
  %v2209 = vpop.f32.mrb[0].mxu0
  %v2210 = vadd.f32 %v1686, %v2209
  %v2211 = vpop.f32.mrb[0].mxu0
  %v2212 = vadd.f32 %v1690, %v2211
  %2213 = vdwg.mxu0
  %v2214 = vmax.f32 %v1905, 0.0
  %v2215 = vmax.f32 %v1907, 0.0
  %v2216 = vmax.f32 %v1948, 0.0
  %v2217 = vmax.f32 %v1950, 0.0
  %v2218 = vmax.f32 %v1991, 0.0
  %v2219 = vmax.f32 %v1993, 0.0
  %v2220 = vmax.f32 %v2034, 0.0
  %v2221 = vmax.f32 %v2036, 0.0
  %v2222 = vmax.f32 %v2077, 0.0
  %v2223 = vmax.f32 %v2079, 0.0
  %v2224 = vmax.f32 %v2120, 0.0
  %v2225 = vmax.f32 %v2122, 0.0
  %v2226 = vmax.f32 %v2163, 0.0
  %v2227 = vmax.f32 %v2165, 0.0
  %v2228 = vmax.f32 %v2206, 0.0
  %v2229 = vmax.f32 %v2208, 0.0
  %v2230 = vmax.f32 %v1909, 0.0
  %v2231 = vmax.f32 %v1911, 0.0
  %v2232 = vmax.f32 %v1952, 0.0
  %v2233 = vmax.f32 %v1954, 0.0
  %v2234 = vmax.f32 %v1995, 0.0
  %v2235 = vmax.f32 %v1997, 0.0
  %v2236 = vmax.f32 %v2038, 0.0
  %v2237 = vmax.f32 %v2040, 0.0
  %v2238 = vmax.f32 %v2081, 0.0
  %v2239 = vmax.f32 %v2083, 0.0
  %v2240 = vmax.f32 %v2124, 0.0
  %v2241 = vmax.f32 %v2126, 0.0
  %v2242 = vmax.f32 %v2167, 0.0
  %v2243 = vmax.f32 %v2169, 0.0
  %v2244 = vmax.f32 %v2210, 0.0
  %v2245 = vmax.f32 %v2212, 0.0
  %v2246 = vpack.c.bf16 %v2230, %v2214
  %v2247 = vpack.c.bf16 %v2231, %v2215
  %v2248 = vpack.c.bf16 %v2232, %v2216
  %v2249 = vpack.c.bf16 %v2233, %v2217
  %v2250 = vpack.c.bf16 %v2234, %v2218
  %v2251 = vpack.c.bf16 %v2235, %v2219
  %v2252 = vpack.c.bf16 %v2236, %v2220
  %v2253 = vpack.c.bf16 %v2237, %v2221
  %v2254 = vpack.c.bf16 %v2238, %v2222
  %v2255 = vpack.c.bf16 %v2239, %v2223
  %v2256 = vpack.c.bf16 %v2240, %v2224
  %v2257 = vpack.c.bf16 %v2241, %v2225
  %v2258 = vpack.c.bf16 %v2242, %v2226
  %v2259 = vpack.c.bf16 %v2243, %v2227
  %v2260 = vpack.c.bf16 %v2244, %v2228
  %v2261 = vpack.c.bf16 %v2245, %v2229
  %v2262 = vld [vmem:[%s9] sm:$0xf]
  %v2263 = vld [vmem:[%s9 + $0x4] sm:$0xf]
  %v2264 = vld [vmem:[%s9 + $0x8] sm:$0xf]
  %v2265 = vld [vmem:[%s9 + $0xc] sm:$0xf]
  %v2266 = vld [vmem:[%s9 + $0x10] sm:$0xf]
  %v2267 = vld [vmem:[%s9 + $0x14] sm:$0xf]
  %v2268 = vld [vmem:[%s9 + $0x18] sm:$0xf]
  %v2269 = vld [vmem:[%s9 + $0x1c] sm:$0xf]
  %v2270 = vld [vmem:[%s9 + $0x20] sm:$0xf]
  %v2271 = vld [vmem:[%s9 + $0x24] sm:$0xf]
  %v2272 = vld [vmem:[%s9 + $0x28] sm:$0xf]
  %v2273 = vld [vmem:[%s9 + $0x2c] sm:$0xf]
  %v2274 = vld [vmem:[%s9 + $0x30] sm:$0xf]
  %v2275 = vld [vmem:[%s9 + $0x34] sm:$0xf]
  %v2276 = vld [vmem:[%s9 + $0x38] sm:$0xf]
  %v2277 = vld [vmem:[%s9 + $0x3c] sm:$0xf]
  %v2278 = vld [vmem:[%s9 + $0x40] sm:$0xf]
  %v2279 = vld [vmem:[%s9 + $0x44] sm:$0xf]
  %v2280 = vld [vmem:[%s9 + $0x48] sm:$0xf]
  %v2281 = vld [vmem:[%s9 + $0x4c] sm:$0xf]
  %v2282 = vld [vmem:[%s9 + $0x50] sm:$0xf]
  %v2283 = vld [vmem:[%s9 + $0x54] sm:$0xf]
  %v2284 = vld [vmem:[%s9 + $0x58] sm:$0xf]
  %v2285 = vld [vmem:[%s9 + $0x5c] sm:$0xf]
  %v2286 = vld [vmem:[%s9 + $0x60] sm:$0xf]
  %v2287 = vld [vmem:[%s9 + $0x64] sm:$0xf]
  %v2288 = vld [vmem:[%s9 + $0x68] sm:$0xf]
  %v2289 = vld [vmem:[%s9 + $0x6c] sm:$0xf]
  %v2290 = vld [vmem:[%s9 + $0x70] sm:$0xf]
  %v2291 = vld [vmem:[%s9 + $0x74] sm:$0xf]
  %v2292 = vld [vmem:[%s9 + $0x78] sm:$0xf]
  %v2293 = vld [vmem:[%s9 + $0x7c] sm:$0xf]
  %v2294 = vld [vmem:[%s9 + $0x80] sm:$0xf]
  %v2295 = vld [vmem:[%s9 + $0x84] sm:$0xf]
  %v2296 = vld [vmem:[%s9 + $0x88] sm:$0xf]
  %v2297 = vld [vmem:[%s9 + $0x8c] sm:$0xf]
  %v2298 = vld [vmem:[%s9 + $0x90] sm:$0xf]
  %v2299 = vld [vmem:[%s9 + $0x94] sm:$0xf]
  %v2300 = vld [vmem:[%s9 + $0x98] sm:$0xf]
  %v2301 = vld [vmem:[%s9 + $0x9c] sm:$0xf]
  %v2302 = vld [vmem:[%s9 + $0xa0] sm:$0xf]
  %v2303 = vld [vmem:[%s9 + $0xa4] sm:$0xf]
  %v2304 = vld [vmem:[%s9 + $0xa8] sm:$0xf]
  %v2305 = vld [vmem:[%s9 + $0xac] sm:$0xf]
  %v2306 = vld [vmem:[%s9 + $0xb0] sm:$0xf]
  %v2307 = vld [vmem:[%s9 + $0xb4] sm:$0xf]
  %v2308 = vld [vmem:[%s9 + $0xb8] sm:$0xf]
  %v2309 = vld [vmem:[%s9 + $0xbc] sm:$0xf]
  %v2310 = vld [vmem:[%s9 + $0xc0] sm:$0xf]
  %v2311 = vld [vmem:[%s9 + $0xc4] sm:$0xf]
  %v2312 = vld [vmem:[%s9 + $0xc8] sm:$0xf]
  %v2313 = vld [vmem:[%s9 + $0xcc] sm:$0xf]
  %v2314 = vld [vmem:[%s9 + $0xd0] sm:$0xf]
  %v2315 = vld [vmem:[%s9 + $0xd4] sm:$0xf]
  %v2316 = vld [vmem:[%s9 + $0xd8] sm:$0xf]
  %v2317 = vld [vmem:[%s9 + $0xdc] sm:$0xf]
  %v2318 = vld [vmem:[%s9 + $0xe0] sm:$0xf]
  %v2319 = vld [vmem:[%s9 + $0xe4] sm:$0xf]
  %v2320 = vld [vmem:[%s9 + $0xe8] sm:$0xf]
  %v2321 = vld [vmem:[%s9 + $0xec] sm:$0xf]
  %v2322 = vld [vmem:[%s9 + $0xf0] sm:$0xf]
  %v2323 = vld [vmem:[%s9 + $0xf4] sm:$0xf]
  %v2324 = vld [vmem:[%s9 + $0xf8] sm:$0xf]
  %v2325 = vld [vmem:[%s9 + $0xfc] sm:$0xf]
  %v2326 = vld [vmem:[%s9 + $0x100] sm:$0xf]
  %v2327 = vld [vmem:[%s9 + $0x104] sm:$0xf]
  %v2328 = vld [vmem:[%s9 + $0x108] sm:$0xf]
  %v2329 = vld [vmem:[%s9 + $0x10c] sm:$0xf]
  %v2330 = vld [vmem:[%s9 + $0x110] sm:$0xf]
  %v2331 = vld [vmem:[%s9 + $0x114] sm:$0xf]
  %v2332 = vld [vmem:[%s9 + $0x118] sm:$0xf]
  %v2333 = vld [vmem:[%s9 + $0x11c] sm:$0xf]
  %v2334 = vld [vmem:[%s9 + $0x120] sm:$0xf]
  %v2335 = vld [vmem:[%s9 + $0x124] sm:$0xf]
  %v2336 = vld [vmem:[%s9 + $0x128] sm:$0xf]
  %v2337 = vld [vmem:[%s9 + $0x12c] sm:$0xf]
  %v2338 = vld [vmem:[%s9 + $0x130] sm:$0xf]
  %v2339 = vld [vmem:[%s9 + $0x134] sm:$0xf]
  %v2340 = vld [vmem:[%s9 + $0x138] sm:$0xf]
  %v2341 = vld [vmem:[%s9 + $0x13c] sm:$0xf]
  %v2342 = vld [vmem:[%s9 + $0x140] sm:$0xf]
  %v2343 = vld [vmem:[%s9 + $0x144] sm:$0xf]
  %v2344 = vld [vmem:[%s9 + $0x148] sm:$0xf]
  %v2345 = vld [vmem:[%s9 + $0x14c] sm:$0xf]
  %v2346 = vld [vmem:[%s9 + $0x150] sm:$0xf]
  %v2347 = vld [vmem:[%s9 + $0x154] sm:$0xf]
  %v2348 = vld [vmem:[%s9 + $0x158] sm:$0xf]
  %v2349 = vld [vmem:[%s9 + $0x15c] sm:$0xf]
  %v2350 = vld [vmem:[%s9 + $0x160] sm:$0xf]
  %v2351 = vld [vmem:[%s9 + $0x164] sm:$0xf]
  %v2352 = vld [vmem:[%s9 + $0x168] sm:$0xf]
  %v2353 = vld [vmem:[%s9 + $0x16c] sm:$0xf]
  %v2354 = vld [vmem:[%s9 + $0x170] sm:$0xf]
  %v2355 = vld [vmem:[%s9 + $0x174] sm:$0xf]
  %v2356 = vld [vmem:[%s9 + $0x178] sm:$0xf]
  %v2357 = vld [vmem:[%s9 + $0x17c] sm:$0xf]
  %v2358 = vld [vmem:[%s9 + $0x180] sm:$0xf]
  %v2359 = vld [vmem:[%s9 + $0x184] sm:$0xf]
  %v2360 = vld [vmem:[%s9 + $0x188] sm:$0xf]
  %v2361 = vld [vmem:[%s9 + $0x18c] sm:$0xf]
  %v2362 = vld [vmem:[%s9 + $0x190] sm:$0xf]
  %v2363 = vld [vmem:[%s9 + $0x194] sm:$0xf]
  %v2364 = vld [vmem:[%s9 + $0x198] sm:$0xf]
  %v2365 = vld [vmem:[%s9 + $0x19c] sm:$0xf]
  %v2366 = vld [vmem:[%s9 + $0x1a0] sm:$0xf]
  %v2367 = vld [vmem:[%s9 + $0x1a4] sm:$0xf]
  %v2368 = vld [vmem:[%s9 + $0x1a8] sm:$0xf]
  %v2369 = vld [vmem:[%s9 + $0x1ac] sm:$0xf]
  %v2370 = vld [vmem:[%s9 + $0x1b0] sm:$0xf]
  %v2371 = vld [vmem:[%s9 + $0x1b4] sm:$0xf]
  %v2372 = vld [vmem:[%s9 + $0x1b8] sm:$0xf]
  %v2373 = vld [vmem:[%s9 + $0x1bc] sm:$0xf]
  %v2374 = vld [vmem:[%s9 + $0x1c0] sm:$0xf]
  %v2375 = vld [vmem:[%s9 + $0x1c4] sm:$0xf]
  %v2376 = vld [vmem:[%s9 + $0x1c8] sm:$0xf]
  %v2377 = vld [vmem:[%s9 + $0x1cc] sm:$0xf]
  %v2378 = vld [vmem:[%s9 + $0x1d0] sm:$0xf]
  %v2379 = vld [vmem:[%s9 + $0x1d4] sm:$0xf]
  %v2380 = vld [vmem:[%s9 + $0x1d8] sm:$0xf]
  %v2381 = vld [vmem:[%s9 + $0x1dc] sm:$0xf]
  %v2382 = vld [vmem:[%s9 + $0x1e0] sm:$0xf]
  %v2383 = vld [vmem:[%s9 + $0x1e4] sm:$0xf]
  %v2384 = vld [vmem:[%s9 + $0x1e8] sm:$0xf]
  %v2385 = vld [vmem:[%s9 + $0x1ec] sm:$0xf]
  %v2386 = vld [vmem:[%s9 + $0x1f0] sm:$0xf]
  %v2387 = vld [vmem:[%s9 + $0x1f4] sm:$0xf]
  %v2388 = vld [vmem:[%s9 + $0x1f8] sm:$0xf]
  %v2389 = vld [vmem:[%s9 + $0x1fc] sm:$0xf]
  %v2390 = vld [vmem:[%s9 + $0x200] sm:$0xf]
  %v2391 = vld [vmem:[%s9 + $0x204] sm:$0xf]
  %v2392 = vld [vmem:[%s9 + $0x208] sm:$0xf]
  %v2393 = vld [vmem:[%s9 + $0x20c] sm:$0xf]
  %v2394 = vld [vmem:[%s9 + $0x210] sm:$0xf]
  %v2395 = vld [vmem:[%s9 + $0x214] sm:$0xf]
  %v2396 = vld [vmem:[%s9 + $0x218] sm:$0xf]
  %v2397 = vld [vmem:[%s9 + $0x21c] sm:$0xf]
  %v2398 = vld [vmem:[%s9 + $0x220] sm:$0xf]
  %v2399 = vld [vmem:[%s9 + $0x224] sm:$0xf]
  %v2400 = vld [vmem:[%s9 + $0x228] sm:$0xf]
  %v2401 = vld [vmem:[%s9 + $0x22c] sm:$0xf]
  %v2402 = vld [vmem:[%s9 + $0x230] sm:$0xf]
  %v2403 = vld [vmem:[%s9 + $0x234] sm:$0xf]
  %v2404 = vld [vmem:[%s9 + $0x238] sm:$0xf]
  %v2405 = vld [vmem:[%s9 + $0x23c] sm:$0xf]
  %v2406 = vld [vmem:[%s9 + $0x240] sm:$0xf]
  %v2407 = vld [vmem:[%s9 + $0x244] sm:$0xf]
  %v2408 = vld [vmem:[%s9 + $0x248] sm:$0xf]
  %v2409 = vld [vmem:[%s9 + $0x24c] sm:$0xf]
  %v2410 = vld [vmem:[%s9 + $0x250] sm:$0xf]
  %v2411 = vld [vmem:[%s9 + $0x254] sm:$0xf]
  %v2412 = vld [vmem:[%s9 + $0x258] sm:$0xf]
  %v2413 = vld [vmem:[%s9 + $0x25c] sm:$0xf]
  %v2414 = vld [vmem:[%s9 + $0x260] sm:$0xf]
  %v2415 = vld [vmem:[%s9 + $0x264] sm:$0xf]
  %v2416 = vld [vmem:[%s9 + $0x268] sm:$0xf]
  %v2417 = vld [vmem:[%s9 + $0x26c] sm:$0xf]
  %v2418 = vld [vmem:[%s9 + $0x270] sm:$0xf]
  %v2419 = vld [vmem:[%s9 + $0x274] sm:$0xf]
  %v2420 = vld [vmem:[%s9 + $0x278] sm:$0xf]
  %v2421 = vld [vmem:[%s9 + $0x27c] sm:$0xf]
  %v2422 = vld [vmem:[%s9 + $0x280] sm:$0xf]
  %v2423 = vld [vmem:[%s9 + $0x284] sm:$0xf]
  %v2424 = vld [vmem:[%s9 + $0x288] sm:$0xf]
  %v2425 = vld [vmem:[%s9 + $0x28c] sm:$0xf]
  %v2426 = vld [vmem:[%s9 + $0x290] sm:$0xf]
  %v2427 = vld [vmem:[%s9 + $0x294] sm:$0xf]
  %v2428 = vld [vmem:[%s9 + $0x298] sm:$0xf]
  %v2429 = vld [vmem:[%s9 + $0x29c] sm:$0xf]
  %v2430 = vld [vmem:[%s9 + $0x2a0] sm:$0xf]
  %v2431 = vld [vmem:[%s9 + $0x2a4] sm:$0xf]
  %v2432 = vld [vmem:[%s9 + $0x2a8] sm:$0xf]
  %v2433 = vld [vmem:[%s9 + $0x2ac] sm:$0xf]
  %v2434 = vld [vmem:[%s9 + $0x2b0] sm:$0xf]
  %v2435 = vld [vmem:[%s9 + $0x2b4] sm:$0xf]
  %v2436 = vld [vmem:[%s9 + $0x2b8] sm:$0xf]
  %v2437 = vld [vmem:[%s9 + $0x2bc] sm:$0xf]
  %v2438 = vld [vmem:[%s9 + $0x2c0] sm:$0xf]
  %v2439 = vld [vmem:[%s9 + $0x2c4] sm:$0xf]
  %v2440 = vld [vmem:[%s9 + $0x2c8] sm:$0xf]
  %v2441 = vld [vmem:[%s9 + $0x2cc] sm:$0xf]
  %v2442 = vld [vmem:[%s9 + $0x2d0] sm:$0xf]
  %v2443 = vld [vmem:[%s9 + $0x2d4] sm:$0xf]
  %v2444 = vld [vmem:[%s9 + $0x2d8] sm:$0xf]
  %v2445 = vld [vmem:[%s9 + $0x2dc] sm:$0xf]
  %v2446 = vld [vmem:[%s9 + $0x2e0] sm:$0xf]
  %v2447 = vld [vmem:[%s9 + $0x2e4] sm:$0xf]
  %v2448 = vld [vmem:[%s9 + $0x2e8] sm:$0xf]
  %v2449 = vld [vmem:[%s9 + $0x2ec] sm:$0xf]
  %v2450 = vld [vmem:[%s9 + $0x2f0] sm:$0xf]
  %v2451 = vld [vmem:[%s9 + $0x2f4] sm:$0xf]
  %v2452 = vld [vmem:[%s9 + $0x2f8] sm:$0xf]
  %v2453 = vld [vmem:[%s9 + $0x2fc] sm:$0xf]
  %v2454 = vld [vmem:[%s9 + $0x300] sm:$0xf]
  %v2455 = vld [vmem:[%s9 + $0x304] sm:$0xf]
  %v2456 = vld [vmem:[%s9 + $0x308] sm:$0xf]
  %v2457 = vld [vmem:[%s9 + $0x30c] sm:$0xf]
  %v2458 = vld [vmem:[%s9 + $0x310] sm:$0xf]
  %v2459 = vld [vmem:[%s9 + $0x314] sm:$0xf]
  %v2460 = vld [vmem:[%s9 + $0x318] sm:$0xf]
  %v2461 = vld [vmem:[%s9 + $0x31c] sm:$0xf]
  %v2462 = vld [vmem:[%s9 + $0x320] sm:$0xf]
  %v2463 = vld [vmem:[%s9 + $0x324] sm:$0xf]
  %v2464 = vld [vmem:[%s9 + $0x328] sm:$0xf]
  %v2465 = vld [vmem:[%s9 + $0x32c] sm:$0xf]
  %v2466 = vld [vmem:[%s9 + $0x330] sm:$0xf]
  %v2467 = vld [vmem:[%s9 + $0x334] sm:$0xf]
  %v2468 = vld [vmem:[%s9 + $0x338] sm:$0xf]
  %v2469 = vld [vmem:[%s9 + $0x33c] sm:$0xf]
  %v2470 = vld [vmem:[%s9 + $0x340] sm:$0xf]
  %v2471 = vld [vmem:[%s9 + $0x344] sm:$0xf]
  %v2472 = vld [vmem:[%s9 + $0x348] sm:$0xf]
  %v2473 = vld [vmem:[%s9 + $0x34c] sm:$0xf]
  %v2474 = vld [vmem:[%s9 + $0x350] sm:$0xf]
  %v2475 = vld [vmem:[%s9 + $0x354] sm:$0xf]
  %v2476 = vld [vmem:[%s9 + $0x358] sm:$0xf]
  %v2477 = vld [vmem:[%s9 + $0x35c] sm:$0xf]
  %v2478 = vld [vmem:[%s9 + $0x360] sm:$0xf]
  %v2479 = vld [vmem:[%s9 + $0x364] sm:$0xf]
  %v2480 = vld [vmem:[%s9 + $0x368] sm:$0xf]
  %v2481 = vld [vmem:[%s9 + $0x36c] sm:$0xf]
  %v2482 = vld [vmem:[%s9 + $0x370] sm:$0xf]
  %v2483 = vld [vmem:[%s9 + $0x374] sm:$0xf]
  %v2484 = vld [vmem:[%s9 + $0x378] sm:$0xf]
  %v2485 = vld [vmem:[%s9 + $0x37c] sm:$0xf]
  %v2486 = vld [vmem:[%s9 + $0x380] sm:$0xf]
  %v2487 = vld [vmem:[%s9 + $0x384] sm:$0xf]
  %v2488 = vld [vmem:[%s9 + $0x388] sm:$0xf]
  %v2489 = vld [vmem:[%s9 + $0x38c] sm:$0xf]
  %v2490 = vld [vmem:[%s9 + $0x390] sm:$0xf]
  %v2491 = vld [vmem:[%s9 + $0x394] sm:$0xf]
  %v2492 = vld [vmem:[%s9 + $0x398] sm:$0xf]
  %v2493 = vld [vmem:[%s9 + $0x39c] sm:$0xf]
  %v2494 = vld [vmem:[%s9 + $0x3a0] sm:$0xf]
  %v2495 = vld [vmem:[%s9 + $0x3a4] sm:$0xf]
  %v2496 = vld [vmem:[%s9 + $0x3a8] sm:$0xf]
  %v2497 = vld [vmem:[%s9 + $0x3ac] sm:$0xf]
  %v2498 = vld [vmem:[%s9 + $0x3b0] sm:$0xf]
  %v2499 = vld [vmem:[%s9 + $0x3b4] sm:$0xf]
  %v2500 = vld [vmem:[%s9 + $0x3b8] sm:$0xf]
  %v2501 = vld [vmem:[%s9 + $0x3bc] sm:$0xf]
  %v2502 = vld [vmem:[%s9 + $0x3c0] sm:$0xf]
  %v2503 = vld [vmem:[%s9 + $0x3c4] sm:$0xf]
  %v2504 = vld [vmem:[%s9 + $0x3c8] sm:$0xf]
  %v2505 = vld [vmem:[%s9 + $0x3cc] sm:$0xf]
  %v2506 = vld [vmem:[%s9 + $0x3d0] sm:$0xf]
  %v2507 = vld [vmem:[%s9 + $0x3d4] sm:$0xf]
  %v2508 = vld [vmem:[%s9 + $0x3d8] sm:$0xf]
  %v2509 = vld [vmem:[%s9 + $0x3dc] sm:$0xf]
  %v2510 = vld [vmem:[%s9 + $0x3e0] sm:$0xf]
  %v2511 = vld [vmem:[%s9 + $0x3e4] sm:$0xf]
  %v2512 = vld [vmem:[%s9 + $0x3e8] sm:$0xf]
  %v2513 = vld [vmem:[%s9 + $0x3ec] sm:$0xf]
  %v2514 = vld [vmem:[%s9 + $0x3f0] sm:$0xf]
  %v2515 = vld [vmem:[%s9 + $0x3f4] sm:$0xf]
  %v2516 = vld [vmem:[%s9 + $0x3f8] sm:$0xf]
  %v2517 = vld [vmem:[%s9 + $0x3fc] sm:$0xf]
  %v2518 = vld [vmem:[%s10] sm:$0x1]
  %v2520 = vlaneseq
  %v2521 = vshrl.u32 %v2520, 7
  %v2522 = vsub.s32 0, %v2521
  %v2523 = vrot.slane %v2518, %v2522
  %v2781 = vunpack.c.l.b16 %v2262
  %v2782 = vunpack.c.l.b16 %v2263
  %v2783 = vunpack.c.l.b16 %v2264
  %v2784 = vunpack.c.l.b16 %v2265
  %v2785 = vunpack.c.l.b16 %v2266
  %v2786 = vunpack.c.l.b16 %v2267
  %v2787 = vunpack.c.l.b16 %v2268
  %v2788 = vunpack.c.l.b16 %v2269
  %v2789 = vunpack.c.l.b16 %v2270
  %v2790 = vunpack.c.l.b16 %v2271
  %v2791 = vunpack.c.l.b16 %v2272
  %v2792 = vunpack.c.l.b16 %v2273
  %v2793 = vunpack.c.l.b16 %v2274
  %v2794 = vunpack.c.l.b16 %v2275
  %v2795 = vunpack.c.l.b16 %v2276
  %v2796 = vunpack.c.l.b16 %v2277
  %v2797 = vunpack.c.l.b16 %v2278
  %v2798 = vunpack.c.l.b16 %v2279
  %v2799 = vunpack.c.l.b16 %v2280
  %v2800 = vunpack.c.l.b16 %v2281
  %v2801 = vunpack.c.l.b16 %v2282
  %v2802 = vunpack.c.l.b16 %v2283
  %v2803 = vunpack.c.l.b16 %v2284
  %v2804 = vunpack.c.l.b16 %v2285
  %v2805 = vunpack.c.l.b16 %v2286
  %v2806 = vunpack.c.l.b16 %v2287
  %v2807 = vunpack.c.l.b16 %v2288
  %v2808 = vunpack.c.l.b16 %v2289
  %v2809 = vunpack.c.l.b16 %v2290
  %v2810 = vunpack.c.l.b16 %v2291
  %v2811 = vunpack.c.l.b16 %v2292
  %v2812 = vunpack.c.l.b16 %v2293
  %v2813 = vunpack.c.l.b16 %v2294
  %v2814 = vunpack.c.l.b16 %v2295
  %v2815 = vunpack.c.l.b16 %v2296
  %v2816 = vunpack.c.l.b16 %v2297
  %v2817 = vunpack.c.l.b16 %v2298
  %v2818 = vunpack.c.l.b16 %v2299
  %v2819 = vunpack.c.l.b16 %v2300
  %v2820 = vunpack.c.l.b16 %v2301
  %v2821 = vunpack.c.l.b16 %v2302
  %v2822 = vunpack.c.l.b16 %v2303
  %v2823 = vunpack.c.l.b16 %v2304
  %v2824 = vunpack.c.l.b16 %v2305
  %v2825 = vunpack.c.l.b16 %v2306
  %v2826 = vunpack.c.l.b16 %v2307
  %v2827 = vunpack.c.l.b16 %v2308
  %v2828 = vunpack.c.l.b16 %v2309
  %v2829 = vunpack.c.l.b16 %v2310
  %v2830 = vunpack.c.l.b16 %v2311
  %v2831 = vunpack.c.l.b16 %v2312
  %v2832 = vunpack.c.l.b16 %v2313
  %v2833 = vunpack.c.l.b16 %v2314
  %v2834 = vunpack.c.l.b16 %v2315
  %v2835 = vunpack.c.l.b16 %v2316
  %v2836 = vunpack.c.l.b16 %v2317
  %v2837 = vunpack.c.l.b16 %v2318
  %v2838 = vunpack.c.l.b16 %v2319
  %v2839 = vunpack.c.l.b16 %v2320
  %v2840 = vunpack.c.l.b16 %v2321
  %v2841 = vunpack.c.l.b16 %v2322
  %v2842 = vunpack.c.l.b16 %v2323
  %v2843 = vunpack.c.l.b16 %v2324
  %v2844 = vunpack.c.l.b16 %v2325
  %v2845 = vunpack.c.l.b16 %v2326
  %v2846 = vunpack.c.l.b16 %v2327
  %v2847 = vunpack.c.l.b16 %v2328
  %v2848 = vunpack.c.l.b16 %v2329
  %v2849 = vunpack.c.l.b16 %v2330
  %v2850 = vunpack.c.l.b16 %v2331
  %v2851 = vunpack.c.l.b16 %v2332
  %v2852 = vunpack.c.l.b16 %v2333
  %v2853 = vunpack.c.l.b16 %v2334
  %v2854 = vunpack.c.l.b16 %v2335
  %v2855 = vunpack.c.l.b16 %v2336
  %v2856 = vunpack.c.l.b16 %v2337
  %v2857 = vunpack.c.l.b16 %v2338
  %v2858 = vunpack.c.l.b16 %v2339
  %v2859 = vunpack.c.l.b16 %v2340
  %v2860 = vunpack.c.l.b16 %v2341
  %v2861 = vunpack.c.l.b16 %v2342
  %v2862 = vunpack.c.l.b16 %v2343
  %v2863 = vunpack.c.l.b16 %v2344
  %v2864 = vunpack.c.l.b16 %v2345
  %v2865 = vunpack.c.l.b16 %v2346
  %v2866 = vunpack.c.l.b16 %v2347
  %v2867 = vunpack.c.l.b16 %v2348
  %v2868 = vunpack.c.l.b16 %v2349
  %v2869 = vunpack.c.l.b16 %v2350
  %v2870 = vunpack.c.l.b16 %v2351
  %v2871 = vunpack.c.l.b16 %v2352
  %v2872 = vunpack.c.l.b16 %v2353
  %v2873 = vunpack.c.l.b16 %v2354
  %v2874 = vunpack.c.l.b16 %v2355
  %v2875 = vunpack.c.l.b16 %v2356
  %v2876 = vunpack.c.l.b16 %v2357
  %v2877 = vunpack.c.l.b16 %v2358
  %v2878 = vunpack.c.l.b16 %v2359
  %v2879 = vunpack.c.l.b16 %v2360
  %v2880 = vunpack.c.l.b16 %v2361
  %v2881 = vunpack.c.l.b16 %v2362
  %v2882 = vunpack.c.l.b16 %v2363
  %v2883 = vunpack.c.l.b16 %v2364
  %v2884 = vunpack.c.l.b16 %v2365
  %v2885 = vunpack.c.l.b16 %v2366
  %v2886 = vunpack.c.l.b16 %v2367
  %v2887 = vunpack.c.l.b16 %v2368
  %v2888 = vunpack.c.l.b16 %v2369
  %v2889 = vunpack.c.l.b16 %v2370
  %v2890 = vunpack.c.l.b16 %v2371
  %v2891 = vunpack.c.l.b16 %v2372
  %v2892 = vunpack.c.l.b16 %v2373
  %v2893 = vunpack.c.l.b16 %v2374
  %v2894 = vunpack.c.l.b16 %v2375
  %v2895 = vunpack.c.l.b16 %v2376
  %v2896 = vunpack.c.l.b16 %v2377
  %v2897 = vunpack.c.l.b16 %v2378
  %v2898 = vunpack.c.l.b16 %v2379
  %v2899 = vunpack.c.l.b16 %v2380
  %v2900 = vunpack.c.l.b16 %v2381
  %v2901 = vunpack.c.l.b16 %v2382
  %v2902 = vunpack.c.l.b16 %v2383
  %v2903 = vunpack.c.l.b16 %v2384
  %v2904 = vunpack.c.l.b16 %v2385
  %v2905 = vunpack.c.l.b16 %v2386
  %v2906 = vunpack.c.l.b16 %v2387
  %v2907 = vunpack.c.l.b16 %v2388
  %v2908 = vunpack.c.l.b16 %v2389
  %v2909 = vunpack.c.l.b16 %v2390
  %v2910 = vunpack.c.l.b16 %v2391
  %v2911 = vunpack.c.l.b16 %v2392
  %v2912 = vunpack.c.l.b16 %v2393
  %v2913 = vunpack.c.l.b16 %v2394
  %v2914 = vunpack.c.l.b16 %v2395
  %v2915 = vunpack.c.l.b16 %v2396
  %v2916 = vunpack.c.l.b16 %v2397
  %v2917 = vunpack.c.l.b16 %v2398
  %v2918 = vunpack.c.l.b16 %v2399
  %v2919 = vunpack.c.l.b16 %v2400
  %v2920 = vunpack.c.l.b16 %v2401
  %v2921 = vunpack.c.l.b16 %v2402
  %v2922 = vunpack.c.l.b16 %v2403
  %v2923 = vunpack.c.l.b16 %v2404
  %v2924 = vunpack.c.l.b16 %v2405
  %v2925 = vunpack.c.l.b16 %v2406
  %v2926 = vunpack.c.l.b16 %v2407
  %v2927 = vunpack.c.l.b16 %v2408
  %v2928 = vunpack.c.l.b16 %v2409
  %v2929 = vunpack.c.l.b16 %v2410
  %v2930 = vunpack.c.l.b16 %v2411
  %v2931 = vunpack.c.l.b16 %v2412
  %v2932 = vunpack.c.l.b16 %v2413
  %v2933 = vunpack.c.l.b16 %v2414
  %v2934 = vunpack.c.l.b16 %v2415
  %v2935 = vunpack.c.l.b16 %v2416
  %v2936 = vunpack.c.l.b16 %v2417
  %v2937 = vunpack.c.l.b16 %v2418
  %v2938 = vunpack.c.l.b16 %v2419
  %v2939 = vunpack.c.l.b16 %v2420
  %v2940 = vunpack.c.l.b16 %v2421
  %v2941 = vunpack.c.l.b16 %v2422
  %v2942 = vunpack.c.l.b16 %v2423
  %v2943 = vunpack.c.l.b16 %v2424
  %v2944 = vunpack.c.l.b16 %v2425
  %v2945 = vunpack.c.l.b16 %v2426
  %v2946 = vunpack.c.l.b16 %v2427
  %v2947 = vunpack.c.l.b16 %v2428
  %v2948 = vunpack.c.l.b16 %v2429
  %v2949 = vunpack.c.l.b16 %v2430
  %v2950 = vunpack.c.l.b16 %v2431
  %v2951 = vunpack.c.l.b16 %v2432
  %v2952 = vunpack.c.l.b16 %v2433
  %v2953 = vunpack.c.l.b16 %v2434
  %v2954 = vunpack.c.l.b16 %v2435
  %v2955 = vunpack.c.l.b16 %v2436
  %v2956 = vunpack.c.l.b16 %v2437
  %v2957 = vunpack.c.l.b16 %v2438
  %v2958 = vunpack.c.l.b16 %v2439
  %v2959 = vunpack.c.l.b16 %v2440
  %v2960 = vunpack.c.l.b16 %v2441
  %v2961 = vunpack.c.l.b16 %v2442
  %v2962 = vunpack.c.l.b16 %v2443
  %v2963 = vunpack.c.l.b16 %v2444
  %v2964 = vunpack.c.l.b16 %v2445
  %v2965 = vunpack.c.l.b16 %v2446
  %v2966 = vunpack.c.l.b16 %v2447
  %v2967 = vunpack.c.l.b16 %v2448
  %v2968 = vunpack.c.l.b16 %v2449
  %v2969 = vunpack.c.l.b16 %v2450
  %v2970 = vunpack.c.l.b16 %v2451
  %v2971 = vunpack.c.l.b16 %v2452
  %v2972 = vunpack.c.l.b16 %v2453
  %v2973 = vunpack.c.l.b16 %v2454
  %v2974 = vunpack.c.l.b16 %v2455
  %v2975 = vunpack.c.l.b16 %v2456
  %v2976 = vunpack.c.l.b16 %v2457
  %v2977 = vunpack.c.l.b16 %v2458
  %v2978 = vunpack.c.l.b16 %v2459
  %v2979 = vunpack.c.l.b16 %v2460
  %v2980 = vunpack.c.l.b16 %v2461
  %v2981 = vunpack.c.l.b16 %v2462
  %v2982 = vunpack.c.l.b16 %v2463
  %v2983 = vunpack.c.l.b16 %v2464
  %v2984 = vunpack.c.l.b16 %v2465
  %v2985 = vunpack.c.l.b16 %v2466
  %v2986 = vunpack.c.l.b16 %v2467
  %v2987 = vunpack.c.l.b16 %v2468
  %v2988 = vunpack.c.l.b16 %v2469
  %v2989 = vunpack.c.l.b16 %v2470
  %v2990 = vunpack.c.l.b16 %v2471
  %v2991 = vunpack.c.l.b16 %v2472
  %v2992 = vunpack.c.l.b16 %v2473
  %v2993 = vunpack.c.l.b16 %v2474
  %v2994 = vunpack.c.l.b16 %v2475
  %v2995 = vunpack.c.l.b16 %v2476
  %v2996 = vunpack.c.l.b16 %v2477
  %v2997 = vunpack.c.l.b16 %v2478
  %v2998 = vunpack.c.l.b16 %v2479
  %v2999 = vunpack.c.l.b16 %v2480
  %v3000 = vunpack.c.l.b16 %v2481
  %v3001 = vunpack.c.l.b16 %v2482
  %v3002 = vunpack.c.l.b16 %v2483
  %v3003 = vunpack.c.l.b16 %v2484
  %v3004 = vunpack.c.l.b16 %v2485
  %v3005 = vunpack.c.l.b16 %v2486
  %v3006 = vunpack.c.l.b16 %v2487
  %v3007 = vunpack.c.l.b16 %v2488
  %v3008 = vunpack.c.l.b16 %v2489
  %v3009 = vunpack.c.l.b16 %v2490
  %v3010 = vunpack.c.l.b16 %v2491
  %v3011 = vunpack.c.l.b16 %v2492
  %v3012 = vunpack.c.l.b16 %v2493
  %v3013 = vunpack.c.l.b16 %v2494
  %v3014 = vunpack.c.l.b16 %v2495
  %v3015 = vunpack.c.l.b16 %v2496
  %v3016 = vunpack.c.l.b16 %v2497
  %v3017 = vunpack.c.l.b16 %v2498
  %v3018 = vunpack.c.l.b16 %v2499
  %v3019 = vunpack.c.l.b16 %v2500
  %v3020 = vunpack.c.l.b16 %v2501
  %v3021 = vunpack.c.l.b16 %v2502
  %v3022 = vunpack.c.l.b16 %v2503
  %v3023 = vunpack.c.l.b16 %v2504
  %v3024 = vunpack.c.l.b16 %v2505
  %v3025 = vunpack.c.l.b16 %v2506
  %v3026 = vunpack.c.l.b16 %v2507
  %v3027 = vunpack.c.l.b16 %v2508
  %v3028 = vunpack.c.l.b16 %v2509
  %v3029 = vunpack.c.l.b16 %v2510
  %v3030 = vunpack.c.l.b16 %v2511
  %v3031 = vunpack.c.l.b16 %v2512
  %v3032 = vunpack.c.l.b16 %v2513
  %v3033 = vunpack.c.l.b16 %v2514
  %v3034 = vunpack.c.l.b16 %v2515
  %v3035 = vunpack.c.l.b16 %v2516
  %v3036 = vunpack.c.l.b16 %v2517
  %v3037 = vpack.c.b16 %v2782, %v2781
  %v3038 = vpack.c.b16 %v2784, %v2783
  %v3039 = vpack.c.b16 %v2786, %v2785
  %v3040 = vpack.c.b16 %v2788, %v2787
  %v3041 = vpack.c.b16 %v2790, %v2789
  %v3042 = vpack.c.b16 %v2792, %v2791
  %v3043 = vpack.c.b16 %v2794, %v2793
  %v3044 = vpack.c.b16 %v2796, %v2795
  %v3045 = vpack.c.b16 %v2798, %v2797
  %v3046 = vpack.c.b16 %v2800, %v2799
  %v3047 = vpack.c.b16 %v2802, %v2801
  %v3048 = vpack.c.b16 %v2804, %v2803
  %v3049 = vpack.c.b16 %v2806, %v2805
  %v3050 = vpack.c.b16 %v2808, %v2807
  %v3051 = vpack.c.b16 %v2810, %v2809
  %v3052 = vpack.c.b16 %v2812, %v2811
  %v3053 = vpack.c.b16 %v2814, %v2813
  %v3054 = vpack.c.b16 %v2816, %v2815
  %v3055 = vpack.c.b16 %v2818, %v2817
  %v3056 = vpack.c.b16 %v2820, %v2819
  %v3057 = vpack.c.b16 %v2822, %v2821
  %v3058 = vpack.c.b16 %v2824, %v2823
  %v3059 = vpack.c.b16 %v2826, %v2825
  %v3060 = vpack.c.b16 %v2828, %v2827
  %v3061 = vpack.c.b16 %v2830, %v2829
  %v3062 = vpack.c.b16 %v2832, %v2831
  %v3063 = vpack.c.b16 %v2834, %v2833
  %v3064 = vpack.c.b16 %v2836, %v2835
  %v3065 = vpack.c.b16 %v2838, %v2837
  %v3066 = vpack.c.b16 %v2840, %v2839
  %v3067 = vpack.c.b16 %v2842, %v2841
  %v3068 = vpack.c.b16 %v2844, %v2843
  %v3069 = vpack.c.b16 %v2846, %v2845
  %v3070 = vpack.c.b16 %v2848, %v2847
  %v3071 = vpack.c.b16 %v2850, %v2849
  %v3072 = vpack.c.b16 %v2852, %v2851
  %v3073 = vpack.c.b16 %v2854, %v2853
  %v3074 = vpack.c.b16 %v2856, %v2855
  %v3075 = vpack.c.b16 %v2858, %v2857
  %v3076 = vpack.c.b16 %v2860, %v2859
  %v3077 = vpack.c.b16 %v2862, %v2861
  %v3078 = vpack.c.b16 %v2864, %v2863
  %v3079 = vpack.c.b16 %v2866, %v2865
  %v3080 = vpack.c.b16 %v2868, %v2867
  %v3081 = vpack.c.b16 %v2870, %v2869
  %v3082 = vpack.c.b16 %v2872, %v2871
  %v3083 = vpack.c.b16 %v2874, %v2873
  %v3084 = vpack.c.b16 %v2876, %v2875
  %v3085 = vpack.c.b16 %v2878, %v2877
  %v3086 = vpack.c.b16 %v2880, %v2879
  %v3087 = vpack.c.b16 %v2882, %v2881
  %v3088 = vpack.c.b16 %v2884, %v2883
  %v3089 = vpack.c.b16 %v2886, %v2885
  %v3090 = vpack.c.b16 %v2888, %v2887
  %v3091 = vpack.c.b16 %v2890, %v2889
  %v3092 = vpack.c.b16 %v2892, %v2891
  %v3093 = vpack.c.b16 %v2894, %v2893
  %v3094 = vpack.c.b16 %v2896, %v2895
  %v3095 = vpack.c.b16 %v2898, %v2897
  %v3096 = vpack.c.b16 %v2900, %v2899
  %v3097 = vpack.c.b16 %v2902, %v2901
  %v3098 = vpack.c.b16 %v2904, %v2903
  %v3099 = vpack.c.b16 %v2906, %v2905
  %v3100 = vpack.c.b16 %v2908, %v2907
  %v3101 = vpack.c.b16 %v2910, %v2909
  %v3102 = vpack.c.b16 %v2912, %v2911
  %v3103 = vpack.c.b16 %v2914, %v2913
  %v3104 = vpack.c.b16 %v2916, %v2915
  %v3105 = vpack.c.b16 %v2918, %v2917
  %v3106 = vpack.c.b16 %v2920, %v2919
  %v3107 = vpack.c.b16 %v2922, %v2921
  %v3108 = vpack.c.b16 %v2924, %v2923
  %v3109 = vpack.c.b16 %v2926, %v2925
  %v3110 = vpack.c.b16 %v2928, %v2927
  %v3111 = vpack.c.b16 %v2930, %v2929
  %v3112 = vpack.c.b16 %v2932, %v2931
  %v3113 = vpack.c.b16 %v2934, %v2933
  %v3114 = vpack.c.b16 %v2936, %v2935
  %v3115 = vpack.c.b16 %v2938, %v2937
  %v3116 = vpack.c.b16 %v2940, %v2939
  %v3117 = vpack.c.b16 %v2942, %v2941
  %v3118 = vpack.c.b16 %v2944, %v2943
  %v3119 = vpack.c.b16 %v2946, %v2945
  %v3120 = vpack.c.b16 %v2948, %v2947
  %v3121 = vpack.c.b16 %v2950, %v2949
  %v3122 = vpack.c.b16 %v2952, %v2951
  %v3123 = vpack.c.b16 %v2954, %v2953
  %v3124 = vpack.c.b16 %v2956, %v2955
  %v3125 = vpack.c.b16 %v2958, %v2957
  %v3126 = vpack.c.b16 %v2960, %v2959
  %v3127 = vpack.c.b16 %v2962, %v2961
  %v3128 = vpack.c.b16 %v2964, %v2963
  %v3129 = vpack.c.b16 %v2966, %v2965
  %v3130 = vpack.c.b16 %v2968, %v2967
  %v3131 = vpack.c.b16 %v2970, %v2969
  %v3132 = vpack.c.b16 %v2972, %v2971
  %v3133 = vpack.c.b16 %v2974, %v2973
  %v3134 = vpack.c.b16 %v2976, %v2975
  %v3135 = vpack.c.b16 %v2978, %v2977
  %v3136 = vpack.c.b16 %v2980, %v2979
  %v3137 = vpack.c.b16 %v2982, %v2981
  %v3138 = vpack.c.b16 %v2984, %v2983
  %v3139 = vpack.c.b16 %v2986, %v2985
  %v3140 = vpack.c.b16 %v2988, %v2987
  %v3141 = vpack.c.b16 %v2990, %v2989
  %v3142 = vpack.c.b16 %v2992, %v2991
  %v3143 = vpack.c.b16 %v2994, %v2993
  %v3144 = vpack.c.b16 %v2996, %v2995
  %v3145 = vpack.c.b16 %v2998, %v2997
  %v3146 = vpack.c.b16 %v3000, %v2999
  %v3147 = vpack.c.b16 %v3002, %v3001
  %v3148 = vpack.c.b16 %v3004, %v3003
  %v3149 = vpack.c.b16 %v3006, %v3005
  %v3150 = vpack.c.b16 %v3008, %v3007
  %v3151 = vpack.c.b16 %v3010, %v3009
  %v3152 = vpack.c.b16 %v3012, %v3011
  %v3153 = vpack.c.b16 %v3014, %v3013
  %v3154 = vpack.c.b16 %v3016, %v3015
  %v3155 = vpack.c.b16 %v3018, %v3017
  %v3156 = vpack.c.b16 %v3020, %v3019
  %v3157 = vpack.c.b16 %v3022, %v3021
  %v3158 = vpack.c.b16 %v3024, %v3023
  %v3159 = vpack.c.b16 %v3026, %v3025
  %v3160 = vpack.c.b16 %v3028, %v3027
  %v3161 = vpack.c.b16 %v3030, %v3029
  %v3162 = vpack.c.b16 %v3032, %v3031
  %v3163 = vpack.c.b16 %v3034, %v3033
  %v3164 = vpack.c.b16 %v3036, %v3035
  %3293 = vmatprep.subr.bf16.mxu0 0
  %3294 = vmatpush1.bf16.msra.mxu0 %v3037
  %3295 = vmatprep.subr.bf16.mxu0 0
  %3296 = vmatpush1.bf16.msra.mxu0 %v3038
  %3297 = vmatprep.subr.bf16.mxu0 0
  %3298 = vmatpush1.bf16.msra.mxu0 %v3039
  %3299 = vmatprep.subr.bf16.mxu0 0
  %3300 = vmatpush1.bf16.msra.mxu0 %v3040
  %3301 = vmatprep.subr.bf16.mxu0 0
  %3302 = vmatpush1.bf16.msra.mxu0 %v3041
  %3303 = vmatprep.subr.bf16.mxu0 0
  %3304 = vmatpush1.bf16.msra.mxu0 %v3042
  %3305 = vmatprep.subr.bf16.mxu0 0
  %3306 = vmatpush1.bf16.msra.mxu0 %v3043
  %3307 = vmatprep.subr.bf16.mxu0 0
  %3308 = vmatpush1.bf16.msra.mxu0 %v3044
  %3309 = vmatprep.subr.bf16.mxu0 0
  %3310 = vmatpush1.bf16.msra.mxu0 %v3045
  %3311 = vmatprep.subr.bf16.mxu0 0
  %3312 = vmatpush1.bf16.msra.mxu0 %v3046
  %3313 = vmatprep.subr.bf16.mxu0 0
  %3314 = vmatpush1.bf16.msra.mxu0 %v3047
  %3315 = vmatprep.subr.bf16.mxu0 0
  %3316 = vmatpush1.bf16.msra.mxu0 %v3048
  %3317 = vmatprep.subr.bf16.mxu0 0
  %3318 = vmatpush1.bf16.msra.mxu0 %v3049
  %3319 = vmatprep.subr.bf16.mxu0 0
  %3320 = vmatpush1.bf16.msra.mxu0 %v3050
  %3321 = vmatprep.subr.bf16.mxu0 0
  %3322 = vmatpush1.bf16.msra.mxu0 %v3051
  %3323 = vmatprep.subr.bf16.mxu0 0
  %3324 = vmatpush1.bf16.msra.mxu0 %v3052
  %3325 = vmatprep.mubr.bf16.mxu0 %v2247
  %3326 = vmatmul.mubr.bf16.gmra.mrb[0].mxu0 %v2246
  %v3327 = vpop.f32.mrb[0].mxu0
  %v3328 = vadd.f32 %v2523, %v3327
  %v3329 = vpop.f32.mrb[0].mxu0
  %v3330 = vpop.f32.mrb[0].mxu0
  %v3331 = vadd.f32 %v2523, %v3330
  %v3332 = vpop.f32.mrb[0].mxu0
  %3333 = vdwg.mxu0
  %3334 = vmatprep.subr.bf16.mxu0 0
  %3335 = vmatpush1.bf16.msra.mxu0 %v3053
  %3336 = vmatprep.subr.bf16.mxu0 0
  %3337 = vmatpush1.bf16.msra.mxu0 %v3054
  %3338 = vmatprep.subr.bf16.mxu0 0
  %3339 = vmatpush1.bf16.msra.mxu0 %v3055
  %3340 = vmatprep.subr.bf16.mxu0 0
  %3341 = vmatpush1.bf16.msra.mxu0 %v3056
  %3342 = vmatprep.subr.bf16.mxu0 0
  %3343 = vmatpush1.bf16.msra.mxu0 %v3057
  %3344 = vmatprep.subr.bf16.mxu0 0
  %3345 = vmatpush1.bf16.msra.mxu0 %v3058
  %3346 = vmatprep.subr.bf16.mxu0 0
  %3347 = vmatpush1.bf16.msra.mxu0 %v3059
  %3348 = vmatprep.subr.bf16.mxu0 0
  %3349 = vmatpush1.bf16.msra.mxu0 %v3060
  %3350 = vmatprep.subr.bf16.mxu0 0
  %3351 = vmatpush1.bf16.msra.mxu0 %v3061
  %3352 = vmatprep.subr.bf16.mxu0 0
  %3353 = vmatpush1.bf16.msra.mxu0 %v3062
  %3354 = vmatprep.subr.bf16.mxu0 0
  %3355 = vmatpush1.bf16.msra.mxu0 %v3063
  %3356 = vmatprep.subr.bf16.mxu0 0
  %3357 = vmatpush1.bf16.msra.mxu0 %v3064
  %3358 = vmatprep.subr.bf16.mxu0 0
  %3359 = vmatpush1.bf16.msra.mxu0 %v3065
  %3360 = vmatprep.subr.bf16.mxu0 0
  %3361 = vmatpush1.bf16.msra.mxu0 %v3066
  %3362 = vmatprep.subr.bf16.mxu0 0
  %3363 = vmatpush1.bf16.msra.mxu0 %v3067
  %3364 = vmatprep.subr.bf16.mxu0 0
  %3365 = vmatpush1.bf16.msra.mxu0 %v3068
  %3366 = vmatprep.mubr.bf16.mxu0 %v2249
  %3367 = vmatmul.mubr.bf16.gmra.mrb[0].mxu0 %v2248
  %v3368 = vpop.f32.mrb[0].mxu0
  %v3369 = vadd.f32 %v3328, %v3368
  %v3370 = vpop.f32.mrb[0].mxu0
  %v3371 = vpop.f32.mrb[0].mxu0
  %v3372 = vadd.f32 %v3331, %v3371
  %v3373 = vpop.f32.mrb[0].mxu0
  %3374 = vdwg.mxu0
  %3375 = vmatprep.subr.bf16.mxu0 0
  %3376 = vmatpush1.bf16.msra.mxu0 %v3069
  %3377 = vmatprep.subr.bf16.mxu0 0
  %3378 = vmatpush1.bf16.msra.mxu0 %v3070
  %3379 = vmatprep.subr.bf16.mxu0 0
  %3380 = vmatpush1.bf16.msra.mxu0 %v3071
  %3381 = vmatprep.subr.bf16.mxu0 0
  %3382 = vmatpush1.bf16.msra.mxu0 %v3072
  %3383 = vmatprep.subr.bf16.mxu0 0
  %3384 = vmatpush1.bf16.msra.mxu0 %v3073
  %3385 = vmatprep.subr.bf16.mxu0 0
  %3386 = vmatpush1.bf16.msra.mxu0 %v3074
  %3387 = vmatprep.subr.bf16.mxu0 0
  %3388 = vmatpush1.bf16.msra.mxu0 %v3075
  %3389 = vmatprep.subr.bf16.mxu0 0
  %3390 = vmatpush1.bf16.msra.mxu0 %v3076
  %3391 = vmatprep.subr.bf16.mxu0 0
  %3392 = vmatpush1.bf16.msra.mxu0 %v3077
  %3393 = vmatprep.subr.bf16.mxu0 0
  %3394 = vmatpush1.bf16.msra.mxu0 %v3078
  %3395 = vmatprep.subr.bf16.mxu0 0
  %3396 = vmatpush1.bf16.msra.mxu0 %v3079
  %3397 = vmatprep.subr.bf16.mxu0 0
  %3398 = vmatpush1.bf16.msra.mxu0 %v3080
  %3399 = vmatprep.subr.bf16.mxu0 0
  %3400 = vmatpush1.bf16.msra.mxu0 %v3081
  %3401 = vmatprep.subr.bf16.mxu0 0
  %3402 = vmatpush1.bf16.msra.mxu0 %v3082
  %3403 = vmatprep.subr.bf16.mxu0 0
  %3404 = vmatpush1.bf16.msra.mxu0 %v3083
  %3405 = vmatprep.subr.bf16.mxu0 0
  %3406 = vmatpush1.bf16.msra.mxu0 %v3084
  %3407 = vmatprep.mubr.bf16.mxu0 %v2251
  %3408 = vmatmul.mubr.bf16.gmra.mrb[0].mxu0 %v2250
  %v3409 = vpop.f32.mrb[0].mxu0
  %v3410 = vadd.f32 %v3369, %v3409
  %v3411 = vpop.f32.mrb[0].mxu0
  %v3412 = vpop.f32.mrb[0].mxu0
  %v3413 = vadd.f32 %v3372, %v3412
  %v3414 = vpop.f32.mrb[0].mxu0
  %3415 = vdwg.mxu0
  %3416 = vmatprep.subr.bf16.mxu0 0
  %3417 = vmatpush1.bf16.msra.mxu0 %v3085
  %3418 = vmatprep.subr.bf16.mxu0 0
  %3419 = vmatpush1.bf16.msra.mxu0 %v3086
  %3420 = vmatprep.subr.bf16.mxu0 0
  %3421 = vmatpush1.bf16.msra.mxu0 %v3087
  %3422 = vmatprep.subr.bf16.mxu0 0
  %3423 = vmatpush1.bf16.msra.mxu0 %v3088
  %3424 = vmatprep.subr.bf16.mxu0 0
  %3425 = vmatpush1.bf16.msra.mxu0 %v3089
  %3426 = vmatprep.subr.bf16.mxu0 0
  %3427 = vmatpush1.bf16.msra.mxu0 %v3090
  %3428 = vmatprep.subr.bf16.mxu0 0
  %3429 = vmatpush1.bf16.msra.mxu0 %v3091
  %3430 = vmatprep.subr.bf16.mxu0 0
  %3431 = vmatpush1.bf16.msra.mxu0 %v3092
  %3432 = vmatprep.subr.bf16.mxu0 0
  %3433 = vmatpush1.bf16.msra.mxu0 %v3093
  %3434 = vmatprep.subr.bf16.mxu0 0
  %3435 = vmatpush1.bf16.msra.mxu0 %v3094
  %3436 = vmatprep.subr.bf16.mxu0 0
  %3437 = vmatpush1.bf16.msra.mxu0 %v3095
  %3438 = vmatprep.subr.bf16.mxu0 0
  %3439 = vmatpush1.bf16.msra.mxu0 %v3096
  %3440 = vmatprep.subr.bf16.mxu0 0
  %3441 = vmatpush1.bf16.msra.mxu0 %v3097
  %3442 = vmatprep.subr.bf16.mxu0 0
  %3443 = vmatpush1.bf16.msra.mxu0 %v3098
  %3444 = vmatprep.subr.bf16.mxu0 0
  %3445 = vmatpush1.bf16.msra.mxu0 %v3099
  %3446 = vmatprep.subr.bf16.mxu0 0
  %3447 = vmatpush1.bf16.msra.mxu0 %v3100
  %3448 = vmatprep.mubr.bf16.mxu0 %v2253
  %3449 = vmatmul.mubr.bf16.gmra.mrb[0].mxu0 %v2252
  %v3450 = vpop.f32.mrb[0].mxu0
  %v3451 = vadd.f32 %v3410, %v3450
  %v3452 = vpop.f32.mrb[0].mxu0
  %v3453 = vpop.f32.mrb[0].mxu0
  %v3454 = vadd.f32 %v3413, %v3453
  %v3455 = vpop.f32.mrb[0].mxu0
  %3456 = vdwg.mxu0
  %3457 = vmatprep.subr.bf16.mxu0 0
  %3458 = vmatpush1.bf16.msra.mxu0 %v3101
  %3459 = vmatprep.subr.bf16.mxu0 0
  %3460 = vmatpush1.bf16.msra.mxu0 %v3102
  %3461 = vmatprep.subr.bf16.mxu0 0
  %3462 = vmatpush1.bf16.msra.mxu0 %v3103
  %3463 = vmatprep.subr.bf16.mxu0 0
  %3464 = vmatpush1.bf16.msra.mxu0 %v3104
  %3465 = vmatprep.subr.bf16.mxu0 0
  %3466 = vmatpush1.bf16.msra.mxu0 %v3105
  %3467 = vmatprep.subr.bf16.mxu0 0
  %3468 = vmatpush1.bf16.msra.mxu0 %v3106
  %3469 = vmatprep.subr.bf16.mxu0 0
  %3470 = vmatpush1.bf16.msra.mxu0 %v3107
  %3471 = vmatprep.subr.bf16.mxu0 0
  %3472 = vmatpush1.bf16.msra.mxu0 %v3108
  %3473 = vmatprep.subr.bf16.mxu0 0
  %3474 = vmatpush1.bf16.msra.mxu0 %v3109
  %3475 = vmatprep.subr.bf16.mxu0 0
  %3476 = vmatpush1.bf16.msra.mxu0 %v3110
  %3477 = vmatprep.subr.bf16.mxu0 0
  %3478 = vmatpush1.bf16.msra.mxu0 %v3111
  %3479 = vmatprep.subr.bf16.mxu0 0
  %3480 = vmatpush1.bf16.msra.mxu0 %v3112
  %3481 = vmatprep.subr.bf16.mxu0 0
  %3482 = vmatpush1.bf16.msra.mxu0 %v3113
  %3483 = vmatprep.subr.bf16.mxu0 0
  %3484 = vmatpush1.bf16.msra.mxu0 %v3114
  %3485 = vmatprep.subr.bf16.mxu0 0
  %3486 = vmatpush1.bf16.msra.mxu0 %v3115
  %3487 = vmatprep.subr.bf16.mxu0 0
  %3488 = vmatpush1.bf16.msra.mxu0 %v3116
  %3489 = vmatprep.mubr.bf16.mxu0 %v2255
  %3490 = vmatmul.mubr.bf16.gmra.mrb[0].mxu0 %v2254
  %v3491 = vpop.f32.mrb[0].mxu0
  %v3492 = vadd.f32 %v3451, %v3491
  %v3493 = vpop.f32.mrb[0].mxu0
  %v3494 = vpop.f32.mrb[0].mxu0
  %v3495 = vadd.f32 %v3454, %v3494
  %v3496 = vpop.f32.mrb[0].mxu0
  %3497 = vdwg.mxu0
  %3498 = vmatprep.subr.bf16.mxu0 0
  %3499 = vmatpush1.bf16.msra.mxu0 %v3117
  %3500 = vmatprep.subr.bf16.mxu0 0
  %3501 = vmatpush1.bf16.msra.mxu0 %v3118
  %3502 = vmatprep.subr.bf16.mxu0 0
  %3503 = vmatpush1.bf16.msra.mxu0 %v3119
  %3504 = vmatprep.subr.bf16.mxu0 0
  %3505 = vmatpush1.bf16.msra.mxu0 %v3120
  %3506 = vmatprep.subr.bf16.mxu0 0
  %3507 = vmatpush1.bf16.msra.mxu0 %v3121
  %3508 = vmatprep.subr.bf16.mxu0 0
  %3509 = vmatpush1.bf16.msra.mxu0 %v3122
  %3510 = vmatprep.subr.bf16.mxu0 0
  %3511 = vmatpush1.bf16.msra.mxu0 %v3123
  %3512 = vmatprep.subr.bf16.mxu0 0
  %3513 = vmatpush1.bf16.msra.mxu0 %v3124
  %3514 = vmatprep.subr.bf16.mxu0 0
  %3515 = vmatpush1.bf16.msra.mxu0 %v3125
  %3516 = vmatprep.subr.bf16.mxu0 0
  %3517 = vmatpush1.bf16.msra.mxu0 %v3126
  %3518 = vmatprep.subr.bf16.mxu0 0
  %3519 = vmatpush1.bf16.msra.mxu0 %v3127
  %3520 = vmatprep.subr.bf16.mxu0 0
  %3521 = vmatpush1.bf16.msra.mxu0 %v3128
  %3522 = vmatprep.subr.bf16.mxu0 0
  %3523 = vmatpush1.bf16.msra.mxu0 %v3129
  %3524 = vmatprep.subr.bf16.mxu0 0
  %3525 = vmatpush1.bf16.msra.mxu0 %v3130
  %3526 = vmatprep.subr.bf16.mxu0 0
  %3527 = vmatpush1.bf16.msra.mxu0 %v3131
  %3528 = vmatprep.subr.bf16.mxu0 0
  %3529 = vmatpush1.bf16.msra.mxu0 %v3132
  %3530 = vmatprep.mubr.bf16.mxu0 %v2257
  %3531 = vmatmul.mubr.bf16.gmra.mrb[0].mxu0 %v2256
  %v3532 = vpop.f32.mrb[0].mxu0
  %v3533 = vadd.f32 %v3492, %v3532
  %v3534 = vpop.f32.mrb[0].mxu0
  %v3535 = vpop.f32.mrb[0].mxu0
  %v3536 = vadd.f32 %v3495, %v3535
  %v3537 = vpop.f32.mrb[0].mxu0
  %3538 = vdwg.mxu0
  %3539 = vmatprep.subr.bf16.mxu0 0
  %3540 = vmatpush1.bf16.msra.mxu0 %v3133
  %3541 = vmatprep.subr.bf16.mxu0 0
  %3542 = vmatpush1.bf16.msra.mxu0 %v3134
  %3543 = vmatprep.subr.bf16.mxu0 0
  %3544 = vmatpush1.bf16.msra.mxu0 %v3135
  %3545 = vmatprep.subr.bf16.mxu0 0
  %3546 = vmatpush1.bf16.msra.mxu0 %v3136
  %3547 = vmatprep.subr.bf16.mxu0 0
  %3548 = vmatpush1.bf16.msra.mxu0 %v3137
  %3549 = vmatprep.subr.bf16.mxu0 0
  %3550 = vmatpush1.bf16.msra.mxu0 %v3138
  %3551 = vmatprep.subr.bf16.mxu0 0
  %3552 = vmatpush1.bf16.msra.mxu0 %v3139
  %3553 = vmatprep.subr.bf16.mxu0 0
  %3554 = vmatpush1.bf16.msra.mxu0 %v3140
  %3555 = vmatprep.subr.bf16.mxu0 0
  %3556 = vmatpush1.bf16.msra.mxu0 %v3141
  %3557 = vmatprep.subr.bf16.mxu0 0
  %3558 = vmatpush1.bf16.msra.mxu0 %v3142
  %3559 = vmatprep.subr.bf16.mxu0 0
  %3560 = vmatpush1.bf16.msra.mxu0 %v3143
  %3561 = vmatprep.subr.bf16.mxu0 0
  %3562 = vmatpush1.bf16.msra.mxu0 %v3144
  %3563 = vmatprep.subr.bf16.mxu0 0
  %3564 = vmatpush1.bf16.msra.mxu0 %v3145
  %3565 = vmatprep.subr.bf16.mxu0 0
  %3566 = vmatpush1.bf16.msra.mxu0 %v3146
  %3567 = vmatprep.subr.bf16.mxu0 0
  %3568 = vmatpush1.bf16.msra.mxu0 %v3147
  %3569 = vmatprep.subr.bf16.mxu0 0
  %3570 = vmatpush1.bf16.msra.mxu0 %v3148
  %3571 = vmatprep.mubr.bf16.mxu0 %v2259
  %3572 = vmatmul.mubr.bf16.gmra.mrb[0].mxu0 %v2258
  %v3573 = vpop.f32.mrb[0].mxu0
  %v3574 = vadd.f32 %v3533, %v3573
  %v3575 = vpop.f32.mrb[0].mxu0
  %v3576 = vpop.f32.mrb[0].mxu0
  %v3577 = vadd.f32 %v3536, %v3576
  %v3578 = vpop.f32.mrb[0].mxu0
  %3579 = vdwg.mxu0
  %3580 = vmatprep.subr.bf16.mxu0 0
  %3581 = vmatpush1.bf16.msra.mxu0 %v3149
  %3582 = vmatprep.subr.bf16.mxu0 0
  %3583 = vmatpush1.bf16.msra.mxu0 %v3150
  %3584 = vmatprep.subr.bf16.mxu0 0
  %3585 = vmatpush1.bf16.msra.mxu0 %v3151
  %3586 = vmatprep.subr.bf16.mxu0 0
  %3587 = vmatpush1.bf16.msra.mxu0 %v3152
  %3588 = vmatprep.subr.bf16.mxu0 0
  %3589 = vmatpush1.bf16.msra.mxu0 %v3153
  %3590 = vmatprep.subr.bf16.mxu0 0
  %3591 = vmatpush1.bf16.msra.mxu0 %v3154
  %3592 = vmatprep.subr.bf16.mxu0 0
  %3593 = vmatpush1.bf16.msra.mxu0 %v3155
  %3594 = vmatprep.subr.bf16.mxu0 0
  %3595 = vmatpush1.bf16.msra.mxu0 %v3156
  %3596 = vmatprep.subr.bf16.mxu0 0
  %3597 = vmatpush1.bf16.msra.mxu0 %v3157
  %3598 = vmatprep.subr.bf16.mxu0 0
  %3599 = vmatpush1.bf16.msra.mxu0 %v3158
  %3600 = vmatprep.subr.bf16.mxu0 0
  %3601 = vmatpush1.bf16.msra.mxu0 %v3159
  %3602 = vmatprep.subr.bf16.mxu0 0
  %3603 = vmatpush1.bf16.msra.mxu0 %v3160
  %3604 = vmatprep.subr.bf16.mxu0 0
  %3605 = vmatpush1.bf16.msra.mxu0 %v3161
  %3606 = vmatprep.subr.bf16.mxu0 0
  %3607 = vmatpush1.bf16.msra.mxu0 %v3162
  %3608 = vmatprep.subr.bf16.mxu0 0
  %3609 = vmatpush1.bf16.msra.mxu0 %v3163
  %3610 = vmatprep.subr.bf16.mxu0 0
  %3611 = vmatpush1.bf16.msra.mxu0 %v3164
  %3612 = vmatprep.mubr.bf16.mxu0 %v2261
  %3613 = vmatmul.mubr.bf16.gmra.mrb[0].mxu0 %v2260
  %v3614 = vpop.f32.mrb[0].mxu0
  %v3615 = vadd.f32 %v3574, %v3614
  %v3616 = vpop.f32.mrb[0].mxu0
  %v3617 = vpop.f32.mrb[0].mxu0
  %v3618 = vadd.f32 %v3577, %v3617
  %v3619 = vpop.f32.mrb[0].mxu0
  %3620 = vdwg.mxu0
  %v3621 = vadd.f32 %v1588, %v3615
  %v3622 = vadd.f32 %v1589, %v3618
  %v3623 = vsel %vm79, %v3621, 0.0
  %3624 = vadd.xlane.f32.xlu0 %v3623
  %v3625 = vpop.xlane.xlu0 %3624
  %v3626 = vsel %vm79, %v3622, 0.0
  %3627 = vadd.xlane.f32.xlu0 %v3626
  %v3628 = vpop.xlane.xlu0 %3627
  %v3629 = vmul.f32 %v3625, %v1551
  %v3630 = vmul.f32 %v3628, %v1551
  %v3631 = vsub.f32 %v3621, %v3629
  %v3632 = vsub.f32 %v3622, %v3630
  %v3633 = vmul.f32 %v3631, %v3631
  %v3634 = vmul.f32 %v3632, %v3632
  %v3635 = vsel %vm79, %v3633, 0.0
  %3636 = vadd.xlane.f32.xlu0 %v3635
  %v3637 = vpop.xlane.xlu0 %3636
  %v3638 = vsel %vm79, %v3634, 0.0
  %3639 = vadd.xlane.f32.xlu0 %v3638
  %v3640 = vpop.xlane.xlu0 %3639
  %v3641 = vmul.f32 %v3637, %v1551
  %v3642 = vmul.f32 %v3640, %v1551
  %v3643 = vadd.f32 %v3641, 1e-05
  %v3644 = vadd.f32 %v3642, 1e-05
  %v3645 = vrsqrt.pop %v3643
  %v3646 = vrsqrt.pop %v3644
  %v3647 = vmul.f32 %v3631, %v3645
  %v3648 = vmul.f32 %v3632, %v3646
  %v3649 = vld [vmem:[%s11] sm:$0x1]
  %v3651 = vlaneseq
  %v3652 = vshrl.u32 %v3651, 7
  %v3653 = vsub.s32 0, %v3652
  %v3654 = vrot.slane %v3649, %v3653
  %v3656 = vmul.f32 %v3647, %v3654
  %v3657 = vmul.f32 %v3648, %v3654
  %v3658 = vld [vmem:[%s12] sm:$0x1]
  %v3660 = vlaneseq
  %v3661 = vshrl.u32 %v3660, 7
  %v3662 = vsub.s32 0, %v3661
  %v3663 = vrot.slane %v3658, %v3662
  %v3665 = vadd.f32 %v3656, %v3663
  %v3666 = vadd.f32 %v3657, %v3663
  %v3667 = vpack.c.bf16 %v3666, %v3665
  %s3668 = scalar_lea.vmem %s1, 16
  %v3669 = vld [vmem:[%s3668] sm:$0xf]
  %v3670 = vld [vmem:[%s3668 + $0x4] sm:$0xf]
  %v3671 = vld [vmem:[%s3668 + $0x8] sm:$0xf]
  %v3672 = vld [vmem:[%s3668 + $0xc] sm:$0xf]
  %s3673 = scalar_lea.vmem %s2, 1
  %v3674 = vld [vmem:[%s3673] sm:$0x1]
  %v3676 = vlaneseq
  %v3677 = vshrl.u32 %v3676, 7
  %v3678 = vsub.s32 0, %v3677
  %v3679 = vrot.slane %v3674, %v3678
  %v3685 = vunpack.c.l.b16 %v3669
  %v3686 = vunpack.c.l.b16 %v3670
  %v3687 = vunpack.c.l.b16 %v3671
  %v3688 = vunpack.c.l.b16 %v3672
  %v3689 = vpack.c.b16 %v3686, %v3685
  %v3690 = vpack.c.b16 %v3688, %v3687
  %v3694 = vsel %vm79, %v3667, 0
  %3696 = vmatprep.subr.bf16.mxu0 0
  %3697 = vmatpush1.bf16.msra.mxu0 %v3689
  %3698 = vmatprep.subr.bf16.mxu0 0
  %3699 = vmatpush1.bf16.msra.mxu0 %v3690
  %3700 = vmatprep.subr.bf16.mxu0 0
  %3701 = vmatpush1.bf16.msra.mxu0 0
  %3702 = vmatprep.subr.bf16.mxu0 0
  %3703 = vmatpush1.bf16.msra.mxu0 0
  %3704 = vmatprep.subr.bf16.mxu0 0
  %3705 = vmatpush1.bf16.msra.mxu0 0
  %3706 = vmatprep.subr.bf16.mxu0 0
  %3707 = vmatpush1.bf16.msra.mxu0 0
  %3708 = vmatprep.subr.bf16.mxu0 0
  %3709 = vmatpush1.bf16.msra.mxu0 0
  %3710 = vmatprep.subr.bf16.mxu0 0
  %3711 = vmatpush1.bf16.msra.mxu0 0
  %3712 = vmatprep.subr.bf16.mxu0 0
  %3713 = vmatpush1.bf16.msra.mxu0 0
  %3714 = vmatprep.subr.bf16.mxu0 0
  %3715 = vmatpush1.bf16.msra.mxu0 0
  %3716 = vmatprep.subr.bf16.mxu0 0
  %3717 = vmatpush1.bf16.msra.mxu0 0
  %3718 = vmatprep.subr.bf16.mxu0 0
  %3719 = vmatpush1.bf16.msra.mxu0 0
  %3720 = vmatprep.subr.bf16.mxu0 0
  %3721 = vmatpush1.bf16.msra.mxu0 0
  %3722 = vmatprep.subr.bf16.mxu0 0
  %3723 = vmatpush1.bf16.msra.mxu0 0
  %3724 = vmatprep.subr.bf16.mxu0 0
  %3725 = vmatpush1.bf16.msra.mxu0 0
  %3726 = vmatprep.subr.bf16.mxu0 0
  %3727 = vmatpush1.bf16.msra.mxu0 0
  %3728 = vmatprep.mubr.bf16.mxu0 0
  %3729 = vmatmul.mubr.bf16.gmra.mrb[0].mxu0 %v3694
  %v3730 = vpop.f32.mrb[0].mxu0
  %v3731 = vadd.f32 %v3679, %v3730
  %v3732 = vpop.f32.mrb[0].mxu0
  %v3733 = vpop.f32.mrb[0].mxu0
  %v3734 = vadd.f32 %v3679, %v3733
  %v3735 = vpop.f32.mrb[0].mxu0
  %3736 = vdwg.mxu0
  %3738 = vrot.lane.b32.xlu0 %v3731, 96
  %v3739 = vpop.permute.xlu0 %3738
  %v3740 = vsel %vm127, %v3731, 0
  %v3742 = vsel %vm127, %v3739, 0
  %3744 = vmatprep.subr.mxu0 0.0
  %3745 = vmatpush1.xpose.msra.mxu0 %v3742
  %3746 = vmatprep.subr.mxu0 0.0
  %3747 = vmatpush1.xpose.msra.mxu0 0.0
  %3748 = vmatprep.subr.mxu0 0.0
  %3749 = vmatpush1.xpose.msra.mxu0 0.0
  %3750 = vmatprep.subr.mxu0 0.0
  %3751 = vmatpush1.xpose.msra.mxu0 0.0
  %3752 = vmatprep.subr.mxu0 0.0
  %3753 = vmatpush1.xpose.msra.mxu0 0.0
  %3754 = vmatprep.subr.mxu0 0.0
  %3755 = vmatpush1.xpose.msra.mxu0 0.0
  %3756 = vmatprep.subr.mxu0 0.0
  %3757 = vmatpush1.xpose.msra.mxu0 0.0
  %3758 = vmatprep.subr.mxu0 0.0
  %3759 = vmatpush1.xpose.msra.mxu0 0.0
  %3760 = vmatprep.subr.mxu0 0.0
  %3761 = vmatpush1.xpose.msra.mxu0 0.0
  %3762 = vmatprep.subr.mxu0 0.0
  %3763 = vmatpush1.xpose.msra.mxu0 0.0
  %3764 = vmatprep.subr.mxu0 0.0
  %3765 = vmatpush1.xpose.msra.mxu0 0.0
  %3766 = vmatprep.subr.mxu0 0.0
  %3767 = vmatpush1.xpose.msra.mxu0 0.0
  %3768 = vmatprep.subr.mxu0 0.0
  %3769 = vmatpush1.xpose.msra.mxu0 0.0
  %3770 = vmatprep.subr.mxu0 0.0
  %3771 = vmatpush1.xpose.msra.mxu0 0.0
  %3772 = vmatprep.subr.mxu0 0.0
  %3773 = vmatpush1.xpose.msra.mxu0 0.0
  %3774 = vmatprep.subr.mxu0 0.0
  %3775 = vmatpush1.xpose.msra.mxu0 0.0
  %3776 = vmatprep.subr.mxu0 0.0
  %3777 = vmatpush1.xpose.msra.mxu0 0.0
  %3778 = vmatprep.subr.mxu0 0.0
  %3779 = vmatpush1.xpose.msra.mxu0 0.0
  %3780 = vmatprep.subr.mxu0 0.0
  %3781 = vmatpush1.xpose.msra.mxu0 0.0
  %3782 = vmatprep.subr.mxu0 0.0
  %3783 = vmatpush1.xpose.msra.mxu0 0.0
  %3784 = vmatprep.subr.mxu0 0.0
  %3785 = vmatpush1.xpose.msra.mxu0 0.0
  %3786 = vmatprep.subr.mxu0 0.0
  %3787 = vmatpush1.xpose.msra.mxu0 0.0
  %3788 = vmatprep.subr.mxu0 0.0
  %3789 = vmatpush1.xpose.msra.mxu0 0.0
  %3790 = vmatprep.subr.mxu0 0.0
  %3791 = vmatpush1.xpose.msra.mxu0 0.0
  %3792 = vmatprep.subr.mxu0 0.0
  %3793 = vmatpush1.xpose.msra.mxu0 0.0
  %3794 = vmatprep.subr.mxu0 0.0
  %3795 = vmatpush1.xpose.msra.mxu0 0.0
  %3796 = vmatprep.subr.mxu0 0.0
  %3797 = vmatpush1.xpose.msra.mxu0 0.0
  %3798 = vmatprep.subr.mxu0 0.0
  %3799 = vmatpush1.xpose.msra.mxu0 0.0
  %3800 = vmatprep.subr.mxu0 0.0
  %3801 = vmatpush1.xpose.msra.mxu0 0.0
  %3802 = vmatprep.subr.mxu0 0.0
  %3803 = vmatpush1.xpose.msra.mxu0 0.0
  %3804 = vmatprep.subr.mxu0 0.0
  %3805 = vmatpush1.xpose.msra.mxu0 0.0
  %3806 = vmatprep.subr.mxu0 0.0
  %3807 = vmatpush1.xpose.msra.mxu0 0.0
  %3808 = vmatprep.mubr.f32.mxu0 0.0
  %3809 = vmatmul.mubr.f32.gmra.mrb[0].mxu0 %v3740
  %v3810 = vpop.f32.mrb[0].mxu0
  %v3811 = vadd.f32 0.0, %v3810
  %v3812 = vpop.f32.mrb[0].mxu0
  %3813 = vdwg.mxu0
  %3815 = vrot.lane.b32.xlu0 %v3734, 96
  %v3816 = vpop.permute.xlu0 %3815
  %v3817 = vsel %vm127, %v3734, 0
  %v3819 = vsel %vm127, %v3816, 0
  %3821 = vmatprep.subr.mxu0 0.0
  %3822 = vmatpush1.xpose.msra.mxu0 %v3819
  %3823 = vmatprep.subr.mxu0 0.0
  %3824 = vmatpush1.xpose.msra.mxu0 0.0
  %3825 = vmatprep.subr.mxu0 0.0
  %3826 = vmatpush1.xpose.msra.mxu0 0.0
  %3827 = vmatprep.subr.mxu0 0.0
  %3828 = vmatpush1.xpose.msra.mxu0 0.0
  %3829 = vmatprep.subr.mxu0 0.0
  %3830 = vmatpush1.xpose.msra.mxu0 0.0
  %3831 = vmatprep.subr.mxu0 0.0
  %3832 = vmatpush1.xpose.msra.mxu0 0.0
  %3833 = vmatprep.subr.mxu0 0.0
  %3834 = vmatpush1.xpose.msra.mxu0 0.0
  %3835 = vmatprep.subr.mxu0 0.0
  %3836 = vmatpush1.xpose.msra.mxu0 0.0
  %3837 = vmatprep.subr.mxu0 0.0
  %3838 = vmatpush1.xpose.msra.mxu0 0.0
  %3839 = vmatprep.subr.mxu0 0.0
  %3840 = vmatpush1.xpose.msra.mxu0 0.0
  %3841 = vmatprep.subr.mxu0 0.0
  %3842 = vmatpush1.xpose.msra.mxu0 0.0
  %3843 = vmatprep.subr.mxu0 0.0
  %3844 = vmatpush1.xpose.msra.mxu0 0.0
  %3845 = vmatprep.subr.mxu0 0.0
  %3846 = vmatpush1.xpose.msra.mxu0 0.0
  %3847 = vmatprep.subr.mxu0 0.0
  %3848 = vmatpush1.xpose.msra.mxu0 0.0
  %3849 = vmatprep.subr.mxu0 0.0
  %3850 = vmatpush1.xpose.msra.mxu0 0.0
  %3851 = vmatprep.subr.mxu0 0.0
  %3852 = vmatpush1.xpose.msra.mxu0 0.0
  %3853 = vmatprep.subr.mxu0 0.0
  %3854 = vmatpush1.xpose.msra.mxu0 0.0
  %3855 = vmatprep.subr.mxu0 0.0
  %3856 = vmatpush1.xpose.msra.mxu0 0.0
  %3857 = vmatprep.subr.mxu0 0.0
  %3858 = vmatpush1.xpose.msra.mxu0 0.0
  %3859 = vmatprep.subr.mxu0 0.0
  %3860 = vmatpush1.xpose.msra.mxu0 0.0
  %3861 = vmatprep.subr.mxu0 0.0
  %3862 = vmatpush1.xpose.msra.mxu0 0.0
  %3863 = vmatprep.subr.mxu0 0.0
  %3864 = vmatpush1.xpose.msra.mxu0 0.0
  %3865 = vmatprep.subr.mxu0 0.0
  %3866 = vmatpush1.xpose.msra.mxu0 0.0
  %3867 = vmatprep.subr.mxu0 0.0
  %3868 = vmatpush1.xpose.msra.mxu0 0.0
  %3869 = vmatprep.subr.mxu0 0.0
  %3870 = vmatpush1.xpose.msra.mxu0 0.0
  %3871 = vmatprep.subr.mxu0 0.0
  %3872 = vmatpush1.xpose.msra.mxu0 0.0
  %3873 = vmatprep.subr.mxu0 0.0
  %3874 = vmatpush1.xpose.msra.mxu0 0.0
  %3875 = vmatprep.subr.mxu0 0.0
  %3876 = vmatpush1.xpose.msra.mxu0 0.0
  %3877 = vmatprep.subr.mxu0 0.0
  %3878 = vmatpush1.xpose.msra.mxu0 0.0
  %3879 = vmatprep.subr.mxu0 0.0
  %3880 = vmatpush1.xpose.msra.mxu0 0.0
  %3881 = vmatprep.subr.mxu0 0.0
  %3882 = vmatpush1.xpose.msra.mxu0 0.0
  %3883 = vmatprep.subr.mxu0 0.0
  %3884 = vmatpush1.xpose.msra.mxu0 0.0
  %3885 = vmatprep.mubr.f32.mxu0 0.0
  %3886 = vmatmul.mubr.f32.gmra.mrb[0].mxu0 %v3817
  %v3887 = vpop.f32.mrb[0].mxu0
  %v3888 = vadd.f32 0.0, %v3887
  %v3889 = vpop.f32.mrb[0].mxu0
  %3890 = vdwg.mxu0
  %v3891 = vsel %vm127, %v3811, -inf
  %3892 = vmax.xlane.f32.xlu0 %v3891
  %v3893 = vpop.xlane.xlu0 %3892
  %v3894 = vsel %vm127, %v3888, -inf
  %3895 = vmax.xlane.f32.xlu0 %v3894
  %v3896 = vpop.xlane.xlu0 %3895
  %v3897 = vsub.f32 %v3811, %v3893
  %v3898 = vsub.f32 %v3888, %v3896
  %v3899 = vmul.f32 %v3897, 1.442695
  %v3900 = vpow.pop %v3899
  %v3901 = vmul.f32 %v3898, 1.442695
  %v3902 = vpow.pop %v3901
  %v3903 = vsel %vm127, %v3900, 0.0
  %3904 = vadd.xlane.f32.xlu0 %v3903
  %v3905 = vpop.xlane.xlu0 %3904
  %v3906 = vsel %vm127, %v3902, 0.0
  %3907 = vadd.xlane.f32.xlu0 %v3906
  %v3908 = vpop.xlane.xlu0 %3907
  %v3909 = vrcp.pop %v3905
  %v3910 = vrcp.pop %v3908
  %v3911 = vmul.f32 %v3900, %v3909
  %v3912 = vmul.f32 %v3902, %v3910
  %3913 = vrot.lane.b32.xlu0 %v3731, 64
  %v3914 = vpop.permute.xlu0 %3913
  %v3917 = vsel %vm127, %v3911, 0
  %3919 = vmatprep.subr.mxu0 0.0
  %3920 = vmatpush1.msra.mxu0 %v3914
  %3921 = vmatprep.subr.mxu0 0.0
  %3922 = vmatpush1.msra.mxu0 0.0
  %3923 = vmatprep.subr.mxu0 0.0
  %3924 = vmatpush1.msra.mxu0 0.0
  %3925 = vmatprep.subr.mxu0 0.0
  %3926 = vmatpush1.msra.mxu0 0.0
  %3927 = vmatprep.subr.mxu0 0.0
  %3928 = vmatpush1.msra.mxu0 0.0
  %3929 = vmatprep.subr.mxu0 0.0
  %3930 = vmatpush1.msra.mxu0 0.0
  %3931 = vmatprep.subr.mxu0 0.0
  %3932 = vmatpush1.msra.mxu0 0.0
  %3933 = vmatprep.subr.mxu0 0.0
  %3934 = vmatpush1.msra.mxu0 0.0
  %3935 = vmatprep.subr.mxu0 0.0
  %3936 = vmatpush1.msra.mxu0 0.0
  %3937 = vmatprep.subr.mxu0 0.0
  %3938 = vmatpush1.msra.mxu0 0.0
  %3939 = vmatprep.subr.mxu0 0.0
  %3940 = vmatpush1.msra.mxu0 0.0
  %3941 = vmatprep.subr.mxu0 0.0
  %3942 = vmatpush1.msra.mxu0 0.0
  %3943 = vmatprep.subr.mxu0 0.0
  %3944 = vmatpush1.msra.mxu0 0.0
  %3945 = vmatprep.subr.mxu0 0.0
  %3946 = vmatpush1.msra.mxu0 0.0
  %3947 = vmatprep.subr.mxu0 0.0
  %3948 = vmatpush1.msra.mxu0 0.0
  %3949 = vmatprep.subr.mxu0 0.0
  %3950 = vmatpush1.msra.mxu0 0.0
  %3951 = vmatprep.subr.mxu0 0.0
  %3952 = vmatpush1.msra.mxu0 0.0
  %3953 = vmatprep.subr.mxu0 0.0
  %3954 = vmatpush1.msra.mxu0 0.0
  %3955 = vmatprep.subr.mxu0 0.0
  %3956 = vmatpush1.msra.mxu0 0.0
  %3957 = vmatprep.subr.mxu0 0.0
  %3958 = vmatpush1.msra.mxu0 0.0
  %3959 = vmatprep.subr.mxu0 0.0
  %3960 = vmatpush1.msra.mxu0 0.0
  %3961 = vmatprep.subr.mxu0 0.0
  %3962 = vmatpush1.msra.mxu0 0.0
  %3963 = vmatprep.subr.mxu0 0.0
  %3964 = vmatpush1.msra.mxu0 0.0
  %3965 = vmatprep.subr.mxu0 0.0
  %3966 = vmatpush1.msra.mxu0 0.0
  %3967 = vmatprep.subr.mxu0 0.0
  %3968 = vmatpush1.msra.mxu0 0.0
  %3969 = vmatprep.subr.mxu0 0.0
  %3970 = vmatpush1.msra.mxu0 0.0
  %3971 = vmatprep.subr.mxu0 0.0
  %3972 = vmatpush1.msra.mxu0 0.0
  %3973 = vmatprep.subr.mxu0 0.0
  %3974 = vmatpush1.msra.mxu0 0.0
  %3975 = vmatprep.subr.mxu0 0.0
  %3976 = vmatpush1.msra.mxu0 0.0
  %3977 = vmatprep.subr.mxu0 0.0
  %3978 = vmatpush1.msra.mxu0 0.0
  %3979 = vmatprep.subr.mxu0 0.0
  %3980 = vmatpush1.msra.mxu0 0.0
  %3981 = vmatprep.subr.mxu0 0.0
  %3982 = vmatpush1.msra.mxu0 0.0
  %3983 = vmatprep.mubr.f32.mxu0 0.0
  %3984 = vmatmul.mubr.f32.gmra.mrb[0].mxu0 %v3917
  %v3985 = vpop.f32.mrb[0].mxu0
  %v3986 = vadd.f32 0.0, %v3985
  %v3987 = vpop.f32.mrb[0].mxu0
  %3988 = vdwg.mxu0
  %3989 = vrot.lane.b32.xlu0 %v3734, 64
  %v3990 = vpop.permute.xlu0 %3989
  %v3993 = vsel %vm127, %v3912, 0
  %3995 = vmatprep.subr.mxu0 0.0
  %3996 = vmatpush1.msra.mxu0 %v3990
  %3997 = vmatprep.subr.mxu0 0.0
  %3998 = vmatpush1.msra.mxu0 0.0
  %3999 = vmatprep.subr.mxu0 0.0
  %4000 = vmatpush1.msra.mxu0 0.0
  %4001 = vmatprep.subr.mxu0 0.0
  %4002 = vmatpush1.msra.mxu0 0.0
  %4003 = vmatprep.subr.mxu0 0.0
  %4004 = vmatpush1.msra.mxu0 0.0
  %4005 = vmatprep.subr.mxu0 0.0
  %4006 = vmatpush1.msra.mxu0 0.0
  %4007 = vmatprep.subr.mxu0 0.0
  %4008 = vmatpush1.msra.mxu0 0.0
  %4009 = vmatprep.subr.mxu0 0.0
  %4010 = vmatpush1.msra.mxu0 0.0
  %4011 = vmatprep.subr.mxu0 0.0
  %4012 = vmatpush1.msra.mxu0 0.0
  %4013 = vmatprep.subr.mxu0 0.0
  %4014 = vmatpush1.msra.mxu0 0.0
  %4015 = vmatprep.subr.mxu0 0.0
  %4016 = vmatpush1.msra.mxu0 0.0
  %4017 = vmatprep.subr.mxu0 0.0
  %4018 = vmatpush1.msra.mxu0 0.0
  %4019 = vmatprep.subr.mxu0 0.0
  %4020 = vmatpush1.msra.mxu0 0.0
  %4021 = vmatprep.subr.mxu0 0.0
  %4022 = vmatpush1.msra.mxu0 0.0
  %4023 = vmatprep.subr.mxu0 0.0
  %4024 = vmatpush1.msra.mxu0 0.0
  %4025 = vmatprep.subr.mxu0 0.0
  %4026 = vmatpush1.msra.mxu0 0.0
  %4027 = vmatprep.subr.mxu0 0.0
  %4028 = vmatpush1.msra.mxu0 0.0
  %4029 = vmatprep.subr.mxu0 0.0
  %4030 = vmatpush1.msra.mxu0 0.0
  %4031 = vmatprep.subr.mxu0 0.0
  %4032 = vmatpush1.msra.mxu0 0.0
  %4033 = vmatprep.subr.mxu0 0.0
  %4034 = vmatpush1.msra.mxu0 0.0
  %4035 = vmatprep.subr.mxu0 0.0
  %4036 = vmatpush1.msra.mxu0 0.0
  %4037 = vmatprep.subr.mxu0 0.0
  %4038 = vmatpush1.msra.mxu0 0.0
  %4039 = vmatprep.subr.mxu0 0.0
  %4040 = vmatpush1.msra.mxu0 0.0
  %4041 = vmatprep.subr.mxu0 0.0
  %4042 = vmatpush1.msra.mxu0 0.0
  %4043 = vmatprep.subr.mxu0 0.0
  %4044 = vmatpush1.msra.mxu0 0.0
  %4045 = vmatprep.subr.mxu0 0.0
  %4046 = vmatpush1.msra.mxu0 0.0
  %4047 = vmatprep.subr.mxu0 0.0
  %4048 = vmatpush1.msra.mxu0 0.0
  %4049 = vmatprep.subr.mxu0 0.0
  %4050 = vmatpush1.msra.mxu0 0.0
  %4051 = vmatprep.subr.mxu0 0.0
  %4052 = vmatpush1.msra.mxu0 0.0
  %4053 = vmatprep.subr.mxu0 0.0
  %4054 = vmatpush1.msra.mxu0 0.0
  %4055 = vmatprep.subr.mxu0 0.0
  %4056 = vmatpush1.msra.mxu0 0.0
  %4057 = vmatprep.subr.mxu0 0.0
  %4058 = vmatpush1.msra.mxu0 0.0
  %4059 = vmatprep.mubr.f32.mxu0 0.0
  %4060 = vmatmul.mubr.f32.gmra.mrb[0].mxu0 %v3993
  %v4061 = vpop.f32.mrb[0].mxu0
  %v4062 = vadd.f32 0.0, %v4061
  %v4063 = vpop.f32.mrb[0].mxu0
  %4064 = vdwg.mxu0
  %4065 = vrot.lane.b32.xlu0 %v3731, 120
  %v4066 = vpop.permute.xlu0 %4065
  %4067 = vrot.lane.b32.xlu0 %v3731, 88
  %v4068 = vpop.permute.xlu0 %4067
  %v4069 = vsel %vm127, %v4066, 0
  %v4071 = vsel %vm127, %v4068, 0
  %4073 = vmatprep.subr.mxu0 0.0
  %4074 = vmatpush1.xpose.msra.mxu0 %v4071
  %4075 = vmatprep.subr.mxu0 0.0
  %4076 = vmatpush1.xpose.msra.mxu0 0.0
  %4077 = vmatprep.subr.mxu0 0.0
  %4078 = vmatpush1.xpose.msra.mxu0 0.0
  %4079 = vmatprep.subr.mxu0 0.0
  %4080 = vmatpush1.xpose.msra.mxu0 0.0
  %4081 = vmatprep.subr.mxu0 0.0
  %4082 = vmatpush1.xpose.msra.mxu0 0.0
  %4083 = vmatprep.subr.mxu0 0.0
  %4084 = vmatpush1.xpose.msra.mxu0 0.0
  %4085 = vmatprep.subr.mxu0 0.0
  %4086 = vmatpush1.xpose.msra.mxu0 0.0
  %4087 = vmatprep.subr.mxu0 0.0
  %4088 = vmatpush1.xpose.msra.mxu0 0.0
  %4089 = vmatprep.subr.mxu0 0.0
  %4090 = vmatpush1.xpose.msra.mxu0 0.0
  %4091 = vmatprep.subr.mxu0 0.0
  %4092 = vmatpush1.xpose.msra.mxu0 0.0
  %4093 = vmatprep.subr.mxu0 0.0
  %4094 = vmatpush1.xpose.msra.mxu0 0.0
  %4095 = vmatprep.subr.mxu0 0.0
  %4096 = vmatpush1.xpose.msra.mxu0 0.0
  %4097 = vmatprep.subr.mxu0 0.0
  %4098 = vmatpush1.xpose.msra.mxu0 0.0
  %4099 = vmatprep.subr.mxu0 0.0
  %4100 = vmatpush1.xpose.msra.mxu0 0.0
  %4101 = vmatprep.subr.mxu0 0.0
  %4102 = vmatpush1.xpose.msra.mxu0 0.0
  %4103 = vmatprep.subr.mxu0 0.0
  %4104 = vmatpush1.xpose.msra.mxu0 0.0
  %4105 = vmatprep.subr.mxu0 0.0
  %4106 = vmatpush1.xpose.msra.mxu0 0.0
  %4107 = vmatprep.subr.mxu0 0.0
  %4108 = vmatpush1.xpose.msra.mxu0 0.0
  %4109 = vmatprep.subr.mxu0 0.0
  %4110 = vmatpush1.xpose.msra.mxu0 0.0
  %4111 = vmatprep.subr.mxu0 0.0
  %4112 = vmatpush1.xpose.msra.mxu0 0.0
  %4113 = vmatprep.subr.mxu0 0.0
  %4114 = vmatpush1.xpose.msra.mxu0 0.0
  %4115 = vmatprep.subr.mxu0 0.0
  %4116 = vmatpush1.xpose.msra.mxu0 0.0
  %4117 = vmatprep.subr.mxu0 0.0
  %4118 = vmatpush1.xpose.msra.mxu0 0.0
  %4119 = vmatprep.subr.mxu0 0.0
  %4120 = vmatpush1.xpose.msra.mxu0 0.0
  %4121 = vmatprep.subr.mxu0 0.0
  %4122 = vmatpush1.xpose.msra.mxu0 0.0
  %4123 = vmatprep.subr.mxu0 0.0
  %4124 = vmatpush1.xpose.msra.mxu0 0.0
  %4125 = vmatprep.subr.mxu0 0.0
  %4126 = vmatpush1.xpose.msra.mxu0 0.0
  %4127 = vmatprep.subr.mxu0 0.0
  %4128 = vmatpush1.xpose.msra.mxu0 0.0
  %4129 = vmatprep.subr.mxu0 0.0
  %4130 = vmatpush1.xpose.msra.mxu0 0.0
  %4131 = vmatprep.subr.mxu0 0.0
  %4132 = vmatpush1.xpose.msra.mxu0 0.0
  %4133 = vmatprep.subr.mxu0 0.0
  %4134 = vmatpush1.xpose.msra.mxu0 0.0
  %4135 = vmatprep.subr.mxu0 0.0
  %4136 = vmatpush1.xpose.msra.mxu0 0.0
  %4137 = vmatprep.mubr.f32.mxu0 0.0
  %4138 = vmatmul.mubr.f32.gmra.mrb[0].mxu0 %v4069
  %v4139 = vpop.f32.mrb[0].mxu0
  %v4140 = vadd.f32 0.0, %v4139
  %v4141 = vpop.f32.mrb[0].mxu0
  %4142 = vdwg.mxu0
  %4143 = vrot.lane.b32.xlu0 %v3734, 120
  %v4144 = vpop.permute.xlu0 %4143
  %4145 = vrot.lane.b32.xlu0 %v3734, 88
  %v4146 = vpop.permute.xlu0 %4145
  %v4147 = vsel %vm127, %v4144, 0
  %v4149 = vsel %vm127, %v4146, 0
  %4151 = vmatprep.subr.mxu0 0.0
  %4152 = vmatpush1.xpose.msra.mxu0 %v4149
  %4153 = vmatprep.subr.mxu0 0.0
  %4154 = vmatpush1.xpose.msra.mxu0 0.0
  %4155 = vmatprep.subr.mxu0 0.0
  %4156 = vmatpush1.xpose.msra.mxu0 0.0
  %4157 = vmatprep.subr.mxu0 0.0
  %4158 = vmatpush1.xpose.msra.mxu0 0.0
  %4159 = vmatprep.subr.mxu0 0.0
  %4160 = vmatpush1.xpose.msra.mxu0 0.0
  %4161 = vmatprep.subr.mxu0 0.0
  %4162 = vmatpush1.xpose.msra.mxu0 0.0
  %4163 = vmatprep.subr.mxu0 0.0
  %4164 = vmatpush1.xpose.msra.mxu0 0.0
  %4165 = vmatprep.subr.mxu0 0.0
  %4166 = vmatpush1.xpose.msra.mxu0 0.0
  %4167 = vmatprep.subr.mxu0 0.0
  %4168 = vmatpush1.xpose.msra.mxu0 0.0
  %4169 = vmatprep.subr.mxu0 0.0
  %4170 = vmatpush1.xpose.msra.mxu0 0.0
  %4171 = vmatprep.subr.mxu0 0.0
  %4172 = vmatpush1.xpose.msra.mxu0 0.0
  %4173 = vmatprep.subr.mxu0 0.0
  %4174 = vmatpush1.xpose.msra.mxu0 0.0
  %4175 = vmatprep.subr.mxu0 0.0
  %4176 = vmatpush1.xpose.msra.mxu0 0.0
  %4177 = vmatprep.subr.mxu0 0.0
  %4178 = vmatpush1.xpose.msra.mxu0 0.0
  %4179 = vmatprep.subr.mxu0 0.0
  %4180 = vmatpush1.xpose.msra.mxu0 0.0
  %4181 = vmatprep.subr.mxu0 0.0
  %4182 = vmatpush1.xpose.msra.mxu0 0.0
  %4183 = vmatprep.subr.mxu0 0.0
  %4184 = vmatpush1.xpose.msra.mxu0 0.0
  %4185 = vmatprep.subr.mxu0 0.0
  %4186 = vmatpush1.xpose.msra.mxu0 0.0
  %4187 = vmatprep.subr.mxu0 0.0
  %4188 = vmatpush1.xpose.msra.mxu0 0.0
  %4189 = vmatprep.subr.mxu0 0.0
  %4190 = vmatpush1.xpose.msra.mxu0 0.0
  %4191 = vmatprep.subr.mxu0 0.0
  %4192 = vmatpush1.xpose.msra.mxu0 0.0
  %4193 = vmatprep.subr.mxu0 0.0
  %4194 = vmatpush1.xpose.msra.mxu0 0.0
  %4195 = vmatprep.subr.mxu0 0.0
  %4196 = vmatpush1.xpose.msra.mxu0 0.0
  %4197 = vmatprep.subr.mxu0 0.0
  %4198 = vmatpush1.xpose.msra.mxu0 0.0
  %4199 = vmatprep.subr.mxu0 0.0
  %4200 = vmatpush1.xpose.msra.mxu0 0.0
  %4201 = vmatprep.subr.mxu0 0.0
  %4202 = vmatpush1.xpose.msra.mxu0 0.0
  %4203 = vmatprep.subr.mxu0 0.0
  %4204 = vmatpush1.xpose.msra.mxu0 0.0
  %4205 = vmatprep.subr.mxu0 0.0
  %4206 = vmatpush1.xpose.msra.mxu0 0.0
  %4207 = vmatprep.subr.mxu0 0.0
  %4208 = vmatpush1.xpose.msra.mxu0 0.0
  %4209 = vmatprep.subr.mxu0 0.0
  %4210 = vmatpush1.xpose.msra.mxu0 0.0
  %4211 = vmatprep.subr.mxu0 0.0
  %4212 = vmatpush1.xpose.msra.mxu0 0.0
  %4213 = vmatprep.subr.mxu0 0.0
  %4214 = vmatpush1.xpose.msra.mxu0 0.0
  %4215 = vmatprep.mubr.f32.mxu0 0.0
  %4216 = vmatmul.mubr.f32.gmra.mrb[0].mxu0 %v4147
  %v4217 = vpop.f32.mrb[0].mxu0
  %v4218 = vadd.f32 0.0, %v4217
  %v4219 = vpop.f32.mrb[0].mxu0
  %4220 = vdwg.mxu0
  %v4221 = vsel %vm127, %v4140, -inf
  %4222 = vmax.xlane.f32.xlu0 %v4221
  %v4223 = vpop.xlane.xlu0 %4222
  %v4224 = vsel %vm127, %v4218, -inf
  %4225 = vmax.xlane.f32.xlu0 %v4224
  %v4226 = vpop.xlane.xlu0 %4225
  %v4227 = vsub.f32 %v4140, %v4223
  %v4228 = vsub.f32 %v4218, %v4226
  %v4229 = vmul.f32 %v4227, 1.442695
  %v4230 = vpow.pop %v4229
  %v4231 = vmul.f32 %v4228, 1.442695
  %v4232 = vpow.pop %v4231
  %v4233 = vsel %vm127, %v4230, 0.0
  %4234 = vadd.xlane.f32.xlu0 %v4233
  %v4235 = vpop.xlane.xlu0 %4234
  %v4236 = vsel %vm127, %v4232, 0.0
  %4237 = vadd.xlane.f32.xlu0 %v4236
  %v4238 = vpop.xlane.xlu0 %4237
  %v4239 = vrcp.pop %v4235
  %v4240 = vrcp.pop %v4238
  %v4241 = vmul.f32 %v4230, %v4239
  %v4242 = vmul.f32 %v4232, %v4240
  %4243 = vrot.lane.b32.xlu0 %v3731, 56
  %v4244 = vpop.permute.xlu0 %4243
  %v4247 = vsel %vm127, %v4241, 0
  %4249 = vmatprep.subr.mxu0 0.0
  %4250 = vmatpush1.msra.mxu0 %v4244
  %4251 = vmatprep.subr.mxu0 0.0
  %4252 = vmatpush1.msra.mxu0 0.0
  %4253 = vmatprep.subr.mxu0 0.0
  %4254 = vmatpush1.msra.mxu0 0.0
  %4255 = vmatprep.subr.mxu0 0.0
  %4256 = vmatpush1.msra.mxu0 0.0
  %4257 = vmatprep.subr.mxu0 0.0
  %4258 = vmatpush1.msra.mxu0 0.0
  %4259 = vmatprep.subr.mxu0 0.0
  %4260 = vmatpush1.msra.mxu0 0.0
  %4261 = vmatprep.subr.mxu0 0.0
  %4262 = vmatpush1.msra.mxu0 0.0
  %4263 = vmatprep.subr.mxu0 0.0
  %4264 = vmatpush1.msra.mxu0 0.0
  %4265 = vmatprep.subr.mxu0 0.0
  %4266 = vmatpush1.msra.mxu0 0.0
  %4267 = vmatprep.subr.mxu0 0.0
  %4268 = vmatpush1.msra.mxu0 0.0
  %4269 = vmatprep.subr.mxu0 0.0
  %4270 = vmatpush1.msra.mxu0 0.0
  %4271 = vmatprep.subr.mxu0 0.0
  %4272 = vmatpush1.msra.mxu0 0.0
  %4273 = vmatprep.subr.mxu0 0.0
  %4274 = vmatpush1.msra.mxu0 0.0
  %4275 = vmatprep.subr.mxu0 0.0
  %4276 = vmatpush1.msra.mxu0 0.0
  %4277 = vmatprep.subr.mxu0 0.0
  %4278 = vmatpush1.msra.mxu0 0.0
  %4279 = vmatprep.subr.mxu0 0.0
  %4280 = vmatpush1.msra.mxu0 0.0
  %4281 = vmatprep.subr.mxu0 0.0
  %4282 = vmatpush1.msra.mxu0 0.0
  %4283 = vmatprep.subr.mxu0 0.0
  %4284 = vmatpush1.msra.mxu0 0.0
  %4285 = vmatprep.subr.mxu0 0.0
  %4286 = vmatpush1.msra.mxu0 0.0
  %4287 = vmatprep.subr.mxu0 0.0
  %4288 = vmatpush1.msra.mxu0 0.0
  %4289 = vmatprep.subr.mxu0 0.0
  %4290 = vmatpush1.msra.mxu0 0.0
  %4291 = vmatprep.subr.mxu0 0.0
  %4292 = vmatpush1.msra.mxu0 0.0
  %4293 = vmatprep.subr.mxu0 0.0
  %4294 = vmatpush1.msra.mxu0 0.0
  %4295 = vmatprep.subr.mxu0 0.0
  %4296 = vmatpush1.msra.mxu0 0.0
  %4297 = vmatprep.subr.mxu0 0.0
  %4298 = vmatpush1.msra.mxu0 0.0
  %4299 = vmatprep.subr.mxu0 0.0
  %4300 = vmatpush1.msra.mxu0 0.0
  %4301 = vmatprep.subr.mxu0 0.0
  %4302 = vmatpush1.msra.mxu0 0.0
  %4303 = vmatprep.subr.mxu0 0.0
  %4304 = vmatpush1.msra.mxu0 0.0
  %4305 = vmatprep.subr.mxu0 0.0
  %4306 = vmatpush1.msra.mxu0 0.0
  %4307 = vmatprep.subr.mxu0 0.0
  %4308 = vmatpush1.msra.mxu0 0.0
  %4309 = vmatprep.subr.mxu0 0.0
  %4310 = vmatpush1.msra.mxu0 0.0
  %4311 = vmatprep.subr.mxu0 0.0
  %4312 = vmatpush1.msra.mxu0 0.0
  %4313 = vmatprep.mubr.f32.mxu0 0.0
  %4314 = vmatmul.mubr.f32.gmra.mrb[0].mxu0 %v4247
  %v4315 = vpop.f32.mrb[0].mxu0
  %v4316 = vadd.f32 0.0, %v4315
  %v4317 = vpop.f32.mrb[0].mxu0
  %4318 = vdwg.mxu0
  %4319 = vrot.lane.b32.xlu0 %v3734, 56
  %v4320 = vpop.permute.xlu0 %4319
  %v4323 = vsel %vm127, %v4242, 0
  %4325 = vmatprep.subr.mxu0 0.0
  %4326 = vmatpush1.msra.mxu0 %v4320
  %4327 = vmatprep.subr.mxu0 0.0
  %4328 = vmatpush1.msra.mxu0 0.0
  %4329 = vmatprep.subr.mxu0 0.0
  %4330 = vmatpush1.msra.mxu0 0.0
  %4331 = vmatprep.subr.mxu0 0.0
  %4332 = vmatpush1.msra.mxu0 0.0
  %4333 = vmatprep.subr.mxu0 0.0
  %4334 = vmatpush1.msra.mxu0 0.0
  %4335 = vmatprep.subr.mxu0 0.0
  %4336 = vmatpush1.msra.mxu0 0.0
  %4337 = vmatprep.subr.mxu0 0.0
  %4338 = vmatpush1.msra.mxu0 0.0
  %4339 = vmatprep.subr.mxu0 0.0
  %4340 = vmatpush1.msra.mxu0 0.0
  %4341 = vmatprep.subr.mxu0 0.0
  %4342 = vmatpush1.msra.mxu0 0.0
  %4343 = vmatprep.subr.mxu0 0.0
  %4344 = vmatpush1.msra.mxu0 0.0
  %4345 = vmatprep.subr.mxu0 0.0
  %4346 = vmatpush1.msra.mxu0 0.0
  %4347 = vmatprep.subr.mxu0 0.0
  %4348 = vmatpush1.msra.mxu0 0.0
  %4349 = vmatprep.subr.mxu0 0.0
  %4350 = vmatpush1.msra.mxu0 0.0
  %4351 = vmatprep.subr.mxu0 0.0
  %4352 = vmatpush1.msra.mxu0 0.0
  %4353 = vmatprep.subr.mxu0 0.0
  %4354 = vmatpush1.msra.mxu0 0.0
  %4355 = vmatprep.subr.mxu0 0.0
  %4356 = vmatpush1.msra.mxu0 0.0
  %4357 = vmatprep.subr.mxu0 0.0
  %4358 = vmatpush1.msra.mxu0 0.0
  %4359 = vmatprep.subr.mxu0 0.0
  %4360 = vmatpush1.msra.mxu0 0.0
  %4361 = vmatprep.subr.mxu0 0.0
  %4362 = vmatpush1.msra.mxu0 0.0
  %4363 = vmatprep.subr.mxu0 0.0
  %4364 = vmatpush1.msra.mxu0 0.0
  %4365 = vmatprep.subr.mxu0 0.0
  %4366 = vmatpush1.msra.mxu0 0.0
  %4367 = vmatprep.subr.mxu0 0.0
  %4368 = vmatpush1.msra.mxu0 0.0
  %4369 = vmatprep.subr.mxu0 0.0
  %4370 = vmatpush1.msra.mxu0 0.0
  %4371 = vmatprep.subr.mxu0 0.0
  %4372 = vmatpush1.msra.mxu0 0.0
  %4373 = vmatprep.subr.mxu0 0.0
  %4374 = vmatpush1.msra.mxu0 0.0
  %4375 = vmatprep.subr.mxu0 0.0
  %4376 = vmatpush1.msra.mxu0 0.0
  %4377 = vmatprep.subr.mxu0 0.0
  %4378 = vmatpush1.msra.mxu0 0.0
  %4379 = vmatprep.subr.mxu0 0.0
  %4380 = vmatpush1.msra.mxu0 0.0
  %4381 = vmatprep.subr.mxu0 0.0
  %4382 = vmatpush1.msra.mxu0 0.0
  %4383 = vmatprep.subr.mxu0 0.0
  %4384 = vmatpush1.msra.mxu0 0.0
  %4385 = vmatprep.subr.mxu0 0.0
  %4386 = vmatpush1.msra.mxu0 0.0
  %4387 = vmatprep.subr.mxu0 0.0
  %4388 = vmatpush1.msra.mxu0 0.0
  %4389 = vmatprep.mubr.f32.mxu0 0.0
  %4390 = vmatmul.mubr.f32.gmra.mrb[0].mxu0 %v4323
  %v4391 = vpop.f32.mrb[0].mxu0
  %v4392 = vadd.f32 0.0, %v4391
  %v4393 = vpop.f32.mrb[0].mxu0
  %4394 = vdwg.mxu0
  %4395 = vrot.lane.b32.xlu0 %v3731, 112
  %v4396 = vpop.permute.xlu0 %4395
  %4397 = vrot.lane.b32.xlu0 %v3731, 80
  %v4398 = vpop.permute.xlu0 %4397
  %v4399 = vsel %vm127, %v4396, 0
  %v4401 = vsel %vm127, %v4398, 0
  %4403 = vmatprep.subr.mxu0 0.0
  %4404 = vmatpush1.xpose.msra.mxu0 %v4401
  %4405 = vmatprep.subr.mxu0 0.0
  %4406 = vmatpush1.xpose.msra.mxu0 0.0
  %4407 = vmatprep.subr.mxu0 0.0
  %4408 = vmatpush1.xpose.msra.mxu0 0.0
  %4409 = vmatprep.subr.mxu0 0.0
  %4410 = vmatpush1.xpose.msra.mxu0 0.0
  %4411 = vmatprep.subr.mxu0 0.0
  %4412 = vmatpush1.xpose.msra.mxu0 0.0
  %4413 = vmatprep.subr.mxu0 0.0
  %4414 = vmatpush1.xpose.msra.mxu0 0.0
  %4415 = vmatprep.subr.mxu0 0.0
  %4416 = vmatpush1.xpose.msra.mxu0 0.0
  %4417 = vmatprep.subr.mxu0 0.0
  %4418 = vmatpush1.xpose.msra.mxu0 0.0
  %4419 = vmatprep.subr.mxu0 0.0
  %4420 = vmatpush1.xpose.msra.mxu0 0.0
  %4421 = vmatprep.subr.mxu0 0.0
  %4422 = vmatpush1.xpose.msra.mxu0 0.0
  %4423 = vmatprep.subr.mxu0 0.0
  %4424 = vmatpush1.xpose.msra.mxu0 0.0
  %4425 = vmatprep.subr.mxu0 0.0
  %4426 = vmatpush1.xpose.msra.mxu0 0.0
  %4427 = vmatprep.subr.mxu0 0.0
  %4428 = vmatpush1.xpose.msra.mxu0 0.0
  %4429 = vmatprep.subr.mxu0 0.0
  %4430 = vmatpush1.xpose.msra.mxu0 0.0
  %4431 = vmatprep.subr.mxu0 0.0
  %4432 = vmatpush1.xpose.msra.mxu0 0.0
  %4433 = vmatprep.subr.mxu0 0.0
  %4434 = vmatpush1.xpose.msra.mxu0 0.0
  %4435 = vmatprep.subr.mxu0 0.0
  %4436 = vmatpush1.xpose.msra.mxu0 0.0
  %4437 = vmatprep.subr.mxu0 0.0
  %4438 = vmatpush1.xpose.msra.mxu0 0.0
  %4439 = vmatprep.subr.mxu0 0.0
  %4440 = vmatpush1.xpose.msra.mxu0 0.0
  %4441 = vmatprep.subr.mxu0 0.0
  %4442 = vmatpush1.xpose.msra.mxu0 0.0
  %4443 = vmatprep.subr.mxu0 0.0
  %4444 = vmatpush1.xpose.msra.mxu0 0.0
  %4445 = vmatprep.subr.mxu0 0.0
  %4446 = vmatpush1.xpose.msra.mxu0 0.0
  %4447 = vmatprep.subr.mxu0 0.0
  %4448 = vmatpush1.xpose.msra.mxu0 0.0
  %4449 = vmatprep.subr.mxu0 0.0
  %4450 = vmatpush1.xpose.msra.mxu0 0.0
  %4451 = vmatprep.subr.mxu0 0.0
  %4452 = vmatpush1.xpose.msra.mxu0 0.0
  %4453 = vmatprep.subr.mxu0 0.0
  %4454 = vmatpush1.xpose.msra.mxu0 0.0
  %4455 = vmatprep.subr.mxu0 0.0
  %4456 = vmatpush1.xpose.msra.mxu0 0.0
  %4457 = vmatprep.subr.mxu0 0.0
  %4458 = vmatpush1.xpose.msra.mxu0 0.0
  %4459 = vmatprep.subr.mxu0 0.0
  %4460 = vmatpush1.xpose.msra.mxu0 0.0
  %4461 = vmatprep.subr.mxu0 0.0
  %4462 = vmatpush1.xpose.msra.mxu0 0.0
  %4463 = vmatprep.subr.mxu0 0.0
  %4464 = vmatpush1.xpose.msra.mxu0 0.0
  %4465 = vmatprep.subr.mxu0 0.0
  %4466 = vmatpush1.xpose.msra.mxu0 0.0
  %4467 = vmatprep.mubr.f32.mxu0 0.0
  %4468 = vmatmul.mubr.f32.gmra.mrb[0].mxu0 %v4399
  %v4469 = vpop.f32.mrb[0].mxu0
  %v4470 = vadd.f32 0.0, %v4469
  %v4471 = vpop.f32.mrb[0].mxu0
  %4472 = vdwg.mxu0
  %4473 = vrot.lane.b32.xlu0 %v3734, 112
  %v4474 = vpop.permute.xlu0 %4473
  %4475 = vrot.lane.b32.xlu0 %v3734, 80
  %v4476 = vpop.permute.xlu0 %4475
  %v4477 = vsel %vm127, %v4474, 0
  %v4479 = vsel %vm127, %v4476, 0
  %4481 = vmatprep.subr.mxu0 0.0
  %4482 = vmatpush1.xpose.msra.mxu0 %v4479
  %4483 = vmatprep.subr.mxu0 0.0
  %4484 = vmatpush1.xpose.msra.mxu0 0.0
  %4485 = vmatprep.subr.mxu0 0.0
  %4486 = vmatpush1.xpose.msra.mxu0 0.0
  %4487 = vmatprep.subr.mxu0 0.0
  %4488 = vmatpush1.xpose.msra.mxu0 0.0
  %4489 = vmatprep.subr.mxu0 0.0
  %4490 = vmatpush1.xpose.msra.mxu0 0.0
  %4491 = vmatprep.subr.mxu0 0.0
  %4492 = vmatpush1.xpose.msra.mxu0 0.0
  %4493 = vmatprep.subr.mxu0 0.0
  %4494 = vmatpush1.xpose.msra.mxu0 0.0
  %4495 = vmatprep.subr.mxu0 0.0
  %4496 = vmatpush1.xpose.msra.mxu0 0.0
  %4497 = vmatprep.subr.mxu0 0.0
  %4498 = vmatpush1.xpose.msra.mxu0 0.0
  %4499 = vmatprep.subr.mxu0 0.0
  %4500 = vmatpush1.xpose.msra.mxu0 0.0
  %4501 = vmatprep.subr.mxu0 0.0
  %4502 = vmatpush1.xpose.msra.mxu0 0.0
  %4503 = vmatprep.subr.mxu0 0.0
  %4504 = vmatpush1.xpose.msra.mxu0 0.0
  %4505 = vmatprep.subr.mxu0 0.0
  %4506 = vmatpush1.xpose.msra.mxu0 0.0
  %4507 = vmatprep.subr.mxu0 0.0
  %4508 = vmatpush1.xpose.msra.mxu0 0.0
  %4509 = vmatprep.subr.mxu0 0.0
  %4510 = vmatpush1.xpose.msra.mxu0 0.0
  %4511 = vmatprep.subr.mxu0 0.0
  %4512 = vmatpush1.xpose.msra.mxu0 0.0
  %4513 = vmatprep.subr.mxu0 0.0
  %4514 = vmatpush1.xpose.msra.mxu0 0.0
  %4515 = vmatprep.subr.mxu0 0.0
  %4516 = vmatpush1.xpose.msra.mxu0 0.0
  %4517 = vmatprep.subr.mxu0 0.0
  %4518 = vmatpush1.xpose.msra.mxu0 0.0
  %4519 = vmatprep.subr.mxu0 0.0
  %4520 = vmatpush1.xpose.msra.mxu0 0.0
  %4521 = vmatprep.subr.mxu0 0.0
  %4522 = vmatpush1.xpose.msra.mxu0 0.0
  %4523 = vmatprep.subr.mxu0 0.0
  %4524 = vmatpush1.xpose.msra.mxu0 0.0
  %4525 = vmatprep.subr.mxu0 0.0
  %4526 = vmatpush1.xpose.msra.mxu0 0.0
  %4527 = vmatprep.subr.mxu0 0.0
  %4528 = vmatpush1.xpose.msra.mxu0 0.0
  %4529 = vmatprep.subr.mxu0 0.0
  %4530 = vmatpush1.xpose.msra.mxu0 0.0
  %4531 = vmatprep.subr.mxu0 0.0
  %4532 = vmatpush1.xpose.msra.mxu0 0.0
  %4533 = vmatprep.subr.mxu0 0.0
  %4534 = vmatpush1.xpose.msra.mxu0 0.0
  %4535 = vmatprep.subr.mxu0 0.0
  %4536 = vmatpush1.xpose.msra.mxu0 0.0
  %4537 = vmatprep.subr.mxu0 0.0
  %4538 = vmatpush1.xpose.msra.mxu0 0.0
  %4539 = vmatprep.subr.mxu0 0.0
  %4540 = vmatpush1.xpose.msra.mxu0 0.0
  %4541 = vmatprep.subr.mxu0 0.0
  %4542 = vmatpush1.xpose.msra.mxu0 0.0
  %4543 = vmatprep.subr.mxu0 0.0
  %4544 = vmatpush1.xpose.msra.mxu0 0.0
  %4545 = vmatprep.mubr.f32.mxu0 0.0
  %4546 = vmatmul.mubr.f32.gmra.mrb[0].mxu0 %v4477
  %v4547 = vpop.f32.mrb[0].mxu0
  %v4548 = vadd.f32 0.0, %v4547
  %v4549 = vpop.f32.mrb[0].mxu0
  %4550 = vdwg.mxu0
  %v4551 = vsel %vm127, %v4470, -inf
  %4552 = vmax.xlane.f32.xlu0 %v4551
  %v4553 = vpop.xlane.xlu0 %4552
  %v4554 = vsel %vm127, %v4548, -inf
  %4555 = vmax.xlane.f32.xlu0 %v4554
  %v4556 = vpop.xlane.xlu0 %4555
  %v4557 = vsub.f32 %v4470, %v4553
  %v4558 = vsub.f32 %v4548, %v4556
  %v4559 = vmul.f32 %v4557, 1.442695
  %v4560 = vpow.pop %v4559
  %v4561 = vmul.f32 %v4558, 1.442695
  %v4562 = vpow.pop %v4561
  %v4563 = vsel %vm127, %v4560, 0.0
  %4564 = vadd.xlane.f32.xlu0 %v4563
  %v4565 = vpop.xlane.xlu0 %4564
  %v4566 = vsel %vm127, %v4562, 0.0
  %4567 = vadd.xlane.f32.xlu0 %v4566
  %v4568 = vpop.xlane.xlu0 %4567
  %v4569 = vrcp.pop %v4565
  %v4570 = vrcp.pop %v4568
  %v4571 = vmul.f32 %v4560, %v4569
  %v4572 = vmul.f32 %v4562, %v4570
  %4573 = vrot.lane.b32.xlu0 %v3731, 48
  %v4574 = vpop.permute.xlu0 %4573
  %v4577 = vsel %vm127, %v4571, 0
  %4579 = vmatprep.subr.mxu0 0.0
  %4580 = vmatpush1.msra.mxu0 %v4574
  %4581 = vmatprep.subr.mxu0 0.0
  %4582 = vmatpush1.msra.mxu0 0.0
  %4583 = vmatprep.subr.mxu0 0.0
  %4584 = vmatpush1.msra.mxu0 0.0
  %4585 = vmatprep.subr.mxu0 0.0
  %4586 = vmatpush1.msra.mxu0 0.0
  %4587 = vmatprep.subr.mxu0 0.0
  %4588 = vmatpush1.msra.mxu0 0.0
  %4589 = vmatprep.subr.mxu0 0.0
  %4590 = vmatpush1.msra.mxu0 0.0
  %4591 = vmatprep.subr.mxu0 0.0
  %4592 = vmatpush1.msra.mxu0 0.0
  %4593 = vmatprep.subr.mxu0 0.0
  %4594 = vmatpush1.msra.mxu0 0.0
  %4595 = vmatprep.subr.mxu0 0.0
  %4596 = vmatpush1.msra.mxu0 0.0
  %4597 = vmatprep.subr.mxu0 0.0
  %4598 = vmatpush1.msra.mxu0 0.0
  %4599 = vmatprep.subr.mxu0 0.0
  %4600 = vmatpush1.msra.mxu0 0.0
  %4601 = vmatprep.subr.mxu0 0.0
  %4602 = vmatpush1.msra.mxu0 0.0
  %4603 = vmatprep.subr.mxu0 0.0
  %4604 = vmatpush1.msra.mxu0 0.0
  %4605 = vmatprep.subr.mxu0 0.0
  %4606 = vmatpush1.msra.mxu0 0.0
  %4607 = vmatprep.subr.mxu0 0.0
  %4608 = vmatpush1.msra.mxu0 0.0
  %4609 = vmatprep.subr.mxu0 0.0
  %4610 = vmatpush1.msra.mxu0 0.0
  %4611 = vmatprep.subr.mxu0 0.0
  %4612 = vmatpush1.msra.mxu0 0.0
  %4613 = vmatprep.subr.mxu0 0.0
  %4614 = vmatpush1.msra.mxu0 0.0
  %4615 = vmatprep.subr.mxu0 0.0
  %4616 = vmatpush1.msra.mxu0 0.0
  %4617 = vmatprep.subr.mxu0 0.0
  %4618 = vmatpush1.msra.mxu0 0.0
  %4619 = vmatprep.subr.mxu0 0.0
  %4620 = vmatpush1.msra.mxu0 0.0
  %4621 = vmatprep.subr.mxu0 0.0
  %4622 = vmatpush1.msra.mxu0 0.0
  %4623 = vmatprep.subr.mxu0 0.0
  %4624 = vmatpush1.msra.mxu0 0.0
  %4625 = vmatprep.subr.mxu0 0.0
  %4626 = vmatpush1.msra.mxu0 0.0
  %4627 = vmatprep.subr.mxu0 0.0
  %4628 = vmatpush1.msra.mxu0 0.0
  %4629 = vmatprep.subr.mxu0 0.0
  %4630 = vmatpush1.msra.mxu0 0.0
  %4631 = vmatprep.subr.mxu0 0.0
  %4632 = vmatpush1.msra.mxu0 0.0
  %4633 = vmatprep.subr.mxu0 0.0
  %4634 = vmatpush1.msra.mxu0 0.0
  %4635 = vmatprep.subr.mxu0 0.0
  %4636 = vmatpush1.msra.mxu0 0.0
  %4637 = vmatprep.subr.mxu0 0.0
  %4638 = vmatpush1.msra.mxu0 0.0
  %4639 = vmatprep.subr.mxu0 0.0
  %4640 = vmatpush1.msra.mxu0 0.0
  %4641 = vmatprep.subr.mxu0 0.0
  %4642 = vmatpush1.msra.mxu0 0.0
  %4643 = vmatprep.mubr.f32.mxu0 0.0
  %4644 = vmatmul.mubr.f32.gmra.mrb[0].mxu0 %v4577
  %v4645 = vpop.f32.mrb[0].mxu0
  %v4646 = vadd.f32 0.0, %v4645
  %v4647 = vpop.f32.mrb[0].mxu0
  %4648 = vdwg.mxu0
  %4649 = vrot.lane.b32.xlu0 %v3734, 48
  %v4650 = vpop.permute.xlu0 %4649
  %v4653 = vsel %vm127, %v4572, 0
  %4655 = vmatprep.subr.mxu0 0.0
  %4656 = vmatpush1.msra.mxu0 %v4650
  %4657 = vmatprep.subr.mxu0 0.0
  %4658 = vmatpush1.msra.mxu0 0.0
  %4659 = vmatprep.subr.mxu0 0.0
  %4660 = vmatpush1.msra.mxu0 0.0
  %4661 = vmatprep.subr.mxu0 0.0
  %4662 = vmatpush1.msra.mxu0 0.0
  %4663 = vmatprep.subr.mxu0 0.0
  %4664 = vmatpush1.msra.mxu0 0.0
  %4665 = vmatprep.subr.mxu0 0.0
  %4666 = vmatpush1.msra.mxu0 0.0
  %4667 = vmatprep.subr.mxu0 0.0
  %4668 = vmatpush1.msra.mxu0 0.0
  %4669 = vmatprep.subr.mxu0 0.0
  %4670 = vmatpush1.msra.mxu0 0.0
  %4671 = vmatprep.subr.mxu0 0.0
  %4672 = vmatpush1.msra.mxu0 0.0
  %4673 = vmatprep.subr.mxu0 0.0
  %4674 = vmatpush1.msra.mxu0 0.0
  %4675 = vmatprep.subr.mxu0 0.0
  %4676 = vmatpush1.msra.mxu0 0.0
  %4677 = vmatprep.subr.mxu0 0.0
  %4678 = vmatpush1.msra.mxu0 0.0
  %4679 = vmatprep.subr.mxu0 0.0
  %4680 = vmatpush1.msra.mxu0 0.0
  %4681 = vmatprep.subr.mxu0 0.0
  %4682 = vmatpush1.msra.mxu0 0.0
  %4683 = vmatprep.subr.mxu0 0.0
  %4684 = vmatpush1.msra.mxu0 0.0
  %4685 = vmatprep.subr.mxu0 0.0
  %4686 = vmatpush1.msra.mxu0 0.0
  %4687 = vmatprep.subr.mxu0 0.0
  %4688 = vmatpush1.msra.mxu0 0.0
  %4689 = vmatprep.subr.mxu0 0.0
  %4690 = vmatpush1.msra.mxu0 0.0
  %4691 = vmatprep.subr.mxu0 0.0
  %4692 = vmatpush1.msra.mxu0 0.0
  %4693 = vmatprep.subr.mxu0 0.0
  %4694 = vmatpush1.msra.mxu0 0.0
  %4695 = vmatprep.subr.mxu0 0.0
  %4696 = vmatpush1.msra.mxu0 0.0
  %4697 = vmatprep.subr.mxu0 0.0
  %4698 = vmatpush1.msra.mxu0 0.0
  %4699 = vmatprep.subr.mxu0 0.0
  %4700 = vmatpush1.msra.mxu0 0.0
  %4701 = vmatprep.subr.mxu0 0.0
  %4702 = vmatpush1.msra.mxu0 0.0
  %4703 = vmatprep.subr.mxu0 0.0
  %4704 = vmatpush1.msra.mxu0 0.0
  %4705 = vmatprep.subr.mxu0 0.0
  %4706 = vmatpush1.msra.mxu0 0.0
  %4707 = vmatprep.subr.mxu0 0.0
  %4708 = vmatpush1.msra.mxu0 0.0
  %4709 = vmatprep.subr.mxu0 0.0
  %4710 = vmatpush1.msra.mxu0 0.0
  %4711 = vmatprep.subr.mxu0 0.0
  %4712 = vmatpush1.msra.mxu0 0.0
  %4713 = vmatprep.subr.mxu0 0.0
  %4714 = vmatpush1.msra.mxu0 0.0
  %4715 = vmatprep.subr.mxu0 0.0
  %4716 = vmatpush1.msra.mxu0 0.0
  %4717 = vmatprep.subr.mxu0 0.0
  %4718 = vmatpush1.msra.mxu0 0.0
  %4719 = vmatprep.mubr.f32.mxu0 0.0
  %4720 = vmatmul.mubr.f32.gmra.mrb[0].mxu0 %v4653
  %v4721 = vpop.f32.mrb[0].mxu0
  %v4722 = vadd.f32 0.0, %v4721
  %v4723 = vpop.f32.mrb[0].mxu0
  %4724 = vdwg.mxu0
  %4725 = vrot.lane.b32.xlu0 %v3731, 104
  %v4726 = vpop.permute.xlu0 %4725
  %4727 = vrot.lane.b32.xlu0 %v3731, 72
  %v4728 = vpop.permute.xlu0 %4727
  %v4729 = vsel %vm127, %v4726, 0
  %v4731 = vsel %vm127, %v4728, 0
  %4733 = vmatprep.subr.mxu0 0.0
  %4734 = vmatpush1.xpose.msra.mxu0 %v4731
  %4735 = vmatprep.subr.mxu0 0.0
  %4736 = vmatpush1.xpose.msra.mxu0 0.0
  %4737 = vmatprep.subr.mxu0 0.0
  %4738 = vmatpush1.xpose.msra.mxu0 0.0
  %4739 = vmatprep.subr.mxu0 0.0
  %4740 = vmatpush1.xpose.msra.mxu0 0.0
  %4741 = vmatprep.subr.mxu0 0.0
  %4742 = vmatpush1.xpose.msra.mxu0 0.0
  %4743 = vmatprep.subr.mxu0 0.0
  %4744 = vmatpush1.xpose.msra.mxu0 0.0
  %4745 = vmatprep.subr.mxu0 0.0
  %4746 = vmatpush1.xpose.msra.mxu0 0.0
  %4747 = vmatprep.subr.mxu0 0.0
  %4748 = vmatpush1.xpose.msra.mxu0 0.0
  %4749 = vmatprep.subr.mxu0 0.0
  %4750 = vmatpush1.xpose.msra.mxu0 0.0
  %4751 = vmatprep.subr.mxu0 0.0
  %4752 = vmatpush1.xpose.msra.mxu0 0.0
  %4753 = vmatprep.subr.mxu0 0.0
  %4754 = vmatpush1.xpose.msra.mxu0 0.0
  %4755 = vmatprep.subr.mxu0 0.0
  %4756 = vmatpush1.xpose.msra.mxu0 0.0
  %4757 = vmatprep.subr.mxu0 0.0
  %4758 = vmatpush1.xpose.msra.mxu0 0.0
  %4759 = vmatprep.subr.mxu0 0.0
  %4760 = vmatpush1.xpose.msra.mxu0 0.0
  %4761 = vmatprep.subr.mxu0 0.0
  %4762 = vmatpush1.xpose.msra.mxu0 0.0
  %4763 = vmatprep.subr.mxu0 0.0
  %4764 = vmatpush1.xpose.msra.mxu0 0.0
  %4765 = vmatprep.subr.mxu0 0.0
  %4766 = vmatpush1.xpose.msra.mxu0 0.0
  %4767 = vmatprep.subr.mxu0 0.0
  %4768 = vmatpush1.xpose.msra.mxu0 0.0
  %4769 = vmatprep.subr.mxu0 0.0
  %4770 = vmatpush1.xpose.msra.mxu0 0.0
  %4771 = vmatprep.subr.mxu0 0.0
  %4772 = vmatpush1.xpose.msra.mxu0 0.0
  %4773 = vmatprep.subr.mxu0 0.0
  %4774 = vmatpush1.xpose.msra.mxu0 0.0
  %4775 = vmatprep.subr.mxu0 0.0
  %4776 = vmatpush1.xpose.msra.mxu0 0.0
  %4777 = vmatprep.subr.mxu0 0.0
  %4778 = vmatpush1.xpose.msra.mxu0 0.0
  %4779 = vmatprep.subr.mxu0 0.0
  %4780 = vmatpush1.xpose.msra.mxu0 0.0
  %4781 = vmatprep.subr.mxu0 0.0
  %4782 = vmatpush1.xpose.msra.mxu0 0.0
  %4783 = vmatprep.subr.mxu0 0.0
  %4784 = vmatpush1.xpose.msra.mxu0 0.0
  %4785 = vmatprep.subr.mxu0 0.0
  %4786 = vmatpush1.xpose.msra.mxu0 0.0
  %4787 = vmatprep.subr.mxu0 0.0
  %4788 = vmatpush1.xpose.msra.mxu0 0.0
  %4789 = vmatprep.subr.mxu0 0.0
  %4790 = vmatpush1.xpose.msra.mxu0 0.0
  %4791 = vmatprep.subr.mxu0 0.0
  %4792 = vmatpush1.xpose.msra.mxu0 0.0
  %4793 = vmatprep.subr.mxu0 0.0
  %4794 = vmatpush1.xpose.msra.mxu0 0.0
  %4795 = vmatprep.subr.mxu0 0.0
  %4796 = vmatpush1.xpose.msra.mxu0 0.0
  %4797 = vmatprep.mubr.f32.mxu0 0.0
  %4798 = vmatmul.mubr.f32.gmra.mrb[0].mxu0 %v4729
  %v4799 = vpop.f32.mrb[0].mxu0
  %v4800 = vadd.f32 0.0, %v4799
  %v4801 = vpop.f32.mrb[0].mxu0
  %4802 = vdwg.mxu0
  %4803 = vrot.lane.b32.xlu0 %v3734, 104
  %v4804 = vpop.permute.xlu0 %4803
  %4805 = vrot.lane.b32.xlu0 %v3734, 72
  %v4806 = vpop.permute.xlu0 %4805
  %v4807 = vsel %vm127, %v4804, 0
  %v4809 = vsel %vm127, %v4806, 0
  %4811 = vmatprep.subr.mxu0 0.0
  %4812 = vmatpush1.xpose.msra.mxu0 %v4809
  %4813 = vmatprep.subr.mxu0 0.0
  %4814 = vmatpush1.xpose.msra.mxu0 0.0
  %4815 = vmatprep.subr.mxu0 0.0
  %4816 = vmatpush1.xpose.msra.mxu0 0.0
  %4817 = vmatprep.subr.mxu0 0.0
  %4818 = vmatpush1.xpose.msra.mxu0 0.0
  %4819 = vmatprep.subr.mxu0 0.0
  %4820 = vmatpush1.xpose.msra.mxu0 0.0
  %4821 = vmatprep.subr.mxu0 0.0
  %4822 = vmatpush1.xpose.msra.mxu0 0.0
  %4823 = vmatprep.subr.mxu0 0.0
  %4824 = vmatpush1.xpose.msra.mxu0 0.0
  %4825 = vmatprep.subr.mxu0 0.0
  %4826 = vmatpush1.xpose.msra.mxu0 0.0
  %4827 = vmatprep.subr.mxu0 0.0
  %4828 = vmatpush1.xpose.msra.mxu0 0.0
  %4829 = vmatprep.subr.mxu0 0.0
  %4830 = vmatpush1.xpose.msra.mxu0 0.0
  %4831 = vmatprep.subr.mxu0 0.0
  %4832 = vmatpush1.xpose.msra.mxu0 0.0
  %4833 = vmatprep.subr.mxu0 0.0
  %4834 = vmatpush1.xpose.msra.mxu0 0.0
  %4835 = vmatprep.subr.mxu0 0.0
  %4836 = vmatpush1.xpose.msra.mxu0 0.0
  %4837 = vmatprep.subr.mxu0 0.0
  %4838 = vmatpush1.xpose.msra.mxu0 0.0
  %4839 = vmatprep.subr.mxu0 0.0
  %4840 = vmatpush1.xpose.msra.mxu0 0.0
  %4841 = vmatprep.subr.mxu0 0.0
  %4842 = vmatpush1.xpose.msra.mxu0 0.0
  %4843 = vmatprep.subr.mxu0 0.0
  %4844 = vmatpush1.xpose.msra.mxu0 0.0
  %4845 = vmatprep.subr.mxu0 0.0
  %4846 = vmatpush1.xpose.msra.mxu0 0.0
  %4847 = vmatprep.subr.mxu0 0.0
  %4848 = vmatpush1.xpose.msra.mxu0 0.0
  %4849 = vmatprep.subr.mxu0 0.0
  %4850 = vmatpush1.xpose.msra.mxu0 0.0
  %4851 = vmatprep.subr.mxu0 0.0
  %4852 = vmatpush1.xpose.msra.mxu0 0.0
  %4853 = vmatprep.subr.mxu0 0.0
  %4854 = vmatpush1.xpose.msra.mxu0 0.0
  %4855 = vmatprep.subr.mxu0 0.0
  %4856 = vmatpush1.xpose.msra.mxu0 0.0
  %4857 = vmatprep.subr.mxu0 0.0
  %4858 = vmatpush1.xpose.msra.mxu0 0.0
  %4859 = vmatprep.subr.mxu0 0.0
  %4860 = vmatpush1.xpose.msra.mxu0 0.0
  %4861 = vmatprep.subr.mxu0 0.0
  %4862 = vmatpush1.xpose.msra.mxu0 0.0
  %4863 = vmatprep.subr.mxu0 0.0
  %4864 = vmatpush1.xpose.msra.mxu0 0.0
  %4865 = vmatprep.subr.mxu0 0.0
  %4866 = vmatpush1.xpose.msra.mxu0 0.0
  %4867 = vmatprep.subr.mxu0 0.0
  %4868 = vmatpush1.xpose.msra.mxu0 0.0
  %4869 = vmatprep.subr.mxu0 0.0
  %4870 = vmatpush1.xpose.msra.mxu0 0.0
  %4871 = vmatprep.subr.mxu0 0.0
  %4872 = vmatpush1.xpose.msra.mxu0 0.0
  %4873 = vmatprep.subr.mxu0 0.0
  %4874 = vmatpush1.xpose.msra.mxu0 0.0
  %4875 = vmatprep.mubr.f32.mxu0 0.0
  %4876 = vmatmul.mubr.f32.gmra.mrb[0].mxu0 %v4807
  %v4877 = vpop.f32.mrb[0].mxu0
  %v4878 = vadd.f32 0.0, %v4877
  %v4879 = vpop.f32.mrb[0].mxu0
  %4880 = vdwg.mxu0
  %v4881 = vsel %vm127, %v4800, -inf
  %4882 = vmax.xlane.f32.xlu0 %v4881
  %v4883 = vpop.xlane.xlu0 %4882
  %v4884 = vsel %vm127, %v4878, -inf
  %4885 = vmax.xlane.f32.xlu0 %v4884
  %v4886 = vpop.xlane.xlu0 %4885
  %v4887 = vsub.f32 %v4800, %v4883
  %v4888 = vsub.f32 %v4878, %v4886
  %v4889 = vmul.f32 %v4887, 1.442695
  %v4890 = vpow.pop %v4889
  %v4891 = vmul.f32 %v4888, 1.442695
  %v4892 = vpow.pop %v4891
  %v4893 = vsel %vm127, %v4890, 0.0
  %4894 = vadd.xlane.f32.xlu0 %v4893
  %v4895 = vpop.xlane.xlu0 %4894
  %v4896 = vsel %vm127, %v4892, 0.0
  %4897 = vadd.xlane.f32.xlu0 %v4896
  %v4898 = vpop.xlane.xlu0 %4897
  %v4899 = vrcp.pop %v4895
  %v4900 = vrcp.pop %v4898
  %v4901 = vmul.f32 %v4890, %v4899
  %v4902 = vmul.f32 %v4892, %v4900
  %4903 = vrot.lane.b32.xlu0 %v3731, 40
  %v4904 = vpop.permute.xlu0 %4903
  %v4907 = vsel %vm127, %v4901, 0
  %4909 = vmatprep.subr.mxu0 0.0
  %4910 = vmatpush1.msra.mxu0 %v4904
  %4911 = vmatprep.subr.mxu0 0.0
  %4912 = vmatpush1.msra.mxu0 0.0
  %4913 = vmatprep.subr.mxu0 0.0
  %4914 = vmatpush1.msra.mxu0 0.0
  %4915 = vmatprep.subr.mxu0 0.0
  %4916 = vmatpush1.msra.mxu0 0.0
  %4917 = vmatprep.subr.mxu0 0.0
  %4918 = vmatpush1.msra.mxu0 0.0
  %4919 = vmatprep.subr.mxu0 0.0
  %4920 = vmatpush1.msra.mxu0 0.0
  %4921 = vmatprep.subr.mxu0 0.0
  %4922 = vmatpush1.msra.mxu0 0.0
  %4923 = vmatprep.subr.mxu0 0.0
  %4924 = vmatpush1.msra.mxu0 0.0
  %4925 = vmatprep.subr.mxu0 0.0
  %4926 = vmatpush1.msra.mxu0 0.0
  %4927 = vmatprep.subr.mxu0 0.0
  %4928 = vmatpush1.msra.mxu0 0.0
  %4929 = vmatprep.subr.mxu0 0.0
  %4930 = vmatpush1.msra.mxu0 0.0
  %4931 = vmatprep.subr.mxu0 0.0
  %4932 = vmatpush1.msra.mxu0 0.0
  %4933 = vmatprep.subr.mxu0 0.0
  %4934 = vmatpush1.msra.mxu0 0.0
  %4935 = vmatprep.subr.mxu0 0.0
  %4936 = vmatpush1.msra.mxu0 0.0
  %4937 = vmatprep.subr.mxu0 0.0
  %4938 = vmatpush1.msra.mxu0 0.0
  %4939 = vmatprep.subr.mxu0 0.0
  %4940 = vmatpush1.msra.mxu0 0.0
  %4941 = vmatprep.subr.mxu0 0.0
  %4942 = vmatpush1.msra.mxu0 0.0
  %4943 = vmatprep.subr.mxu0 0.0
  %4944 = vmatpush1.msra.mxu0 0.0
  %4945 = vmatprep.subr.mxu0 0.0
  %4946 = vmatpush1.msra.mxu0 0.0
  %4947 = vmatprep.subr.mxu0 0.0
  %4948 = vmatpush1.msra.mxu0 0.0
  %4949 = vmatprep.subr.mxu0 0.0
  %4950 = vmatpush1.msra.mxu0 0.0
  %4951 = vmatprep.subr.mxu0 0.0
  %4952 = vmatpush1.msra.mxu0 0.0
  %4953 = vmatprep.subr.mxu0 0.0
  %4954 = vmatpush1.msra.mxu0 0.0
  %4955 = vmatprep.subr.mxu0 0.0
  %4956 = vmatpush1.msra.mxu0 0.0
  %4957 = vmatprep.subr.mxu0 0.0
  %4958 = vmatpush1.msra.mxu0 0.0
  %4959 = vmatprep.subr.mxu0 0.0
  %4960 = vmatpush1.msra.mxu0 0.0
  %4961 = vmatprep.subr.mxu0 0.0
  %4962 = vmatpush1.msra.mxu0 0.0
  %4963 = vmatprep.subr.mxu0 0.0
  %4964 = vmatpush1.msra.mxu0 0.0
  %4965 = vmatprep.subr.mxu0 0.0
  %4966 = vmatpush1.msra.mxu0 0.0
  %4967 = vmatprep.subr.mxu0 0.0
  %4968 = vmatpush1.msra.mxu0 0.0
  %4969 = vmatprep.subr.mxu0 0.0
  %4970 = vmatpush1.msra.mxu0 0.0
  %4971 = vmatprep.subr.mxu0 0.0
  %4972 = vmatpush1.msra.mxu0 0.0
  %4973 = vmatprep.mubr.f32.mxu0 0.0
  %4974 = vmatmul.mubr.f32.gmra.mrb[0].mxu0 %v4907
  %v4975 = vpop.f32.mrb[0].mxu0
  %v4976 = vadd.f32 0.0, %v4975
  %v4977 = vpop.f32.mrb[0].mxu0
  %4978 = vdwg.mxu0
  %4979 = vrot.lane.b32.xlu0 %v3734, 40
  %v4980 = vpop.permute.xlu0 %4979
  %v4983 = vsel %vm127, %v4902, 0
  %4985 = vmatprep.subr.mxu0 0.0
  %4986 = vmatpush1.msra.mxu0 %v4980
  %4987 = vmatprep.subr.mxu0 0.0
  %4988 = vmatpush1.msra.mxu0 0.0
  %4989 = vmatprep.subr.mxu0 0.0
  %4990 = vmatpush1.msra.mxu0 0.0
  %4991 = vmatprep.subr.mxu0 0.0
  %4992 = vmatpush1.msra.mxu0 0.0
  %4993 = vmatprep.subr.mxu0 0.0
  %4994 = vmatpush1.msra.mxu0 0.0
  %4995 = vmatprep.subr.mxu0 0.0
  %4996 = vmatpush1.msra.mxu0 0.0
  %4997 = vmatprep.subr.mxu0 0.0
  %4998 = vmatpush1.msra.mxu0 0.0
  %4999 = vmatprep.subr.mxu0 0.0
  %5000 = vmatpush1.msra.mxu0 0.0
  %5001 = vmatprep.subr.mxu0 0.0
  %5002 = vmatpush1.msra.mxu0 0.0
  %5003 = vmatprep.subr.mxu0 0.0
  %5004 = vmatpush1.msra.mxu0 0.0
  %5005 = vmatprep.subr.mxu0 0.0
  %5006 = vmatpush1.msra.mxu0 0.0
  %5007 = vmatprep.subr.mxu0 0.0
  %5008 = vmatpush1.msra.mxu0 0.0
  %5009 = vmatprep.subr.mxu0 0.0
  %5010 = vmatpush1.msra.mxu0 0.0
  %5011 = vmatprep.subr.mxu0 0.0
  %5012 = vmatpush1.msra.mxu0 0.0
  %5013 = vmatprep.subr.mxu0 0.0
  %5014 = vmatpush1.msra.mxu0 0.0
  %5015 = vmatprep.subr.mxu0 0.0
  %5016 = vmatpush1.msra.mxu0 0.0
  %5017 = vmatprep.subr.mxu0 0.0
  %5018 = vmatpush1.msra.mxu0 0.0
  %5019 = vmatprep.subr.mxu0 0.0
  %5020 = vmatpush1.msra.mxu0 0.0
  %5021 = vmatprep.subr.mxu0 0.0
  %5022 = vmatpush1.msra.mxu0 0.0
  %5023 = vmatprep.subr.mxu0 0.0
  %5024 = vmatpush1.msra.mxu0 0.0
  %5025 = vmatprep.subr.mxu0 0.0
  %5026 = vmatpush1.msra.mxu0 0.0
  %5027 = vmatprep.subr.mxu0 0.0
  %5028 = vmatpush1.msra.mxu0 0.0
  %5029 = vmatprep.subr.mxu0 0.0
  %5030 = vmatpush1.msra.mxu0 0.0
  %5031 = vmatprep.subr.mxu0 0.0
  %5032 = vmatpush1.msra.mxu0 0.0
  %5033 = vmatprep.subr.mxu0 0.0
  %5034 = vmatpush1.msra.mxu0 0.0
  %5035 = vmatprep.subr.mxu0 0.0
  %5036 = vmatpush1.msra.mxu0 0.0
  %5037 = vmatprep.subr.mxu0 0.0
  %5038 = vmatpush1.msra.mxu0 0.0
  %5039 = vmatprep.subr.mxu0 0.0
  %5040 = vmatpush1.msra.mxu0 0.0
  %5041 = vmatprep.subr.mxu0 0.0
  %5042 = vmatpush1.msra.mxu0 0.0
  %5043 = vmatprep.subr.mxu0 0.0
  %5044 = vmatpush1.msra.mxu0 0.0
  %5045 = vmatprep.subr.mxu0 0.0
  %5046 = vmatpush1.msra.mxu0 0.0
  %5047 = vmatprep.subr.mxu0 0.0
  %5048 = vmatpush1.msra.mxu0 0.0
  %5049 = vmatprep.mubr.f32.mxu0 0.0
  %5050 = vmatmul.mubr.f32.gmra.mrb[0].mxu0 %v4983
  %v5051 = vpop.f32.mrb[0].mxu0
  %v5052 = vadd.f32 0.0, %v5051
  %v5053 = vpop.f32.mrb[0].mxu0
  %5054 = vdwg.mxu0
  %5057 = vrot.lane.b32.xlu0 %v4316, 8
  %v5058 = vpop.permute.xlu0 %5057
  %5059 = vrot.lane.b32.xlu0 %v4392, 8
  %v5060 = vpop.permute.xlu0 %5059
  %5065 = vrot.lane.b32.xlu0 %v4646, 16
  %v5066 = vpop.permute.xlu0 %5065
  %5067 = vrot.lane.b32.xlu0 %v4722, 16
  %v5068 = vpop.permute.xlu0 %5067
  %5073 = vrot.lane.b32.xlu0 %v4976, 24
  %v5074 = vpop.permute.xlu0 %5073
  %5075 = vrot.lane.b32.xlu0 %v5052, 24
  %v5076 = vpop.permute.xlu0 %5075
  %v5079 = vsel %vm127, %v3986, %v5058
  %v5080 = vsel %vm127, %v4062, %v5060
  %v5081 = vsel %vm1469, %v5079, %v5066
  %v5082 = vsel %vm1469, %v5080, %v5068
  %v5083 = vsel %vm1472, %v5081, %v5074
  %v5084 = vsel %vm1472, %v5082, %v5076
  %v5085 = vpack.c.bf16 %v5084, %v5083
  %s5086 = scalar_lea.vmem %s3, 16
  %v5087 = vld [vmem:[%s5086] sm:$0xf]
  %v5088 = vld [vmem:[%s5086 + $0x4] sm:$0xf]
  %v5089 = vld [vmem:[%s5086 + $0x8] sm:$0xf]
  %v5090 = vld [vmem:[%s5086 + $0xc] sm:$0xf]
  %s5091 = scalar_lea.vmem %s4, 1
  %v5092 = vld [vmem:[%s5091] sm:$0x1]
  %v5094 = vlaneseq
  %v5095 = vshrl.u32 %v5094, 7
  %v5096 = vsub.s32 0, %v5095
  %v5097 = vrot.slane %v5092, %v5096
  %v5103 = vunpack.c.l.b16 %v5087
  %v5104 = vunpack.c.l.b16 %v5088
  %v5105 = vunpack.c.l.b16 %v5089
  %v5106 = vunpack.c.l.b16 %v5090
  %v5107 = vpack.c.b16 %v5104, %v5103
  %v5108 = vpack.c.b16 %v5106, %v5105
  %v5112 = vsel %vm79, %v5085, 0
  %5114 = vmatprep.subr.bf16.mxu0 0
  %5115 = vmatpush1.bf16.msra.mxu0 %v5107
  %5116 = vmatprep.subr.bf16.mxu0 0
  %5117 = vmatpush1.bf16.msra.mxu0 %v5108
  %5118 = vmatprep.subr.bf16.mxu0 0
  %5119 = vmatpush1.bf16.msra.mxu0 0
  %5120 = vmatprep.subr.bf16.mxu0 0
  %5121 = vmatpush1.bf16.msra.mxu0 0
  %5122 = vmatprep.subr.bf16.mxu0 0
  %5123 = vmatpush1.bf16.msra.mxu0 0
  %5124 = vmatprep.subr.bf16.mxu0 0
  %5125 = vmatpush1.bf16.msra.mxu0 0
  %5126 = vmatprep.subr.bf16.mxu0 0
  %5127 = vmatpush1.bf16.msra.mxu0 0
  %5128 = vmatprep.subr.bf16.mxu0 0
  %5129 = vmatpush1.bf16.msra.mxu0 0
  %5130 = vmatprep.subr.bf16.mxu0 0
  %5131 = vmatpush1.bf16.msra.mxu0 0
  %5132 = vmatprep.subr.bf16.mxu0 0
  %5133 = vmatpush1.bf16.msra.mxu0 0
  %5134 = vmatprep.subr.bf16.mxu0 0
  %5135 = vmatpush1.bf16.msra.mxu0 0
  %5136 = vmatprep.subr.bf16.mxu0 0
  %5137 = vmatpush1.bf16.msra.mxu0 0
  %5138 = vmatprep.subr.bf16.mxu0 0
  %5139 = vmatpush1.bf16.msra.mxu0 0
  %5140 = vmatprep.subr.bf16.mxu0 0
  %5141 = vmatpush1.bf16.msra.mxu0 0
  %5142 = vmatprep.subr.bf16.mxu0 0
  %5143 = vmatpush1.bf16.msra.mxu0 0
  %5144 = vmatprep.subr.bf16.mxu0 0
  %5145 = vmatpush1.bf16.msra.mxu0 0
  %5146 = vmatprep.mubr.bf16.mxu0 0
  %5147 = vmatmul.mubr.bf16.gmra.mrb[0].mxu0 %v5112
  %v5148 = vpop.f32.mrb[0].mxu0
  %v5149 = vadd.f32 %v5097, %v5148
  %v5150 = vpop.f32.mrb[0].mxu0
  %v5151 = vpop.f32.mrb[0].mxu0
  %v5152 = vadd.f32 %v5097, %v5151
  %v5153 = vpop.f32.mrb[0].mxu0
  %5154 = vdwg.mxu0
  %v5155 = vadd.f32 %v3665, %v5149
  %v5156 = vadd.f32 %v3666, %v5152
  %v5157 = vsel %vm79, %v5155, 0.0
  %5158 = vadd.xlane.f32.xlu0 %v5157
  %v5159 = vpop.xlane.xlu0 %5158
  %v5160 = vsel %vm79, %v5156, 0.0
  %5161 = vadd.xlane.f32.xlu0 %v5160
  %v5162 = vpop.xlane.xlu0 %5161
  %v5163 = vmul.f32 %v5159, %v1551
  %v5164 = vmul.f32 %v5162, %v1551
  %v5165 = vsub.f32 %v5155, %v5163
  %v5166 = vsub.f32 %v5156, %v5164
  %v5167 = vmul.f32 %v5165, %v5165
  %v5168 = vmul.f32 %v5166, %v5166
  %v5169 = vsel %vm79, %v5167, 0.0
  %5170 = vadd.xlane.f32.xlu0 %v5169
  %v5171 = vpop.xlane.xlu0 %5170
  %v5172 = vsel %vm79, %v5168, 0.0
  %5173 = vadd.xlane.f32.xlu0 %v5172
  %v5174 = vpop.xlane.xlu0 %5173
  %v5175 = vmul.f32 %v5171, %v1551
  %v5176 = vmul.f32 %v5174, %v1551
  %v5177 = vadd.f32 %v5175, 1e-05
  %v5178 = vadd.f32 %v5176, 1e-05
  %v5179 = vrsqrt.pop %v5177
  %v5180 = vrsqrt.pop %v5178
  %v5181 = vmul.f32 %v5165, %v5179
  %v5182 = vmul.f32 %v5166, %v5180
  %s5183 = scalar_lea.vmem %s5, 1
  %v5184 = vld [vmem:[%s5183] sm:$0x1]
  %v5186 = vlaneseq
  %v5187 = vshrl.u32 %v5186, 7
  %v5188 = vsub.s32 0, %v5187
  %v5189 = vrot.slane %v5184, %v5188
  %v5191 = vmul.f32 %v5181, %v5189
  %v5192 = vmul.f32 %v5182, %v5189
  %s5193 = scalar_lea.vmem %s6, 1
  %v5194 = vld [vmem:[%s5193] sm:$0x1]
  %v5196 = vlaneseq
  %v5197 = vshrl.u32 %v5196, 7
  %v5198 = vsub.s32 0, %v5197
  %v5199 = vrot.slane %v5194, %v5198
  %v5201 = vadd.f32 %v5191, %v5199
  %v5202 = vadd.f32 %v5192, %v5199
  %v5203 = vpack.c.bf16 %v5202, %v5201
  %s5204 = scalar_lea.vmem %s7, 256
  %v5205 = vld [vmem:[%s5204] sm:$0xff]
  %v5206 = vld [vmem:[%s5204 + $0x8] sm:$0xff]
  %v5207 = vld [vmem:[%s5204 + $0x10] sm:$0xff]
  %v5208 = vld [vmem:[%s5204 + $0x18] sm:$0xff]
  %v5209 = vld [vmem:[%s5204 + $0x20] sm:$0xff]
  %v5210 = vld [vmem:[%s5204 + $0x28] sm:$0xff]
  %v5211 = vld [vmem:[%s5204 + $0x30] sm:$0xff]
  %v5212 = vld [vmem:[%s5204 + $0x38] sm:$0xff]
  %v5213 = vld [vmem:[%s5204 + $0x40] sm:$0xff]
  %v5214 = vld [vmem:[%s5204 + $0x48] sm:$0xff]
  %v5215 = vld [vmem:[%s5204 + $0x50] sm:$0xff]
  %v5216 = vld [vmem:[%s5204 + $0x58] sm:$0xff]
  %v5217 = vld [vmem:[%s5204 + $0x60] sm:$0xff]
  %v5218 = vld [vmem:[%s5204 + $0x68] sm:$0xff]
  %v5219 = vld [vmem:[%s5204 + $0x70] sm:$0xff]
  %v5220 = vld [vmem:[%s5204 + $0x78] sm:$0xff]
  %v5221 = vld [vmem:[%s5204 + $0x80] sm:$0xff]
  %v5222 = vld [vmem:[%s5204 + $0x88] sm:$0xff]
  %v5223 = vld [vmem:[%s5204 + $0x90] sm:$0xff]
  %v5224 = vld [vmem:[%s5204 + $0x98] sm:$0xff]
  %v5225 = vld [vmem:[%s5204 + $0xa0] sm:$0xff]
  %v5226 = vld [vmem:[%s5204 + $0xa8] sm:$0xff]
  %v5227 = vld [vmem:[%s5204 + $0xb0] sm:$0xff]
  %v5228 = vld [vmem:[%s5204 + $0xb8] sm:$0xff]
  %v5229 = vld [vmem:[%s5204 + $0xc0] sm:$0xff]
  %v5230 = vld [vmem:[%s5204 + $0xc8] sm:$0xff]
  %v5231 = vld [vmem:[%s5204 + $0xd0] sm:$0xff]
  %v5232 = vld [vmem:[%s5204 + $0xd8] sm:$0xff]
  %v5233 = vld [vmem:[%s5204 + $0xe0] sm:$0xff]
  %v5234 = vld [vmem:[%s5204 + $0xe8] sm:$0xff]
  %v5235 = vld [vmem:[%s5204 + $0xf0] sm:$0xff]
  %v5236 = vld [vmem:[%s5204 + $0xf8] sm:$0xff]
  %s5237 = scalar_lea.vmem %s8, 16
  %v5238 = vld [vmem:[%s5237] sm:$0xff]
  %v5239 = vld [vmem:[%s5237 + $0x8] sm:$0xff]
  %v5242 = vlaneseq
  %v5243 = vshrl.u32 %v5242, 7
  %v5244 = vsub.s32 0, %v5243
  %v5245 = vrot.slane %v5238, %v5244
  %v5246 = vlaneseq
  %v5247 = vshrl.u32 %v5246, 7
  %v5248 = vsub.s32 1, %v5247
  %v5249 = vrot.slane %v5238, %v5248
  %v5250 = vlaneseq
  %v5251 = vshrl.u32 %v5250, 7
  %v5252 = vsub.s32 2, %v5251
  %v5253 = vrot.slane %v5238, %v5252
  %v5254 = vlaneseq
  %v5255 = vshrl.u32 %v5254, 7
  %v5256 = vsub.s32 3, %v5255
  %v5257 = vrot.slane %v5238, %v5256
  %v5258 = vlaneseq
  %v5259 = vshrl.u32 %v5258, 7
  %v5260 = vsub.s32 4, %v5259
  %v5261 = vrot.slane %v5238, %v5260
  %v5262 = vlaneseq
  %v5263 = vshrl.u32 %v5262, 7
  %v5264 = vsub.s32 5, %v5263
  %v5265 = vrot.slane %v5238, %v5264
  %v5266 = vlaneseq
  %v5267 = vshrl.u32 %v5266, 7
  %v5268 = vsub.s32 6, %v5267
  %v5269 = vrot.slane %v5238, %v5268
  %v5270 = vlaneseq
  %v5271 = vshrl.u32 %v5270, 7
  %v5272 = vsub.s32 7, %v5271
  %v5273 = vrot.slane %v5238, %v5272
  %v5274 = vlaneseq
  %v5275 = vshrl.u32 %v5274, 7
  %v5276 = vsub.s32 0, %v5275
  %v5277 = vrot.slane %v5239, %v5276
  %v5278 = vlaneseq
  %v5279 = vshrl.u32 %v5278, 7
  %v5280 = vsub.s32 1, %v5279
  %v5281 = vrot.slane %v5239, %v5280
  %v5282 = vlaneseq
  %v5283 = vshrl.u32 %v5282, 7
  %v5284 = vsub.s32 2, %v5283
  %v5285 = vrot.slane %v5239, %v5284
  %v5286 = vlaneseq
  %v5287 = vshrl.u32 %v5286, 7
  %v5288 = vsub.s32 3, %v5287
  %v5289 = vrot.slane %v5239, %v5288
  %v5290 = vlaneseq
  %v5291 = vshrl.u32 %v5290, 7
  %v5292 = vsub.s32 4, %v5291
  %v5293 = vrot.slane %v5239, %v5292
  %v5294 = vlaneseq
  %v5295 = vshrl.u32 %v5294, 7
  %v5296 = vsub.s32 5, %v5295
  %v5297 = vrot.slane %v5239, %v5296
  %v5298 = vlaneseq
  %v5299 = vshrl.u32 %v5298, 7
  %v5300 = vsub.s32 6, %v5299
  %v5301 = vrot.slane %v5239, %v5300
  %v5302 = vlaneseq
  %v5303 = vshrl.u32 %v5302, 7
  %v5304 = vsub.s32 7, %v5303
  %v5305 = vrot.slane %v5239, %v5304
  %v5354 = vunpack.c.l.b16 %v5205
  %v5355 = vunpack.c.h.b16 %v5205
  %v5356 = vunpack.c.l.b16 %v5206
  %v5357 = vunpack.c.h.b16 %v5206
  %v5358 = vunpack.c.l.b16 %v5207
  %v5359 = vunpack.c.h.b16 %v5207
  %v5360 = vunpack.c.l.b16 %v5208
  %v5361 = vunpack.c.h.b16 %v5208
  %v5362 = vunpack.c.l.b16 %v5209
  %v5363 = vunpack.c.h.b16 %v5209
  %v5364 = vunpack.c.l.b16 %v5210
  %v5365 = vunpack.c.h.b16 %v5210
  %v5366 = vunpack.c.l.b16 %v5211
  %v5367 = vunpack.c.h.b16 %v5211
  %v5368 = vunpack.c.l.b16 %v5212
  %v5369 = vunpack.c.h.b16 %v5212
  %v5370 = vunpack.c.l.b16 %v5213
  %v5371 = vunpack.c.h.b16 %v5213
  %v5372 = vunpack.c.l.b16 %v5214
  %v5373 = vunpack.c.h.b16 %v5214
  %v5374 = vunpack.c.l.b16 %v5215
  %v5375 = vunpack.c.h.b16 %v5215
  %v5376 = vunpack.c.l.b16 %v5216
  %v5377 = vunpack.c.h.b16 %v5216
  %v5378 = vunpack.c.l.b16 %v5217
  %v5379 = vunpack.c.h.b16 %v5217
  %v5380 = vunpack.c.l.b16 %v5218
  %v5381 = vunpack.c.h.b16 %v5218
  %v5382 = vunpack.c.l.b16 %v5219
  %v5383 = vunpack.c.h.b16 %v5219
  %v5384 = vunpack.c.l.b16 %v5220
  %v5385 = vunpack.c.h.b16 %v5220
  %v5386 = vunpack.c.l.b16 %v5221
  %v5387 = vunpack.c.h.b16 %v5221
  %v5388 = vunpack.c.l.b16 %v5222
  %v5389 = vunpack.c.h.b16 %v5222
  %v5390 = vunpack.c.l.b16 %v5223
  %v5391 = vunpack.c.h.b16 %v5223
  %v5392 = vunpack.c.l.b16 %v5224
  %v5393 = vunpack.c.h.b16 %v5224
  %v5394 = vunpack.c.l.b16 %v5225
  %v5395 = vunpack.c.h.b16 %v5225
  %v5396 = vunpack.c.l.b16 %v5226
  %v5397 = vunpack.c.h.b16 %v5226
  %v5398 = vunpack.c.l.b16 %v5227
  %v5399 = vunpack.c.h.b16 %v5227
  %v5400 = vunpack.c.l.b16 %v5228
  %v5401 = vunpack.c.h.b16 %v5228
  %v5402 = vunpack.c.l.b16 %v5229
  %v5403 = vunpack.c.h.b16 %v5229
  %v5404 = vunpack.c.l.b16 %v5230
  %v5405 = vunpack.c.h.b16 %v5230
  %v5406 = vunpack.c.l.b16 %v5231
  %v5407 = vunpack.c.h.b16 %v5231
  %v5408 = vunpack.c.l.b16 %v5232
  %v5409 = vunpack.c.h.b16 %v5232
  %v5410 = vunpack.c.l.b16 %v5233
  %v5411 = vunpack.c.h.b16 %v5233
  %v5412 = vunpack.c.l.b16 %v5234
  %v5413 = vunpack.c.h.b16 %v5234
  %v5414 = vunpack.c.l.b16 %v5235
  %v5415 = vunpack.c.h.b16 %v5235
  %v5416 = vunpack.c.l.b16 %v5236
  %v5417 = vunpack.c.h.b16 %v5236
  %v5418 = vpack.c.b16 %v5370, %v5354
  %v5419 = vpack.c.b16 %v5371, %v5355
  %v5420 = vpack.c.b16 %v5372, %v5356
  %v5421 = vpack.c.b16 %v5373, %v5357
  %v5422 = vpack.c.b16 %v5374, %v5358
  %v5423 = vpack.c.b16 %v5375, %v5359
  %v5424 = vpack.c.b16 %v5376, %v5360
  %v5425 = vpack.c.b16 %v5377, %v5361
  %v5426 = vpack.c.b16 %v5378, %v5362
  %v5427 = vpack.c.b16 %v5379, %v5363
  %v5428 = vpack.c.b16 %v5380, %v5364
  %v5429 = vpack.c.b16 %v5381, %v5365
  %v5430 = vpack.c.b16 %v5382, %v5366
  %v5431 = vpack.c.b16 %v5383, %v5367
  %v5432 = vpack.c.b16 %v5384, %v5368
  %v5433 = vpack.c.b16 %v5385, %v5369
  %v5434 = vpack.c.b16 %v5402, %v5386
  %v5435 = vpack.c.b16 %v5403, %v5387
  %v5436 = vpack.c.b16 %v5404, %v5388
  %v5437 = vpack.c.b16 %v5405, %v5389
  %v5438 = vpack.c.b16 %v5406, %v5390
  %v5439 = vpack.c.b16 %v5407, %v5391
  %v5440 = vpack.c.b16 %v5408, %v5392
  %v5441 = vpack.c.b16 %v5409, %v5393
  %v5442 = vpack.c.b16 %v5410, %v5394
  %v5443 = vpack.c.b16 %v5411, %v5395
  %v5444 = vpack.c.b16 %v5412, %v5396
  %v5445 = vpack.c.b16 %v5413, %v5397
  %v5446 = vpack.c.b16 %v5414, %v5398
  %v5447 = vpack.c.b16 %v5415, %v5399
  %v5448 = vpack.c.b16 %v5416, %v5400
  %v5449 = vpack.c.b16 %v5417, %v5401
  %v5483 = vsel %vm79, %v5203, 0
  %5485 = vmatprep.subr.bf16.mxu0 %v5419
  %5486 = vmatpush1.bf16.msra.mxu0 %v5418
  %5487 = vmatprep.subr.bf16.mxu0 %v5435
  %5488 = vmatpush1.bf16.msra.mxu0 %v5434
  %5489 = vmatprep.subr.bf16.mxu0 0
  %5490 = vmatpush1.bf16.msra.mxu0 0
  %5491 = vmatprep.subr.bf16.mxu0 0
  %5492 = vmatpush1.bf16.msra.mxu0 0
  %5493 = vmatprep.subr.bf16.mxu0 0
  %5494 = vmatpush1.bf16.msra.mxu0 0
  %5495 = vmatprep.subr.bf16.mxu0 0
  %5496 = vmatpush1.bf16.msra.mxu0 0
  %5497 = vmatprep.subr.bf16.mxu0 0
  %5498 = vmatpush1.bf16.msra.mxu0 0
  %5499 = vmatprep.subr.bf16.mxu0 0
  %5500 = vmatpush1.bf16.msra.mxu0 0
  %5501 = vmatprep.subr.bf16.mxu0 0
  %5502 = vmatpush1.bf16.msra.mxu0 0
  %5503 = vmatprep.subr.bf16.mxu0 0
  %5504 = vmatpush1.bf16.msra.mxu0 0
  %5505 = vmatprep.subr.bf16.mxu0 0
  %5506 = vmatpush1.bf16.msra.mxu0 0
  %5507 = vmatprep.subr.bf16.mxu0 0
  %5508 = vmatpush1.bf16.msra.mxu0 0
  %5509 = vmatprep.subr.bf16.mxu0 0
  %5510 = vmatpush1.bf16.msra.mxu0 0
  %5511 = vmatprep.subr.bf16.mxu0 0
  %5512 = vmatpush1.bf16.msra.mxu0 0
  %5513 = vmatprep.subr.bf16.mxu0 0
  %5514 = vmatpush1.bf16.msra.mxu0 0
  %5515 = vmatprep.subr.bf16.mxu0 0
  %5516 = vmatpush1.bf16.msra.mxu0 0
  %5517 = vmatprep.mubr.bf16.mxu0 0
  %5518 = vmatmul.mubr.bf16.gmra.mrb[0].mxu0 %v5483
  %v5519 = vpop.f32.mrb[0].mxu0
  %v5520 = vadd.f32 %v5245, %v5519
  %v5521 = vpop.f32.mrb[0].mxu0
  %v5522 = vadd.f32 %v5249, %v5521
  %v5523 = vpop.f32.mrb[0].mxu0
  %v5524 = vadd.f32 %v5245, %v5523
  %v5525 = vpop.f32.mrb[0].mxu0
  %v5526 = vadd.f32 %v5249, %v5525
  %5527 = vdwg.mxu0
  %5528 = vmatprep.subr.bf16.mxu0 %v5421
  %5529 = vmatpush1.bf16.msra.mxu0 %v5420
  %5530 = vmatprep.subr.bf16.mxu0 %v5437
  %5531 = vmatpush1.bf16.msra.mxu0 %v5436
  %5532 = vmatprep.subr.bf16.mxu0 0
  %5533 = vmatpush1.bf16.msra.mxu0 0
  %5534 = vmatprep.subr.bf16.mxu0 0
  %5535 = vmatpush1.bf16.msra.mxu0 0
  %5536 = vmatprep.subr.bf16.mxu0 0
  %5537 = vmatpush1.bf16.msra.mxu0 0
  %5538 = vmatprep.subr.bf16.mxu0 0
  %5539 = vmatpush1.bf16.msra.mxu0 0
  %5540 = vmatprep.subr.bf16.mxu0 0
  %5541 = vmatpush1.bf16.msra.mxu0 0
  %5542 = vmatprep.subr.bf16.mxu0 0
  %5543 = vmatpush1.bf16.msra.mxu0 0
  %5544 = vmatprep.subr.bf16.mxu0 0
  %5545 = vmatpush1.bf16.msra.mxu0 0
  %5546 = vmatprep.subr.bf16.mxu0 0
  %5547 = vmatpush1.bf16.msra.mxu0 0
  %5548 = vmatprep.subr.bf16.mxu0 0
  %5549 = vmatpush1.bf16.msra.mxu0 0
  %5550 = vmatprep.subr.bf16.mxu0 0
  %5551 = vmatpush1.bf16.msra.mxu0 0
  %5552 = vmatprep.subr.bf16.mxu0 0
  %5553 = vmatpush1.bf16.msra.mxu0 0
  %5554 = vmatprep.subr.bf16.mxu0 0
  %5555 = vmatpush1.bf16.msra.mxu0 0
  %5556 = vmatprep.subr.bf16.mxu0 0
  %5557 = vmatpush1.bf16.msra.mxu0 0
  %5558 = vmatprep.subr.bf16.mxu0 0
  %5559 = vmatpush1.bf16.msra.mxu0 0
  %5560 = vmatprep.mubr.bf16.mxu0 0
  %5561 = vmatmul.mubr.bf16.gmra.mrb[0].mxu0 %v5483
  %v5562 = vpop.f32.mrb[0].mxu0
  %v5563 = vadd.f32 %v5253, %v5562
  %v5564 = vpop.f32.mrb[0].mxu0
  %v5565 = vadd.f32 %v5257, %v5564
  %v5566 = vpop.f32.mrb[0].mxu0
  %v5567 = vadd.f32 %v5253, %v5566
  %v5568 = vpop.f32.mrb[0].mxu0
  %v5569 = vadd.f32 %v5257, %v5568
  %5570 = vdwg.mxu0
  %5571 = vmatprep.subr.bf16.mxu0 %v5423
  %5572 = vmatpush1.bf16.msra.mxu0 %v5422
  %5573 = vmatprep.subr.bf16.mxu0 %v5439
  %5574 = vmatpush1.bf16.msra.mxu0 %v5438
  %5575 = vmatprep.subr.bf16.mxu0 0
  %5576 = vmatpush1.bf16.msra.mxu0 0
  %5577 = vmatprep.subr.bf16.mxu0 0
  %5578 = vmatpush1.bf16.msra.mxu0 0
  %5579 = vmatprep.subr.bf16.mxu0 0
  %5580 = vmatpush1.bf16.msra.mxu0 0
  %5581 = vmatprep.subr.bf16.mxu0 0
  %5582 = vmatpush1.bf16.msra.mxu0 0
  %5583 = vmatprep.subr.bf16.mxu0 0
  %5584 = vmatpush1.bf16.msra.mxu0 0
  %5585 = vmatprep.subr.bf16.mxu0 0
  %5586 = vmatpush1.bf16.msra.mxu0 0
  %5587 = vmatprep.subr.bf16.mxu0 0
  %5588 = vmatpush1.bf16.msra.mxu0 0
  %5589 = vmatprep.subr.bf16.mxu0 0
  %5590 = vmatpush1.bf16.msra.mxu0 0
  %5591 = vmatprep.subr.bf16.mxu0 0
  %5592 = vmatpush1.bf16.msra.mxu0 0
  %5593 = vmatprep.subr.bf16.mxu0 0
  %5594 = vmatpush1.bf16.msra.mxu0 0
  %5595 = vmatprep.subr.bf16.mxu0 0
  %5596 = vmatpush1.bf16.msra.mxu0 0
  %5597 = vmatprep.subr.bf16.mxu0 0
  %5598 = vmatpush1.bf16.msra.mxu0 0
  %5599 = vmatprep.subr.bf16.mxu0 0
  %5600 = vmatpush1.bf16.msra.mxu0 0
  %5601 = vmatprep.subr.bf16.mxu0 0
  %5602 = vmatpush1.bf16.msra.mxu0 0
  %5603 = vmatprep.mubr.bf16.mxu0 0
  %5604 = vmatmul.mubr.bf16.gmra.mrb[0].mxu0 %v5483
  %v5605 = vpop.f32.mrb[0].mxu0
  %v5606 = vadd.f32 %v5261, %v5605
  %v5607 = vpop.f32.mrb[0].mxu0
  %v5608 = vadd.f32 %v5265, %v5607
  %v5609 = vpop.f32.mrb[0].mxu0
  %v5610 = vadd.f32 %v5261, %v5609
  %v5611 = vpop.f32.mrb[0].mxu0
  %v5612 = vadd.f32 %v5265, %v5611
  %5613 = vdwg.mxu0
  %5614 = vmatprep.subr.bf16.mxu0 %v5425
  %5615 = vmatpush1.bf16.msra.mxu0 %v5424
  %5616 = vmatprep.subr.bf16.mxu0 %v5441
  %5617 = vmatpush1.bf16.msra.mxu0 %v5440
  %5618 = vmatprep.subr.bf16.mxu0 0
  %5619 = vmatpush1.bf16.msra.mxu0 0
  %5620 = vmatprep.subr.bf16.mxu0 0
  %5621 = vmatpush1.bf16.msra.mxu0 0
  %5622 = vmatprep.subr.bf16.mxu0 0
  %5623 = vmatpush1.bf16.msra.mxu0 0
  %5624 = vmatprep.subr.bf16.mxu0 0
  %5625 = vmatpush1.bf16.msra.mxu0 0
  %5626 = vmatprep.subr.bf16.mxu0 0
  %5627 = vmatpush1.bf16.msra.mxu0 0
  %5628 = vmatprep.subr.bf16.mxu0 0
  %5629 = vmatpush1.bf16.msra.mxu0 0
  %5630 = vmatprep.subr.bf16.mxu0 0
  %5631 = vmatpush1.bf16.msra.mxu0 0
  %5632 = vmatprep.subr.bf16.mxu0 0
  %5633 = vmatpush1.bf16.msra.mxu0 0
  %5634 = vmatprep.subr.bf16.mxu0 0
  %5635 = vmatpush1.bf16.msra.mxu0 0
  %5636 = vmatprep.subr.bf16.mxu0 0
  %5637 = vmatpush1.bf16.msra.mxu0 0
  %5638 = vmatprep.subr.bf16.mxu0 0
  %5639 = vmatpush1.bf16.msra.mxu0 0
  %5640 = vmatprep.subr.bf16.mxu0 0
  %5641 = vmatpush1.bf16.msra.mxu0 0
  %5642 = vmatprep.subr.bf16.mxu0 0
  %5643 = vmatpush1.bf16.msra.mxu0 0
  %5644 = vmatprep.subr.bf16.mxu0 0
  %5645 = vmatpush1.bf16.msra.mxu0 0
  %5646 = vmatprep.mubr.bf16.mxu0 0
  %5647 = vmatmul.mubr.bf16.gmra.mrb[0].mxu0 %v5483
  %v5648 = vpop.f32.mrb[0].mxu0
  %v5649 = vadd.f32 %v5269, %v5648
  %v5650 = vpop.f32.mrb[0].mxu0
  %v5651 = vadd.f32 %v5273, %v5650
  %v5652 = vpop.f32.mrb[0].mxu0
  %v5653 = vadd.f32 %v5269, %v5652
  %v5654 = vpop.f32.mrb[0].mxu0
  %v5655 = vadd.f32 %v5273, %v5654
  %5656 = vdwg.mxu0
  %5657 = vmatprep.subr.bf16.mxu0 %v5427
  %5658 = vmatpush1.bf16.msra.mxu0 %v5426
  %5659 = vmatprep.subr.bf16.mxu0 %v5443
  %5660 = vmatpush1.bf16.msra.mxu0 %v5442
  %5661 = vmatprep.subr.bf16.mxu0 0
  %5662 = vmatpush1.bf16.msra.mxu0 0
  %5663 = vmatprep.subr.bf16.mxu0 0
  %5664 = vmatpush1.bf16.msra.mxu0 0
  %5665 = vmatprep.subr.bf16.mxu0 0
  %5666 = vmatpush1.bf16.msra.mxu0 0
  %5667 = vmatprep.subr.bf16.mxu0 0
  %5668 = vmatpush1.bf16.msra.mxu0 0
  %5669 = vmatprep.subr.bf16.mxu0 0
  %5670 = vmatpush1.bf16.msra.mxu0 0
  %5671 = vmatprep.subr.bf16.mxu0 0
  %5672 = vmatpush1.bf16.msra.mxu0 0
  %5673 = vmatprep.subr.bf16.mxu0 0
  %5674 = vmatpush1.bf16.msra.mxu0 0
  %5675 = vmatprep.subr.bf16.mxu0 0
  %5676 = vmatpush1.bf16.msra.mxu0 0
  %5677 = vmatprep.subr.bf16.mxu0 0
  %5678 = vmatpush1.bf16.msra.mxu0 0
  %5679 = vmatprep.subr.bf16.mxu0 0
  %5680 = vmatpush1.bf16.msra.mxu0 0
  %5681 = vmatprep.subr.bf16.mxu0 0
  %5682 = vmatpush1.bf16.msra.mxu0 0
  %5683 = vmatprep.subr.bf16.mxu0 0
  %5684 = vmatpush1.bf16.msra.mxu0 0
  %5685 = vmatprep.subr.bf16.mxu0 0
  %5686 = vmatpush1.bf16.msra.mxu0 0
  %5687 = vmatprep.subr.bf16.mxu0 0
  %5688 = vmatpush1.bf16.msra.mxu0 0
  %5689 = vmatprep.mubr.bf16.mxu0 0
  %5690 = vmatmul.mubr.bf16.gmra.mrb[0].mxu0 %v5483
  %v5691 = vpop.f32.mrb[0].mxu0
  %v5692 = vadd.f32 %v5277, %v5691
  %v5693 = vpop.f32.mrb[0].mxu0
  %v5694 = vadd.f32 %v5281, %v5693
  %v5695 = vpop.f32.mrb[0].mxu0
  %v5696 = vadd.f32 %v5277, %v5695
  %v5697 = vpop.f32.mrb[0].mxu0
  %v5698 = vadd.f32 %v5281, %v5697
  %5699 = vdwg.mxu0
  %5700 = vmatprep.subr.bf16.mxu0 %v5429
  %5701 = vmatpush1.bf16.msra.mxu0 %v5428
  %5702 = vmatprep.subr.bf16.mxu0 %v5445
  %5703 = vmatpush1.bf16.msra.mxu0 %v5444
  %5704 = vmatprep.subr.bf16.mxu0 0
  %5705 = vmatpush1.bf16.msra.mxu0 0
  %5706 = vmatprep.subr.bf16.mxu0 0
  %5707 = vmatpush1.bf16.msra.mxu0 0
  %5708 = vmatprep.subr.bf16.mxu0 0
  %5709 = vmatpush1.bf16.msra.mxu0 0
  %5710 = vmatprep.subr.bf16.mxu0 0
  %5711 = vmatpush1.bf16.msra.mxu0 0
  %5712 = vmatprep.subr.bf16.mxu0 0
  %5713 = vmatpush1.bf16.msra.mxu0 0
  %5714 = vmatprep.subr.bf16.mxu0 0
  %5715 = vmatpush1.bf16.msra.mxu0 0
  %5716 = vmatprep.subr.bf16.mxu0 0
  %5717 = vmatpush1.bf16.msra.mxu0 0
  %5718 = vmatprep.subr.bf16.mxu0 0
  %5719 = vmatpush1.bf16.msra.mxu0 0
  %5720 = vmatprep.subr.bf16.mxu0 0
  %5721 = vmatpush1.bf16.msra.mxu0 0
  %5722 = vmatprep.subr.bf16.mxu0 0
  %5723 = vmatpush1.bf16.msra.mxu0 0
  %5724 = vmatprep.subr.bf16.mxu0 0
  %5725 = vmatpush1.bf16.msra.mxu0 0
  %5726 = vmatprep.subr.bf16.mxu0 0
  %5727 = vmatpush1.bf16.msra.mxu0 0
  %5728 = vmatprep.subr.bf16.mxu0 0
  %5729 = vmatpush1.bf16.msra.mxu0 0
  %5730 = vmatprep.subr.bf16.mxu0 0
  %5731 = vmatpush1.bf16.msra.mxu0 0
  %5732 = vmatprep.mubr.bf16.mxu0 0
  %5733 = vmatmul.mubr.bf16.gmra.mrb[0].mxu0 %v5483
  %v5734 = vpop.f32.mrb[0].mxu0
  %v5735 = vadd.f32 %v5285, %v5734
  %v5736 = vpop.f32.mrb[0].mxu0
  %v5737 = vadd.f32 %v5289, %v5736
  %v5738 = vpop.f32.mrb[0].mxu0
  %v5739 = vadd.f32 %v5285, %v5738
  %v5740 = vpop.f32.mrb[0].mxu0
  %v5741 = vadd.f32 %v5289, %v5740
  %5742 = vdwg.mxu0
  %5743 = vmatprep.subr.bf16.mxu0 %v5431
  %5744 = vmatpush1.bf16.msra.mxu0 %v5430
  %5745 = vmatprep.subr.bf16.mxu0 %v5447
  %5746 = vmatpush1.bf16.msra.mxu0 %v5446
  %5747 = vmatprep.subr.bf16.mxu0 0
  %5748 = vmatpush1.bf16.msra.mxu0 0
  %5749 = vmatprep.subr.bf16.mxu0 0
  %5750 = vmatpush1.bf16.msra.mxu0 0
  %5751 = vmatprep.subr.bf16.mxu0 0
  %5752 = vmatpush1.bf16.msra.mxu0 0
  %5753 = vmatprep.subr.bf16.mxu0 0
  %5754 = vmatpush1.bf16.msra.mxu0 0
  %5755 = vmatprep.subr.bf16.mxu0 0
  %5756 = vmatpush1.bf16.msra.mxu0 0
  %5757 = vmatprep.subr.bf16.mxu0 0
  %5758 = vmatpush1.bf16.msra.mxu0 0
  %5759 = vmatprep.subr.bf16.mxu0 0
  %5760 = vmatpush1.bf16.msra.mxu0 0
  %5761 = vmatprep.subr.bf16.mxu0 0
  %5762 = vmatpush1.bf16.msra.mxu0 0
  %5763 = vmatprep.subr.bf16.mxu0 0
  %5764 = vmatpush1.bf16.msra.mxu0 0
  %5765 = vmatprep.subr.bf16.mxu0 0
  %5766 = vmatpush1.bf16.msra.mxu0 0
  %5767 = vmatprep.subr.bf16.mxu0 0
  %5768 = vmatpush1.bf16.msra.mxu0 0
  %5769 = vmatprep.subr.bf16.mxu0 0
  %5770 = vmatpush1.bf16.msra.mxu0 0
  %5771 = vmatprep.subr.bf16.mxu0 0
  %5772 = vmatpush1.bf16.msra.mxu0 0
  %5773 = vmatprep.subr.bf16.mxu0 0
  %5774 = vmatpush1.bf16.msra.mxu0 0
  %5775 = vmatprep.mubr.bf16.mxu0 0
  %5776 = vmatmul.mubr.bf16.gmra.mrb[0].mxu0 %v5483
  %v5777 = vpop.f32.mrb[0].mxu0
  %v5778 = vadd.f32 %v5293, %v5777
  %v5779 = vpop.f32.mrb[0].mxu0
  %v5780 = vadd.f32 %v5297, %v5779
  %v5781 = vpop.f32.mrb[0].mxu0
  %v5782 = vadd.f32 %v5293, %v5781
  %v5783 = vpop.f32.mrb[0].mxu0
  %v5784 = vadd.f32 %v5297, %v5783
  %5785 = vdwg.mxu0
  %5786 = vmatprep.subr.bf16.mxu0 %v5433
  %5787 = vmatpush1.bf16.msra.mxu0 %v5432
  %5788 = vmatprep.subr.bf16.mxu0 %v5449
  %5789 = vmatpush1.bf16.msra.mxu0 %v5448
  %5790 = vmatprep.subr.bf16.mxu0 0
  %5791 = vmatpush1.bf16.msra.mxu0 0
  %5792 = vmatprep.subr.bf16.mxu0 0
  %5793 = vmatpush1.bf16.msra.mxu0 0
  %5794 = vmatprep.subr.bf16.mxu0 0
  %5795 = vmatpush1.bf16.msra.mxu0 0
  %5796 = vmatprep.subr.bf16.mxu0 0
  %5797 = vmatpush1.bf16.msra.mxu0 0
  %5798 = vmatprep.subr.bf16.mxu0 0
  %5799 = vmatpush1.bf16.msra.mxu0 0
  %5800 = vmatprep.subr.bf16.mxu0 0
  %5801 = vmatpush1.bf16.msra.mxu0 0
  %5802 = vmatprep.subr.bf16.mxu0 0
  %5803 = vmatpush1.bf16.msra.mxu0 0
  %5804 = vmatprep.subr.bf16.mxu0 0
  %5805 = vmatpush1.bf16.msra.mxu0 0
  %5806 = vmatprep.subr.bf16.mxu0 0
  %5807 = vmatpush1.bf16.msra.mxu0 0
  %5808 = vmatprep.subr.bf16.mxu0 0
  %5809 = vmatpush1.bf16.msra.mxu0 0
  %5810 = vmatprep.subr.bf16.mxu0 0
  %5811 = vmatpush1.bf16.msra.mxu0 0
  %5812 = vmatprep.subr.bf16.mxu0 0
  %5813 = vmatpush1.bf16.msra.mxu0 0
  %5814 = vmatprep.subr.bf16.mxu0 0
  %5815 = vmatpush1.bf16.msra.mxu0 0
  %5816 = vmatprep.subr.bf16.mxu0 0
  %5817 = vmatpush1.bf16.msra.mxu0 0
  %5818 = vmatprep.mubr.bf16.mxu0 0
  %5819 = vmatmul.mubr.bf16.gmra.mrb[0].mxu0 %v5483
  %v5820 = vpop.f32.mrb[0].mxu0
  %v5821 = vadd.f32 %v5301, %v5820
  %v5822 = vpop.f32.mrb[0].mxu0
  %v5823 = vadd.f32 %v5305, %v5822
  %v5824 = vpop.f32.mrb[0].mxu0
  %v5825 = vadd.f32 %v5301, %v5824
  %v5826 = vpop.f32.mrb[0].mxu0
  %v5827 = vadd.f32 %v5305, %v5826
  %5828 = vdwg.mxu0
  %v5829 = vmax.f32 %v5520, 0.0
  %v5830 = vmax.f32 %v5522, 0.0
  %v5831 = vmax.f32 %v5563, 0.0
  %v5832 = vmax.f32 %v5565, 0.0
  %v5833 = vmax.f32 %v5606, 0.0
  %v5834 = vmax.f32 %v5608, 0.0
  %v5835 = vmax.f32 %v5649, 0.0
  %v5836 = vmax.f32 %v5651, 0.0
  %v5837 = vmax.f32 %v5692, 0.0
  %v5838 = vmax.f32 %v5694, 0.0
  %v5839 = vmax.f32 %v5735, 0.0
  %v5840 = vmax.f32 %v5737, 0.0
  %v5841 = vmax.f32 %v5778, 0.0
  %v5842 = vmax.f32 %v5780, 0.0
  %v5843 = vmax.f32 %v5821, 0.0
  %v5844 = vmax.f32 %v5823, 0.0
  %v5845 = vmax.f32 %v5524, 0.0
  %v5846 = vmax.f32 %v5526, 0.0
  %v5847 = vmax.f32 %v5567, 0.0
  %v5848 = vmax.f32 %v5569, 0.0
  %v5849 = vmax.f32 %v5610, 0.0
  %v5850 = vmax.f32 %v5612, 0.0
  %v5851 = vmax.f32 %v5653, 0.0
  %v5852 = vmax.f32 %v5655, 0.0
  %v5853 = vmax.f32 %v5696, 0.0
  %v5854 = vmax.f32 %v5698, 0.0
  %v5855 = vmax.f32 %v5739, 0.0
  %v5856 = vmax.f32 %v5741, 0.0
  %v5857 = vmax.f32 %v5782, 0.0
  %v5858 = vmax.f32 %v5784, 0.0
  %v5859 = vmax.f32 %v5825, 0.0
  %v5860 = vmax.f32 %v5827, 0.0
  %v5861 = vpack.c.bf16 %v5845, %v5829
  %v5862 = vpack.c.bf16 %v5846, %v5830
  %v5863 = vpack.c.bf16 %v5847, %v5831
  %v5864 = vpack.c.bf16 %v5848, %v5832
  %v5865 = vpack.c.bf16 %v5849, %v5833
  %v5866 = vpack.c.bf16 %v5850, %v5834
  %v5867 = vpack.c.bf16 %v5851, %v5835
  %v5868 = vpack.c.bf16 %v5852, %v5836
  %v5869 = vpack.c.bf16 %v5853, %v5837
  %v5870 = vpack.c.bf16 %v5854, %v5838
  %v5871 = vpack.c.bf16 %v5855, %v5839
  %v5872 = vpack.c.bf16 %v5856, %v5840
  %v5873 = vpack.c.bf16 %v5857, %v5841
  %v5874 = vpack.c.bf16 %v5858, %v5842
  %v5875 = vpack.c.bf16 %v5859, %v5843
  %v5876 = vpack.c.bf16 %v5860, %v5844
  %s5877 = scalar_lea.vmem %s9, 1024
  %v5878 = vld [vmem:[%s5877] sm:$0xf]
  %v5879 = vld [vmem:[%s5877 + $0x4] sm:$0xf]
  %v5880 = vld [vmem:[%s5877 + $0x8] sm:$0xf]
  %v5881 = vld [vmem:[%s5877 + $0xc] sm:$0xf]
  %v5882 = vld [vmem:[%s5877 + $0x10] sm:$0xf]
  %v5883 = vld [vmem:[%s5877 + $0x14] sm:$0xf]
  %v5884 = vld [vmem:[%s5877 + $0x18] sm:$0xf]
  %v5885 = vld [vmem:[%s5877 + $0x1c] sm:$0xf]
  %v5886 = vld [vmem:[%s5877 + $0x20] sm:$0xf]
  %v5887 = vld [vmem:[%s5877 + $0x24] sm:$0xf]
  %v5888 = vld [vmem:[%s5877 + $0x28] sm:$0xf]
  %v5889 = vld [vmem:[%s5877 + $0x2c] sm:$0xf]
  %v5890 = vld [vmem:[%s5877 + $0x30] sm:$0xf]
  %v5891 = vld [vmem:[%s5877 + $0x34] sm:$0xf]
  %v5892 = vld [vmem:[%s5877 + $0x38] sm:$0xf]
  %v5893 = vld [vmem:[%s5877 + $0x3c] sm:$0xf]
  %v5894 = vld [vmem:[%s5877 + $0x40] sm:$0xf]
  %v5895 = vld [vmem:[%s5877 + $0x44] sm:$0xf]
  %v5896 = vld [vmem:[%s5877 + $0x48] sm:$0xf]
  %v5897 = vld [vmem:[%s5877 + $0x4c] sm:$0xf]
  %v5898 = vld [vmem:[%s5877 + $0x50] sm:$0xf]
  %v5899 = vld [vmem:[%s5877 + $0x54] sm:$0xf]
  %v5900 = vld [vmem:[%s5877 + $0x58] sm:$0xf]
  %v5901 = vld [vmem:[%s5877 + $0x5c] sm:$0xf]
  %v5902 = vld [vmem:[%s5877 + $0x60] sm:$0xf]
  %v5903 = vld [vmem:[%s5877 + $0x64] sm:$0xf]
  %v5904 = vld [vmem:[%s5877 + $0x68] sm:$0xf]
  %v5905 = vld [vmem:[%s5877 + $0x6c] sm:$0xf]
  %v5906 = vld [vmem:[%s5877 + $0x70] sm:$0xf]
  %v5907 = vld [vmem:[%s5877 + $0x74] sm:$0xf]
  %v5908 = vld [vmem:[%s5877 + $0x78] sm:$0xf]
  %v5909 = vld [vmem:[%s5877 + $0x7c] sm:$0xf]
  %v5910 = vld [vmem:[%s5877 + $0x80] sm:$0xf]
  %v5911 = vld [vmem:[%s5877 + $0x84] sm:$0xf]
  %v5912 = vld [vmem:[%s5877 + $0x88] sm:$0xf]
  %v5913 = vld [vmem:[%s5877 + $0x8c] sm:$0xf]
  %v5914 = vld [vmem:[%s5877 + $0x90] sm:$0xf]
  %v5915 = vld [vmem:[%s5877 + $0x94] sm:$0xf]
  %v5916 = vld [vmem:[%s5877 + $0x98] sm:$0xf]
  %v5917 = vld [vmem:[%s5877 + $0x9c] sm:$0xf]
  %v5918 = vld [vmem:[%s5877 + $0xa0] sm:$0xf]
  %v5919 = vld [vmem:[%s5877 + $0xa4] sm:$0xf]
  %v5920 = vld [vmem:[%s5877 + $0xa8] sm:$0xf]
  %v5921 = vld [vmem:[%s5877 + $0xac] sm:$0xf]
  %v5922 = vld [vmem:[%s5877 + $0xb0] sm:$0xf]
  %v5923 = vld [vmem:[%s5877 + $0xb4] sm:$0xf]
  %v5924 = vld [vmem:[%s5877 + $0xb8] sm:$0xf]
  %v5925 = vld [vmem:[%s5877 + $0xbc] sm:$0xf]
  %v5926 = vld [vmem:[%s5877 + $0xc0] sm:$0xf]
  %v5927 = vld [vmem:[%s5877 + $0xc4] sm:$0xf]
  %v5928 = vld [vmem:[%s5877 + $0xc8] sm:$0xf]
  %v5929 = vld [vmem:[%s5877 + $0xcc] sm:$0xf]
  %v5930 = vld [vmem:[%s5877 + $0xd0] sm:$0xf]
  %v5931 = vld [vmem:[%s5877 + $0xd4] sm:$0xf]
  %v5932 = vld [vmem:[%s5877 + $0xd8] sm:$0xf]
  %v5933 = vld [vmem:[%s5877 + $0xdc] sm:$0xf]
  %v5934 = vld [vmem:[%s5877 + $0xe0] sm:$0xf]
  %v5935 = vld [vmem:[%s5877 + $0xe4] sm:$0xf]
  %v5936 = vld [vmem:[%s5877 + $0xe8] sm:$0xf]
  %v5937 = vld [vmem:[%s5877 + $0xec] sm:$0xf]
  %v5938 = vld [vmem:[%s5877 + $0xf0] sm:$0xf]
  %v5939 = vld [vmem:[%s5877 + $0xf4] sm:$0xf]
  %v5940 = vld [vmem:[%s5877 + $0xf8] sm:$0xf]
  %v5941 = vld [vmem:[%s5877 + $0xfc] sm:$0xf]
  %v5942 = vld [vmem:[%s5877 + $0x100] sm:$0xf]
  %v5943 = vld [vmem:[%s5877 + $0x104] sm:$0xf]
  %v5944 = vld [vmem:[%s5877 + $0x108] sm:$0xf]
  %v5945 = vld [vmem:[%s5877 + $0x10c] sm:$0xf]
  %v5946 = vld [vmem:[%s5877 + $0x110] sm:$0xf]
  %v5947 = vld [vmem:[%s5877 + $0x114] sm:$0xf]
  %v5948 = vld [vmem:[%s5877 + $0x118] sm:$0xf]
  %v5949 = vld [vmem:[%s5877 + $0x11c] sm:$0xf]
  %v5950 = vld [vmem:[%s5877 + $0x120] sm:$0xf]
  %v5951 = vld [vmem:[%s5877 + $0x124] sm:$0xf]
  %v5952 = vld [vmem:[%s5877 + $0x128] sm:$0xf]
  %v5953 = vld [vmem:[%s5877 + $0x12c] sm:$0xf]
  %v5954 = vld [vmem:[%s5877 + $0x130] sm:$0xf]
  %v5955 = vld [vmem:[%s5877 + $0x134] sm:$0xf]
  %v5956 = vld [vmem:[%s5877 + $0x138] sm:$0xf]
  %v5957 = vld [vmem:[%s5877 + $0x13c] sm:$0xf]
  %v5958 = vld [vmem:[%s5877 + $0x140] sm:$0xf]
  %v5959 = vld [vmem:[%s5877 + $0x144] sm:$0xf]
  %v5960 = vld [vmem:[%s5877 + $0x148] sm:$0xf]
  %v5961 = vld [vmem:[%s5877 + $0x14c] sm:$0xf]
  %v5962 = vld [vmem:[%s5877 + $0x150] sm:$0xf]
  %v5963 = vld [vmem:[%s5877 + $0x154] sm:$0xf]
  %v5964 = vld [vmem:[%s5877 + $0x158] sm:$0xf]
  %v5965 = vld [vmem:[%s5877 + $0x15c] sm:$0xf]
  %v5966 = vld [vmem:[%s5877 + $0x160] sm:$0xf]
  %v5967 = vld [vmem:[%s5877 + $0x164] sm:$0xf]
  %v5968 = vld [vmem:[%s5877 + $0x168] sm:$0xf]
  %v5969 = vld [vmem:[%s5877 + $0x16c] sm:$0xf]
  %v5970 = vld [vmem:[%s5877 + $0x170] sm:$0xf]
  %v5971 = vld [vmem:[%s5877 + $0x174] sm:$0xf]
  %v5972 = vld [vmem:[%s5877 + $0x178] sm:$0xf]
  %v5973 = vld [vmem:[%s5877 + $0x17c] sm:$0xf]
  %v5974 = vld [vmem:[%s5877 + $0x180] sm:$0xf]
  %v5975 = vld [vmem:[%s5877 + $0x184] sm:$0xf]
  %v5976 = vld [vmem:[%s5877 + $0x188] sm:$0xf]
  %v5977 = vld [vmem:[%s5877 + $0x18c] sm:$0xf]
  %v5978 = vld [vmem:[%s5877 + $0x190] sm:$0xf]
  %v5979 = vld [vmem:[%s5877 + $0x194] sm:$0xf]
  %v5980 = vld [vmem:[%s5877 + $0x198] sm:$0xf]
  %v5981 = vld [vmem:[%s5877 + $0x19c] sm:$0xf]
  %v5982 = vld [vmem:[%s5877 + $0x1a0] sm:$0xf]
  %v5983 = vld [vmem:[%s5877 + $0x1a4] sm:$0xf]
  %v5984 = vld [vmem:[%s5877 + $0x1a8] sm:$0xf]
  %v5985 = vld [vmem:[%s5877 + $0x1ac] sm:$0xf]
  %v5986 = vld [vmem:[%s5877 + $0x1b0] sm:$0xf]
  %v5987 = vld [vmem:[%s5877 + $0x1b4] sm:$0xf]
  %v5988 = vld [vmem:[%s5877 + $0x1b8] sm:$0xf]
  %v5989 = vld [vmem:[%s5877 + $0x1bc] sm:$0xf]
  %v5990 = vld [vmem:[%s5877 + $0x1c0] sm:$0xf]
  %v5991 = vld [vmem:[%s5877 + $0x1c4] sm:$0xf]
  %v5992 = vld [vmem:[%s5877 + $0x1c8] sm:$0xf]
  %v5993 = vld [vmem:[%s5877 + $0x1cc] sm:$0xf]
  %v5994 = vld [vmem:[%s5877 + $0x1d0] sm:$0xf]
  %v5995 = vld [vmem:[%s5877 + $0x1d4] sm:$0xf]
  %v5996 = vld [vmem:[%s5877 + $0x1d8] sm:$0xf]
  %v5997 = vld [vmem:[%s5877 + $0x1dc] sm:$0xf]
  %v5998 = vld [vmem:[%s5877 + $0x1e0] sm:$0xf]
  %v5999 = vld [vmem:[%s5877 + $0x1e4] sm:$0xf]
  %v6000 = vld [vmem:[%s5877 + $0x1e8] sm:$0xf]
  %v6001 = vld [vmem:[%s5877 + $0x1ec] sm:$0xf]
  %v6002 = vld [vmem:[%s5877 + $0x1f0] sm:$0xf]
  %v6003 = vld [vmem:[%s5877 + $0x1f4] sm:$0xf]
  %v6004 = vld [vmem:[%s5877 + $0x1f8] sm:$0xf]
  %v6005 = vld [vmem:[%s5877 + $0x1fc] sm:$0xf]
  %v6006 = vld [vmem:[%s5877 + $0x200] sm:$0xf]
  %v6007 = vld [vmem:[%s5877 + $0x204] sm:$0xf]
  %v6008 = vld [vmem:[%s5877 + $0x208] sm:$0xf]
  %v6009 = vld [vmem:[%s5877 + $0x20c] sm:$0xf]
  %v6010 = vld [vmem:[%s5877 + $0x210] sm:$0xf]
  %v6011 = vld [vmem:[%s5877 + $0x214] sm:$0xf]
  %v6012 = vld [vmem:[%s5877 + $0x218] sm:$0xf]
  %v6013 = vld [vmem:[%s5877 + $0x21c] sm:$0xf]
  %v6014 = vld [vmem:[%s5877 + $0x220] sm:$0xf]
  %v6015 = vld [vmem:[%s5877 + $0x224] sm:$0xf]
  %v6016 = vld [vmem:[%s5877 + $0x228] sm:$0xf]
  %v6017 = vld [vmem:[%s5877 + $0x22c] sm:$0xf]
  %v6018 = vld [vmem:[%s5877 + $0x230] sm:$0xf]
  %v6019 = vld [vmem:[%s5877 + $0x234] sm:$0xf]
  %v6020 = vld [vmem:[%s5877 + $0x238] sm:$0xf]
  %v6021 = vld [vmem:[%s5877 + $0x23c] sm:$0xf]
  %v6022 = vld [vmem:[%s5877 + $0x240] sm:$0xf]
  %v6023 = vld [vmem:[%s5877 + $0x244] sm:$0xf]
  %v6024 = vld [vmem:[%s5877 + $0x248] sm:$0xf]
  %v6025 = vld [vmem:[%s5877 + $0x24c] sm:$0xf]
  %v6026 = vld [vmem:[%s5877 + $0x250] sm:$0xf]
  %v6027 = vld [vmem:[%s5877 + $0x254] sm:$0xf]
  %v6028 = vld [vmem:[%s5877 + $0x258] sm:$0xf]
  %v6029 = vld [vmem:[%s5877 + $0x25c] sm:$0xf]
  %v6030 = vld [vmem:[%s5877 + $0x260] sm:$0xf]
  %v6031 = vld [vmem:[%s5877 + $0x264] sm:$0xf]
  %v6032 = vld [vmem:[%s5877 + $0x268] sm:$0xf]
  %v6033 = vld [vmem:[%s5877 + $0x26c] sm:$0xf]
  %v6034 = vld [vmem:[%s5877 + $0x270] sm:$0xf]
  %v6035 = vld [vmem:[%s5877 + $0x274] sm:$0xf]
  %v6036 = vld [vmem:[%s5877 + $0x278] sm:$0xf]
  %v6037 = vld [vmem:[%s5877 + $0x27c] sm:$0xf]
  %v6038 = vld [vmem:[%s5877 + $0x280] sm:$0xf]
  %v6039 = vld [vmem:[%s5877 + $0x284] sm:$0xf]
  %v6040 = vld [vmem:[%s5877 + $0x288] sm:$0xf]
  %v6041 = vld [vmem:[%s5877 + $0x28c] sm:$0xf]
  %v6042 = vld [vmem:[%s5877 + $0x290] sm:$0xf]
  %v6043 = vld [vmem:[%s5877 + $0x294] sm:$0xf]
  %v6044 = vld [vmem:[%s5877 + $0x298] sm:$0xf]
  %v6045 = vld [vmem:[%s5877 + $0x29c] sm:$0xf]
  %v6046 = vld [vmem:[%s5877 + $0x2a0] sm:$0xf]
  %v6047 = vld [vmem:[%s5877 + $0x2a4] sm:$0xf]
  %v6048 = vld [vmem:[%s5877 + $0x2a8] sm:$0xf]
  %v6049 = vld [vmem:[%s5877 + $0x2ac] sm:$0xf]
  %v6050 = vld [vmem:[%s5877 + $0x2b0] sm:$0xf]
  %v6051 = vld [vmem:[%s5877 + $0x2b4] sm:$0xf]
  %v6052 = vld [vmem:[%s5877 + $0x2b8] sm:$0xf]
  %v6053 = vld [vmem:[%s5877 + $0x2bc] sm:$0xf]
  %v6054 = vld [vmem:[%s5877 + $0x2c0] sm:$0xf]
  %v6055 = vld [vmem:[%s5877 + $0x2c4] sm:$0xf]
  %v6056 = vld [vmem:[%s5877 + $0x2c8] sm:$0xf]
  %v6057 = vld [vmem:[%s5877 + $0x2cc] sm:$0xf]
  %v6058 = vld [vmem:[%s5877 + $0x2d0] sm:$0xf]
  %v6059 = vld [vmem:[%s5877 + $0x2d4] sm:$0xf]
  %v6060 = vld [vmem:[%s5877 + $0x2d8] sm:$0xf]
  %v6061 = vld [vmem:[%s5877 + $0x2dc] sm:$0xf]
  %v6062 = vld [vmem:[%s5877 + $0x2e0] sm:$0xf]
  %v6063 = vld [vmem:[%s5877 + $0x2e4] sm:$0xf]
  %v6064 = vld [vmem:[%s5877 + $0x2e8] sm:$0xf]
  %v6065 = vld [vmem:[%s5877 + $0x2ec] sm:$0xf]
  %v6066 = vld [vmem:[%s5877 + $0x2f0] sm:$0xf]
  %v6067 = vld [vmem:[%s5877 + $0x2f4] sm:$0xf]
  %v6068 = vld [vmem:[%s5877 + $0x2f8] sm:$0xf]
  %v6069 = vld [vmem:[%s5877 + $0x2fc] sm:$0xf]
  %v6070 = vld [vmem:[%s5877 + $0x300] sm:$0xf]
  %v6071 = vld [vmem:[%s5877 + $0x304] sm:$0xf]
  %v6072 = vld [vmem:[%s5877 + $0x308] sm:$0xf]
  %v6073 = vld [vmem:[%s5877 + $0x30c] sm:$0xf]
  %v6074 = vld [vmem:[%s5877 + $0x310] sm:$0xf]
  %v6075 = vld [vmem:[%s5877 + $0x314] sm:$0xf]
  %v6076 = vld [vmem:[%s5877 + $0x318] sm:$0xf]
  %v6077 = vld [vmem:[%s5877 + $0x31c] sm:$0xf]
  %v6078 = vld [vmem:[%s5877 + $0x320] sm:$0xf]
  %v6079 = vld [vmem:[%s5877 + $0x324] sm:$0xf]
  %v6080 = vld [vmem:[%s5877 + $0x328] sm:$0xf]
  %v6081 = vld [vmem:[%s5877 + $0x32c] sm:$0xf]
  %v6082 = vld [vmem:[%s5877 + $0x330] sm:$0xf]
  %v6083 = vld [vmem:[%s5877 + $0x334] sm:$0xf]
  %v6084 = vld [vmem:[%s5877 + $0x338] sm:$0xf]
  %v6085 = vld [vmem:[%s5877 + $0x33c] sm:$0xf]
  %v6086 = vld [vmem:[%s5877 + $0x340] sm:$0xf]
  %v6087 = vld [vmem:[%s5877 + $0x344] sm:$0xf]
  %v6088 = vld [vmem:[%s5877 + $0x348] sm:$0xf]
  %v6089 = vld [vmem:[%s5877 + $0x34c] sm:$0xf]
  %v6090 = vld [vmem:[%s5877 + $0x350] sm:$0xf]
  %v6091 = vld [vmem:[%s5877 + $0x354] sm:$0xf]
  %v6092 = vld [vmem:[%s5877 + $0x358] sm:$0xf]
  %v6093 = vld [vmem:[%s5877 + $0x35c] sm:$0xf]
  %v6094 = vld [vmem:[%s5877 + $0x360] sm:$0xf]
  %v6095 = vld [vmem:[%s5877 + $0x364] sm:$0xf]
  %v6096 = vld [vmem:[%s5877 + $0x368] sm:$0xf]
  %v6097 = vld [vmem:[%s5877 + $0x36c] sm:$0xf]
  %v6098 = vld [vmem:[%s5877 + $0x370] sm:$0xf]
  %v6099 = vld [vmem:[%s5877 + $0x374] sm:$0xf]
  %v6100 = vld [vmem:[%s5877 + $0x378] sm:$0xf]
  %v6101 = vld [vmem:[%s5877 + $0x37c] sm:$0xf]
  %v6102 = vld [vmem:[%s5877 + $0x380] sm:$0xf]
  %v6103 = vld [vmem:[%s5877 + $0x384] sm:$0xf]
  %v6104 = vld [vmem:[%s5877 + $0x388] sm:$0xf]
  %v6105 = vld [vmem:[%s5877 + $0x38c] sm:$0xf]
  %v6106 = vld [vmem:[%s5877 + $0x390] sm:$0xf]
  %v6107 = vld [vmem:[%s5877 + $0x394] sm:$0xf]
  %v6108 = vld [vmem:[%s5877 + $0x398] sm:$0xf]
  %v6109 = vld [vmem:[%s5877 + $0x39c] sm:$0xf]
  %v6110 = vld [vmem:[%s5877 + $0x3a0] sm:$0xf]
  %v6111 = vld [vmem:[%s5877 + $0x3a4] sm:$0xf]
  %v6112 = vld [vmem:[%s5877 + $0x3a8] sm:$0xf]
  %v6113 = vld [vmem:[%s5877 + $0x3ac] sm:$0xf]
  %v6114 = vld [vmem:[%s5877 + $0x3b0] sm:$0xf]
  %v6115 = vld [vmem:[%s5877 + $0x3b4] sm:$0xf]
  %v6116 = vld [vmem:[%s5877 + $0x3b8] sm:$0xf]
  %v6117 = vld [vmem:[%s5877 + $0x3bc] sm:$0xf]
  %v6118 = vld [vmem:[%s5877 + $0x3c0] sm:$0xf]
  %v6119 = vld [vmem:[%s5877 + $0x3c4] sm:$0xf]
  %v6120 = vld [vmem:[%s5877 + $0x3c8] sm:$0xf]
  %v6121 = vld [vmem:[%s5877 + $0x3cc] sm:$0xf]
  %v6122 = vld [vmem:[%s5877 + $0x3d0] sm:$0xf]
  %v6123 = vld [vmem:[%s5877 + $0x3d4] sm:$0xf]
  %v6124 = vld [vmem:[%s5877 + $0x3d8] sm:$0xf]
  %v6125 = vld [vmem:[%s5877 + $0x3dc] sm:$0xf]
  %v6126 = vld [vmem:[%s5877 + $0x3e0] sm:$0xf]
  %v6127 = vld [vmem:[%s5877 + $0x3e4] sm:$0xf]
  %v6128 = vld [vmem:[%s5877 + $0x3e8] sm:$0xf]
  %v6129 = vld [vmem:[%s5877 + $0x3ec] sm:$0xf]
  %v6130 = vld [vmem:[%s5877 + $0x3f0] sm:$0xf]
  %v6131 = vld [vmem:[%s5877 + $0x3f4] sm:$0xf]
  %v6132 = vld [vmem:[%s5877 + $0x3f8] sm:$0xf]
  %v6133 = vld [vmem:[%s5877 + $0x3fc] sm:$0xf]
  %s6134 = scalar_lea.vmem %s10, 1
  %v6135 = vld [vmem:[%s6134] sm:$0x1]
  %v6137 = vlaneseq
  %v6138 = vshrl.u32 %v6137, 7
  %v6139 = vsub.s32 0, %v6138
  %v6140 = vrot.slane %v6135, %v6139
  %v6398 = vunpack.c.l.b16 %v5878
  %v6399 = vunpack.c.l.b16 %v5879
  %v6400 = vunpack.c.l.b16 %v5880
  %v6401 = vunpack.c.l.b16 %v5881
  %v6402 = vunpack.c.l.b16 %v5882
  %v6403 = vunpack.c.l.b16 %v5883
  %v6404 = vunpack.c.l.b16 %v5884
  %v6405 = vunpack.c.l.b16 %v5885
  %v6406 = vunpack.c.l.b16 %v5886
  %v6407 = vunpack.c.l.b16 %v5887
  %v6408 = vunpack.c.l.b16 %v5888
  %v6409 = vunpack.c.l.b16 %v5889
  %v6410 = vunpack.c.l.b16 %v5890
  %v6411 = vunpack.c.l.b16 %v5891
  %v6412 = vunpack.c.l.b16 %v5892
  %v6413 = vunpack.c.l.b16 %v5893
  %v6414 = vunpack.c.l.b16 %v5894
  %v6415 = vunpack.c.l.b16 %v5895
  %v6416 = vunpack.c.l.b16 %v5896
  %v6417 = vunpack.c.l.b16 %v5897
  %v6418 = vunpack.c.l.b16 %v5898
  %v6419 = vunpack.c.l.b16 %v5899
  %v6420 = vunpack.c.l.b16 %v5900
  %v6421 = vunpack.c.l.b16 %v5901
  %v6422 = vunpack.c.l.b16 %v5902
  %v6423 = vunpack.c.l.b16 %v5903
  %v6424 = vunpack.c.l.b16 %v5904
  %v6425 = vunpack.c.l.b16 %v5905
  %v6426 = vunpack.c.l.b16 %v5906
  %v6427 = vunpack.c.l.b16 %v5907
  %v6428 = vunpack.c.l.b16 %v5908
  %v6429 = vunpack.c.l.b16 %v5909
  %v6430 = vunpack.c.l.b16 %v5910
  %v6431 = vunpack.c.l.b16 %v5911
  %v6432 = vunpack.c.l.b16 %v5912
  %v6433 = vunpack.c.l.b16 %v5913
  %v6434 = vunpack.c.l.b16 %v5914
  %v6435 = vunpack.c.l.b16 %v5915
  %v6436 = vunpack.c.l.b16 %v5916
  %v6437 = vunpack.c.l.b16 %v5917
  %v6438 = vunpack.c.l.b16 %v5918
  %v6439 = vunpack.c.l.b16 %v5919
  %v6440 = vunpack.c.l.b16 %v5920
  %v6441 = vunpack.c.l.b16 %v5921
  %v6442 = vunpack.c.l.b16 %v5922
  %v6443 = vunpack.c.l.b16 %v5923
  %v6444 = vunpack.c.l.b16 %v5924
  %v6445 = vunpack.c.l.b16 %v5925
  %v6446 = vunpack.c.l.b16 %v5926
  %v6447 = vunpack.c.l.b16 %v5927
  %v6448 = vunpack.c.l.b16 %v5928
  %v6449 = vunpack.c.l.b16 %v5929
  %v6450 = vunpack.c.l.b16 %v5930
  %v6451 = vunpack.c.l.b16 %v5931
  %v6452 = vunpack.c.l.b16 %v5932
  %v6453 = vunpack.c.l.b16 %v5933
  %v6454 = vunpack.c.l.b16 %v5934
  %v6455 = vunpack.c.l.b16 %v5935
  %v6456 = vunpack.c.l.b16 %v5936
  %v6457 = vunpack.c.l.b16 %v5937
  %v6458 = vunpack.c.l.b16 %v5938
  %v6459 = vunpack.c.l.b16 %v5939
  %v6460 = vunpack.c.l.b16 %v5940
  %v6461 = vunpack.c.l.b16 %v5941
  %v6462 = vunpack.c.l.b16 %v5942
  %v6463 = vunpack.c.l.b16 %v5943
  %v6464 = vunpack.c.l.b16 %v5944
  %v6465 = vunpack.c.l.b16 %v5945
  %v6466 = vunpack.c.l.b16 %v5946
  %v6467 = vunpack.c.l.b16 %v5947
  %v6468 = vunpack.c.l.b16 %v5948
  %v6469 = vunpack.c.l.b16 %v5949
  %v6470 = vunpack.c.l.b16 %v5950
  %v6471 = vunpack.c.l.b16 %v5951
  %v6472 = vunpack.c.l.b16 %v5952
  %v6473 = vunpack.c.l.b16 %v5953
  %v6474 = vunpack.c.l.b16 %v5954
  %v6475 = vunpack.c.l.b16 %v5955
  %v6476 = vunpack.c.l.b16 %v5956
  %v6477 = vunpack.c.l.b16 %v5957
  %v6478 = vunpack.c.l.b16 %v5958
  %v6479 = vunpack.c.l.b16 %v5959
  %v6480 = vunpack.c.l.b16 %v5960
  %v6481 = vunpack.c.l.b16 %v5961
  %v6482 = vunpack.c.l.b16 %v5962
  %v6483 = vunpack.c.l.b16 %v5963
  %v6484 = vunpack.c.l.b16 %v5964
  %v6485 = vunpack.c.l.b16 %v5965
  %v6486 = vunpack.c.l.b16 %v5966
  %v6487 = vunpack.c.l.b16 %v5967
  %v6488 = vunpack.c.l.b16 %v5968
  %v6489 = vunpack.c.l.b16 %v5969
  %v6490 = vunpack.c.l.b16 %v5970
  %v6491 = vunpack.c.l.b16 %v5971
  %v6492 = vunpack.c.l.b16 %v5972
  %v6493 = vunpack.c.l.b16 %v5973
  %v6494 = vunpack.c.l.b16 %v5974
  %v6495 = vunpack.c.l.b16 %v5975
  %v6496 = vunpack.c.l.b16 %v5976
  %v6497 = vunpack.c.l.b16 %v5977
  %v6498 = vunpack.c.l.b16 %v5978
  %v6499 = vunpack.c.l.b16 %v5979
  %v6500 = vunpack.c.l.b16 %v5980
  %v6501 = vunpack.c.l.b16 %v5981
  %v6502 = vunpack.c.l.b16 %v5982
  %v6503 = vunpack.c.l.b16 %v5983
  %v6504 = vunpack.c.l.b16 %v5984
  %v6505 = vunpack.c.l.b16 %v5985
  %v6506 = vunpack.c.l.b16 %v5986
  %v6507 = vunpack.c.l.b16 %v5987
  %v6508 = vunpack.c.l.b16 %v5988
  %v6509 = vunpack.c.l.b16 %v5989
  %v6510 = vunpack.c.l.b16 %v5990
  %v6511 = vunpack.c.l.b16 %v5991
  %v6512 = vunpack.c.l.b16 %v5992
  %v6513 = vunpack.c.l.b16 %v5993
  %v6514 = vunpack.c.l.b16 %v5994
  %v6515 = vunpack.c.l.b16 %v5995
  %v6516 = vunpack.c.l.b16 %v5996
  %v6517 = vunpack.c.l.b16 %v5997
  %v6518 = vunpack.c.l.b16 %v5998
  %v6519 = vunpack.c.l.b16 %v5999
  %v6520 = vunpack.c.l.b16 %v6000
  %v6521 = vunpack.c.l.b16 %v6001
  %v6522 = vunpack.c.l.b16 %v6002
  %v6523 = vunpack.c.l.b16 %v6003
  %v6524 = vunpack.c.l.b16 %v6004
  %v6525 = vunpack.c.l.b16 %v6005
  %v6526 = vunpack.c.l.b16 %v6006
  %v6527 = vunpack.c.l.b16 %v6007
  %v6528 = vunpack.c.l.b16 %v6008
  %v6529 = vunpack.c.l.b16 %v6009
  %v6530 = vunpack.c.l.b16 %v6010
  %v6531 = vunpack.c.l.b16 %v6011
  %v6532 = vunpack.c.l.b16 %v6012
  %v6533 = vunpack.c.l.b16 %v6013
  %v6534 = vunpack.c.l.b16 %v6014
  %v6535 = vunpack.c.l.b16 %v6015
  %v6536 = vunpack.c.l.b16 %v6016
  %v6537 = vunpack.c.l.b16 %v6017
  %v6538 = vunpack.c.l.b16 %v6018
  %v6539 = vunpack.c.l.b16 %v6019
  %v6540 = vunpack.c.l.b16 %v6020
  %v6541 = vunpack.c.l.b16 %v6021
  %v6542 = vunpack.c.l.b16 %v6022
  %v6543 = vunpack.c.l.b16 %v6023
  %v6544 = vunpack.c.l.b16 %v6024
  %v6545 = vunpack.c.l.b16 %v6025
  %v6546 = vunpack.c.l.b16 %v6026
  %v6547 = vunpack.c.l.b16 %v6027
  %v6548 = vunpack.c.l.b16 %v6028
  %v6549 = vunpack.c.l.b16 %v6029
  %v6550 = vunpack.c.l.b16 %v6030
  %v6551 = vunpack.c.l.b16 %v6031
  %v6552 = vunpack.c.l.b16 %v6032
  %v6553 = vunpack.c.l.b16 %v6033
  %v6554 = vunpack.c.l.b16 %v6034
  %v6555 = vunpack.c.l.b16 %v6035
  %v6556 = vunpack.c.l.b16 %v6036
  %v6557 = vunpack.c.l.b16 %v6037
  %v6558 = vunpack.c.l.b16 %v6038
  %v6559 = vunpack.c.l.b16 %v6039
  %v6560 = vunpack.c.l.b16 %v6040
  %v6561 = vunpack.c.l.b16 %v6041
  %v6562 = vunpack.c.l.b16 %v6042
  %v6563 = vunpack.c.l.b16 %v6043
  %v6564 = vunpack.c.l.b16 %v6044
  %v6565 = vunpack.c.l.b16 %v6045
  %v6566 = vunpack.c.l.b16 %v6046
  %v6567 = vunpack.c.l.b16 %v6047
  %v6568 = vunpack.c.l.b16 %v6048
  %v6569 = vunpack.c.l.b16 %v6049
  %v6570 = vunpack.c.l.b16 %v6050
  %v6571 = vunpack.c.l.b16 %v6051
  %v6572 = vunpack.c.l.b16 %v6052
  %v6573 = vunpack.c.l.b16 %v6053
  %v6574 = vunpack.c.l.b16 %v6054
  %v6575 = vunpack.c.l.b16 %v6055
  %v6576 = vunpack.c.l.b16 %v6056
  %v6577 = vunpack.c.l.b16 %v6057
  %v6578 = vunpack.c.l.b16 %v6058
  %v6579 = vunpack.c.l.b16 %v6059
  %v6580 = vunpack.c.l.b16 %v6060
  %v6581 = vunpack.c.l.b16 %v6061
  %v6582 = vunpack.c.l.b16 %v6062
  %v6583 = vunpack.c.l.b16 %v6063
  %v6584 = vunpack.c.l.b16 %v6064
  %v6585 = vunpack.c.l.b16 %v6065
  %v6586 = vunpack.c.l.b16 %v6066
  %v6587 = vunpack.c.l.b16 %v6067
  %v6588 = vunpack.c.l.b16 %v6068
  %v6589 = vunpack.c.l.b16 %v6069
  %v6590 = vunpack.c.l.b16 %v6070
  %v6591 = vunpack.c.l.b16 %v6071
  %v6592 = vunpack.c.l.b16 %v6072
  %v6593 = vunpack.c.l.b16 %v6073
  %v6594 = vunpack.c.l.b16 %v6074
  %v6595 = vunpack.c.l.b16 %v6075
  %v6596 = vunpack.c.l.b16 %v6076
  %v6597 = vunpack.c.l.b16 %v6077
  %v6598 = vunpack.c.l.b16 %v6078
  %v6599 = vunpack.c.l.b16 %v6079
  %v6600 = vunpack.c.l.b16 %v6080
  %v6601 = vunpack.c.l.b16 %v6081
  %v6602 = vunpack.c.l.b16 %v6082
  %v6603 = vunpack.c.l.b16 %v6083
  %v6604 = vunpack.c.l.b16 %v6084
  %v6605 = vunpack.c.l.b16 %v6085
  %v6606 = vunpack.c.l.b16 %v6086
  %v6607 = vunpack.c.l.b16 %v6087
  %v6608 = vunpack.c.l.b16 %v6088
  %v6609 = vunpack.c.l.b16 %v6089
  %v6610 = vunpack.c.l.b16 %v6090
  %v6611 = vunpack.c.l.b16 %v6091
  %v6612 = vunpack.c.l.b16 %v6092
  %v6613 = vunpack.c.l.b16 %v6093
  %v6614 = vunpack.c.l.b16 %v6094
  %v6615 = vunpack.c.l.b16 %v6095
  %v6616 = vunpack.c.l.b16 %v6096
  %v6617 = vunpack.c.l.b16 %v6097
  %v6618 = vunpack.c.l.b16 %v6098
  %v6619 = vunpack.c.l.b16 %v6099
  %v6620 = vunpack.c.l.b16 %v6100
  %v6621 = vunpack.c.l.b16 %v6101
  %v6622 = vunpack.c.l.b16 %v6102
  %v6623 = vunpack.c.l.b16 %v6103
  %v6624 = vunpack.c.l.b16 %v6104
  %v6625 = vunpack.c.l.b16 %v6105
  %v6626 = vunpack.c.l.b16 %v6106
  %v6627 = vunpack.c.l.b16 %v6107
  %v6628 = vunpack.c.l.b16 %v6108
  %v6629 = vunpack.c.l.b16 %v6109
  %v6630 = vunpack.c.l.b16 %v6110
  %v6631 = vunpack.c.l.b16 %v6111
  %v6632 = vunpack.c.l.b16 %v6112
  %v6633 = vunpack.c.l.b16 %v6113
  %v6634 = vunpack.c.l.b16 %v6114
  %v6635 = vunpack.c.l.b16 %v6115
  %v6636 = vunpack.c.l.b16 %v6116
  %v6637 = vunpack.c.l.b16 %v6117
  %v6638 = vunpack.c.l.b16 %v6118
  %v6639 = vunpack.c.l.b16 %v6119
  %v6640 = vunpack.c.l.b16 %v6120
  %v6641 = vunpack.c.l.b16 %v6121
  %v6642 = vunpack.c.l.b16 %v6122
  %v6643 = vunpack.c.l.b16 %v6123
  %v6644 = vunpack.c.l.b16 %v6124
  %v6645 = vunpack.c.l.b16 %v6125
  %v6646 = vunpack.c.l.b16 %v6126
  %v6647 = vunpack.c.l.b16 %v6127
  %v6648 = vunpack.c.l.b16 %v6128
  %v6649 = vunpack.c.l.b16 %v6129
  %v6650 = vunpack.c.l.b16 %v6130
  %v6651 = vunpack.c.l.b16 %v6131
  %v6652 = vunpack.c.l.b16 %v6132
  %v6653 = vunpack.c.l.b16 %v6133
  %v6654 = vpack.c.b16 %v6399, %v6398
  %v6655 = vpack.c.b16 %v6401, %v6400
  %v6656 = vpack.c.b16 %v6403, %v6402
  %v6657 = vpack.c.b16 %v6405, %v6404
  %v6658 = vpack.c.b16 %v6407, %v6406
  %v6659 = vpack.c.b16 %v6409, %v6408
  %v6660 = vpack.c.b16 %v6411, %v6410
  %v6661 = vpack.c.b16 %v6413, %v6412
  %v6662 = vpack.c.b16 %v6415, %v6414
  %v6663 = vpack.c.b16 %v6417, %v6416
  %v6664 = vpack.c.b16 %v6419, %v6418
  %v6665 = vpack.c.b16 %v6421, %v6420
  %v6666 = vpack.c.b16 %v6423, %v6422
  %v6667 = vpack.c.b16 %v6425, %v6424
  %v6668 = vpack.c.b16 %v6427, %v6426
  %v6669 = vpack.c.b16 %v6429, %v6428
  %v6670 = vpack.c.b16 %v6431, %v6430
  %v6671 = vpack.c.b16 %v6433, %v6432
  %v6672 = vpack.c.b16 %v6435, %v6434
  %v6673 = vpack.c.b16 %v6437, %v6436
  %v6674 = vpack.c.b16 %v6439, %v6438
  %v6675 = vpack.c.b16 %v6441, %v6440
  %v6676 = vpack.c.b16 %v6443, %v6442
  %v6677 = vpack.c.b16 %v6445, %v6444
  %v6678 = vpack.c.b16 %v6447, %v6446
  %v6679 = vpack.c.b16 %v6449, %v6448
  %v6680 = vpack.c.b16 %v6451, %v6450
  %v6681 = vpack.c.b16 %v6453, %v6452
  %v6682 = vpack.c.b16 %v6455, %v6454
  %v6683 = vpack.c.b16 %v6457, %v6456
  %v6684 = vpack.c.b16 %v6459, %v6458
  %v6685 = vpack.c.b16 %v6461, %v6460
  %v6686 = vpack.c.b16 %v6463, %v6462
  %v6687 = vpack.c.b16 %v6465, %v6464
  %v6688 = vpack.c.b16 %v6467, %v6466
  %v6689 = vpack.c.b16 %v6469, %v6468
  %v6690 = vpack.c.b16 %v6471, %v6470
  %v6691 = vpack.c.b16 %v6473, %v6472
  %v6692 = vpack.c.b16 %v6475, %v6474
  %v6693 = vpack.c.b16 %v6477, %v6476
  %v6694 = vpack.c.b16 %v6479, %v6478
  %v6695 = vpack.c.b16 %v6481, %v6480
  %v6696 = vpack.c.b16 %v6483, %v6482
  %v6697 = vpack.c.b16 %v6485, %v6484
  %v6698 = vpack.c.b16 %v6487, %v6486
  %v6699 = vpack.c.b16 %v6489, %v6488
  %v6700 = vpack.c.b16 %v6491, %v6490
  %v6701 = vpack.c.b16 %v6493, %v6492
  %v6702 = vpack.c.b16 %v6495, %v6494
  %v6703 = vpack.c.b16 %v6497, %v6496
  %v6704 = vpack.c.b16 %v6499, %v6498
  %v6705 = vpack.c.b16 %v6501, %v6500
  %v6706 = vpack.c.b16 %v6503, %v6502
  %v6707 = vpack.c.b16 %v6505, %v6504
  %v6708 = vpack.c.b16 %v6507, %v6506
  %v6709 = vpack.c.b16 %v6509, %v6508
  %v6710 = vpack.c.b16 %v6511, %v6510
  %v6711 = vpack.c.b16 %v6513, %v6512
  %v6712 = vpack.c.b16 %v6515, %v6514
  %v6713 = vpack.c.b16 %v6517, %v6516
  %v6714 = vpack.c.b16 %v6519, %v6518
  %v6715 = vpack.c.b16 %v6521, %v6520
  %v6716 = vpack.c.b16 %v6523, %v6522
  %v6717 = vpack.c.b16 %v6525, %v6524
  %v6718 = vpack.c.b16 %v6527, %v6526
  %v6719 = vpack.c.b16 %v6529, %v6528
  %v6720 = vpack.c.b16 %v6531, %v6530
  %v6721 = vpack.c.b16 %v6533, %v6532
  %v6722 = vpack.c.b16 %v6535, %v6534
  %v6723 = vpack.c.b16 %v6537, %v6536
  %v6724 = vpack.c.b16 %v6539, %v6538
  %v6725 = vpack.c.b16 %v6541, %v6540
  %v6726 = vpack.c.b16 %v6543, %v6542
  %v6727 = vpack.c.b16 %v6545, %v6544
  %v6728 = vpack.c.b16 %v6547, %v6546
  %v6729 = vpack.c.b16 %v6549, %v6548
  %v6730 = vpack.c.b16 %v6551, %v6550
  %v6731 = vpack.c.b16 %v6553, %v6552
  %v6732 = vpack.c.b16 %v6555, %v6554
  %v6733 = vpack.c.b16 %v6557, %v6556
  %v6734 = vpack.c.b16 %v6559, %v6558
  %v6735 = vpack.c.b16 %v6561, %v6560
  %v6736 = vpack.c.b16 %v6563, %v6562
  %v6737 = vpack.c.b16 %v6565, %v6564
  %v6738 = vpack.c.b16 %v6567, %v6566
  %v6739 = vpack.c.b16 %v6569, %v6568
  %v6740 = vpack.c.b16 %v6571, %v6570
  %v6741 = vpack.c.b16 %v6573, %v6572
  %v6742 = vpack.c.b16 %v6575, %v6574
  %v6743 = vpack.c.b16 %v6577, %v6576
  %v6744 = vpack.c.b16 %v6579, %v6578
  %v6745 = vpack.c.b16 %v6581, %v6580
  %v6746 = vpack.c.b16 %v6583, %v6582
  %v6747 = vpack.c.b16 %v6585, %v6584
  %v6748 = vpack.c.b16 %v6587, %v6586
  %v6749 = vpack.c.b16 %v6589, %v6588
  %v6750 = vpack.c.b16 %v6591, %v6590
  %v6751 = vpack.c.b16 %v6593, %v6592
  %v6752 = vpack.c.b16 %v6595, %v6594
  %v6753 = vpack.c.b16 %v6597, %v6596
  %v6754 = vpack.c.b16 %v6599, %v6598
  %v6755 = vpack.c.b16 %v6601, %v6600
  %v6756 = vpack.c.b16 %v6603, %v6602
  %v6757 = vpack.c.b16 %v6605, %v6604
  %v6758 = vpack.c.b16 %v6607, %v6606
  %v6759 = vpack.c.b16 %v6609, %v6608
  %v6760 = vpack.c.b16 %v6611, %v6610
  %v6761 = vpack.c.b16 %v6613, %v6612
  %v6762 = vpack.c.b16 %v6615, %v6614
  %v6763 = vpack.c.b16 %v6617, %v6616
  %v6764 = vpack.c.b16 %v6619, %v6618
  %v6765 = vpack.c.b16 %v6621, %v6620
  %v6766 = vpack.c.b16 %v6623, %v6622
  %v6767 = vpack.c.b16 %v6625, %v6624
  %v6768 = vpack.c.b16 %v6627, %v6626
  %v6769 = vpack.c.b16 %v6629, %v6628
  %v6770 = vpack.c.b16 %v6631, %v6630
  %v6771 = vpack.c.b16 %v6633, %v6632
  %v6772 = vpack.c.b16 %v6635, %v6634
  %v6773 = vpack.c.b16 %v6637, %v6636
  %v6774 = vpack.c.b16 %v6639, %v6638
  %v6775 = vpack.c.b16 %v6641, %v6640
  %v6776 = vpack.c.b16 %v6643, %v6642
  %v6777 = vpack.c.b16 %v6645, %v6644
  %v6778 = vpack.c.b16 %v6647, %v6646
  %v6779 = vpack.c.b16 %v6649, %v6648
  %v6780 = vpack.c.b16 %v6651, %v6650
  %v6781 = vpack.c.b16 %v6653, %v6652
  %6910 = vmatprep.subr.bf16.mxu0 0
  %6911 = vmatpush1.bf16.msra.mxu0 %v6654
  %6912 = vmatprep.subr.bf16.mxu0 0
  %6913 = vmatpush1.bf16.msra.mxu0 %v6655
  %6914 = vmatprep.subr.bf16.mxu0 0
  %6915 = vmatpush1.bf16.msra.mxu0 %v6656
  %6916 = vmatprep.subr.bf16.mxu0 0
  %6917 = vmatpush1.bf16.msra.mxu0 %v6657
  %6918 = vmatprep.subr.bf16.mxu0 0
  %6919 = vmatpush1.bf16.msra.mxu0 %v6658
  %6920 = vmatprep.subr.bf16.mxu0 0
  %6921 = vmatpush1.bf16.msra.mxu0 %v6659
  %6922 = vmatprep.subr.bf16.mxu0 0
  %6923 = vmatpush1.bf16.msra.mxu0 %v6660
  %6924 = vmatprep.subr.bf16.mxu0 0
  %6925 = vmatpush1.bf16.msra.mxu0 %v6661
  %6926 = vmatprep.subr.bf16.mxu0 0
  %6927 = vmatpush1.bf16.msra.mxu0 %v6662
  %6928 = vmatprep.subr.bf16.mxu0 0
  %6929 = vmatpush1.bf16.msra.mxu0 %v6663
  %6930 = vmatprep.subr.bf16.mxu0 0
  %6931 = vmatpush1.bf16.msra.mxu0 %v6664
  %6932 = vmatprep.subr.bf16.mxu0 0
  %6933 = vmatpush1.bf16.msra.mxu0 %v6665
  %6934 = vmatprep.subr.bf16.mxu0 0
  %6935 = vmatpush1.bf16.msra.mxu0 %v6666
  %6936 = vmatprep.subr.bf16.mxu0 0
  %6937 = vmatpush1.bf16.msra.mxu0 %v6667
  %6938 = vmatprep.subr.bf16.mxu0 0
  %6939 = vmatpush1.bf16.msra.mxu0 %v6668
  %6940 = vmatprep.subr.bf16.mxu0 0
  %6941 = vmatpush1.bf16.msra.mxu0 %v6669
  %6942 = vmatprep.mubr.bf16.mxu0 %v5862
  %6943 = vmatmul.mubr.bf16.gmra.mrb[0].mxu0 %v5861
  %v6944 = vpop.f32.mrb[0].mxu0
  %v6945 = vadd.f32 %v6140, %v6944
  %v6946 = vpop.f32.mrb[0].mxu0
  %v6947 = vpop.f32.mrb[0].mxu0
  %v6948 = vadd.f32 %v6140, %v6947
  %v6949 = vpop.f32.mrb[0].mxu0
  %6950 = vdwg.mxu0
  %6951 = vmatprep.subr.bf16.mxu0 0
  %6952 = vmatpush1.bf16.msra.mxu0 %v6670
  %6953 = vmatprep.subr.bf16.mxu0 0
  %6954 = vmatpush1.bf16.msra.mxu0 %v6671
  %6955 = vmatprep.subr.bf16.mxu0 0
  %6956 = vmatpush1.bf16.msra.mxu0 %v6672
  %6957 = vmatprep.subr.bf16.mxu0 0
  %6958 = vmatpush1.bf16.msra.mxu0 %v6673
  %6959 = vmatprep.subr.bf16.mxu0 0
  %6960 = vmatpush1.bf16.msra.mxu0 %v6674
  %6961 = vmatprep.subr.bf16.mxu0 0
  %6962 = vmatpush1.bf16.msra.mxu0 %v6675
  %6963 = vmatprep.subr.bf16.mxu0 0
  %6964 = vmatpush1.bf16.msra.mxu0 %v6676
  %6965 = vmatprep.subr.bf16.mxu0 0
  %6966 = vmatpush1.bf16.msra.mxu0 %v6677
  %6967 = vmatprep.subr.bf16.mxu0 0
  %6968 = vmatpush1.bf16.msra.mxu0 %v6678
  %6969 = vmatprep.subr.bf16.mxu0 0
  %6970 = vmatpush1.bf16.msra.mxu0 %v6679
  %6971 = vmatprep.subr.bf16.mxu0 0
  %6972 = vmatpush1.bf16.msra.mxu0 %v6680
  %6973 = vmatprep.subr.bf16.mxu0 0
  %6974 = vmatpush1.bf16.msra.mxu0 %v6681
  %6975 = vmatprep.subr.bf16.mxu0 0
  %6976 = vmatpush1.bf16.msra.mxu0 %v6682
  %6977 = vmatprep.subr.bf16.mxu0 0
  %6978 = vmatpush1.bf16.msra.mxu0 %v6683
  %6979 = vmatprep.subr.bf16.mxu0 0
  %6980 = vmatpush1.bf16.msra.mxu0 %v6684
  %6981 = vmatprep.subr.bf16.mxu0 0
  %6982 = vmatpush1.bf16.msra.mxu0 %v6685
  %6983 = vmatprep.mubr.bf16.mxu0 %v5864
  %6984 = vmatmul.mubr.bf16.gmra.mrb[0].mxu0 %v5863
  %v6985 = vpop.f32.mrb[0].mxu0
  %v6986 = vadd.f32 %v6945, %v6985
  %v6987 = vpop.f32.mrb[0].mxu0
  %v6988 = vpop.f32.mrb[0].mxu0
  %v6989 = vadd.f32 %v6948, %v6988
  %v6990 = vpop.f32.mrb[0].mxu0
  %6991 = vdwg.mxu0
  %6992 = vmatprep.subr.bf16.mxu0 0
  %6993 = vmatpush1.bf16.msra.mxu0 %v6686
  %6994 = vmatprep.subr.bf16.mxu0 0
  %6995 = vmatpush1.bf16.msra.mxu0 %v6687
  %6996 = vmatprep.subr.bf16.mxu0 0
  %6997 = vmatpush1.bf16.msra.mxu0 %v6688
  %6998 = vmatprep.subr.bf16.mxu0 0
  %6999 = vmatpush1.bf16.msra.mxu0 %v6689
  %7000 = vmatprep.subr.bf16.mxu0 0
  %7001 = vmatpush1.bf16.msra.mxu0 %v6690
  %7002 = vmatprep.subr.bf16.mxu0 0
  %7003 = vmatpush1.bf16.msra.mxu0 %v6691
  %7004 = vmatprep.subr.bf16.mxu0 0
  %7005 = vmatpush1.bf16.msra.mxu0 %v6692
  %7006 = vmatprep.subr.bf16.mxu0 0
  %7007 = vmatpush1.bf16.msra.mxu0 %v6693
  %7008 = vmatprep.subr.bf16.mxu0 0
  %7009 = vmatpush1.bf16.msra.mxu0 %v6694
  %7010 = vmatprep.subr.bf16.mxu0 0
  %7011 = vmatpush1.bf16.msra.mxu0 %v6695
  %7012 = vmatprep.subr.bf16.mxu0 0
  %7013 = vmatpush1.bf16.msra.mxu0 %v6696
  %7014 = vmatprep.subr.bf16.mxu0 0
  %7015 = vmatpush1.bf16.msra.mxu0 %v6697
  %7016 = vmatprep.subr.bf16.mxu0 0
  %7017 = vmatpush1.bf16.msra.mxu0 %v6698
  %7018 = vmatprep.subr.bf16.mxu0 0
  %7019 = vmatpush1.bf16.msra.mxu0 %v6699
  %7020 = vmatprep.subr.bf16.mxu0 0
  %7021 = vmatpush1.bf16.msra.mxu0 %v6700
  %7022 = vmatprep.subr.bf16.mxu0 0
  %7023 = vmatpush1.bf16.msra.mxu0 %v6701
  %7024 = vmatprep.mubr.bf16.mxu0 %v5866
  %7025 = vmatmul.mubr.bf16.gmra.mrb[0].mxu0 %v5865
  %v7026 = vpop.f32.mrb[0].mxu0
  %v7027 = vadd.f32 %v6986, %v7026
  %v7028 = vpop.f32.mrb[0].mxu0
  %v7029 = vpop.f32.mrb[0].mxu0
  %v7030 = vadd.f32 %v6989, %v7029
  %v7031 = vpop.f32.mrb[0].mxu0
  %7032 = vdwg.mxu0
  %7033 = vmatprep.subr.bf16.mxu0 0
  %7034 = vmatpush1.bf16.msra.mxu0 %v6702
  %7035 = vmatprep.subr.bf16.mxu0 0
  %7036 = vmatpush1.bf16.msra.mxu0 %v6703
  %7037 = vmatprep.subr.bf16.mxu0 0
  %7038 = vmatpush1.bf16.msra.mxu0 %v6704
  %7039 = vmatprep.subr.bf16.mxu0 0
  %7040 = vmatpush1.bf16.msra.mxu0 %v6705
  %7041 = vmatprep.subr.bf16.mxu0 0
  %7042 = vmatpush1.bf16.msra.mxu0 %v6706
  %7043 = vmatprep.subr.bf16.mxu0 0
  %7044 = vmatpush1.bf16.msra.mxu0 %v6707
  %7045 = vmatprep.subr.bf16.mxu0 0
  %7046 = vmatpush1.bf16.msra.mxu0 %v6708
  %7047 = vmatprep.subr.bf16.mxu0 0
  %7048 = vmatpush1.bf16.msra.mxu0 %v6709
  %7049 = vmatprep.subr.bf16.mxu0 0
  %7050 = vmatpush1.bf16.msra.mxu0 %v6710
  %7051 = vmatprep.subr.bf16.mxu0 0
  %7052 = vmatpush1.bf16.msra.mxu0 %v6711
  %7053 = vmatprep.subr.bf16.mxu0 0
  %7054 = vmatpush1.bf16.msra.mxu0 %v6712
  %7055 = vmatprep.subr.bf16.mxu0 0
  %7056 = vmatpush1.bf16.msra.mxu0 %v6713
  %7057 = vmatprep.subr.bf16.mxu0 0
  %7058 = vmatpush1.bf16.msra.mxu0 %v6714
  %7059 = vmatprep.subr.bf16.mxu0 0
  %7060 = vmatpush1.bf16.msra.mxu0 %v6715
  %7061 = vmatprep.subr.bf16.mxu0 0
  %7062 = vmatpush1.bf16.msra.mxu0 %v6716
  %7063 = vmatprep.subr.bf16.mxu0 0
  %7064 = vmatpush1.bf16.msra.mxu0 %v6717
  %7065 = vmatprep.mubr.bf16.mxu0 %v5868
  %7066 = vmatmul.mubr.bf16.gmra.mrb[0].mxu0 %v5867
  %v7067 = vpop.f32.mrb[0].mxu0
  %v7068 = vadd.f32 %v7027, %v7067
  %v7069 = vpop.f32.mrb[0].mxu0
  %v7070 = vpop.f32.mrb[0].mxu0
  %v7071 = vadd.f32 %v7030, %v7070
  %v7072 = vpop.f32.mrb[0].mxu0
  %7073 = vdwg.mxu0
  %7074 = vmatprep.subr.bf16.mxu0 0
  %7075 = vmatpush1.bf16.msra.mxu0 %v6718
  %7076 = vmatprep.subr.bf16.mxu0 0
  %7077 = vmatpush1.bf16.msra.mxu0 %v6719
  %7078 = vmatprep.subr.bf16.mxu0 0
  %7079 = vmatpush1.bf16.msra.mxu0 %v6720
  %7080 = vmatprep.subr.bf16.mxu0 0
  %7081 = vmatpush1.bf16.msra.mxu0 %v6721
  %7082 = vmatprep.subr.bf16.mxu0 0
  %7083 = vmatpush1.bf16.msra.mxu0 %v6722
  %7084 = vmatprep.subr.bf16.mxu0 0
  %7085 = vmatpush1.bf16.msra.mxu0 %v6723
  %7086 = vmatprep.subr.bf16.mxu0 0
  %7087 = vmatpush1.bf16.msra.mxu0 %v6724
  %7088 = vmatprep.subr.bf16.mxu0 0
  %7089 = vmatpush1.bf16.msra.mxu0 %v6725
  %7090 = vmatprep.subr.bf16.mxu0 0
  %7091 = vmatpush1.bf16.msra.mxu0 %v6726
  %7092 = vmatprep.subr.bf16.mxu0 0
  %7093 = vmatpush1.bf16.msra.mxu0 %v6727
  %7094 = vmatprep.subr.bf16.mxu0 0
  %7095 = vmatpush1.bf16.msra.mxu0 %v6728
  %7096 = vmatprep.subr.bf16.mxu0 0
  %7097 = vmatpush1.bf16.msra.mxu0 %v6729
  %7098 = vmatprep.subr.bf16.mxu0 0
  %7099 = vmatpush1.bf16.msra.mxu0 %v6730
  %7100 = vmatprep.subr.bf16.mxu0 0
  %7101 = vmatpush1.bf16.msra.mxu0 %v6731
  %7102 = vmatprep.subr.bf16.mxu0 0
  %7103 = vmatpush1.bf16.msra.mxu0 %v6732
  %7104 = vmatprep.subr.bf16.mxu0 0
  %7105 = vmatpush1.bf16.msra.mxu0 %v6733
  %7106 = vmatprep.mubr.bf16.mxu0 %v5870
  %7107 = vmatmul.mubr.bf16.gmra.mrb[0].mxu0 %v5869
  %v7108 = vpop.f32.mrb[0].mxu0
  %v7109 = vadd.f32 %v7068, %v7108
  %v7110 = vpop.f32.mrb[0].mxu0
  %v7111 = vpop.f32.mrb[0].mxu0
  %v7112 = vadd.f32 %v7071, %v7111
  %v7113 = vpop.f32.mrb[0].mxu0
  %7114 = vdwg.mxu0
  %7115 = vmatprep.subr.bf16.mxu0 0
  %7116 = vmatpush1.bf16.msra.mxu0 %v6734
  %7117 = vmatprep.subr.bf16.mxu0 0
  %7118 = vmatpush1.bf16.msra.mxu0 %v6735
  %7119 = vmatprep.subr.bf16.mxu0 0
  %7120 = vmatpush1.bf16.msra.mxu0 %v6736
  %7121 = vmatprep.subr.bf16.mxu0 0
  %7122 = vmatpush1.bf16.msra.mxu0 %v6737
  %7123 = vmatprep.subr.bf16.mxu0 0
  %7124 = vmatpush1.bf16.msra.mxu0 %v6738
  %7125 = vmatprep.subr.bf16.mxu0 0
  %7126 = vmatpush1.bf16.msra.mxu0 %v6739
  %7127 = vmatprep.subr.bf16.mxu0 0
  %7128 = vmatpush1.bf16.msra.mxu0 %v6740
  %7129 = vmatprep.subr.bf16.mxu0 0
  %7130 = vmatpush1.bf16.msra.mxu0 %v6741
  %7131 = vmatprep.subr.bf16.mxu0 0
  %7132 = vmatpush1.bf16.msra.mxu0 %v6742
  %7133 = vmatprep.subr.bf16.mxu0 0
  %7134 = vmatpush1.bf16.msra.mxu0 %v6743
  %7135 = vmatprep.subr.bf16.mxu0 0
  %7136 = vmatpush1.bf16.msra.mxu0 %v6744
  %7137 = vmatprep.subr.bf16.mxu0 0
  %7138 = vmatpush1.bf16.msra.mxu0 %v6745
  %7139 = vmatprep.subr.bf16.mxu0 0
  %7140 = vmatpush1.bf16.msra.mxu0 %v6746
  %7141 = vmatprep.subr.bf16.mxu0 0
  %7142 = vmatpush1.bf16.msra.mxu0 %v6747
  %7143 = vmatprep.subr.bf16.mxu0 0
  %7144 = vmatpush1.bf16.msra.mxu0 %v6748
  %7145 = vmatprep.subr.bf16.mxu0 0
  %7146 = vmatpush1.bf16.msra.mxu0 %v6749
  %7147 = vmatprep.mubr.bf16.mxu0 %v5872
  %7148 = vmatmul.mubr.bf16.gmra.mrb[0].mxu0 %v5871
  %v7149 = vpop.f32.mrb[0].mxu0
  %v7150 = vadd.f32 %v7109, %v7149
  %v7151 = vpop.f32.mrb[0].mxu0
  %v7152 = vpop.f32.mrb[0].mxu0
  %v7153 = vadd.f32 %v7112, %v7152
  %v7154 = vpop.f32.mrb[0].mxu0
  %7155 = vdwg.mxu0
  %7156 = vmatprep.subr.bf16.mxu0 0
  %7157 = vmatpush1.bf16.msra.mxu0 %v6750
  %7158 = vmatprep.subr.bf16.mxu0 0
  %7159 = vmatpush1.bf16.msra.mxu0 %v6751
  %7160 = vmatprep.subr.bf16.mxu0 0
  %7161 = vmatpush1.bf16.msra.mxu0 %v6752
  %7162 = vmatprep.subr.bf16.mxu0 0
  %7163 = vmatpush1.bf16.msra.mxu0 %v6753
  %7164 = vmatprep.subr.bf16.mxu0 0
  %7165 = vmatpush1.bf16.msra.mxu0 %v6754
  %7166 = vmatprep.subr.bf16.mxu0 0
  %7167 = vmatpush1.bf16.msra.mxu0 %v6755
  %7168 = vmatprep.subr.bf16.mxu0 0
  %7169 = vmatpush1.bf16.msra.mxu0 %v6756
  %7170 = vmatprep.subr.bf16.mxu0 0
  %7171 = vmatpush1.bf16.msra.mxu0 %v6757
  %7172 = vmatprep.subr.bf16.mxu0 0
  %7173 = vmatpush1.bf16.msra.mxu0 %v6758
  %7174 = vmatprep.subr.bf16.mxu0 0
  %7175 = vmatpush1.bf16.msra.mxu0 %v6759
  %7176 = vmatprep.subr.bf16.mxu0 0
  %7177 = vmatpush1.bf16.msra.mxu0 %v6760
  %7178 = vmatprep.subr.bf16.mxu0 0
  %7179 = vmatpush1.bf16.msra.mxu0 %v6761
  %7180 = vmatprep.subr.bf16.mxu0 0
  %7181 = vmatpush1.bf16.msra.mxu0 %v6762
  %7182 = vmatprep.subr.bf16.mxu0 0
  %7183 = vmatpush1.bf16.msra.mxu0 %v6763
  %7184 = vmatprep.subr.bf16.mxu0 0
  %7185 = vmatpush1.bf16.msra.mxu0 %v6764
  %7186 = vmatprep.subr.bf16.mxu0 0
  %7187 = vmatpush1.bf16.msra.mxu0 %v6765
  %7188 = vmatprep.mubr.bf16.mxu0 %v5874
  %7189 = vmatmul.mubr.bf16.gmra.mrb[0].mxu0 %v5873
  %v7190 = vpop.f32.mrb[0].mxu0
  %v7191 = vadd.f32 %v7150, %v7190
  %v7192 = vpop.f32.mrb[0].mxu0
  %v7193 = vpop.f32.mrb[0].mxu0
  %v7194 = vadd.f32 %v7153, %v7193
  %v7195 = vpop.f32.mrb[0].mxu0
  %7196 = vdwg.mxu0
  %7197 = vmatprep.subr.bf16.mxu0 0
  %7198 = vmatpush1.bf16.msra.mxu0 %v6766
  %7199 = vmatprep.subr.bf16.mxu0 0
  %7200 = vmatpush1.bf16.msra.mxu0 %v6767
  %7201 = vmatprep.subr.bf16.mxu0 0
  %7202 = vmatpush1.bf16.msra.mxu0 %v6768
  %7203 = vmatprep.subr.bf16.mxu0 0
  %7204 = vmatpush1.bf16.msra.mxu0 %v6769
  %7205 = vmatprep.subr.bf16.mxu0 0
  %7206 = vmatpush1.bf16.msra.mxu0 %v6770
  %7207 = vmatprep.subr.bf16.mxu0 0
  %7208 = vmatpush1.bf16.msra.mxu0 %v6771
  %7209 = vmatprep.subr.bf16.mxu0 0
  %7210 = vmatpush1.bf16.msra.mxu0 %v6772
  %7211 = vmatprep.subr.bf16.mxu0 0
  %7212 = vmatpush1.bf16.msra.mxu0 %v6773
  %7213 = vmatprep.subr.bf16.mxu0 0
  %7214 = vmatpush1.bf16.msra.mxu0 %v6774
  %7215 = vmatprep.subr.bf16.mxu0 0
  %7216 = vmatpush1.bf16.msra.mxu0 %v6775
  %7217 = vmatprep.subr.bf16.mxu0 0
  %7218 = vmatpush1.bf16.msra.mxu0 %v6776
  %7219 = vmatprep.subr.bf16.mxu0 0
  %7220 = vmatpush1.bf16.msra.mxu0 %v6777
  %7221 = vmatprep.subr.bf16.mxu0 0
  %7222 = vmatpush1.bf16.msra.mxu0 %v6778
  %7223 = vmatprep.subr.bf16.mxu0 0
  %7224 = vmatpush1.bf16.msra.mxu0 %v6779
  %7225 = vmatprep.subr.bf16.mxu0 0
  %7226 = vmatpush1.bf16.msra.mxu0 %v6780
  %7227 = vmatprep.subr.bf16.mxu0 0
  %7228 = vmatpush1.bf16.msra.mxu0 %v6781
  %7229 = vmatprep.mubr.bf16.mxu0 %v5876
  %7230 = vmatmul.mubr.bf16.gmra.mrb[0].mxu0 %v5875
  %v7231 = vpop.f32.mrb[0].mxu0
  %v7232 = vadd.f32 %v7191, %v7231
  %v7233 = vpop.f32.mrb[0].mxu0
  %v7234 = vpop.f32.mrb[0].mxu0
  %v7235 = vadd.f32 %v7194, %v7234
  %v7236 = vpop.f32.mrb[0].mxu0
  %7237 = vdwg.mxu0
  %v7238 = vadd.f32 %v5201, %v7232
  %v7239 = vadd.f32 %v5202, %v7235
  %v7240 = vsel %vm79, %v7238, 0.0
  %7241 = vadd.xlane.f32.xlu0 %v7240
  %v7242 = vpop.xlane.xlu0 %7241
  %v7243 = vsel %vm79, %v7239, 0.0
  %7244 = vadd.xlane.f32.xlu0 %v7243
  %v7245 = vpop.xlane.xlu0 %7244
  %v7246 = vmul.f32 %v7242, %v1551
  %v7247 = vmul.f32 %v7245, %v1551
  %v7248 = vsub.f32 %v7238, %v7246
  %v7249 = vsub.f32 %v7239, %v7247
  %v7250 = vmul.f32 %v7248, %v7248
  %v7251 = vmul.f32 %v7249, %v7249
  %v7252 = vsel %vm79, %v7250, 0.0
  %7253 = vadd.xlane.f32.xlu0 %v7252
  %v7254 = vpop.xlane.xlu0 %7253
  %v7255 = vsel %vm79, %v7251, 0.0
  %7256 = vadd.xlane.f32.xlu0 %v7255
  %v7257 = vpop.xlane.xlu0 %7256
  %v7258 = vmul.f32 %v7254, %v1551
  %v7259 = vmul.f32 %v7257, %v1551
  %v7260 = vadd.f32 %v7258, 1e-05
  %v7261 = vadd.f32 %v7259, 1e-05
  %v7262 = vrsqrt.pop %v7260
  %v7263 = vrsqrt.pop %v7261
  %v7264 = vmul.f32 %v7248, %v7262
  %v7265 = vmul.f32 %v7249, %v7263
  %s7266 = scalar_lea.vmem %s11, 1
  %v7267 = vld [vmem:[%s7266] sm:$0x1]
  %v7269 = vlaneseq
  %v7270 = vshrl.u32 %v7269, 7
  %v7271 = vsub.s32 0, %v7270
  %v7272 = vrot.slane %v7267, %v7271
  %v7274 = vmul.f32 %v7264, %v7272
  %v7275 = vmul.f32 %v7265, %v7272
  %s7276 = scalar_lea.vmem %s12, 1
  %v7277 = vld [vmem:[%s7276] sm:$0x1]
  %v7279 = vlaneseq
  %v7280 = vshrl.u32 %v7279, 7
  %v7281 = vsub.s32 0, %v7280
  %v7282 = vrot.slane %v7277, %v7281
  %v7284 = vadd.f32 %v7274, %v7282
  %v7285 = vadd.f32 %v7275, %v7282
  %v7286 = vld [vmem:[%s13] sm:$0xff]
  %v7287 = vld [vmem:[%s13 + $0x8] sm:$0xff]
  %v7288 = vld [vmem:[%s13 + $0x10] sm:$0xff]
  %v7289 = vld [vmem:[%s13 + $0x18] sm:$0xff]
  %v7290 = vld [vmem:[#allocation2] sm:$0x1]
  %v7292 = vlaneseq
  %v7293 = vshrl.u32 %v7292, 7
  %v7294 = vsub.s32 0, %v7293
  %v7295 = vrot.slane %v7290, %v7294
  %v7298 = vsel %vm79, %v7284, 0
  %v7301 = vsel %vm79, %v7285, 0
  %7303 = vmatprep.subr.mxu0 0.0
  %7304 = vmatpush1.msra.mxu0 %v7286
  %7305 = vmatprep.subr.mxu0 0.0
  %7306 = vmatpush1.msra.mxu0 %v7287
  %7307 = vmatprep.subr.mxu0 0.0
  %7308 = vmatpush1.msra.mxu0 %v7288
  %7309 = vmatprep.subr.mxu0 0.0
  %7310 = vmatpush1.msra.mxu0 %v7289
  %7311 = vmatprep.subr.mxu0 0.0
  %7312 = vmatpush1.msra.mxu0 0.0
  %7313 = vmatprep.subr.mxu0 0.0
  %7314 = vmatpush1.msra.mxu0 0.0
  %7315 = vmatprep.subr.mxu0 0.0
  %7316 = vmatpush1.msra.mxu0 0.0
  %7317 = vmatprep.subr.mxu0 0.0
  %7318 = vmatpush1.msra.mxu0 0.0
  %7319 = vmatprep.subr.mxu0 0.0
  %7320 = vmatpush1.msra.mxu0 0.0
  %7321 = vmatprep.subr.mxu0 0.0
  %7322 = vmatpush1.msra.mxu0 0.0
  %7323 = vmatprep.subr.mxu0 0.0
  %7324 = vmatpush1.msra.mxu0 0.0
  %7325 = vmatprep.subr.mxu0 0.0
  %7326 = vmatpush1.msra.mxu0 0.0
  %7327 = vmatprep.subr.mxu0 0.0
  %7328 = vmatpush1.msra.mxu0 0.0
  %7329 = vmatprep.subr.mxu0 0.0
  %7330 = vmatpush1.msra.mxu0 0.0
  %7331 = vmatprep.subr.mxu0 0.0
  %7332 = vmatpush1.msra.mxu0 0.0
  %7333 = vmatprep.subr.mxu0 0.0
  %7334 = vmatpush1.msra.mxu0 0.0
  %7335 = vmatprep.subr.mxu0 0.0
  %7336 = vmatpush1.msra.mxu0 0.0
  %7337 = vmatprep.subr.mxu0 0.0
  %7338 = vmatpush1.msra.mxu0 0.0
  %7339 = vmatprep.subr.mxu0 0.0
  %7340 = vmatpush1.msra.mxu0 0.0
  %7341 = vmatprep.subr.mxu0 0.0
  %7342 = vmatpush1.msra.mxu0 0.0
  %7343 = vmatprep.subr.mxu0 0.0
  %7344 = vmatpush1.msra.mxu0 0.0
  %7345 = vmatprep.subr.mxu0 0.0
  %7346 = vmatpush1.msra.mxu0 0.0
  %7347 = vmatprep.subr.mxu0 0.0
  %7348 = vmatpush1.msra.mxu0 0.0
  %7349 = vmatprep.subr.mxu0 0.0
  %7350 = vmatpush1.msra.mxu0 0.0
  %7351 = vmatprep.subr.mxu0 0.0
  %7352 = vmatpush1.msra.mxu0 0.0
  %7353 = vmatprep.subr.mxu0 0.0
  %7354 = vmatpush1.msra.mxu0 0.0
  %7355 = vmatprep.subr.mxu0 0.0
  %7356 = vmatpush1.msra.mxu0 0.0
  %7357 = vmatprep.subr.mxu0 0.0
  %7358 = vmatpush1.msra.mxu0 0.0
  %7359 = vmatprep.subr.mxu0 0.0
  %7360 = vmatpush1.msra.mxu0 0.0
  %7361 = vmatprep.subr.mxu0 0.0
  %7362 = vmatpush1.msra.mxu0 0.0
  %7363 = vmatprep.subr.mxu0 0.0
  %7364 = vmatpush1.msra.mxu0 0.0
  %7365 = vmatprep.subr.mxu0 0.0
  %7366 = vmatpush1.msra.mxu0 0.0
  %7367 = vmatprep.mubr.f32.mxu0 0.0
  %7368 = vmatmul.mubr.f32.gmra.mrb[0].mxu0 %v7298
  %v7369 = vpop.f32.mrb[0].mxu0
  %v7370 = vadd.f32 %v7295, %v7369
  %v7371 = vpop.f32.mrb[0].mxu0
  %7372 = vmatprep.mubr.f32.mxu0 0.0
  %7373 = vmatmul.mubr.f32.gmra.mrb[0].mxu0 %v7301
  %v7374 = vpop.f32.mrb[0].mxu0
  %v7375 = vadd.f32 %v7295, %v7374
  %v7376 = vpop.f32.mrb[0].mxu0
  %7377 = vdwg.mxu0
  %vm7378 = vcmask 7168
  %7379 = vst.msk [vmem:[%s15] sm:$0xff] %vm7378, %v7370
  %7380 = vst.msk [vmem:[%s15 + $0x8] sm:$0xff] %vm7378, %v7375
  // Predicated region
  $region62: #{transformer_self_forward.1} parent=0 // pred_check
    _
  $region63: #{transformer_self_forward.1} parent=0 // pred_check_branch
    %7382 = sbr.rel (0) target = $region65
  $region64: #{transformer_self_forward.1} parent=0 // pred_region
    _
  $region65: #{transformer_self_forward.1} parent=0 // pred_fallthru
    _
  // Predicated region
  $region66: #{transformer_self_forward.1} parent=0 // pred_check
    _
  $region67: #{transformer_self_forward.1} parent=0 // pred_check_branch
    %7384 = sbr.rel (0) target = $region69
  $region68: #{transformer_self_forward.1} parent=0 // pred_region
    _
  $region69: #{transformer_self_forward.1} parent=0 // pred_fallthru
    _

</llo_original>
